<compile_context>
chip_gen: v7x
topology: tpu7x:2x2x1
jax: 0.10.0
libtpu: 0.0.40
codegen_flags: <defaults>
</compile_context>

<pallas_src>
import jax
import jax.numpy as jnp
import numpy as np
from jax.experimental import pallas as pl
from jax.experimental.pallas import tpu as pltpu

_BN_EPS = 1e-5
_LRELU_SLOPE = 0.2
_VMEM_LIMIT = 32 * 1024 * 1024     # explicit scoped-VMEM limit, safe on v5e/v6e/v7x
_NDF = 32
_NC = 3


def _leaky_relu(x):
    return jnp.where(x > 0, x, _LRELU_SLOPE * x)


# ----------------------------------------------------------------------------
# In-kernel helpers (pure jnp, traced inside the kernels)
# ----------------------------------------------------------------------------
def _shift_down1(a, axis):
    """Shift `a` by +1 along `axis` with a leading zero (element i reads i-1)."""
    zshape = list(a.shape)
    zshape[axis] = 1
    z = jnp.zeros(zshape, a.dtype)
    out = jnp.concatenate([z, a], axis=axis)
    idx = [slice(None)] * a.ndim
    idx[axis] = slice(0, a.shape[axis])
    return out[tuple(idx)]


def _taps_stride1(z):
    """Nine im2col tap slabs of a stride-1 3x3 pad-1 conv.  z: (B, H, W, C)."""
    B, H, W, C = z.shape
    zr = jnp.zeros((B, 1, W, C), z.dtype)
    zp = jnp.concatenate([zr, z, zr], axis=1)
    zc = jnp.zeros((B, H + 2, 1, C), z.dtype)
    zp = jnp.concatenate([zc, zp, zc], axis=2)
    return [zp[:, ky:ky + H, kx:kx + W, :] for ky in range(3) for kx in range(3)]


def _taps_stride2(s, cin):
    """Nine im2col tap slabs of a stride-2 3x3 pad-1 conv, taken from the
    space-to-depth image s: (B, Ho, Wo, 4*cin) with channel block
    (p*2+q)*cin + c  ==  x[2a+p, 2b+q, c].
    Tap (ky,kx) reads x[2a+ky-1, 2b+kx-1]; only ky==0 / kx==0 touch the pad,
    which becomes a 1-row/1-col zero shift (no strided loads, no transposes)."""
    slabs = []
    for ky in range(3):
        p, shift_r = ((0, False) if ky == 1 else (1, ky == 0))
        for kx in range(3):
            q, shift_c = ((0, False) if kx == 1 else (1, kx == 0))
            blk = s[..., (2 * p + q) * cin:(2 * p + q + 1) * cin]
            if shift_r:
                blk = _shift_down1(blk, 1)
            if shift_c:
                blk = _shift_down1(blk, 2)
            slabs.append(blk)
    return slabs


# ----------------------------------------------------------------------------
# Generic fused layer kernel:
#   [BN affine of previous layer (+LReLU | +0.1*residual)] -> 3x3 conv
#   -> [LReLU] / [sigmoid VPU head], optional BN partial-stat emission.
# ----------------------------------------------------------------------------
def _make_conv_kernel(*, stride, cin, cout, pre_affine, pre_lrelu, residual,
                      has_bias, post, emit_stats, emit_pre, vpu_head):
    def kernel(*refs):
        it = iter(refs)
        x_ref = next(it)
        scale_ref = shift_ref = res_ref = None
        if pre_affine:
            scale_ref = next(it)
            shift_ref = next(it)
        if residual:
            res_ref = next(it)
        w_ref = next(it)
        b_ref = next(it) if has_bias else None
        o_ref = next(it)
        pre_ref = next(it) if emit_pre else None
        st_ref = next(it) if emit_stats else None

        x = x_ref[...]                                  # (B, Hin, Win, Ce) f32
        # Fused BatchNorm affine of the *previous* layer (scale/shift finalized
        # outside from batch stats), then LReLU or the ResnetBlock residual.
        if pre_affine:
            z = x * scale_ref[...] + shift_ref[...]
            if pre_lrelu:
                z = _leaky_relu(z)
            if residual:
                z = res_ref[...] + 0.1 * z
        else:
            z = x
        if emit_pre:                                    # ResnetBlock input, reused
            pre_ref[...] = z                            # later as the residual

        B = z.shape[0]
        if vpu_head:
            # Cout == 1: broadcast multiply + lane reduction on the VPU (a
            # 1-column MXU matvec would waste the array and the store); keep
            # everything f32 (v5e VPU has no bf16).
            slabs = _taps_stride1(z) if stride == 1 else _taps_stride2(z, cin)
            patches = jnp.concatenate(slabs, axis=-1)   # (B, Ho, Wo, 9*cin)
            y = jnp.sum(patches * w_ref[...], axis=-1)  # (B, Ho, Wo)
            o_ref[...] = 1.0 / (1.0 + jnp.exp(-y))
            return

        # bf16 operands / f32 accumulation: native MXU mode on v5e/v6e/v7x and
        # half the im2col bytes.  One big-K dot per (tile, layer).
        zb = z.astype(jnp.bfloat16)
        slabs = _taps_stride1(zb) if stride == 1 else _taps_stride2(zb, cin)
        ho, wo = slabs[0].shape[1], slabs[0].shape[2]
        patches = jnp.concatenate(slabs, axis=-1).reshape(B * ho * wo, 9 * cin)
        y = jnp.dot(patches, w_ref[...], preferred_element_type=jnp.float32)
        if has_bias:
            y = y + b_ref[...]

        if emit_stats:                                  # per-tile BN partial sums
            st_ref[0] = jnp.concatenate(
                [jnp.sum(y, axis=0, keepdims=True),
                 jnp.sum(y * y, axis=0, keepdims=True)], axis=0)

        if post == "lrelu":
            y = _leaky_relu(y)
        o_ref[...] = y.reshape(B, ho, wo, cout)
    return kernel


def _front_kernel(x_ref, w0_ref, w1_ref, o_ref):
    """conv0: 3x3 s2 (3->ndf) + LReLU, then conv1: 3x3 s1 (ndf->ndf) + LReLU,
    fused in one kernel (no BatchNorm in between, so no batch-stat boundary).
    x_ref holds the space-to-depth input image (B, H/2, W/2, 4*3)."""
    s = x_ref[...].astype(jnp.bfloat16)
    B, Ho, Wo, _ = s.shape
    # conv0 (stride 2) via s2d taps, single K=27 dot.
    slabs = _taps_stride2(s, _NC)
    patches = jnp.concatenate(slabs, axis=-1).reshape(B * Ho * Wo, 9 * _NC)
    h = jnp.dot(patches, w0_ref[...], preferred_element_type=jnp.float32)
    h = _leaky_relu(h).reshape(B, Ho, Wo, _NDF)
    # conv1 (stride 1), single K=288 dot, no intermediate HBM round trip.
    hb = h.astype(jnp.bfloat16)
    slabs = _taps_stride1(hb)
    patches = jnp.concatenate(slabs, axis=-1).reshape(B * Ho * Wo, 9 * _NDF)
    y = jnp.dot(patches, w1_ref[...], preferred_element_type=jnp.float32)
    o_ref[...] = _leaky_relu(y).reshape(B, Ho, Wo, _NDF)


# ----------------------------------------------------------------------------
# Wrappers
# ----------------------------------------------------------------------------
def _compiler_params():
    return pltpu.CompilerParams(dimension_semantics=("parallel",),
                                vmem_limit_bytes=_VMEM_LIMIT)


def _pick_btile(n, ho, wo, bytes_per_sample):
    """Largest batch tile that divides N, keeps the grid >= 2 when possible
    (two TensorCores on v7x), keeps blocks small for VMEM (v7x has 64 MiB) and
    targets ~512 MXU rows (M = B_TILE*Ho*Wo) per dot."""
    cands = []
    for d in range(1, n + 1):
        if n % d:
            continue
        if n >= 2 and n // d < 2:
            continue
        if d * bytes_per_sample > (6 << 20):
            continue
        cands.append(d)
    if not cands:
        return 1
    good = [d for d in cands if d * ho * wo <= 512]
    return max(good) if good else min(cands)


def _space_to_depth(x):
    # (N, H, W, C) -> (N, H/2, W/2, 4C), channel index = (p*2+q)*C + c
    N, H, W, C = x.shape
    x = x.reshape(N, H // 2, 2, W // 2, 2, C)
    x = jnp.transpose(x, (0, 1, 3, 2, 4, 5))
    return x.reshape(N, H // 2, W // 2, 4 * C)


def conv_layer(x, w, *, stride, cin, cout, bias=None, scale=None, shift=None,
               residual=None, pre_lrelu=False, post="none",
               emit_stats=False, emit_pre=False, vpu_head=False):
    """One fused layer.
    stride==1: x is the raw NHWC activation (N, H, W, cin).
    stride==2: x is the space-to-depth image (N, H/2, W/2, 4*cin) and
               scale/shift/residual (if given) use the same s2d channel layout."""
    assert stride in (1, 2)
    assert residual is None or scale is not None
    assert not emit_pre or stride == 1
    N = x.shape[0]
    ho, wo = x.shape[1], x.shape[2]
    pre_affine = scale is not None

    in_bytes = int(np.prod(x.shape[1:])) * 4 * (2 if residual is not None else 1)
    bt = _pick_btile(N, ho, wo, in_bytes)
    grid = N // bt

    in_specs = [pl.BlockSpec((bt,) + x.shape[1:], lambda g: (g, 0, 0, 0))]
    args = [x]
    if pre_affine:
        c_eff = x.shape[-1]
        in_specs.append(pl.BlockSpec((1, c_eff), lambda g: (0, 0)))
        in_specs.append(pl.BlockSpec((1, c_eff), lambda g: (0, 0)))
        args += [scale, shift]
    if residual is not None:
        in_specs.append(pl.BlockSpec((bt,) + residual.shape[1:],
                                     lambda g: (g, 0, 0, 0)))
        args.append(residual)
    if vpu_head:
        w2d = w.reshape(1, 9 * cin).astype(jnp.float32)
    else:
        w2d = w.reshape(9 * cin, cout).astype(jnp.bfloat16)
    in_specs.append(pl.BlockSpec(w2d.shape, lambda g: (0, 0)))
    args.append(w2d)
    if bias is not None:
        in_specs.append(pl.BlockSpec((1, cout), lambda g: (0, 0)))
        args.append(bias.reshape(1, cout).astype(jnp.float32))

    out_shapes, out_specs = [], []
    if vpu_head:
        out_shapes.append(jax.ShapeDtypeStruct((N, ho, wo), jnp.float32))
        out_specs.append(pl.BlockSpec((bt, ho, wo), lambda g: (g, 0, 0)))
    else:
        out_shapes.append(jax.ShapeDtypeStruct((N, ho, wo, cout), jnp.float32))
        out_specs.append(pl.BlockSpec((bt, ho, wo, cout), lambda g: (g, 0, 0, 0)))
    if emit_pre:
        out_shapes.append(jax.ShapeDtypeStruct(x.shape, jnp.float32))
        out_specs.append(pl.BlockSpec((bt,) + x.shape[1:], lambda g: (g, 0, 0, 0)))
    if emit_stats:
        out_shapes.append(jax.ShapeDtypeStruct((grid, 2, cout), jnp.float32))
        out_specs.append(pl.BlockSpec((1, 2, cout), lambda g: (g, 0, 0)))

    kernel = _make_conv_kernel(
        stride=stride, cin=cin, cout=cout, pre_affine=pre_affine,
        pre_lrelu=pre_lrelu, residual=residual is not None,
        has_bias=bias is not None, post=post, emit_stats=emit_stats,
        emit_pre=emit_pre, vpu_head=vpu_head)

    multi = len(out_shapes) > 1
    return pl.pallas_call(
        kernel, grid=(grid,), in_specs=in_specs,
        out_specs=tuple(out_specs) if multi else out_specs[0],
        out_shape=tuple(out_shapes) if multi else out_shapes[0],
        compiler_params=_compiler_params())(*args)


def front_layer(x_nhwc, w0, w1):
    """Fused conv0(s2)+LReLU + conv1(s1)+LReLU."""
    N, H, W, _ = x_nhwc.shape
    s = _space_to_depth(x_nhwc)                        # (N, H/2, W/2, 12)
    ho, wo = H // 2, W // 2
    bt = _pick_btile(N, ho, wo, ho * wo * 4 * _NC * 4)
    grid = N // bt
    w0_2d = w0.reshape(9 * _NC, _NDF).astype(jnp.bfloat16)
    w1_2d = w1.reshape(9 * _NDF, _NDF).astype(jnp.bfloat16)
    return pl.pallas_call(
        _front_kernel, grid=(grid,),
        in_specs=[pl.BlockSpec((bt, ho, wo, 4 * _NC), lambda g: (g, 0, 0, 0)),
                  pl.BlockSpec(w0_2d.shape, lambda g: (0, 0)),
                  pl.BlockSpec(w1_2d.shape, lambda g: (0, 0))],
        out_specs=pl.BlockSpec((bt, ho, wo, _NDF), lambda g: (g, 0, 0, 0)),
        out_shape=jax.ShapeDtypeStruct((N, ho, wo, _NDF), jnp.float32),
        compiler_params=_compiler_params())(s, w0_2d, w1_2d)


def _bn_scale_shift(stats, gamma, beta, count):
    """Finalize training-mode BatchNorm batch statistics (biased variance,
    eps=1e-5) into a per-channel (scale, shift); O(C) work in plain JAX."""
    tot = jnp.sum(stats, axis=0)                       # (2, C)
    mean = tot[0] / count
    var = tot[1] / count - mean * mean
    scale = gamma * jax.lax.rsqrt(var + _BN_EPS)
    shift = beta - mean * scale
    return scale.reshape(1, -1), shift.reshape(1, -1)


def _tile4(a):
    # per-channel params -> space-to-depth channel layout ((p*2+q)*C + c)
    return jnp.tile(a, (1, 4))


# ----------------------------------------------------------------------------
# Model: _netD forward (8 pallas_calls)
# ----------------------------------------------------------------------------
def netd_forward(x_nchw, params):
    # NCHW -> NHWC once at the model boundary (channels on the 128-lane axis).
    x = jnp.transpose(x_nchw, (0, 2, 3, 1)).astype(jnp.float32)
    N, H, W, _ = x.shape
    ndf = _NDF

    # K1: conv0 (3->ndf, s2) + LReLU + conv1 (ndf->ndf, s1) + LReLU (fused).
    h1 = front_layer(x, params["w0"], params["w1"])            # (N, H/2, W/2, ndf)
    cnt1 = N * (H // 2) * (W // 2)

    # ---- ResnetBlock(ndf) ----
    rb = params["rb1"]
    y_a, st_a = conv_layer(h1, rb["w1"], stride=1, cin=ndf, cout=ndf,
                           bias=rb["b1"], emit_stats=True)
    sc_a, sh_a = _bn_scale_shift(st_a, rb["g1"], rb["be1"], cnt1)
    y_b, st_b = conv_layer(y_a, rb["w2"], stride=1, cin=ndf, cout=ndf,
                           bias=rb["b2"], scale=sc_a, shift=sh_a,
                           pre_lrelu=True, emit_stats=True)
    sc_b, sh_b = _bn_scale_shift(st_b, rb["g2"], rb["be2"], cnt1)

    # K4: [BN_b + residual h1] fused into conv2 (ndf->2ndf, s2).
    y_c, st_c = conv_layer(_space_to_depth(y_b), params["w2"], stride=2,
                           cin=ndf, cout=2 * ndf,
                           scale=_tile4(sc_b), shift=_tile4(sh_b),
                           residual=_space_to_depth(h1), emit_stats=True)
    cnt2 = N * (H // 4) * (W // 4)
    sc_c, sh_c = _bn_scale_shift(st_c, params["g2"], params["be2"], cnt2)

    # ---- ResnetBlock(2*ndf); the consumer also re-emits its own input
    #      h2 = LReLU(BN_c(y_c)) for the later residual. ----
    rb = params["rb2"]
    y_d, h2, st_d = conv_layer(y_c, rb["w1"], stride=1, cin=2 * ndf, cout=2 * ndf,
                               bias=rb["b1"], scale=sc_c, shift=sh_c,
                               pre_lrelu=True, emit_stats=True, emit_pre=True)
    sc_d, sh_d = _bn_scale_shift(st_d, rb["g1"], rb["be1"], cnt2)
    y_e, st_e = conv_layer(y_d, rb["w2"], stride=1, cin=2 * ndf, cout=2 * ndf,
                           bias=rb["b2"], scale=sc_d, shift=sh_d,
                           pre_lrelu=True, emit_stats=True)
    sc_e, sh_e = _bn_scale_shift(st_e, rb["g2"], rb["be2"], cnt2)

    # K7: [BN_e + residual h2] fused into conv3 (2ndf->4ndf, s2).
    y_f, st_f = conv_layer(_space_to_depth(y_e), params["w3"], stride=2,
                           cin=2 * ndf, cout=4 * ndf,
                           scale=_tile4(sc_e), shift=_tile4(sh_e),
                           residual=_space_to_depth(h2), emit_stats=True)
    cnt3 = N * (H // 8) * (W // 8)
    sc_f, sh_f = _bn_scale_shift(st_f, params["g3"], params["be3"], cnt3)

    # K8: [BN_f + LReLU] fused into conv4 (4ndf->1, s2) + sigmoid (VPU head).
    out = conv_layer(_space_to_depth(y_f), params["w4"], stride=2,
                     cin=4 * ndf, cout=1,
                     scale=_tile4(sc_f), shift=_tile4(sh_f),
                     pre_lrelu=True, vpu_head=True)
    # torch: output.view(-1, 1).squeeze(1)
    return out.reshape(-1)


# ----------------------------------------------------------------------------
# Pure-JAX reference (lax.conv, bf16 operands / f32 accumulation to match the
# kernel's MXU mode; the tiny final conv stays f32 like the kernel's VPU head).
# ----------------------------------------------------------------------------
def _reference_netd(x_nchw, params):
    x = jnp.transpose(x_nchw, (0, 2, 3, 1)).astype(jnp.float32)

    def conv(y, w, b=None, stride=1, bf16=True):
        lhs = y.astype(jnp.bfloat16) if bf16 else y
        rhs = w.astype(jnp.bfloat16) if bf16 else w
        out = jax.lax.conv_general_dilated(
            lhs, rhs, window_strides=(stride, stride), padding=((1, 1), (1, 1)),
            dimension_numbers=("NHWC", "HWIO", "NHWC"),
            preferred_element_type=jnp.float32,
            precision=None if bf16 else jax.lax.Precision.HIGHEST)
        return out if b is None else out + b.reshape(1, 1, 1, -1)

    def bn(y, g, be):
        m = jnp.mean(y, axis=(0, 1, 2), keepdims=True)
        v = jnp.mean((y - m) ** 2, axis=(0, 1, 2), keepdims=True)
        return (y - m) * jax.lax.rsqrt(v + _BN_EPS) * g.reshape(1, 1, 1, -1) \
            + be.reshape(1, 1, 1, -1)

    def rb(y, p):
        d = _leaky_relu(bn(conv(y, p["w1"], p["b1"]), p["g1"], p["be1"]))
        d = bn(conv(d, p["w2"], p["b2"]), p["g2"], p["be2"])
        return y + 0.1 * d

    h = _leaky_relu(conv(x, params["w0"], stride=2))
    h = _leaky_relu(conv(h, params["w1"], stride=1))
    h = rb(h, params["rb1"])
    h = _leaky_relu(bn(conv(h, params["w2"], stride=2), params["g2"], params["be2"]))
    h = rb(h, params["rb2"])
    h = _leaky_relu(bn(conv(h, params["w3"], stride=2), params["g3"], params["be3"]))
    h = conv(h, params["w4"], stride=2, bf16=False)
    h = 1.0 / (1.0 + jnp.exp(-h))
    return jnp.transpose(h, (0, 3, 1, 2)).reshape(-1)


# ----------------------------------------------------------------------------
# Parameter construction (HWIO conv weights == PyTorch OIHW.transpose(2,3,1,0))
# ----------------------------------------------------------------------------
def _conv_w(key, cin, cout, with_bias):
    k1, k2 = jax.random.split(key)
    scale = 1.0 / np.sqrt(cin * 9)
    w = jax.random.uniform(k1, (3, 3, cin, cout), jnp.float32, -scale, scale)
    b = jax.random.uniform(k2, (cout,), jnp.float32, -scale, scale) if with_bias else None
    return w, b


def _rb_params(key, c):
    k1, k2 = jax.random.split(key)
    w1, b1 = _conv_w(k1, c, c, True)
    w2, b2 = _conv_w(k2, c, c, True)
    return {"w1": w1, "b1": b1, "g1": jnp.ones((c,), jnp.float32),
            "be1": jnp.zeros((c,), jnp.float32),
            "w2": w2, "b2": b2, "g2": jnp.ones((c,), jnp.float32),
            "be2": jnp.zeros((c,), jnp.float32)}


def _init_params(key):
    ks = jax.random.split(key, 7)
    p = {}
    p["w0"], _ = _conv_w(ks[0], _NC, _NDF, False)          # use_bias=False (BatchNorm)
    p["w1"], _ = _conv_w(ks[1], _NDF, _NDF, False)
    p["rb1"] = _rb_params(ks[2], _NDF)
    p["w2"], _ = _conv_w(ks[3], _NDF, _NDF * 2, False)
    p["g2"] = jnp.ones((_NDF * 2,), jnp.float32)
    p["be2"] = jnp.zeros((_NDF * 2,), jnp.float32)
    p["rb2"] = _rb_params(ks[4], _NDF * 2)
    p["w3"], _ = _conv_w(ks[5], _NDF * 2, _NDF * 4, False)
    p["g3"] = jnp.ones((_NDF * 4,), jnp.float32)
    p["be3"] = jnp.zeros((_NDF * 4,), jnp.float32)
    p["w4"], _ = _conv_w(ks[6], _NDF * 4, 1, False)
    return p


if __name__ == "__main__":
    N, H, W = 2, 16, 16
    key = jax.random.PRNGKey(0)
    kx, kp = jax.random.split(key)
    x = jax.random.normal(kx, (N, _NC, H, W), jnp.float32)
    params = _init_params(kp)

    out = jax.block_until_ready(jax.jit(netd_forward)(x, params))
    ref = jax.block_until_ready(jax.jit(_reference_netd)(x, params))
    np.testing.assert_allclose(np.asarray(out), np.asarray(ref), rtol=3e-3, atol=3e-3)

    print("KERNEL_OK")
</pallas_src>

<mosaic_0001>
module attributes {stable_mosaic.version = 11 : i64} {
  func.func @kernel(%arg0: i32, %arg1: memref<1x8x8x32xf32, #tpu.memory_space<vmem>>, %arg2: memref<288x32xbf16, #tpu.memory_space<vmem>>, %arg3: memref<1x32xf32, #tpu.memory_space<vmem>>, %arg4: memref<1x8x8x32xf32, #tpu.memory_space<vmem>>, %arg5: memref<1x2x32xf32, #tpu.memory_space<vmem>>) attributes {dimension_semantics = [#tpu.dimension_semantics<parallel>], iteration_bounds = array<i64: 2>, scalar_prefetch = 0 : i64, scratch_operands = 0 : i64, tpu.core_type = #tpu.core_type<tc>, window_params = [{transform_indices = @transform_0, window_bounds = array<i64: 1, 8, 8, 32>}, {pipeline_mode = #tpu.pipeline_mode<synchronous>, transform_indices = @transform_1, window_bounds = array<i64: 288, 32>}, {pipeline_mode = #tpu.pipeline_mode<synchronous>, transform_indices = @transform_2, window_bounds = array<i64: 1, 32>}, {transform_indices = @transform_3, window_bounds = array<i64: 1, 8, 8, 32>}, {transform_indices = @transform_4, window_bounds = array<i64: 1, 2, 32>}]} {
    %c0 = arith.constant 0 : index
    %c0_0 = arith.constant 0 : index
    %c0_1 = arith.constant 0 : index
    %c0_2 = arith.constant 0 : index
    %0 = vector.load %arg1[%c0, %c0_0, %c0_1, %c0_2] : memref<1x8x8x32xf32, #tpu.memory_space<vmem>>, vector<1x8x8x32xf32>
    %1 = arith.truncf %0 : vector<1x8x8x32xf32> to vector<1x8x8x32xbf16>
    %cst = arith.constant 0.000000e+00 : bf16
    %2 = vector.broadcast %cst : bf16 to vector<1x1x8x32xbf16>
    %3 = tpu.concatenate %2, %1, %2 in 1 : vector<1x1x8x32xbf16>, vector<1x8x8x32xbf16>, vector<1x1x8x32xbf16> -> vector<1x10x8x32xbf16>
    %cst_3 = arith.constant 0.000000e+00 : bf16
    %4 = vector.broadcast %cst_3 : bf16 to vector<1x10x1x32xbf16>
    %5 = tpu.concatenate %4, %3, %4 in 2 : vector<1x10x1x32xbf16>, vector<1x10x8x32xbf16>, vector<1x10x1x32xbf16> -> vector<1x10x10x32xbf16>
    %6 = vector.extract_strided_slice %5 {offsets = [0, 0, 0, 0], sizes = [1, 8, 8, 32], strides = [1, 1, 1, 1]} : vector<1x10x10x32xbf16> to vector<1x8x8x32xbf16>
    %7 = vector.extract_strided_slice %5 {offsets = [0, 0, 1, 0], sizes = [1, 8, 8, 32], strides = [1, 1, 1, 1]} : vector<1x10x10x32xbf16> to vector<1x8x8x32xbf16>
    %8 = vector.extract_strided_slice %5 {offsets = [0, 0, 2, 0], sizes = [1, 8, 8, 32], strides = [1, 1, 1, 1]} : vector<1x10x10x32xbf16> to vector<1x8x8x32xbf16>
    %9 = vector.extract_strided_slice %5 {offsets = [0, 1, 0, 0], sizes = [1, 8, 8, 32], strides = [1, 1, 1, 1]} : vector<1x10x10x32xbf16> to vector<1x8x8x32xbf16>
    %10 = vector.extract_strided_slice %5 {offsets = [0, 1, 1, 0], sizes = [1, 8, 8, 32], strides = [1, 1, 1, 1]} : vector<1x10x10x32xbf16> to vector<1x8x8x32xbf16>
    %11 = vector.extract_strided_slice %5 {offsets = [0, 1, 2, 0], sizes = [1, 8, 8, 32], strides = [1, 1, 1, 1]} : vector<1x10x10x32xbf16> to vector<1x8x8x32xbf16>
    %12 = vector.extract_strided_slice %5 {offsets = [0, 2, 0, 0], sizes = [1, 8, 8, 32], strides = [1, 1, 1, 1]} : vector<1x10x10x32xbf16> to vector<1x8x8x32xbf16>
    %13 = vector.extract_strided_slice %5 {offsets = [0, 2, 1, 0], sizes = [1, 8, 8, 32], strides = [1, 1, 1, 1]} : vector<1x10x10x32xbf16> to vector<1x8x8x32xbf16>
    %14 = vector.extract_strided_slice %5 {offsets = [0, 2, 2, 0], sizes = [1, 8, 8, 32], strides = [1, 1, 1, 1]} : vector<1x10x10x32xbf16> to vector<1x8x8x32xbf16>
    %15 = tpu.concatenate %6, %7, %8, %9, %10, %11, %12, %13, %14 in 3 : vector<1x8x8x32xbf16>, vector<1x8x8x32xbf16>, vector<1x8x8x32xbf16>, vector<1x8x8x32xbf16>, vector<1x8x8x32xbf16>, vector<1x8x8x32xbf16>, vector<1x8x8x32xbf16>, vector<1x8x8x32xbf16>, vector<1x8x8x32xbf16> -> vector<1x8x8x288xbf16>
    %16 = vector.shape_cast %15 : vector<1x8x8x288xbf16> to vector<64x288xbf16>
    %c0_4 = arith.constant 0 : index
    %c0_5 = arith.constant 0 : index
    %17 = vector.load %arg2[%c0_4, %c0_5] : memref<288x32xbf16, #tpu.memory_space<vmem>>, vector<288x32xbf16>
    %cst_6 = arith.constant dense<0.000000e+00> : vector<64x32xf32>
    %18 = tpu.matmul %16, %17, %cst_6 {dimension_numbers = #tpu.dot_dimension_numbers<[1], [0], [0], [1], [0, 0, 1, 1], [], []>} : vector<64x288xbf16>, vector<288x32xbf16>, vector<64x32xf32> -> vector<64x32xf32>
    %c0_7 = arith.constant 0 : index
    %c0_8 = arith.constant 0 : index
    %19 = vector.load %arg3[%c0_7, %c0_8] : memref<1x32xf32, #tpu.memory_space<vmem>>, vector<1x32xf32>
    %20 = vector.broadcast %19 : vector<1x32xf32> to vector<64x32xf32>
    %21 = arith.addf %18, %20 : vector<64x32xf32>
    %cst_9 = arith.constant dense<0.000000e+00> : vector<32xf32>
    %22 = vector.multi_reduction <add>, %21, %cst_9 [0] : vector<64x32xf32> to vector<32xf32>
    %23 = vector.shape_cast %22 : vector<32xf32> to vector<1x32xf32>
    %24 = arith.mulf %21, %21 : vector<64x32xf32>
    %cst_10 = arith.constant dense<0.000000e+00> : vector<32xf32>
    %25 = vector.multi_reduction <add>, %24, %cst_10 [0] : vector<64x32xf32> to vector<32xf32>
    %26 = vector.shape_cast %25 : vector<32xf32> to vector<1x32xf32>
    %27 = tpu.concatenate %23, %26 in 0 : vector<1x32xf32>, vector<1x32xf32> -> vector<2x32xf32>
    %c0_11 = arith.constant 0 : index
    %c0_12 = arith.constant 0 : index
    %c0_13 = arith.constant 0 : index
    %28 = vector.load %arg5[%c0_11, %c0_12, %c0_13] : memref<1x2x32xf32, #tpu.memory_space<vmem>>, vector<1x2x32xf32>
    %29 = vector.shape_cast %28 : vector<1x2x32xf32> to vector<2x32xf32>
    %30 = vector.shape_cast %27 : vector<2x32xf32> to vector<1x2x32xf32>
    tpu.vector_store %arg5[%c0_11, %c0_12, %c0_13], %30 {strides = array<i32>} : memref<1x2x32xf32, #tpu.memory_space<vmem>>, vector<1x2x32xf32>,
    %31 = vector.shape_cast %21 : vector<64x32xf32> to vector<1x8x8x32xf32>
    %c0_14 = arith.constant 0 : index
    %c0_15 = arith.constant 0 : index
    %c0_16 = arith.constant 0 : index
    %c0_17 = arith.constant 0 : index
    %32 = vector.load %arg4[%c0_14, %c0_15, %c0_16, %c0_17] : memref<1x8x8x32xf32, #tpu.memory_space<vmem>>, vector<1x8x8x32xf32>
    tpu.vector_store %arg4[%c0_14, %c0_15, %c0_16, %c0_17], %31 {strides = array<i32>} : memref<1x8x8x32xf32, #tpu.memory_space<vmem>>, vector<1x8x8x32xf32>,
    return
  }
  func.func @transform_0(%arg0: i32) -> (i32, i32, i32, i32) {
    %c0_i32 = arith.constant 0 : i32
    %c0_i32_0 = arith.constant 0 : i32
    %c0_i32_1 = arith.constant 0 : i32
    %c0_i32_2 = arith.constant 0 : i32
    return %arg0, %c0_i32, %c0_i32_0, %c0_i32_1 : i32, i32, i32, i32
  }
  func.func @transform_1(%arg0: i32) -> (i32, i32) {
    %c0_i32 = arith.constant 0 : i32
    %c0_i32_0 = arith.constant 0 : i32
    %c0_i32_1 = arith.constant 0 : i32
    return %c0_i32, %c0_i32_0 : i32, i32
  }
  func.func @transform_2(%arg0: i32) -> (i32, i32) {
    %c0_i32 = arith.constant 0 : i32
    %c0_i32_0 = arith.constant 0 : i32
    %c0_i32_1 = arith.constant 0 : i32
    return %c0_i32, %c0_i32_0 : i32, i32
  }
  func.func @transform_3(%arg0: i32) -> (i32, i32, i32, i32) {
    %c0_i32 = arith.constant 0 : i32
    %c0_i32_0 = arith.constant 0 : i32
    %c0_i32_1 = arith.constant 0 : i32
    %c0_i32_2 = arith.constant 0 : i32
    return %arg0, %c0_i32, %c0_i32_0, %c0_i32_1 : i32, i32, i32, i32
  }
  func.func @transform_4(%arg0: i32) -> (i32, i32, i32) {
    %c0_i32 = arith.constant 0 : i32
    %c0_i32_0 = arith.constant 0 : i32
    %c0_i32_1 = arith.constant 0 : i32
    return %arg0, %c0_i32, %c0_i32_0 : i32, i32, i32
  }
}

module attributes {stable_mosaic.version = 11 : i64} {
  func.func @_front_kernel(%arg0: i32, %arg1: memref<1x8x8x12xf32, #tpu.memory_space<vmem>>, %arg2: memref<27x32xbf16, #tpu.memory_space<vmem>>, %arg3: memref<288x32xbf16, #tpu.memory_space<vmem>>, %arg4: memref<1x8x8x32xf32, #tpu.memory_space<vmem>>) attributes {dimension_semantics = [#tpu.dimension_semantics<parallel>], iteration_bounds = array<i64: 2>, scalar_prefetch = 0 : i64, scratch_operands = 0 : i64, tpu.core_type = #tpu.core_type<tc>, window_params = [{transform_indices = @transform_0, window_bounds = array<i64: 1, 8, 8, 12>}, {pipeline_mode = #tpu.pipeline_mode<synchronous>, transform_indices = @transform_1, window_bounds = array<i64: 27, 32>}, {pipeline_mode = #tpu.pipeline_mode<synchronous>, transform_indices = @transform_2, window_bounds = array<i64: 288, 32>}, {transform_indices = @transform_3, window_bounds = array<i64: 1, 8, 8, 32>}]} {
    %c0 = arith.constant 0 : index
    %c0_0 = arith.constant 0 : index
    %c0_1 = arith.constant 0 : index
    %c0_2 = arith.constant 0 : index
    %0 = vector.load %arg1[%c0, %c0_0, %c0_1, %c0_2] : memref<1x8x8x12xf32, #tpu.memory_space<vmem>>, vector<1x8x8x12xf32>
    %1 = arith.truncf %0 : vector<1x8x8x12xf32> to vector<1x8x8x12xbf16>
    %2 = vector.extract_strided_slice %1 {offsets = [0, 0, 0, 9], sizes = [1, 8, 8, 3], strides = [1, 1, 1, 1]} : vector<1x8x8x12xbf16> to vector<1x8x8x3xbf16>
    %cst = arith.constant 0.000000e+00 : bf16
    %3 = vector.broadcast %cst : bf16 to vector<1x1x8x3xbf16>
    %4 = tpu.concatenate %3, %2 in 1 : vector<1x1x8x3xbf16>, vector<1x8x8x3xbf16> -> vector<1x9x8x3xbf16>
    %5 = vector.extract_strided_slice %4 {offsets = [0, 0, 0, 0], sizes = [1, 8, 8, 3], strides = [1, 1, 1, 1]} : vector<1x9x8x3xbf16> to vector<1x8x8x3xbf16>
    %cst_3 = arith.constant 0.000000e+00 : bf16
    %6 = vector.broadcast %cst_3 : bf16 to vector<1x8x1x3xbf16>
    %7 = tpu.concatenate %6, %5 in 2 : vector<1x8x1x3xbf16>, vector<1x8x8x3xbf16> -> vector<1x8x9x3xbf16>
    %8 = vector.extract_strided_slice %7 {offsets = [0, 0, 0, 0], sizes = [1, 8, 8, 3], strides = [1, 1, 1, 1]} : vector<1x8x9x3xbf16> to vector<1x8x8x3xbf16>
    %9 = vector.extract_strided_slice %1 {offsets = [0, 0, 0, 6], sizes = [1, 8, 8, 3], strides = [1, 1, 1, 1]} : vector<1x8x8x12xbf16> to vector<1x8x8x3xbf16>
    %cst_4 = arith.constant 0.000000e+00 : bf16
    %10 = vector.broadcast %cst_4 : bf16 to vector<1x1x8x3xbf16>
    %11 = tpu.concatenate %10, %9 in 1 : vector<1x1x8x3xbf16>, vector<1x8x8x3xbf16> -> vector<1x9x8x3xbf16>
    %12 = vector.extract_strided_slice %11 {offsets = [0, 0, 0, 0], sizes = [1, 8, 8, 3], strides = [1, 1, 1, 1]} : vector<1x9x8x3xbf16> to vector<1x8x8x3xbf16>
    %13 = vector.extract_strided_slice %1 {offsets = [0, 0, 0, 9], sizes = [1, 8, 8, 3], strides = [1, 1, 1, 1]} : vector<1x8x8x12xbf16> to vector<1x8x8x3xbf16>
    %cst_5 = arith.constant 0.000000e+00 : bf16
    %14 = vector.broadcast %cst_5 : bf16 to vector<1x1x8x3xbf16>
    %15 = tpu.concatenate %14, %13 in 1 : vector<1x1x8x3xbf16>, vector<1x8x8x3xbf16> -> vector<1x9x8x3xbf16>
    %16 = vector.extract_strided_slice %15 {offsets = [0, 0, 0, 0], sizes = [1, 8, 8, 3], strides = [1, 1, 1, 1]} : vector<1x9x8x3xbf16> to vector<1x8x8x3xbf16>
    %17 = vector.extract_strided_slice %1 {offsets = [0, 0, 0, 3], sizes = [1, 8, 8, 3], strides = [1, 1, 1, 1]} : vector<1x8x8x12xbf16> to vector<1x8x8x3xbf16>
    %cst_6 = arith.constant 0.000000e+00 : bf16
    %18 = vector.broadcast %cst_6 : bf16 to vector<1x8x1x3xbf16>
    %19 = tpu.concatenate %18, %17 in 2 : vector<1x8x1x3xbf16>, vector<1x8x8x3xbf16> -> vector<1x8x9x3xbf16>
    %20 = vector.extract_strided_slice %19 {offsets = [0, 0, 0, 0], sizes = [1, 8, 8, 3], strides = [1, 1, 1, 1]} : vector<1x8x9x3xbf16> to vector<1x8x8x3xbf16>
    %21 = vector.extract_strided_slice %1 {offsets = [0, 0, 0, 0], sizes = [1, 8, 8, 3], strides = [1, 1, 1, 1]} : vector<1x8x8x12xbf16> to vector<1x8x8x3xbf16>
    %22 = vector.extract_strided_slice %1 {offsets = [0, 0, 0, 3], sizes = [1, 8, 8, 3], strides = [1, 1, 1, 1]} : vector<1x8x8x12xbf16> to vector<1x8x8x3xbf16>
    %23 = vector.extract_strided_slice %1 {offsets = [0, 0, 0, 9], sizes = [1, 8, 8, 3], strides = [1, 1, 1, 1]} : vector<1x8x8x12xbf16> to vector<1x8x8x3xbf16>
    %cst_7 = arith.constant 0.000000e+00 : bf16
    %24 = vector.broadcast %cst_7 : bf16 to vector<1x8x1x3xbf16>
    %25 = tpu.concatenate %24, %23 in 2 : vector<1x8x1x3xbf16>, vector<1x8x8x3xbf16> -> vector<1x8x9x3xbf16>
    %26 = vector.extract_strided_slice %25 {offsets = [0, 0, 0, 0], sizes = [1, 8, 8, 3], strides = [1, 1, 1, 1]} : vector<1x8x9x3xbf16> to vector<1x8x8x3xbf16>
    %27 = vector.extract_strided_slice %1 {offsets = [0, 0, 0, 6], sizes = [1, 8, 8, 3], strides = [1, 1, 1, 1]} : vector<1x8x8x12xbf16> to vector<1x8x8x3xbf16>
    %28 = vector.extract_strided_slice %1 {offsets = [0, 0, 0, 9], sizes = [1, 8, 8, 3], strides = [1, 1, 1, 1]} : vector<1x8x8x12xbf16> to vector<1x8x8x3xbf16>
    %29 = tpu.concatenate %8, %12, %16, %20, %21, %22, %26, %27, %28 in 3 : vector<1x8x8x3xbf16>, vector<1x8x8x3xbf16>, vector<1x8x8x3xbf16>, vector<1x8x8x3xbf16>, vector<1x8x8x3xbf16>, vector<1x8x8x3xbf16>, vector<1x8x8x3xbf16>, vector<1x8x8x3xbf16>, vector<1x8x8x3xbf16> -> vector<1x8x8x27xbf16>
    %30 = vector.shape_cast %29 : vector<1x8x8x27xbf16> to vector<64x27xbf16>
    %c0_8 = arith.constant 0 : index
    %c0_9 = arith.constant 0 : index
    %31 = vector.load %arg2[%c0_8, %c0_9] : memref<27x32xbf16, #tpu.memory_space<vmem>>, vector<27x32xbf16>
    %cst_10 = arith.constant dense<0.000000e+00> : vector<64x32xf32>
    %32 = tpu.matmul %30, %31, %cst_10 {dimension_numbers = #tpu.dot_dimension_numbers<[1], [0], [0], [1], [0, 0, 1, 1], [], []>} : vector<64x27xbf16>, vector<27x32xbf16>, vector<64x32xf32> -> vector<64x32xf32>
    %cst_11 = arith.constant 0.000000e+00 : f32
    %33 = vector.broadcast %cst_11 : f32 to vector<64x32xf32>
    %34 = arith.cmpf ogt, %32, %33 : vector<64x32xf32>
    %cst_12 = arith.constant 2.000000e-01 : f32
    %35 = vector.broadcast %cst_12 : f32 to vector<64x32xf32>
    %36 = arith.mulf %35, %32 : vector<64x32xf32>
    %37 = arith.select %34, %32, %36 : vector<64x32xi1>, vector<64x32xf32>
    %38 = vector.shape_cast %37 : vector<64x32xf32> to vector<1x8x8x32xf32>
    %39 = arith.truncf %38 : vector<1x8x8x32xf32> to vector<1x8x8x32xbf16>
    %cst_13 = arith.constant 0.000000e+00 : bf16
    %40 = vector.broadcast %cst_13 : bf16 to vector<1x1x8x32xbf16>
    %41 = tpu.concatenate %40, %39, %40 in 1 : vector<1x1x8x32xbf16>, vector<1x8x8x32xbf16>, vector<1x1x8x32xbf16> -> vector<1x10x8x32xbf16>
    %cst_14 = arith.constant 0.000000e+00 : bf16
    %42 = vector.broadcast %cst_14 : bf16 to vector<1x10x1x32xbf16>
    %43 = tpu.concatenate %42, %41, %42 in 2 : vector<1x10x1x32xbf16>, vector<1x10x8x32xbf16>, vector<1x10x1x32xbf16> -> vector<1x10x10x32xbf16>
    %44 = vector.extract_strided_slice %43 {offsets = [0, 0, 0, 0], sizes = [1, 8, 8, 32], strides = [1, 1, 1, 1]} : vector<1x10x10x32xbf16> to vector<1x8x8x32xbf16>
    %45 = vector.extract_strided_slice %43 {offsets = [0, 0, 1, 0], sizes = [1, 8, 8, 32], strides = [1, 1, 1, 1]} : vector<1x10x10x32xbf16> to vector<1x8x8x32xbf16>
    %46 = vector.extract_strided_slice %43 {offsets = [0, 0, 2, 0], sizes = [1, 8, 8, 32], strides = [1, 1, 1, 1]} : vector<1x10x10x32xbf16> to vector<1x8x8x32xbf16>
    %47 = vector.extract_strided_slice %43 {offsets = [0, 1, 0, 0], sizes = [1, 8, 8, 32], strides = [1, 1, 1, 1]} : vector<1x10x10x32xbf16> to vector<1x8x8x32xbf16>
    %48 = vector.extract_strided_slice %43 {offsets = [0, 1, 1, 0], sizes = [1, 8, 8, 32], strides = [1, 1, 1, 1]} : vector<1x10x10x32xbf16> to vector<1x8x8x32xbf16>
    %49 = vector.extract_strided_slice %43 {offsets = [0, 1, 2, 0], sizes = [1, 8, 8, 32], strides = [1, 1, 1, 1]} : vector<1x10x10x32xbf16> to vector<1x8x8x32xbf16>
    %50 = vector.extract_strided_slice %43 {offsets = [0, 2, 0, 0], sizes = [1, 8, 8, 32], strides = [1, 1, 1, 1]} : vector<1x10x10x32xbf16> to vector<1x8x8x32xbf16>
    %51 = vector.extract_strided_slice %43 {offsets = [0, 2, 1, 0], sizes = [1, 8, 8, 32], strides = [1, 1, 1, 1]} : vector<1x10x10x32xbf16> to vector<1x8x8x32xbf16>
    %52 = vector.extract_strided_slice %43 {offsets = [0, 2, 2, 0], sizes = [1, 8, 8, 32], strides = [1, 1, 1, 1]} : vector<1x10x10x32xbf16> to vector<1x8x8x32xbf16>
    %53 = tpu.concatenate %44, %45, %46, %47, %48, %49, %50, %51, %52 in 3 : vector<1x8x8x32xbf16>, vector<1x8x8x32xbf16>, vector<1x8x8x32xbf16>, vector<1x8x8x32xbf16>, vector<1x8x8x32xbf16>, vector<1x8x8x32xbf16>, vector<1x8x8x32xbf16>, vector<1x8x8x32xbf16>, vector<1x8x8x32xbf16> -> vector<1x8x8x288xbf16>
    %54 = vector.shape_cast %53 : vector<1x8x8x288xbf16> to vector<64x288xbf16>
    %c0_15 = arith.constant 0 : index
    %c0_16 = arith.constant 0 : index
    %55 = vector.load %arg3[%c0_15, %c0_16] : memref<288x32xbf16, #tpu.memory_space<vmem>>, vector<288x32xbf16>
    %cst_17 = arith.constant dense<0.000000e+00> : vector<64x32xf32>
    %56 = tpu.matmul %54, %55, %cst_17 {dimension_numbers = #tpu.dot_dimension_numbers<[1], [0], [0], [1], [0, 0, 1, 1], [], []>} : vector<64x288xbf16>, vector<288x32xbf16>, vector<64x32xf32> -> vector<64x32xf32>
    %cst_18 = arith.constant 0.000000e+00 : f32
    %57 = vector.broadcast %cst_18 : f32 to vector<64x32xf32>
    %58 = arith.cmpf ogt, %56, %57 : vector<64x32xf32>
    %cst_19 = arith.constant 2.000000e-01 : f32
    %59 = vector.broadcast %cst_19 : f32 to vector<64x32xf32>
    %60 = arith.mulf %59, %56 : vector<64x32xf32>
    %61 = arith.select %58, %56, %60 : vector<64x32xi1>, vector<64x32xf32>
    %62 = vector.shape_cast %61 : vector<64x32xf32> to vector<1x8x8x32xf32>
    %c0_20 = arith.constant 0 : index
    %c0_21 = arith.constant 0 : index
    %c0_22 = arith.constant 0 : index
    %c0_23 = arith.constant 0 : index
    %63 = vector.load %arg4[%c0_20, %c0_21, %c0_22, %c0_23] : memref<1x8x8x32xf32, #tpu.memory_space<vmem>>, vector<1x8x8x32xf32>
    tpu.vector_store %arg4[%c0_20, %c0_21, %c0_22, %c0_23], %62 {strides = array<i32>} : memref<1x8x8x32xf32, #tpu.memory_space<vmem>>, vector<1x8x8x32xf32>,
    return
  }
  func.func @transform_0(%arg0: i32) -> (i32, i32, i32, i32) {
    %c0_i32 = arith.constant 0 : i32
    %c0_i32_0 = arith.constant 0 : i32
    %c0_i32_1 = arith.constant 0 : i32
    %c0_i32_2 = arith.constant 0 : i32
    return %arg0, %c0_i32, %c0_i32_0, %c0_i32_1 : i32, i32, i32, i32
  }
  func.func @transform_1(%arg0: i32) -> (i32, i32) {
    %c0_i32 = arith.constant 0 : i32
    %c0_i32_0 = arith.constant 0 : i32
    %c0_i32_1 = arith.constant 0 : i32
    return %c0_i32, %c0_i32_0 : i32, i32
  }
  func.func @transform_2(%arg0: i32) -> (i32, i32) {
    %c0_i32 = arith.constant 0 : i32
    %c0_i32_0 = arith.constant 0 : i32
    %c0_i32_1 = arith.constant 0 : i32
    return %c0_i32, %c0_i32_0 : i32, i32
  }
  func.func @transform_3(%arg0: i32) -> (i32, i32, i32, i32) {
    %c0_i32 = arith.constant 0 : i32
    %c0_i32_0 = arith.constant 0 : i32
    %c0_i32_1 = arith.constant 0 : i32
    %c0_i32_2 = arith.constant 0 : i32
    return %arg0, %c0_i32, %c0_i32_0, %c0_i32_1 : i32, i32, i32, i32
  }
}

module attributes {stable_mosaic.version = 11 : i64} {
  func.func @kernel(%arg0: i32, %arg1: memref<1x8x8x32xf32, #tpu.memory_space<vmem>>, %arg2: memref<1x32xf32, #tpu.memory_space<vmem>>, %arg3: memref<1x32xf32, #tpu.memory_space<vmem>>, %arg4: memref<288x32xbf16, #tpu.memory_space<vmem>>, %arg5: memref<1x32xf32, #tpu.memory_space<vmem>>, %arg6: memref<1x8x8x32xf32, #tpu.memory_space<vmem>>, %arg7: memref<1x2x32xf32, #tpu.memory_space<vmem>>) attributes {dimension_semantics = [#tpu.dimension_semantics<parallel>], iteration_bounds = array<i64: 2>, scalar_prefetch = 0 : i64, scratch_operands = 0 : i64, tpu.core_type = #tpu.core_type<tc>, window_params = [{transform_indices = @transform_0, window_bounds = array<i64: 1, 8, 8, 32>}, {pipeline_mode = #tpu.pipeline_mode<synchronous>, transform_indices = @transform_1, window_bounds = array<i64: 1, 32>}, {pipeline_mode = #tpu.pipeline_mode<synchronous>, transform_indices = @transform_2, window_bounds = array<i64: 1, 32>}, {pipeline_mode = #tpu.pipeline_mode<synchronous>, transform_indices = @transform_3, window_bounds = array<i64: 288, 32>}, {pipeline_mode = #tpu.pipeline_mode<synchronous>, transform_indices = @transform_4, window_bounds = array<i64: 1, 32>}, {transform_indices = @transform_5, window_bounds = array<i64: 1, 8, 8, 32>}, {transform_indices = @transform_6, window_bounds = array<i64: 1, 2, 32>}]} {
    %c0 = arith.constant 0 : index
    %c0_0 = arith.constant 0 : index
    %c0_1 = arith.constant 0 : index
    %c0_2 = arith.constant 0 : index
    %0 = vector.load %arg1[%c0, %c0_0, %c0_1, %c0_2] : memref<1x8x8x32xf32, #tpu.memory_space<vmem>>, vector<1x8x8x32xf32>
    %c0_3 = arith.constant 0 : index
    %c0_4 = arith.constant 0 : index
    %1 = vector.load %arg2[%c0_3, %c0_4] : memref<1x32xf32, #tpu.memory_space<vmem>>, vector<1x32xf32>
    %2 = vector.shape_cast %1 : vector<1x32xf32> to vector<1x1x1x32xf32>
    %3 = vector.broadcast %2 : vector<1x1x1x32xf32> to vector<1x8x8x32xf32>
    %4 = arith.mulf %0, %3 : vector<1x8x8x32xf32>
    %c0_5 = arith.constant 0 : index
    %c0_6 = arith.constant 0 : index
    %5 = vector.load %arg3[%c0_5, %c0_6] : memref<1x32xf32, #tpu.memory_space<vmem>>, vector<1x32xf32>
    %6 = vector.shape_cast %5 : vector<1x32xf32> to vector<1x1x1x32xf32>
    %7 = vector.broadcast %6 : vector<1x1x1x32xf32> to vector<1x8x8x32xf32>
    %8 = arith.addf %4, %7 : vector<1x8x8x32xf32>
    %cst = arith.constant 0.000000e+00 : f32
    %9 = vector.broadcast %cst : f32 to vector<1x8x8x32xf32>
    %10 = arith.cmpf ogt, %8, %9 : vector<1x8x8x32xf32>
    %cst_7 = arith.constant 2.000000e-01 : f32
    %11 = vector.broadcast %cst_7 : f32 to vector<1x8x8x32xf32>
    %12 = arith.mulf %11, %8 : vector<1x8x8x32xf32>
    %13 = arith.select %10, %8, %12 : vector<1x8x8x32xi1>, vector<1x8x8x32xf32>
    %14 = arith.truncf %13 : vector<1x8x8x32xf32> to vector<1x8x8x32xbf16>
    %cst_8 = arith.constant 0.000000e+00 : bf16
    %15 = vector.broadcast %cst_8 : bf16 to vector<1x1x8x32xbf16>
    %16 = tpu.concatenate %15, %14, %15 in 1 : vector<1x1x8x32xbf16>, vector<1x8x8x32xbf16>, vector<1x1x8x32xbf16> -> vector<1x10x8x32xbf16>
    %cst_9 = arith.constant 0.000000e+00 : bf16
    %17 = vector.broadcast %cst_9 : bf16 to vector<1x10x1x32xbf16>
    %18 = tpu.concatenate %17, %16, %17 in 2 : vector<1x10x1x32xbf16>, vector<1x10x8x32xbf16>, vector<1x10x1x32xbf16> -> vector<1x10x10x32xbf16>
    %19 = vector.extract_strided_slice %18 {offsets = [0, 0, 0, 0], sizes = [1, 8, 8, 32], strides = [1, 1, 1, 1]} : vector<1x10x10x32xbf16> to vector<1x8x8x32xbf16>
    %20 = vector.extract_strided_slice %18 {offsets = [0, 0, 1, 0], sizes = [1, 8, 8, 32], strides = [1, 1, 1, 1]} : vector<1x10x10x32xbf16> to vector<1x8x8x32xbf16>
    %21 = vector.extract_strided_slice %18 {offsets = [0, 0, 2, 0], sizes = [1, 8, 8, 32], strides = [1, 1, 1, 1]} : vector<1x10x10x32xbf16> to vector<1x8x8x32xbf16>
    %22 = vector.extract_strided_slice %18 {offsets = [0, 1, 0, 0], sizes = [1, 8, 8, 32], strides = [1, 1, 1, 1]} : vector<1x10x10x32xbf16> to vector<1x8x8x32xbf16>
    %23 = vector.extract_strided_slice %18 {offsets = [0, 1, 1, 0], sizes = [1, 8, 8, 32], strides = [1, 1, 1, 1]} : vector<1x10x10x32xbf16> to vector<1x8x8x32xbf16>
    %24 = vector.extract_strided_slice %18 {offsets = [0, 1, 2, 0], sizes = [1, 8, 8, 32], strides = [1, 1, 1, 1]} : vector<1x10x10x32xbf16> to vector<1x8x8x32xbf16>
    %25 = vector.extract_strided_slice %18 {offsets = [0, 2, 0, 0], sizes = [1, 8, 8, 32], strides = [1, 1, 1, 1]} : vector<1x10x10x32xbf16> to vector<1x8x8x32xbf16>
    %26 = vector.extract_strided_slice %18 {offsets = [0, 2, 1, 0], sizes = [1, 8, 8, 32], strides = [1, 1, 1, 1]} : vector<1x10x10x32xbf16> to vector<1x8x8x32xbf16>
    %27 = vector.extract_strided_slice %18 {offsets = [0, 2, 2, 0], sizes = [1, 8, 8, 32], strides = [1, 1, 1, 1]} : vector<1x10x10x32xbf16> to vector<1x8x8x32xbf16>
    %28 = tpu.concatenate %19, %20, %21, %22, %23, %24, %25, %26, %27 in 3 : vector<1x8x8x32xbf16>, vector<1x8x8x32xbf16>, vector<1x8x8x32xbf16>, vector<1x8x8x32xbf16>, vector<1x8x8x32xbf16>, vector<1x8x8x32xbf16>, vector<1x8x8x32xbf16>, vector<1x8x8x32xbf16>, vector<1x8x8x32xbf16> -> vector<1x8x8x288xbf16>
    %29 = vector.shape_cast %28 : vector<1x8x8x288xbf16> to vector<64x288xbf16>
    %c0_10 = arith.constant 0 : index
    %c0_11 = arith.constant 0 : index
    %30 = vector.load %arg4[%c0_10, %c0_11] : memref<288x32xbf16, #tpu.memory_space<vmem>>, vector<288x32xbf16>
    %cst_12 = arith.constant dense<0.000000e+00> : vector<64x32xf32>
    %31 = tpu.matmul %29, %30, %cst_12 {dimension_numbers = #tpu.dot_dimension_numbers<[1], [0], [0], [1], [0, 0, 1, 1], [], []>} : vector<64x288xbf16>, vector<288x32xbf16>, vector<64x32xf32> -> vector<64x32xf32>
    %c0_13 = arith.constant 0 : index
    %c0_14 = arith.constant 0 : index
    %32 = vector.load %arg5[%c0_13, %c0_14] : memref<1x32xf32, #tpu.memory_space<vmem>>, vector<1x32xf32>
    %33 = vector.broadcast %32 : vector<1x32xf32> to vector<64x32xf32>
    %34 = arith.addf %31, %33 : vector<64x32xf32>
    %cst_15 = arith.constant dense<0.000000e+00> : vector<32xf32>
    %35 = vector.multi_reduction <add>, %34, %cst_15 [0] : vector<64x32xf32> to vector<32xf32>
    %36 = vector.shape_cast %35 : vector<32xf32> to vector<1x32xf32>
    %37 = arith.mulf %34, %34 : vector<64x32xf32>
    %cst_16 = arith.constant dense<0.000000e+00> : vector<32xf32>
    %38 = vector.multi_reduction <add>, %37, %cst_16 [0] : vector<64x32xf32> to vector<32xf32>
    %39 = vector.shape_cast %38 : vector<32xf32> to vector<1x32xf32>
    %40 = tpu.concatenate %36, %39 in 0 : vector<1x32xf32>, vector<1x32xf32> -> vector<2x32xf32>
    %c0_17 = arith.constant 0 : index
    %c0_18 = arith.constant 0 : index
    %c0_19 = arith.constant 0 : index
    %41 = vector.load %arg7[%c0_17, %c0_18, %c0_19] : memref<1x2x32xf32, #tpu.memory_space<vmem>>, vector<1x2x32xf32>
    %42 = vector.shape_cast %41 : vector<1x2x32xf32> to vector<2x32xf32>
    %43 = vector.shape_cast %40 : vector<2x32xf32> to vector<1x2x32xf32>
    tpu.vector_store %arg7[%c0_17, %c0_18, %c0_19], %43 {strides = array<i32>} : memref<1x2x32xf32, #tpu.memory_space<vmem>>, vector<1x2x32xf32>,
    %44 = vector.shape_cast %34 : vector<64x32xf32> to vector<1x8x8x32xf32>
    %c0_20 = arith.constant 0 : index
    %c0_21 = arith.constant 0 : index
    %c0_22 = arith.constant 0 : index
    %c0_23 = arith.constant 0 : index
    %45 = vector.load %arg6[%c0_20, %c0_21, %c0_22, %c0_23] : memref<1x8x8x32xf32, #tpu.memory_space<vmem>>, vector<1x8x8x32xf32>
    tpu.vector_store %arg6[%c0_20, %c0_21, %c0_22, %c0_23], %44 {strides = array<i32>} : memref<1x8x8x32xf32, #tpu.memory_space<vmem>>, vector<1x8x8x32xf32>,
    return
  }
  func.func @transform_0(%arg0: i32) -> (i32, i32, i32, i32) {
    %c0_i32 = arith.constant 0 : i32
    %c0_i32_0 = arith.constant 0 : i32
    %c0_i32_1 = arith.constant 0 : i32
    %c0_i32_2 = arith.constant 0 : i32
    return %arg0, %c0_i32, %c0_i32_0, %c0_i32_1 : i32, i32, i32, i32
  }
  func.func @transform_1(%arg0: i32) -> (i32, i32) {
    %c0_i32 = arith.constant 0 : i32
    %c0_i32_0 = arith.constant 0 : i32
    %c0_i32_1 = arith.constant 0 : i32
    return %c0_i32, %c0_i32_0 : i32, i32
  }
  func.func @transform_2(%arg0: i32) -> (i32, i32) {
    %c0_i32 = arith.constant 0 : i32
    %c0_i32_0 = arith.constant 0 : i32
    %c0_i32_1 = arith.constant 0 : i32
    return %c0_i32, %c0_i32_0 : i32, i32
  }
  func.func @transform_3(%arg0: i32) -> (i32, i32) {
    %c0_i32 = arith.constant 0 : i32
    %c0_i32_0 = arith.constant 0 : i32
    %c0_i32_1 = arith.constant 0 : i32
    return %c0_i32, %c0_i32_0 : i32, i32
  }
  func.func @transform_4(%arg0: i32) -> (i32, i32) {
    %c0_i32 = arith.constant 0 : i32
    %c0_i32_0 = arith.constant 0 : i32
    %c0_i32_1 = arith.constant 0 : i32
    return %c0_i32, %c0_i32_0 : i32, i32
  }
  func.func @transform_5(%arg0: i32) -> (i32, i32, i32, i32) {
    %c0_i32 = arith.constant 0 : i32
    %c0_i32_0 = arith.constant 0 : i32
    %c0_i32_1 = arith.constant 0 : i32
    %c0_i32_2 = arith.constant 0 : i32
    return %arg0, %c0_i32, %c0_i32_0, %c0_i32_1 : i32, i32, i32, i32
  }
  func.func @transform_6(%arg0: i32) -> (i32, i32, i32) {
    %c0_i32 = arith.constant 0 : i32
    %c0_i32_0 = arith.constant 0 : i32
    %c0_i32_1 = arith.constant 0 : i32
    return %arg0, %c0_i32, %c0_i32_0 : i32, i32, i32
  }
}

module attributes {stable_mosaic.version = 11 : i64} {
  func.func @kernel(%arg0: i32, %arg1: memref<1x4x4x128xf32, #tpu.memory_space<vmem>>, %arg2: memref<1x128xf32, #tpu.memory_space<vmem>>, %arg3: memref<1x128xf32, #tpu.memory_space<vmem>>, %arg4: memref<1x4x4x128xf32, #tpu.memory_space<vmem>>, %arg5: memref<288x64xbf16, #tpu.memory_space<vmem>>, %arg6: memref<1x4x4x64xf32, #tpu.memory_space<vmem>>, %arg7: memref<1x2x64xf32, #tpu.memory_space<vmem>>) attributes {dimension_semantics = [#tpu.dimension_semantics<parallel>], iteration_bounds = array<i64: 2>, scalar_prefetch = 0 : i64, scratch_operands = 0 : i64, tpu.core_type = #tpu.core_type<tc>, window_params = [{transform_indices = @transform_0, window_bounds = array<i64: 1, 4, 4, 128>}, {pipeline_mode = #tpu.pipeline_mode<synchronous>, transform_indices = @transform_1, window_bounds = array<i64: 1, 128>}, {pipeline_mode = #tpu.pipeline_mode<synchronous>, transform_indices = @transform_2, window_bounds = array<i64: 1, 128>}, {transform_indices = @transform_3, window_bounds = array<i64: 1, 4, 4, 128>}, {pipeline_mode = #tpu.pipeline_mode<synchronous>, transform_indices = @transform_4, window_bounds = array<i64: 288, 64>}, {transform_indices = @transform_5, window_bounds = array<i64: 1, 4, 4, 64>}, {transform_indices = @transform_6, window_bounds = array<i64: 1, 2, 64>}]} {
    %c0 = arith.constant 0 : index
    %c0_0 = arith.constant 0 : index
    %c0_1 = arith.constant 0 : index
    %c0_2 = arith.constant 0 : index
    %0 = vector.load %arg1[%c0, %c0_0, %c0_1, %c0_2] : memref<1x4x4x128xf32, #tpu.memory_space<vmem>>, vector<1x4x4x128xf32>
    %c0_3 = arith.constant 0 : index
    %c0_4 = arith.constant 0 : index
    %1 = vector.load %arg2[%c0_3, %c0_4] : memref<1x128xf32, #tpu.memory_space<vmem>>, vector<1x128xf32>
    %2 = vector.shape_cast %1 : vector<1x128xf32> to vector<1x1x1x128xf32>
    %3 = vector.broadcast %2 : vector<1x1x1x128xf32> to vector<1x4x4x128xf32>
    %4 = arith.mulf %0, %3 : vector<1x4x4x128xf32>
    %c0_5 = arith.constant 0 : index
    %c0_6 = arith.constant 0 : index
    %5 = vector.load %arg3[%c0_5, %c0_6] : memref<1x128xf32, #tpu.memory_space<vmem>>, vector<1x128xf32>
    %6 = vector.shape_cast %5 : vector<1x128xf32> to vector<1x1x1x128xf32>
    %7 = vector.broadcast %6 : vector<1x1x1x128xf32> to vector<1x4x4x128xf32>
    %8 = arith.addf %4, %7 : vector<1x4x4x128xf32>
    %c0_7 = arith.constant 0 : index
    %c0_8 = arith.constant 0 : index
    %c0_9 = arith.constant 0 : index
    %c0_10 = arith.constant 0 : index
    %9 = vector.load %arg4[%c0_7, %c0_8, %c0_9, %c0_10] : memref<1x4x4x128xf32, #tpu.memory_space<vmem>>, vector<1x4x4x128xf32>
    %cst = arith.constant 1.000000e-01 : f32
    %10 = vector.broadcast %cst : f32 to vector<1x4x4x128xf32>
    %11 = arith.mulf %10, %8 : vector<1x4x4x128xf32>
    %12 = arith.addf %9, %11 : vector<1x4x4x128xf32>
    %13 = arith.truncf %12 : vector<1x4x4x128xf32> to vector<1x4x4x128xbf16>
    %14 = vector.extract_strided_slice %13 {offsets = [0, 0, 0, 96], sizes = [1, 4, 4, 32], strides = [1, 1, 1, 1]} : vector<1x4x4x128xbf16> to vector<1x4x4x32xbf16>
    %cst_11 = arith.constant 0.000000e+00 : bf16
    %15 = vector.broadcast %cst_11 : bf16 to vector<1x1x4x32xbf16>
    %16 = tpu.concatenate %15, %14 in 1 : vector<1x1x4x32xbf16>, vector<1x4x4x32xbf16> -> vector<1x5x4x32xbf16>
    %17 = vector.extract_strided_slice %16 {offsets = [0, 0, 0, 0], sizes = [1, 4, 4, 32], strides = [1, 1, 1, 1]} : vector<1x5x4x32xbf16> to vector<1x4x4x32xbf16>
    %cst_12 = arith.constant 0.000000e+00 : bf16
    %18 = vector.broadcast %cst_12 : bf16 to vector<1x4x1x32xbf16>
    %19 = tpu.concatenate %18, %17 in 2 : vector<1x4x1x32xbf16>, vector<1x4x4x32xbf16> -> vector<1x4x5x32xbf16>
    %20 = vector.extract_strided_slice %19 {offsets = [0, 0, 0, 0], sizes = [1, 4, 4, 32], strides = [1, 1, 1, 1]} : vector<1x4x5x32xbf16> to vector<1x4x4x32xbf16>
    %21 = vector.extract_strided_slice %13 {offsets = [0, 0, 0, 64], sizes = [1, 4, 4, 32], strides = [1, 1, 1, 1]} : vector<1x4x4x128xbf16> to vector<1x4x4x32xbf16>
    %cst_13 = arith.constant 0.000000e+00 : bf16
    %22 = vector.broadcast %cst_13 : bf16 to vector<1x1x4x32xbf16>
    %23 = tpu.concatenate %22, %21 in 1 : vector<1x1x4x32xbf16>, vector<1x4x4x32xbf16> -> vector<1x5x4x32xbf16>
    %24 = vector.extract_strided_slice %23 {offsets = [0, 0, 0, 0], sizes = [1, 4, 4, 32], strides = [1, 1, 1, 1]} : vector<1x5x4x32xbf16> to vector<1x4x4x32xbf16>
    %25 = vector.extract_strided_slice %13 {offsets = [0, 0, 0, 96], sizes = [1, 4, 4, 32], strides = [1, 1, 1, 1]} : vector<1x4x4x128xbf16> to vector<1x4x4x32xbf16>
    %cst_14 = arith.constant 0.000000e+00 : bf16
    %26 = vector.broadcast %cst_14 : bf16 to vector<1x1x4x32xbf16>
    %27 = tpu.concatenate %26, %25 in 1 : vector<1x1x4x32xbf16>, vector<1x4x4x32xbf16> -> vector<1x5x4x32xbf16>
    %28 = vector.extract_strided_slice %27 {offsets = [0, 0, 0, 0], sizes = [1, 4, 4, 32], strides = [1, 1, 1, 1]} : vector<1x5x4x32xbf16> to vector<1x4x4x32xbf16>
    %29 = vector.extract_strided_slice %13 {offsets = [0, 0, 0, 32], sizes = [1, 4, 4, 32], strides = [1, 1, 1, 1]} : vector<1x4x4x128xbf16> to vector<1x4x4x32xbf16>
    %cst_15 = arith.constant 0.000000e+00 : bf16
    %30 = vector.broadcast %cst_15 : bf16 to vector<1x4x1x32xbf16>
    %31 = tpu.concatenate %30, %29 in 2 : vector<1x4x1x32xbf16>, vector<1x4x4x32xbf16> -> vector<1x4x5x32xbf16>
    %32 = vector.extract_strided_slice %31 {offsets = [0, 0, 0, 0], sizes = [1, 4, 4, 32], strides = [1, 1, 1, 1]} : vector<1x4x5x32xbf16> to vector<1x4x4x32xbf16>
    %33 = vector.extract_strided_slice %13 {offsets = [0, 0, 0, 0], sizes = [1, 4, 4, 32], strides = [1, 1, 1, 1]} : vector<1x4x4x128xbf16> to vector<1x4x4x32xbf16>
    %34 = vector.extract_strided_slice %13 {offsets = [0, 0, 0, 32], sizes = [1, 4, 4, 32], strides = [1, 1, 1, 1]} : vector<1x4x4x128xbf16> to vector<1x4x4x32xbf16>
    %35 = vector.extract_strided_slice %13 {offsets = [0, 0, 0, 96], sizes = [1, 4, 4, 32], strides = [1, 1, 1, 1]} : vector<1x4x4x128xbf16> to vector<1x4x4x32xbf16>
    %cst_16 = arith.constant 0.000000e+00 : bf16
    %36 = vector.broadcast %cst_16 : bf16 to vector<1x4x1x32xbf16>
    %37 = tpu.concatenate %36, %35 in 2 : vector<1x4x1x32xbf16>, vector<1x4x4x32xbf16> -> vector<1x4x5x32xbf16>
    %38 = vector.extract_strided_slice %37 {offsets = [0, 0, 0, 0], sizes = [1, 4, 4, 32], strides = [1, 1, 1, 1]} : vector<1x4x5x32xbf16> to vector<1x4x4x32xbf16>
    %39 = vector.extract_strided_slice %13 {offsets = [0, 0, 0, 64], sizes = [1, 4, 4, 32], strides = [1, 1, 1, 1]} : vector<1x4x4x128xbf16> to vector<1x4x4x32xbf16>
    %40 = vector.extract_strided_slice %13 {offsets = [0, 0, 0, 96], sizes = [1, 4, 4, 32], strides = [1, 1, 1, 1]} : vector<1x4x4x128xbf16> to vector<1x4x4x32xbf16>
    %41 = tpu.concatenate %20, %24, %28, %32, %33, %34, %38, %39, %40 in 3 : vector<1x4x4x32xbf16>, vector<1x4x4x32xbf16>, vector<1x4x4x32xbf16>, vector<1x4x4x32xbf16>, vector<1x4x4x32xbf16>, vector<1x4x4x32xbf16>, vector<1x4x4x32xbf16>, vector<1x4x4x32xbf16>, vector<1x4x4x32xbf16> -> vector<1x4x4x288xbf16>
    %42 = vector.shape_cast %41 : vector<1x4x4x288xbf16> to vector<16x288xbf16>
    %c0_17 = arith.constant 0 : index
    %c0_18 = arith.constant 0 : index
    %43 = vector.load %arg5[%c0_17, %c0_18] : memref<288x64xbf16, #tpu.memory_space<vmem>>, vector<288x64xbf16>
    %cst_19 = arith.constant dense<0.000000e+00> : vector<16x64xf32>
    %44 = tpu.matmul %42, %43, %cst_19 {dimension_numbers = #tpu.dot_dimension_numbers<[1], [0], [0], [1], [0, 0, 1, 1], [], []>} : vector<16x288xbf16>, vector<288x64xbf16>, vector<16x64xf32> -> vector<16x64xf32>
    %cst_20 = arith.constant dense<0.000000e+00> : vector<64xf32>
    %45 = vector.multi_reduction <add>, %44, %cst_20 [0] : vector<16x64xf32> to vector<64xf32>
    %46 = vector.shape_cast %45 : vector<64xf32> to vector<1x64xf32>
    %47 = arith.mulf %44, %44 : vector<16x64xf32>
    %cst_21 = arith.constant dense<0.000000e+00> : vector<64xf32>
    %48 = vector.multi_reduction <add>, %47, %cst_21 [0] : vector<16x64xf32> to vector<64xf32>
    %49 = vector.shape_cast %48 : vector<64xf32> to vector<1x64xf32>
    %50 = tpu.concatenate %46, %49 in 0 : vector<1x64xf32>, vector<1x64xf32> -> vector<2x64xf32>
    %c0_22 = arith.constant 0 : index
    %c0_23 = arith.constant 0 : index
    %c0_24 = arith.constant 0 : index
    %51 = vector.load %arg7[%c0_22, %c0_23, %c0_24] : memref<1x2x64xf32, #tpu.memory_space<vmem>>, vector<1x2x64xf32>
    %52 = vector.shape_cast %51 : vector<1x2x64xf32> to vector<2x64xf32>
    %53 = vector.shape_cast %50 : vector<2x64xf32> to vector<1x2x64xf32>
    tpu.vector_store %arg7[%c0_22, %c0_23, %c0_24], %53 {strides = array<i32>} : memref<1x2x64xf32, #tpu.memory_space<vmem>>, vector<1x2x64xf32>,
    %54 = vector.shape_cast %44 : vector<16x64xf32> to vector<1x4x4x64xf32>
    %c0_25 = arith.constant 0 : index
    %c0_26 = arith.constant 0 : index
    %c0_27 = arith.constant 0 : index
    %c0_28 = arith.constant 0 : index
    %55 = vector.load %arg6[%c0_25, %c0_26, %c0_27, %c0_28] : memref<1x4x4x64xf32, #tpu.memory_space<vmem>>, vector<1x4x4x64xf32>
    tpu.vector_store %arg6[%c0_25, %c0_26, %c0_27, %c0_28], %54 {strides = array<i32>} : memref<1x4x4x64xf32, #tpu.memory_space<vmem>>, vector<1x4x4x64xf32>,
    return
  }
  func.func @transform_0(%arg0: i32) -> (i32, i32, i32, i32) {
    %c0_i32 = arith.constant 0 : i32
    %c0_i32_0 = arith.constant 0 : i32
    %c0_i32_1 = arith.constant 0 : i32
    %c0_i32_2 = arith.constant 0 : i32
    return %arg0, %c0_i32, %c0_i32_0, %c0_i32_1 : i32, i32, i32, i32
  }
  func.func @transform_1(%arg0: i32) -> (i32, i32) {
    %c0_i32 = arith.constant 0 : i32
    %c0_i32_0 = arith.constant 0 : i32
    %c0_i32_1 = arith.constant 0 : i32
    return %c0_i32, %c0_i32_0 : i32, i32
  }
  func.func @transform_2(%arg0: i32) -> (i32, i32) {
    %c0_i32 = arith.constant 0 : i32
    %c0_i32_0 = arith.constant 0 : i32
    %c0_i32_1 = arith.constant 0 : i32
    return %c0_i32, %c0_i32_0 : i32, i32
  }
  func.func @transform_3(%arg0: i32) -> (i32, i32, i32, i32) {
    %c0_i32 = arith.constant 0 : i32
    %c0_i32_0 = arith.constant 0 : i32
    %c0_i32_1 = arith.constant 0 : i32
    %c0_i32_2 = arith.constant 0 : i32
    return %arg0, %c0_i32, %c0_i32_0, %c0_i32_1 : i32, i32, i32, i32
  }
  func.func @transform_4(%arg0: i32) -> (i32, i32) {
    %c0_i32 = arith.constant 0 : i32
    %c0_i32_0 = arith.constant 0 : i32
    %c0_i32_1 = arith.constant 0 : i32
    return %c0_i32, %c0_i32_0 : i32, i32
  }
  func.func @transform_5(%arg0: i32) -> (i32, i32, i32, i32) {
    %c0_i32 = arith.constant 0 : i32
    %c0_i32_0 = arith.constant 0 : i32
    %c0_i32_1 = arith.constant 0 : i32
    %c0_i32_2 = arith.constant 0 : i32
    return %arg0, %c0_i32, %c0_i32_0, %c0_i32_1 : i32, i32, i32, i32
  }
  func.func @transform_6(%arg0: i32) -> (i32, i32, i32) {
    %c0_i32 = arith.constant 0 : i32
    %c0_i32_0 = arith.constant 0 : i32
    %c0_i32_1 = arith.constant 0 : i32
    return %arg0, %c0_i32, %c0_i32_0 : i32, i32, i32
  }
}

module attributes {stable_mosaic.version = 11 : i64} {
  func.func @kernel(%arg0: i32, %arg1: memref<1x4x4x64xf32, #tpu.memory_space<vmem>>, %arg2: memref<1x64xf32, #tpu.memory_space<vmem>>, %arg3: memref<1x64xf32, #tpu.memory_space<vmem>>, %arg4: memref<576x64xbf16, #tpu.memory_space<vmem>>, %arg5: memref<1x64xf32, #tpu.memory_space<vmem>>, %arg6: memref<1x4x4x64xf32, #tpu.memory_space<vmem>>, %arg7: memref<1x4x4x64xf32, #tpu.memory_space<vmem>>, %arg8: memref<1x2x64xf32, #tpu.memory_space<vmem>>) attributes {dimension_semantics = [#tpu.dimension_semantics<parallel>], iteration_bounds = array<i64: 2>, scalar_prefetch = 0 : i64, scratch_operands = 0 : i64, tpu.core_type = #tpu.core_type<tc>, window_params = [{transform_indices = @transform_0, window_bounds = array<i64: 1, 4, 4, 64>}, {pipeline_mode = #tpu.pipeline_mode<synchronous>, transform_indices = @transform_1, window_bounds = array<i64: 1, 64>}, {pipeline_mode = #tpu.pipeline_mode<synchronous>, transform_indices = @transform_2, window_bounds = array<i64: 1, 64>}, {pipeline_mode = #tpu.pipeline_mode<synchronous>, transform_indices = @transform_3, window_bounds = array<i64: 576, 64>}, {pipeline_mode = #tpu.pipeline_mode<synchronous>, transform_indices = @transform_4, window_bounds = array<i64: 1, 64>}, {transform_indices = @transform_5, window_bounds = array<i64: 1, 4, 4, 64>}, {transform_indices = @transform_6, window_bounds = array<i64: 1, 4, 4, 64>}, {transform_indices = @transform_7, window_bounds = array<i64: 1, 2, 64>}]} {
    %c0 = arith.constant 0 : index
    %c0_0 = arith.constant 0 : index
    %c0_1 = arith.constant 0 : index
    %c0_2 = arith.constant 0 : index
    %0 = vector.load %arg1[%c0, %c0_0, %c0_1, %c0_2] : memref<1x4x4x64xf32, #tpu.memory_space<vmem>>, vector<1x4x4x64xf32>
    %c0_3 = arith.constant 0 : index
    %c0_4 = arith.constant 0 : index
    %1 = vector.load %arg2[%c0_3, %c0_4] : memref<1x64xf32, #tpu.memory_space<vmem>>, vector<1x64xf32>
    %2 = vector.shape_cast %1 : vector<1x64xf32> to vector<1x1x1x64xf32>
    %3 = vector.broadcast %2 : vector<1x1x1x64xf32> to vector<1x4x4x64xf32>
    %4 = arith.mulf %0, %3 : vector<1x4x4x64xf32>
    %c0_5 = arith.constant 0 : index
    %c0_6 = arith.constant 0 : index
    %5 = vector.load %arg3[%c0_5, %c0_6] : memref<1x64xf32, #tpu.memory_space<vmem>>, vector<1x64xf32>
    %6 = vector.shape_cast %5 : vector<1x64xf32> to vector<1x1x1x64xf32>
    %7 = vector.broadcast %6 : vector<1x1x1x64xf32> to vector<1x4x4x64xf32>
    %8 = arith.addf %4, %7 : vector<1x4x4x64xf32>
    %cst = arith.constant 0.000000e+00 : f32
    %9 = vector.broadcast %cst : f32 to vector<1x4x4x64xf32>
    %10 = arith.cmpf ogt, %8, %9 : vector<1x4x4x64xf32>
    %cst_7 = arith.constant 2.000000e-01 : f32
    %11 = vector.broadcast %cst_7 : f32 to vector<1x4x4x64xf32>
    %12 = arith.mulf %11, %8 : vector<1x4x4x64xf32>
    %13 = arith.select %10, %8, %12 : vector<1x4x4x64xi1>, vector<1x4x4x64xf32>
    %c0_8 = arith.constant 0 : index
    %c0_9 = arith.constant 0 : index
    %c0_10 = arith.constant 0 : index
    %c0_11 = arith.constant 0 : index
    %14 = vector.load %arg7[%c0_8, %c0_9, %c0_10, %c0_11] : memref<1x4x4x64xf32, #tpu.memory_space<vmem>>, vector<1x4x4x64xf32>
    tpu.vector_store %arg7[%c0_8, %c0_9, %c0_10, %c0_11], %13 {strides = array<i32>} : memref<1x4x4x64xf32, #tpu.memory_space<vmem>>, vector<1x4x4x64xf32>,
    %15 = arith.truncf %13 : vector<1x4x4x64xf32> to vector<1x4x4x64xbf16>
    %cst_12 = arith.constant 0.000000e+00 : bf16
    %16 = vector.broadcast %cst_12 : bf16 to vector<1x1x4x64xbf16>
    %17 = tpu.concatenate %16, %15, %16 in 1 : vector<1x1x4x64xbf16>, vector<1x4x4x64xbf16>, vector<1x1x4x64xbf16> -> vector<1x6x4x64xbf16>
    %cst_13 = arith.constant 0.000000e+00 : bf16
    %18 = vector.broadcast %cst_13 : bf16 to vector<1x6x1x64xbf16>
    %19 = tpu.concatenate %18, %17, %18 in 2 : vector<1x6x1x64xbf16>, vector<1x6x4x64xbf16>, vector<1x6x1x64xbf16> -> vector<1x6x6x64xbf16>
    %20 = vector.extract_strided_slice %19 {offsets = [0, 0, 0, 0], sizes = [1, 4, 4, 64], strides = [1, 1, 1, 1]} : vector<1x6x6x64xbf16> to vector<1x4x4x64xbf16>
    %21 = vector.extract_strided_slice %19 {offsets = [0, 0, 1, 0], sizes = [1, 4, 4, 64], strides = [1, 1, 1, 1]} : vector<1x6x6x64xbf16> to vector<1x4x4x64xbf16>
    %22 = vector.extract_strided_slice %19 {offsets = [0, 0, 2, 0], sizes = [1, 4, 4, 64], strides = [1, 1, 1, 1]} : vector<1x6x6x64xbf16> to vector<1x4x4x64xbf16>
    %23 = vector.extract_strided_slice %19 {offsets = [0, 1, 0, 0], sizes = [1, 4, 4, 64], strides = [1, 1, 1, 1]} : vector<1x6x6x64xbf16> to vector<1x4x4x64xbf16>
    %24 = vector.extract_strided_slice %19 {offsets = [0, 1, 1, 0], sizes = [1, 4, 4, 64], strides = [1, 1, 1, 1]} : vector<1x6x6x64xbf16> to vector<1x4x4x64xbf16>
    %25 = vector.extract_strided_slice %19 {offsets = [0, 1, 2, 0], sizes = [1, 4, 4, 64], strides = [1, 1, 1, 1]} : vector<1x6x6x64xbf16> to vector<1x4x4x64xbf16>
    %26 = vector.extract_strided_slice %19 {offsets = [0, 2, 0, 0], sizes = [1, 4, 4, 64], strides = [1, 1, 1, 1]} : vector<1x6x6x64xbf16> to vector<1x4x4x64xbf16>
    %27 = vector.extract_strided_slice %19 {offsets = [0, 2, 1, 0], sizes = [1, 4, 4, 64], strides = [1, 1, 1, 1]} : vector<1x6x6x64xbf16> to vector<1x4x4x64xbf16>
    %28 = vector.extract_strided_slice %19 {offsets = [0, 2, 2, 0], sizes = [1, 4, 4, 64], strides = [1, 1, 1, 1]} : vector<1x6x6x64xbf16> to vector<1x4x4x64xbf16>
    %29 = tpu.concatenate %20, %21, %22, %23, %24, %25, %26, %27, %28 in 3 : vector<1x4x4x64xbf16>, vector<1x4x4x64xbf16>, vector<1x4x4x64xbf16>, vector<1x4x4x64xbf16>, vector<1x4x4x64xbf16>, vector<1x4x4x64xbf16>, vector<1x4x4x64xbf16>, vector<1x4x4x64xbf16>, vector<1x4x4x64xbf16> -> vector<1x4x4x576xbf16>
    %30 = vector.shape_cast %29 : vector<1x4x4x576xbf16> to vector<16x576xbf16>
    %c0_14 = arith.constant 0 : index
    %c0_15 = arith.constant 0 : index
    %31 = vector.load %arg4[%c0_14, %c0_15] : memref<576x64xbf16, #tpu.memory_space<vmem>>, vector<576x64xbf16>
    %cst_16 = arith.constant dense<0.000000e+00> : vector<16x64xf32>
    %32 = tpu.matmul %30, %31, %cst_16 {dimension_numbers = #tpu.dot_dimension_numbers<[1], [0], [0], [1], [0, 0, 1, 1], [], []>} : vector<16x576xbf16>, vector<576x64xbf16>, vector<16x64xf32> -> vector<16x64xf32>
    %c0_17 = arith.constant 0 : index
    %c0_18 = arith.constant 0 : index
    %33 = vector.load %arg5[%c0_17, %c0_18] : memref<1x64xf32, #tpu.memory_space<vmem>>, vector<1x64xf32>
    %34 = vector.broadcast %33 : vector<1x64xf32> to vector<16x64xf32>
    %35 = arith.addf %32, %34 : vector<16x64xf32>
    %cst_19 = arith.constant dense<0.000000e+00> : vector<64xf32>
    %36 = vector.multi_reduction <add>, %35, %cst_19 [0] : vector<16x64xf32> to vector<64xf32>
    %37 = vector.shape_cast %36 : vector<64xf32> to vector<1x64xf32>
    %38 = arith.mulf %35, %35 : vector<16x64xf32>
    %cst_20 = arith.constant dense<0.000000e+00> : vector<64xf32>
    %39 = vector.multi_reduction <add>, %38, %cst_20 [0] : vector<16x64xf32> to vector<64xf32>
    %40 = vector.shape_cast %39 : vector<64xf32> to vector<1x64xf32>
    %41 = tpu.concatenate %37, %40 in 0 : vector<1x64xf32>, vector<1x64xf32> -> vector<2x64xf32>
    %c0_21 = arith.constant 0 : index
    %c0_22 = arith.constant 0 : index
    %c0_23 = arith.constant 0 : index
    %42 = vector.load %arg8[%c0_21, %c0_22, %c0_23] : memref<1x2x64xf32, #tpu.memory_space<vmem>>, vector<1x2x64xf32>
    %43 = vector.shape_cast %42 : vector<1x2x64xf32> to vector<2x64xf32>
    %44 = vector.shape_cast %41 : vector<2x64xf32> to vector<1x2x64xf32>
    tpu.vector_store %arg8[%c0_21, %c0_22, %c0_23], %44 {strides = array<i32>} : memref<1x2x64xf32, #tpu.memory_space<vmem>>, vector<1x2x64xf32>,
    %45 = vector.shape_cast %35 : vector<16x64xf32> to vector<1x4x4x64xf32>
    %c0_24 = arith.constant 0 : index
    %c0_25 = arith.constant 0 : index
    %c0_26 = arith.constant 0 : index
    %c0_27 = arith.constant 0 : index
    %46 = vector.load %arg6[%c0_24, %c0_25, %c0_26, %c0_27] : memref<1x4x4x64xf32, #tpu.memory_space<vmem>>, vector<1x4x4x64xf32>
    tpu.vector_store %arg6[%c0_24, %c0_25, %c0_26, %c0_27], %45 {strides = array<i32>} : memref<1x4x4x64xf32, #tpu.memory_space<vmem>>, vector<1x4x4x64xf32>,
    return
  }
  func.func @transform_0(%arg0: i32) -> (i32, i32, i32, i32) {
    %c0_i32 = arith.constant 0 : i32
    %c0_i32_0 = arith.constant 0 : i32
    %c0_i32_1 = arith.constant 0 : i32
    %c0_i32_2 = arith.constant 0 : i32
    return %arg0, %c0_i32, %c0_i32_0, %c0_i32_1 : i32, i32, i32, i32
  }
  func.func @transform_1(%arg0: i32) -> (i32, i32) {
    %c0_i32 = arith.constant 0 : i32
    %c0_i32_0 = arith.constant 0 : i32
    %c0_i32_1 = arith.constant 0 : i32
    return %c0_i32, %c0_i32_0 : i32, i32
  }
  func.func @transform_2(%arg0: i32) -> (i32, i32) {
    %c0_i32 = arith.constant 0 : i32
    %c0_i32_0 = arith.constant 0 : i32
    %c0_i32_1 = arith.constant 0 : i32
    return %c0_i32, %c0_i32_0 : i32, i32
  }
  func.func @transform_3(%arg0: i32) -> (i32, i32) {
    %c0_i32 = arith.constant 0 : i32
    %c0_i32_0 = arith.constant 0 : i32
    %c0_i32_1 = arith.constant 0 : i32
    return %c0_i32, %c0_i32_0 : i32, i32
  }
  func.func @transform_4(%arg0: i32) -> (i32, i32) {
    %c0_i32 = arith.constant 0 : i32
    %c0_i32_0 = arith.constant 0 : i32
    %c0_i32_1 = arith.constant 0 : i32
    return %c0_i32, %c0_i32_0 : i32, i32
  }
  func.func @transform_5(%arg0: i32) -> (i32, i32, i32, i32) {
    %c0_i32 = arith.constant 0 : i32
    %c0_i32_0 = arith.constant 0 : i32
    %c0_i32_1 = arith.constant 0 : i32
    %c0_i32_2 = arith.constant 0 : i32
    return %arg0, %c0_i32, %c0_i32_0, %c0_i32_1 : i32, i32, i32, i32
  }
  func.func @transform_6(%arg0: i32) -> (i32, i32, i32, i32) {
    %c0_i32 = arith.constant 0 : i32
    %c0_i32_0 = arith.constant 0 : i32
    %c0_i32_1 = arith.constant 0 : i32
    %c0_i32_2 = arith.constant 0 : i32
    return %arg0, %c0_i32, %c0_i32_0, %c0_i32_1 : i32, i32, i32, i32
  }
  func.func @transform_7(%arg0: i32) -> (i32, i32, i32) {
    %c0_i32 = arith.constant 0 : i32
    %c0_i32_0 = arith.constant 0 : i32
    %c0_i32_1 = arith.constant 0 : i32
    return %arg0, %c0_i32, %c0_i32_0 : i32, i32, i32
  }
}

module attributes {stable_mosaic.version = 11 : i64} {
  func.func @kernel(%arg0: i32, %arg1: memref<1x4x4x64xf32, #tpu.memory_space<vmem>>, %arg2: memref<1x64xf32, #tpu.memory_space<vmem>>, %arg3: memref<1x64xf32, #tpu.memory_space<vmem>>, %arg4: memref<576x64xbf16, #tpu.memory_space<vmem>>, %arg5: memref<1x64xf32, #tpu.memory_space<vmem>>, %arg6: memref<1x4x4x64xf32, #tpu.memory_space<vmem>>, %arg7: memref<1x2x64xf32, #tpu.memory_space<vmem>>) attributes {dimension_semantics = [#tpu.dimension_semantics<parallel>], iteration_bounds = array<i64: 2>, scalar_prefetch = 0 : i64, scratch_operands = 0 : i64, tpu.core_type = #tpu.core_type<tc>, window_params = [{transform_indices = @transform_0, window_bounds = array<i64: 1, 4, 4, 64>}, {pipeline_mode = #tpu.pipeline_mode<synchronous>, transform_indices = @transform_1, window_bounds = array<i64: 1, 64>}, {pipeline_mode = #tpu.pipeline_mode<synchronous>, transform_indices = @transform_2, window_bounds = array<i64: 1, 64>}, {pipeline_mode = #tpu.pipeline_mode<synchronous>, transform_indices = @transform_3, window_bounds = array<i64: 576, 64>}, {pipeline_mode = #tpu.pipeline_mode<synchronous>, transform_indices = @transform_4, window_bounds = array<i64: 1, 64>}, {transform_indices = @transform_5, window_bounds = array<i64: 1, 4, 4, 64>}, {transform_indices = @transform_6, window_bounds = array<i64: 1, 2, 64>}]} {
    %c0 = arith.constant 0 : index
    %c0_0 = arith.constant 0 : index
    %c0_1 = arith.constant 0 : index
    %c0_2 = arith.constant 0 : index
    %0 = vector.load %arg1[%c0, %c0_0, %c0_1, %c0_2] : memref<1x4x4x64xf32, #tpu.memory_space<vmem>>, vector<1x4x4x64xf32>
    %c0_3 = arith.constant 0 : index
    %c0_4 = arith.constant 0 : index
    %1 = vector.load %arg2[%c0_3, %c0_4] : memref<1x64xf32, #tpu.memory_space<vmem>>, vector<1x64xf32>
    %2 = vector.shape_cast %1 : vector<1x64xf32> to vector<1x1x1x64xf32>
    %3 = vector.broadcast %2 : vector<1x1x1x64xf32> to vector<1x4x4x64xf32>
    %4 = arith.mulf %0, %3 : vector<1x4x4x64xf32>
    %c0_5 = arith.constant 0 : index
    %c0_6 = arith.constant 0 : index
    %5 = vector.load %arg3[%c0_5, %c0_6] : memref<1x64xf32, #tpu.memory_space<vmem>>, vector<1x64xf32>
    %6 = vector.shape_cast %5 : vector<1x64xf32> to vector<1x1x1x64xf32>
    %7 = vector.broadcast %6 : vector<1x1x1x64xf32> to vector<1x4x4x64xf32>
    %8 = arith.addf %4, %7 : vector<1x4x4x64xf32>
    %cst = arith.constant 0.000000e+00 : f32
    %9 = vector.broadcast %cst : f32 to vector<1x4x4x64xf32>
    %10 = arith.cmpf ogt, %8, %9 : vector<1x4x4x64xf32>
    %cst_7 = arith.constant 2.000000e-01 : f32
    %11 = vector.broadcast %cst_7 : f32 to vector<1x4x4x64xf32>
    %12 = arith.mulf %11, %8 : vector<1x4x4x64xf32>
    %13 = arith.select %10, %8, %12 : vector<1x4x4x64xi1>, vector<1x4x4x64xf32>
    %14 = arith.truncf %13 : vector<1x4x4x64xf32> to vector<1x4x4x64xbf16>
    %cst_8 = arith.constant 0.000000e+00 : bf16
    %15 = vector.broadcast %cst_8 : bf16 to vector<1x1x4x64xbf16>
    %16 = tpu.concatenate %15, %14, %15 in 1 : vector<1x1x4x64xbf16>, vector<1x4x4x64xbf16>, vector<1x1x4x64xbf16> -> vector<1x6x4x64xbf16>
    %cst_9 = arith.constant 0.000000e+00 : bf16
    %17 = vector.broadcast %cst_9 : bf16 to vector<1x6x1x64xbf16>
    %18 = tpu.concatenate %17, %16, %17 in 2 : vector<1x6x1x64xbf16>, vector<1x6x4x64xbf16>, vector<1x6x1x64xbf16> -> vector<1x6x6x64xbf16>
    %19 = vector.extract_strided_slice %18 {offsets = [0, 0, 0, 0], sizes = [1, 4, 4, 64], strides = [1, 1, 1, 1]} : vector<1x6x6x64xbf16> to vector<1x4x4x64xbf16>
    %20 = vector.extract_strided_slice %18 {offsets = [0, 0, 1, 0], sizes = [1, 4, 4, 64], strides = [1, 1, 1, 1]} : vector<1x6x6x64xbf16> to vector<1x4x4x64xbf16>
    %21 = vector.extract_strided_slice %18 {offsets = [0, 0, 2, 0], sizes = [1, 4, 4, 64], strides = [1, 1, 1, 1]} : vector<1x6x6x64xbf16> to vector<1x4x4x64xbf16>
    %22 = vector.extract_strided_slice %18 {offsets = [0, 1, 0, 0], sizes = [1, 4, 4, 64], strides = [1, 1, 1, 1]} : vector<1x6x6x64xbf16> to vector<1x4x4x64xbf16>
    %23 = vector.extract_strided_slice %18 {offsets = [0, 1, 1, 0], sizes = [1, 4, 4, 64], strides = [1, 1, 1, 1]} : vector<1x6x6x64xbf16> to vector<1x4x4x64xbf16>
    %24 = vector.extract_strided_slice %18 {offsets = [0, 1, 2, 0], sizes = [1, 4, 4, 64], strides = [1, 1, 1, 1]} : vector<1x6x6x64xbf16> to vector<1x4x4x64xbf16>
    %25 = vector.extract_strided_slice %18 {offsets = [0, 2, 0, 0], sizes = [1, 4, 4, 64], strides = [1, 1, 1, 1]} : vector<1x6x6x64xbf16> to vector<1x4x4x64xbf16>
    %26 = vector.extract_strided_slice %18 {offsets = [0, 2, 1, 0], sizes = [1, 4, 4, 64], strides = [1, 1, 1, 1]} : vector<1x6x6x64xbf16> to vector<1x4x4x64xbf16>
    %27 = vector.extract_strided_slice %18 {offsets = [0, 2, 2, 0], sizes = [1, 4, 4, 64], strides = [1, 1, 1, 1]} : vector<1x6x6x64xbf16> to vector<1x4x4x64xbf16>
    %28 = tpu.concatenate %19, %20, %21, %22, %23, %24, %25, %26, %27 in 3 : vector<1x4x4x64xbf16>, vector<1x4x4x64xbf16>, vector<1x4x4x64xbf16>, vector<1x4x4x64xbf16>, vector<1x4x4x64xbf16>, vector<1x4x4x64xbf16>, vector<1x4x4x64xbf16>, vector<1x4x4x64xbf16>, vector<1x4x4x64xbf16> -> vector<1x4x4x576xbf16>
    %29 = vector.shape_cast %28 : vector<1x4x4x576xbf16> to vector<16x576xbf16>
    %c0_10 = arith.constant 0 : index
    %c0_11 = arith.constant 0 : index
    %30 = vector.load %arg4[%c0_10, %c0_11] : memref<576x64xbf16, #tpu.memory_space<vmem>>, vector<576x64xbf16>
    %cst_12 = arith.constant dense<0.000000e+00> : vector<16x64xf32>
    %31 = tpu.matmul %29, %30, %cst_12 {dimension_numbers = #tpu.dot_dimension_numbers<[1], [0], [0], [1], [0, 0, 1, 1], [], []>} : vector<16x576xbf16>, vector<576x64xbf16>, vector<16x64xf32> -> vector<16x64xf32>
    %c0_13 = arith.constant 0 : index
    %c0_14 = arith.constant 0 : index
    %32 = vector.load %arg5[%c0_13, %c0_14] : memref<1x64xf32, #tpu.memory_space<vmem>>, vector<1x64xf32>
    %33 = vector.broadcast %32 : vector<1x64xf32> to vector<16x64xf32>
    %34 = arith.addf %31, %33 : vector<16x64xf32>
    %cst_15 = arith.constant dense<0.000000e+00> : vector<64xf32>
    %35 = vector.multi_reduction <add>, %34, %cst_15 [0] : vector<16x64xf32> to vector<64xf32>
    %36 = vector.shape_cast %35 : vector<64xf32> to vector<1x64xf32>
    %37 = arith.mulf %34, %34 : vector<16x64xf32>
    %cst_16 = arith.constant dense<0.000000e+00> : vector<64xf32>
    %38 = vector.multi_reduction <add>, %37, %cst_16 [0] : vector<16x64xf32> to vector<64xf32>
    %39 = vector.shape_cast %38 : vector<64xf32> to vector<1x64xf32>
    %40 = tpu.concatenate %36, %39 in 0 : vector<1x64xf32>, vector<1x64xf32> -> vector<2x64xf32>
    %c0_17 = arith.constant 0 : index
    %c0_18 = arith.constant 0 : index
    %c0_19 = arith.constant 0 : index
    %41 = vector.load %arg7[%c0_17, %c0_18, %c0_19] : memref<1x2x64xf32, #tpu.memory_space<vmem>>, vector<1x2x64xf32>
    %42 = vector.shape_cast %41 : vector<1x2x64xf32> to vector<2x64xf32>
    %43 = vector.shape_cast %40 : vector<2x64xf32> to vector<1x2x64xf32>
    tpu.vector_store %arg7[%c0_17, %c0_18, %c0_19], %43 {strides = array<i32>} : memref<1x2x64xf32, #tpu.memory_space<vmem>>, vector<1x2x64xf32>,
    %44 = vector.shape_cast %34 : vector<16x64xf32> to vector<1x4x4x64xf32>
    %c0_20 = arith.constant 0 : index
    %c0_21 = arith.constant 0 : index
    %c0_22 = arith.constant 0 : index
    %c0_23 = arith.constant 0 : index
    %45 = vector.load %arg6[%c0_20, %c0_21, %c0_22, %c0_23] : memref<1x4x4x64xf32, #tpu.memory_space<vmem>>, vector<1x4x4x64xf32>
    tpu.vector_store %arg6[%c0_20, %c0_21, %c0_22, %c0_23], %44 {strides = array<i32>} : memref<1x4x4x64xf32, #tpu.memory_space<vmem>>, vector<1x4x4x64xf32>,
    return
  }
  func.func @transform_0(%arg0: i32) -> (i32, i32, i32, i32) {
    %c0_i32 = arith.constant 0 : i32
    %c0_i32_0 = arith.constant 0 : i32
    %c0_i32_1 = arith.constant 0 : i32
    %c0_i32_2 = arith.constant 0 : i32
    return %arg0, %c0_i32, %c0_i32_0, %c0_i32_1 : i32, i32, i32, i32
  }
  func.func @transform_1(%arg0: i32) -> (i32, i32) {
    %c0_i32 = arith.constant 0 : i32
    %c0_i32_0 = arith.constant 0 : i32
    %c0_i32_1 = arith.constant 0 : i32
    return %c0_i32, %c0_i32_0 : i32, i32
  }
  func.func @transform_2(%arg0: i32) -> (i32, i32) {
    %c0_i32 = arith.constant 0 : i32
    %c0_i32_0 = arith.constant 0 : i32
    %c0_i32_1 = arith.constant 0 : i32
    return %c0_i32, %c0_i32_0 : i32, i32
  }
  func.func @transform_3(%arg0: i32) -> (i32, i32) {
    %c0_i32 = arith.constant 0 : i32
    %c0_i32_0 = arith.constant 0 : i32
    %c0_i32_1 = arith.constant 0 : i32
    return %c0_i32, %c0_i32_0 : i32, i32
  }
  func.func @transform_4(%arg0: i32) -> (i32, i32) {
    %c0_i32 = arith.constant 0 : i32
    %c0_i32_0 = arith.constant 0 : i32
    %c0_i32_1 = arith.constant 0 : i32
    return %c0_i32, %c0_i32_0 : i32, i32
  }
  func.func @transform_5(%arg0: i32) -> (i32, i32, i32, i32) {
    %c0_i32 = arith.constant 0 : i32
    %c0_i32_0 = arith.constant 0 : i32
    %c0_i32_1 = arith.constant 0 : i32
    %c0_i32_2 = arith.constant 0 : i32
    return %arg0, %c0_i32, %c0_i32_0, %c0_i32_1 : i32, i32, i32, i32
  }
  func.func @transform_6(%arg0: i32) -> (i32, i32, i32) {
    %c0_i32 = arith.constant 0 : i32
    %c0_i32_0 = arith.constant 0 : i32
    %c0_i32_1 = arith.constant 0 : i32
    return %arg0, %c0_i32, %c0_i32_0 : i32, i32, i32
  }
}

module attributes {stable_mosaic.version = 11 : i64} {
  func.func @kernel(%arg0: i32, %arg1: memref<1x2x2x256xf32, #tpu.memory_space<vmem>>, %arg2: memref<1x256xf32, #tpu.memory_space<vmem>>, %arg3: memref<1x256xf32, #tpu.memory_space<vmem>>, %arg4: memref<1x2x2x256xf32, #tpu.memory_space<vmem>>, %arg5: memref<576x128xbf16, #tpu.memory_space<vmem>>, %arg6: memref<1x2x2x128xf32, #tpu.memory_space<vmem>>, %arg7: memref<1x2x128xf32, #tpu.memory_space<vmem>>) attributes {dimension_semantics = [#tpu.dimension_semantics<parallel>], iteration_bounds = array<i64: 2>, scalar_prefetch = 0 : i64, scratch_operands = 0 : i64, tpu.core_type = #tpu.core_type<tc>, window_params = [{transform_indices = @transform_0, window_bounds = array<i64: 1, 2, 2, 256>}, {pipeline_mode = #tpu.pipeline_mode<synchronous>, transform_indices = @transform_1, window_bounds = array<i64: 1, 256>}, {pipeline_mode = #tpu.pipeline_mode<synchronous>, transform_indices = @transform_2, window_bounds = array<i64: 1, 256>}, {transform_indices = @transform_3, window_bounds = array<i64: 1, 2, 2, 256>}, {pipeline_mode = #tpu.pipeline_mode<synchronous>, transform_indices = @transform_4, window_bounds = array<i64: 576, 128>}, {transform_indices = @transform_5, window_bounds = array<i64: 1, 2, 2, 128>}, {transform_indices = @transform_6, window_bounds = array<i64: 1, 2, 128>}]} {
    %c0 = arith.constant 0 : index
    %c0_0 = arith.constant 0 : index
    %c0_1 = arith.constant 0 : index
    %c0_2 = arith.constant 0 : index
    %0 = vector.load %arg1[%c0, %c0_0, %c0_1, %c0_2] : memref<1x2x2x256xf32, #tpu.memory_space<vmem>>, vector<1x2x2x256xf32>
    %c0_3 = arith.constant 0 : index
    %c0_4 = arith.constant 0 : index
    %1 = vector.load %arg2[%c0_3, %c0_4] : memref<1x256xf32, #tpu.memory_space<vmem>>, vector<1x256xf32>
    %2 = vector.shape_cast %1 : vector<1x256xf32> to vector<1x1x1x256xf32>
    %3 = vector.broadcast %2 : vector<1x1x1x256xf32> to vector<1x2x2x256xf32>
    %4 = arith.mulf %0, %3 : vector<1x2x2x256xf32>
    %c0_5 = arith.constant 0 : index
    %c0_6 = arith.constant 0 : index
    %5 = vector.load %arg3[%c0_5, %c0_6] : memref<1x256xf32, #tpu.memory_space<vmem>>, vector<1x256xf32>
    %6 = vector.shape_cast %5 : vector<1x256xf32> to vector<1x1x1x256xf32>
    %7 = vector.broadcast %6 : vector<1x1x1x256xf32> to vector<1x2x2x256xf32>
    %8 = arith.addf %4, %7 : vector<1x2x2x256xf32>
    %c0_7 = arith.constant 0 : index
    %c0_8 = arith.constant 0 : index
    %c0_9 = arith.constant 0 : index
    %c0_10 = arith.constant 0 : index
    %9 = vector.load %arg4[%c0_7, %c0_8, %c0_9, %c0_10] : memref<1x2x2x256xf32, #tpu.memory_space<vmem>>, vector<1x2x2x256xf32>
    %cst = arith.constant 1.000000e-01 : f32
    %10 = vector.broadcast %cst : f32 to vector<1x2x2x256xf32>
    %11 = arith.mulf %10, %8 : vector<1x2x2x256xf32>
    %12 = arith.addf %9, %11 : vector<1x2x2x256xf32>
    %13 = arith.truncf %12 : vector<1x2x2x256xf32> to vector<1x2x2x256xbf16>
    %14 = vector.extract_strided_slice %13 {offsets = [0, 0, 0, 192], sizes = [1, 2, 2, 64], strides = [1, 1, 1, 1]} : vector<1x2x2x256xbf16> to vector<1x2x2x64xbf16>
    %cst_11 = arith.constant 0.000000e+00 : bf16
    %15 = vector.broadcast %cst_11 : bf16 to vector<1x1x2x64xbf16>
    %16 = tpu.concatenate %15, %14 in 1 : vector<1x1x2x64xbf16>, vector<1x2x2x64xbf16> -> vector<1x3x2x64xbf16>
    %17 = vector.extract_strided_slice %16 {offsets = [0, 0, 0, 0], sizes = [1, 2, 2, 64], strides = [1, 1, 1, 1]} : vector<1x3x2x64xbf16> to vector<1x2x2x64xbf16>
    %cst_12 = arith.constant 0.000000e+00 : bf16
    %18 = vector.broadcast %cst_12 : bf16 to vector<1x2x1x64xbf16>
    %19 = tpu.concatenate %18, %17 in 2 : vector<1x2x1x64xbf16>, vector<1x2x2x64xbf16> -> vector<1x2x3x64xbf16>
    %20 = vector.extract_strided_slice %19 {offsets = [0, 0, 0, 0], sizes = [1, 2, 2, 64], strides = [1, 1, 1, 1]} : vector<1x2x3x64xbf16> to vector<1x2x2x64xbf16>
    %21 = vector.extract_strided_slice %13 {offsets = [0, 0, 0, 128], sizes = [1, 2, 2, 64], strides = [1, 1, 1, 1]} : vector<1x2x2x256xbf16> to vector<1x2x2x64xbf16>
    %cst_13 = arith.constant 0.000000e+00 : bf16
    %22 = vector.broadcast %cst_13 : bf16 to vector<1x1x2x64xbf16>
    %23 = tpu.concatenate %22, %21 in 1 : vector<1x1x2x64xbf16>, vector<1x2x2x64xbf16> -> vector<1x3x2x64xbf16>
    %24 = vector.extract_strided_slice %23 {offsets = [0, 0, 0, 0], sizes = [1, 2, 2, 64], strides = [1, 1, 1, 1]} : vector<1x3x2x64xbf16> to vector<1x2x2x64xbf16>
    %25 = vector.extract_strided_slice %13 {offsets = [0, 0, 0, 192], sizes = [1, 2, 2, 64], strides = [1, 1, 1, 1]} : vector<1x2x2x256xbf16> to vector<1x2x2x64xbf16>
    %cst_14 = arith.constant 0.000000e+00 : bf16
    %26 = vector.broadcast %cst_14 : bf16 to vector<1x1x2x64xbf16>
    %27 = tpu.concatenate %26, %25 in 1 : vector<1x1x2x64xbf16>, vector<1x2x2x64xbf16> -> vector<1x3x2x64xbf16>
    %28 = vector.extract_strided_slice %27 {offsets = [0, 0, 0, 0], sizes = [1, 2, 2, 64], strides = [1, 1, 1, 1]} : vector<1x3x2x64xbf16> to vector<1x2x2x64xbf16>
    %29 = vector.extract_strided_slice %13 {offsets = [0, 0, 0, 64], sizes = [1, 2, 2, 64], strides = [1, 1, 1, 1]} : vector<1x2x2x256xbf16> to vector<1x2x2x64xbf16>
    %cst_15 = arith.constant 0.000000e+00 : bf16
    %30 = vector.broadcast %cst_15 : bf16 to vector<1x2x1x64xbf16>
    %31 = tpu.concatenate %30, %29 in 2 : vector<1x2x1x64xbf16>, vector<1x2x2x64xbf16> -> vector<1x2x3x64xbf16>
    %32 = vector.extract_strided_slice %31 {offsets = [0, 0, 0, 0], sizes = [1, 2, 2, 64], strides = [1, 1, 1, 1]} : vector<1x2x3x64xbf16> to vector<1x2x2x64xbf16>
    %33 = vector.extract_strided_slice %13 {offsets = [0, 0, 0, 0], sizes = [1, 2, 2, 64], strides = [1, 1, 1, 1]} : vector<1x2x2x256xbf16> to vector<1x2x2x64xbf16>
    %34 = vector.extract_strided_slice %13 {offsets = [0, 0, 0, 64], sizes = [1, 2, 2, 64], strides = [1, 1, 1, 1]} : vector<1x2x2x256xbf16> to vector<1x2x2x64xbf16>
    %35 = vector.extract_strided_slice %13 {offsets = [0, 0, 0, 192], sizes = [1, 2, 2, 64], strides = [1, 1, 1, 1]} : vector<1x2x2x256xbf16> to vector<1x2x2x64xbf16>
    %cst_16 = arith.constant 0.000000e+00 : bf16
    %36 = vector.broadcast %cst_16 : bf16 to vector<1x2x1x64xbf16>
    %37 = tpu.concatenate %36, %35 in 2 : vector<1x2x1x64xbf16>, vector<1x2x2x64xbf16> -> vector<1x2x3x64xbf16>
    %38 = vector.extract_strided_slice %37 {offsets = [0, 0, 0, 0], sizes = [1, 2, 2, 64], strides = [1, 1, 1, 1]} : vector<1x2x3x64xbf16> to vector<1x2x2x64xbf16>
    %39 = vector.extract_strided_slice %13 {offsets = [0, 0, 0, 128], sizes = [1, 2, 2, 64], strides = [1, 1, 1, 1]} : vector<1x2x2x256xbf16> to vector<1x2x2x64xbf16>
    %40 = vector.extract_strided_slice %13 {offsets = [0, 0, 0, 192], sizes = [1, 2, 2, 64], strides = [1, 1, 1, 1]} : vector<1x2x2x256xbf16> to vector<1x2x2x64xbf16>
    %41 = tpu.concatenate %20, %24, %28, %32, %33, %34, %38, %39, %40 in 3 : vector<1x2x2x64xbf16>, vector<1x2x2x64xbf16>, vector<1x2x2x64xbf16>, vector<1x2x2x64xbf16>, vector<1x2x2x64xbf16>, vector<1x2x2x64xbf16>, vector<1x2x2x64xbf16>, vector<1x2x2x64xbf16>, vector<1x2x2x64xbf16> -> vector<1x2x2x576xbf16>
    %42 = vector.shape_cast %41 : vector<1x2x2x576xbf16> to vector<4x576xbf16>
    %c0_17 = arith.constant 0 : index
    %c0_18 = arith.constant 0 : index
    %43 = vector.load %arg5[%c0_17, %c0_18] : memref<576x128xbf16, #tpu.memory_space<vmem>>, vector<576x128xbf16>
    %cst_19 = arith.constant dense<0.000000e+00> : vector<4x128xf32>
    %44 = tpu.matmul %42, %43, %cst_19 {dimension_numbers = #tpu.dot_dimension_numbers<[1], [0], [0], [1], [0, 0, 1, 1], [], []>} : vector<4x576xbf16>, vector<576x128xbf16>, vector<4x128xf32> -> vector<4x128xf32>
    %cst_20 = arith.constant dense<0.000000e+00> : vector<128xf32>
    %45 = vector.multi_reduction <add>, %44, %cst_20 [0] : vector<4x128xf32> to vector<128xf32>
    %46 = vector.shape_cast %45 : vector<128xf32> to vector<1x128xf32>
    %47 = arith.mulf %44, %44 : vector<4x128xf32>
    %cst_21 = arith.constant dense<0.000000e+00> : vector<128xf32>
    %48 = vector.multi_reduction <add>, %47, %cst_21 [0] : vector<4x128xf32> to vector<128xf32>
    %49 = vector.shape_cast %48 : vector<128xf32> to vector<1x128xf32>
    %50 = tpu.concatenate %46, %49 in 0 : vector<1x128xf32>, vector<1x128xf32> -> vector<2x128xf32>
    %c0_22 = arith.constant 0 : index
    %c0_23 = arith.constant 0 : index
    %c0_24 = arith.constant 0 : index
    %51 = vector.load %arg7[%c0_22, %c0_23, %c0_24] : memref<1x2x128xf32, #tpu.memory_space<vmem>>, vector<1x2x128xf32>
    %52 = vector.shape_cast %51 : vector<1x2x128xf32> to vector<2x128xf32>
    %53 = vector.shape_cast %50 : vector<2x128xf32> to vector<1x2x128xf32>
    tpu.vector_store %arg7[%c0_22, %c0_23, %c0_24], %53 {strides = array<i32>} : memref<1x2x128xf32, #tpu.memory_space<vmem>>, vector<1x2x128xf32>,
    %54 = vector.shape_cast %44 : vector<4x128xf32> to vector<1x2x2x128xf32>
    %c0_25 = arith.constant 0 : index
    %c0_26 = arith.constant 0 : index
    %c0_27 = arith.constant 0 : index
    %c0_28 = arith.constant 0 : index
    %55 = vector.load %arg6[%c0_25, %c0_26, %c0_27, %c0_28] : memref<1x2x2x128xf32, #tpu.memory_space<vmem>>, vector<1x2x2x128xf32>
    tpu.vector_store %arg6[%c0_25, %c0_26, %c0_27, %c0_28], %54 {strides = array<i32>} : memref<1x2x2x128xf32, #tpu.memory_space<vmem>>, vector<1x2x2x128xf32>,
    return
  }
  func.func @transform_0(%arg0: i32) -> (i32, i32, i32, i32) {
    %c0_i32 = arith.constant 0 : i32
    %c0_i32_0 = arith.constant 0 : i32
    %c0_i32_1 = arith.constant 0 : i32
    %c0_i32_2 = arith.constant 0 : i32
    return %arg0, %c0_i32, %c0_i32_0, %c0_i32_1 : i32, i32, i32, i32
  }
  func.func @transform_1(%arg0: i32) -> (i32, i32) {
    %c0_i32 = arith.constant 0 : i32
    %c0_i32_0 = arith.constant 0 : i32
    %c0_i32_1 = arith.constant 0 : i32
    return %c0_i32, %c0_i32_0 : i32, i32
  }
  func.func @transform_2(%arg0: i32) -> (i32, i32) {
    %c0_i32 = arith.constant 0 : i32
    %c0_i32_0 = arith.constant 0 : i32
    %c0_i32_1 = arith.constant 0 : i32
    return %c0_i32, %c0_i32_0 : i32, i32
  }
  func.func @transform_3(%arg0: i32) -> (i32, i32, i32, i32) {
    %c0_i32 = arith.constant 0 : i32
    %c0_i32_0 = arith.constant 0 : i32
    %c0_i32_1 = arith.constant 0 : i32
    %c0_i32_2 = arith.constant 0 : i32
    return %arg0, %c0_i32, %c0_i32_0, %c0_i32_1 : i32, i32, i32, i32
  }
  func.func @transform_4(%arg0: i32) -> (i32, i32) {
    %c0_i32 = arith.constant 0 : i32
    %c0_i32_0 = arith.constant 0 : i32
    %c0_i32_1 = arith.constant 0 : i32
    return %c0_i32, %c0_i32_0 : i32, i32
  }
  func.func @transform_5(%arg0: i32) -> (i32, i32, i32, i32) {
    %c0_i32 = arith.constant 0 : i32
    %c0_i32_0 = arith.constant 0 : i32
    %c0_i32_1 = arith.constant 0 : i32
    %c0_i32_2 = arith.constant 0 : i32
    return %arg0, %c0_i32, %c0_i32_0, %c0_i32_1 : i32, i32, i32, i32
  }
  func.func @transform_6(%arg0: i32) -> (i32, i32, i32) {
    %c0_i32 = arith.constant 0 : i32
    %c0_i32_0 = arith.constant 0 : i32
    %c0_i32_1 = arith.constant 0 : i32
    return %arg0, %c0_i32, %c0_i32_0 : i32, i32, i32
  }
}

module attributes {stable_mosaic.version = 11 : i64} {
  func.func @kernel(%arg0: i32, %arg1: memref<1x1x1x512xf32, #tpu.memory_space<vmem>>, %arg2: memref<1x512xf32, #tpu.memory_space<vmem>>, %arg3: memref<1x512xf32, #tpu.memory_space<vmem>>, %arg4: memref<1x1152xf32, #tpu.memory_space<vmem>>, %arg5: memref<1x1x1xf32, #tpu.memory_space<vmem>>) attributes {dimension_semantics = [#tpu.dimension_semantics<parallel>], iteration_bounds = array<i64: 2>, scalar_prefetch = 0 : i64, scratch_operands = 0 : i64, tpu.core_type = #tpu.core_type<tc>, window_params = [{transform_indices = @transform_0, window_bounds = array<i64: 1, 1, 1, 512>}, {pipeline_mode = #tpu.pipeline_mode<synchronous>, transform_indices = @transform_1, window_bounds = array<i64: 1, 512>}, {pipeline_mode = #tpu.pipeline_mode<synchronous>, transform_indices = @transform_2, window_bounds = array<i64: 1, 512>}, {pipeline_mode = #tpu.pipeline_mode<synchronous>, transform_indices = @transform_3, window_bounds = array<i64: 1, 1152>}, {transform_indices = @transform_4, window_bounds = array<i64: 1, 1, 1>}]} {
    %c0 = arith.constant 0 : index
    %c0_0 = arith.constant 0 : index
    %c0_1 = arith.constant 0 : index
    %c0_2 = arith.constant 0 : index
    %0 = vector.load %arg1[%c0, %c0_0, %c0_1, %c0_2] : memref<1x1x1x512xf32, #tpu.memory_space<vmem>>, vector<1x1x1x512xf32>
    %c0_3 = arith.constant 0 : index
    %c0_4 = arith.constant 0 : index
    %1 = vector.load %arg2[%c0_3, %c0_4] : memref<1x512xf32, #tpu.memory_space<vmem>>, vector<1x512xf32>
    %2 = vector.shape_cast %1 : vector<1x512xf32> to vector<1x1x1x512xf32>
    %3 = arith.mulf %0, %2 : vector<1x1x1x512xf32>
    %c0_5 = arith.constant 0 : index
    %c0_6 = arith.constant 0 : index
    %4 = vector.load %arg3[%c0_5, %c0_6] : memref<1x512xf32, #tpu.memory_space<vmem>>, vector<1x512xf32>
    %5 = vector.shape_cast %4 : vector<1x512xf32> to vector<1x1x1x512xf32>
    %6 = arith.addf %3, %5 : vector<1x1x1x512xf32>
    %cst = arith.constant 0.000000e+00 : f32
    %7 = vector.broadcast %cst : f32 to vector<1x1x1x512xf32>
    %8 = arith.cmpf ogt, %6, %7 : vector<1x1x1x512xf32>
    %cst_7 = arith.constant 2.000000e-01 : f32
    %9 = vector.broadcast %cst_7 : f32 to vector<1x1x1x512xf32>
    %10 = arith.mulf %9, %6 : vector<1x1x1x512xf32>
    %11 = arith.select %8, %6, %10 : vector<1x1x1x512xi1>, vector<1x1x1x512xf32>
    %12 = vector.extract_strided_slice %11 {offsets = [0, 0, 0, 384], sizes = [1, 1, 1, 128], strides = [1, 1, 1, 1]} : vector<1x1x1x512xf32> to vector<1x1x1x128xf32>
    %cst_8 = arith.constant 0.000000e+00 : f32
    %13 = vector.broadcast %cst_8 : f32 to vector<1x1x1x128xf32>
    %14 = tpu.concatenate %13, %12 in 1 : vector<1x1x1x128xf32>, vector<1x1x1x128xf32> -> vector<1x2x1x128xf32>
    %15 = vector.extract_strided_slice %14 {offsets = [0, 0, 0, 0], sizes = [1, 1, 1, 128], strides = [1, 1, 1, 1]} : vector<1x2x1x128xf32> to vector<1x1x1x128xf32>
    %cst_9 = arith.constant 0.000000e+00 : f32
    %16 = vector.broadcast %cst_9 : f32 to vector<1x1x1x128xf32>
    %17 = tpu.concatenate %16, %15 in 2 : vector<1x1x1x128xf32>, vector<1x1x1x128xf32> -> vector<1x1x2x128xf32>
    %18 = vector.extract_strided_slice %17 {offsets = [0, 0, 0, 0], sizes = [1, 1, 1, 128], strides = [1, 1, 1, 1]} : vector<1x1x2x128xf32> to vector<1x1x1x128xf32>
    %19 = vector.extract_strided_slice %11 {offsets = [0, 0, 0, 256], sizes = [1, 1, 1, 128], strides = [1, 1, 1, 1]} : vector<1x1x1x512xf32> to vector<1x1x1x128xf32>
    %cst_10 = arith.constant 0.000000e+00 : f32
    %20 = vector.broadcast %cst_10 : f32 to vector<1x1x1x128xf32>
    %21 = tpu.concatenate %20, %19 in 1 : vector<1x1x1x128xf32>, vector<1x1x1x128xf32> -> vector<1x2x1x128xf32>
    %22 = vector.extract_strided_slice %21 {offsets = [0, 0, 0, 0], sizes = [1, 1, 1, 128], strides = [1, 1, 1, 1]} : vector<1x2x1x128xf32> to vector<1x1x1x128xf32>
    %23 = vector.extract_strided_slice %11 {offsets = [0, 0, 0, 384], sizes = [1, 1, 1, 128], strides = [1, 1, 1, 1]} : vector<1x1x1x512xf32> to vector<1x1x1x128xf32>
    %cst_11 = arith.constant 0.000000e+00 : f32
    %24 = vector.broadcast %cst_11 : f32 to vector<1x1x1x128xf32>
    %25 = tpu.concatenate %24, %23 in 1 : vector<1x1x1x128xf32>, vector<1x1x1x128xf32> -> vector<1x2x1x128xf32>
    %26 = vector.extract_strided_slice %25 {offsets = [0, 0, 0, 0], sizes = [1, 1, 1, 128], strides = [1, 1, 1, 1]} : vector<1x2x1x128xf32> to vector<1x1x1x128xf32>
    %27 = vector.extract_strided_slice %11 {offsets = [0, 0, 0, 128], sizes = [1, 1, 1, 128], strides = [1, 1, 1, 1]} : vector<1x1x1x512xf32> to vector<1x1x1x128xf32>
    %cst_12 = arith.constant 0.000000e+00 : f32
    %28 = vector.broadcast %cst_12 : f32 to vector<1x1x1x128xf32>
    %29 = tpu.concatenate %28, %27 in 2 : vector<1x1x1x128xf32>, vector<1x1x1x128xf32> -> vector<1x1x2x128xf32>
    %30 = vector.extract_strided_slice %29 {offsets = [0, 0, 0, 0], sizes = [1, 1, 1, 128], strides = [1, 1, 1, 1]} : vector<1x1x2x128xf32> to vector<1x1x1x128xf32>
    %31 = vector.extract_strided_slice %11 {offsets = [0, 0, 0, 0], sizes = [1, 1, 1, 128], strides = [1, 1, 1, 1]} : vector<1x1x1x512xf32> to vector<1x1x1x128xf32>
    %32 = vector.extract_strided_slice %11 {offsets = [0, 0, 0, 128], sizes = [1, 1, 1, 128], strides = [1, 1, 1, 1]} : vector<1x1x1x512xf32> to vector<1x1x1x128xf32>
    %33 = vector.extract_strided_slice %11 {offsets = [0, 0, 0, 384], sizes = [1, 1, 1, 128], strides = [1, 1, 1, 1]} : vector<1x1x1x512xf32> to vector<1x1x1x128xf32>
    %cst_13 = arith.constant 0.000000e+00 : f32
    %34 = vector.broadcast %cst_13 : f32 to vector<1x1x1x128xf32>
    %35 = tpu.concatenate %34, %33 in 2 : vector<1x1x1x128xf32>, vector<1x1x1x128xf32> -> vector<1x1x2x128xf32>
    %36 = vector.extract_strided_slice %35 {offsets = [0, 0, 0, 0], sizes = [1, 1, 1, 128], strides = [1, 1, 1, 1]} : vector<1x1x2x128xf32> to vector<1x1x1x128xf32>
    %37 = vector.extract_strided_slice %11 {offsets = [0, 0, 0, 256], sizes = [1, 1, 1, 128], strides = [1, 1, 1, 1]} : vector<1x1x1x512xf32> to vector<1x1x1x128xf32>
    %38 = vector.extract_strided_slice %11 {offsets = [0, 0, 0, 384], sizes = [1, 1, 1, 128], strides = [1, 1, 1, 1]} : vector<1x1x1x512xf32> to vector<1x1x1x128xf32>
    %39 = tpu.concatenate %18, %22, %26, %30, %31, %32, %36, %37, %38 in 3 : vector<1x1x1x128xf32>, vector<1x1x1x128xf32>, vector<1x1x1x128xf32>, vector<1x1x1x128xf32>, vector<1x1x1x128xf32>, vector<1x1x1x128xf32>, vector<1x1x1x128xf32>, vector<1x1x1x128xf32>, vector<1x1x1x128xf32> -> vector<1x1x1x1152xf32>
    %c0_14 = arith.constant 0 : index
    %c0_15 = arith.constant 0 : index
    %40 = vector.load %arg4[%c0_14, %c0_15] : memref<1x1152xf32, #tpu.memory_space<vmem>>, vector<1x1152xf32>
    %41 = vector.shape_cast %40 : vector<1x1152xf32> to vector<1x1x1x1152xf32>
    %42 = arith.mulf %39, %41 : vector<1x1x1x1152xf32>
    %cst_16 = arith.constant dense<0.000000e+00> : vector<1x1x1xf32>
    %43 = vector.multi_reduction <add>, %42, %cst_16 [3] : vector<1x1x1x1152xf32> to vector<1x1x1xf32>
    %cst_17 = arith.constant 0.000000e+00 : f32
    %44 = vector.broadcast %cst_17 : f32 to vector<1x1x1xf32>
    %45 = arith.subf %44, %43 : vector<1x1x1xf32>
    %46 = math.exp %45 : vector<1x1x1xf32>
    %cst_18 = arith.constant 1.000000e+00 : f32
    %47 = vector.broadcast %cst_18 : f32 to vector<1x1x1xf32>
    %48 = arith.addf %47, %46 : vector<1x1x1xf32>
    %cst_19 = arith.constant 1.000000e+00 : f32
    %49 = vector.broadcast %cst_19 : f32 to vector<1x1x1xf32>
    %50 = arith.divf %49, %48 : vector<1x1x1xf32>
    %c0_20 = arith.constant 0 : index
    %c0_21 = arith.constant 0 : index
    %c0_22 = arith.constant 0 : index
    %51 = vector.load %arg5[%c0_20, %c0_21, %c0_22] : memref<1x1x1xf32, #tpu.memory_space<vmem>>, vector<1x1x1xf32>
    tpu.vector_store %arg5[%c0_20, %c0_21, %c0_22], %50 {strides = array<i32>} : memref<1x1x1xf32, #tpu.memory_space<vmem>>, vector<1x1x1xf32>,
    return
  }
  func.func @transform_0(%arg0: i32) -> (i32, i32, i32, i32) {
    %c0_i32 = arith.constant 0 : i32
    %c0_i32_0 = arith.constant 0 : i32
    %c0_i32_1 = arith.constant 0 : i32
    %c0_i32_2 = arith.constant 0 : i32
    return %arg0, %c0_i32, %c0_i32_0, %c0_i32_1 : i32, i32, i32, i32
  }
  func.func @transform_1(%arg0: i32) -> (i32, i32) {
    %c0_i32 = arith.constant 0 : i32
    %c0_i32_0 = arith.constant 0 : i32
    %c0_i32_1 = arith.constant 0 : i32
    return %c0_i32, %c0_i32_0 : i32, i32
  }
  func.func @transform_2(%arg0: i32) -> (i32, i32) {
    %c0_i32 = arith.constant 0 : i32
    %c0_i32_0 = arith.constant 0 : i32
    %c0_i32_1 = arith.constant 0 : i32
    return %c0_i32, %c0_i32_0 : i32, i32
  }
  func.func @transform_3(%arg0: i32) -> (i32, i32) {
    %c0_i32 = arith.constant 0 : i32
    %c0_i32_0 = arith.constant 0 : i32
    %c0_i32_1 = arith.constant 0 : i32
    return %c0_i32, %c0_i32_0 : i32, i32
  }
  func.func @transform_4(%arg0: i32) -> (i32, i32, i32) {
    %c0_i32 = arith.constant 0 : i32
    %c0_i32_0 = arith.constant 0 : i32
    %c0_i32_1 = arith.constant 0 : i32
    return %arg0, %c0_i32, %c0_i32_0 : i32, i32, i32
  }
}

</mosaic_0001>

<llo_original>
// kernel: netd_forward.9
$region0: #{netd_forward.9}
  #allocation0 [shape = 'u32[]', space=smem, size = 0x4, offset = 0x4, fixed_abs, tag = 'smem constant byte address 0x4 - core index']
  #allocation1 [shape = 'u32[144,128]{1,0:T(1,128)}', space=vmem, size = 0x12000, scoped, tag = 'internal scratch']
  %s0 = inlined_call_operand.vmem [shape: f32[2,8,8,32], index: 0, kind: input, shape index: {}]
  %s1 = inlined_call_operand.vmem [shape: bf16[288,32], index: 1, kind: input, shape index: {}]
  %s2 = inlined_call_operand.vmem [shape: f32[1,32], index: 2, kind: input, shape index: {}]
  %s3 = inlined_call_operand.vmem [shape: f32[2,8,8,32], index: 3, kind: output, shape index: {0}]
  %s4 = inlined_call_operand.vmem [shape: f32[2,2,32], index: 4, kind: output, shape index: {1}]
  %5 = xla_tuple %s3, %s4
  %s6 = sld [smem:[#allocation0]]
  $region53: #{netd_forward.9} parent=0
    _
  %s8 = ssub.s32 1, %s6
  %s9 = scalar_select 0, %s8, %s6
  loop: start=0, step=1, limit=4
  $region2: #{netd_forward.9} parent=0 // loop_pre_header
    _
  $region3: #{netd_forward.9} parent=0 // loop_header
    %s11 = sphi 0, %s15
    %p12 = scmp.ge.s32.totalorder %s11, 4
    %s21 = sphi 0, %s23
    %s24 = sphi 0, %s21
    %s25 = sphi 0, %s24
    %s41 = sphi 0, %s25
    %s45 = sphi 0, %s45
    %s47 = sphi 0, %s45
    %s48 = sphi 0, %s47
    %s62 = sphi 0, %s48
    %s66 = sphi 0, %s66
    %s68 = sphi 0, %s66
    %s69 = sphi 0, %s68
    %s83 = sphi 0, %s69
    %s89 = sphi 0, %s91
    %s92 = sphi 0, %s89
    %s93 = sphi 0, %s92
    %s109 = sphi 0, %s93
    %s115 = sphi 0, %s117
    %s118 = sphi 0, %s115
    %s119 = sphi 0, %s118
    %s135 = sphi 0, %s119
  $region4: #{netd_forward.9} parent=0 // loop_header_branch
    %14 = sbr.rel (%p12) target = $region8
  $region5: #{netd_forward.9} parent=0 // loop_body
    %s16 = ssub.s32 %s11, 1
    %s17 = ssub.s32 %s11, 2
    %s18 = sadd.s32 %s11, 1
    %s19 = ssub.s32 %s11, %s18
    %p20 = scmp.eq.s32.totalorder %s19, 0
    %s22 = sadd.s32 %s21, 1
    %s23 = scalar_select %p20, %s21, %s22
    %p26 = pneg %p20
    %p27 = scmp.eq.s32.totalorder %s11, 1
    %p28 = por %p26, %p27
    %p29 = scmp.ne.s32.totalorder %s21, %s24
    %p30 = scmp.eq.s32.totalorder %s11, 0
    %p31 = por %p29, %p30
    %p32 = scmp.ne.s32.totalorder %s21, %s24
    %p33 = scmp.eq.s32.totalorder %s16, 1
    %p34 = por %p32, %p33
    %p35 = scmp.ne.s32.totalorder %s24, %s25
    %p36 = scmp.eq.s32.totalorder %s16, 0
    %p37 = por %p35, %p36
    %p38 = scmp.ne.s32.totalorder %s24, %s25
    %p39 = scmp.eq.s32.totalorder %s17, 1
    %p40 = por %p38, %p39
    %p42 = scmp.ne.s32.totalorder %s25, %s41
    %p43 = scmp.eq.s32.totalorder %s17, 0
    %p44 = por %p42, %p43
    %s46 = sadd.s32 %s45, 1
    %p49 = scmp.eq.s32.totalorder %s11, 1
    %p50 = scmp.ne.s32.totalorder %s45, %s47
    %p51 = scmp.eq.s32.totalorder %s11, 0
    %p52 = por %p50, %p51
    %p53 = scmp.ne.s32.totalorder %s45, %s47
    %p54 = scmp.eq.s32.totalorder %s16, 1
    %p55 = por %p53, %p54
    %p56 = scmp.ne.s32.totalorder %s47, %s48
    %p57 = scmp.eq.s32.totalorder %s16, 0
    %p58 = por %p56, %p57
    %p59 = scmp.ne.s32.totalorder %s47, %s48
    %p60 = scmp.eq.s32.totalorder %s17, 1
    %p61 = por %p59, %p60
    %p63 = scmp.ne.s32.totalorder %s48, %s62
    %p64 = scmp.eq.s32.totalorder %s17, 0
    %p65 = por %p63, %p64
    %s67 = sadd.s32 %s66, 1
    %p70 = scmp.eq.s32.totalorder %s11, 1
    %p71 = scmp.ne.s32.totalorder %s66, %s68
    %p72 = scmp.eq.s32.totalorder %s11, 0
    %p73 = por %p71, %p72
    %p74 = scmp.ne.s32.totalorder %s66, %s68
    %p75 = scmp.eq.s32.totalorder %s16, 1
    %p76 = por %p74, %p75
    %p77 = scmp.ne.s32.totalorder %s68, %s69
    %p78 = scmp.eq.s32.totalorder %s16, 0
    %p79 = por %p77, %p78
    %p80 = scmp.ne.s32.totalorder %s68, %s69
    %p81 = scmp.eq.s32.totalorder %s17, 1
    %p82 = por %p80, %p81
    %p84 = scmp.ne.s32.totalorder %s69, %s83
    %p85 = scmp.eq.s32.totalorder %s17, 0
    %p86 = por %p84, %p85
    %s87 = ssub.s32 %s11, %s18
    %p88 = scmp.eq.s32.totalorder %s87, 0
    %s90 = sadd.s32 %s89, 1
    %s91 = scalar_select %p88, %s89, %s90
    %p94 = pneg %p88
    %p95 = scmp.eq.s32.totalorder %s11, 1
    %p96 = por %p94, %p95
    %p97 = scmp.ne.s32.totalorder %s89, %s92
    %p98 = scmp.eq.s32.totalorder %s11, 0
    %p99 = por %p97, %p98
    %p100 = scmp.ne.s32.totalorder %s89, %s92
    %p101 = scmp.eq.s32.totalorder %s16, 1
    %p102 = por %p100, %p101
    %p103 = scmp.ne.s32.totalorder %s92, %s93
    %p104 = scmp.eq.s32.totalorder %s16, 0
    %p105 = por %p103, %p104
    %p106 = scmp.ne.s32.totalorder %s92, %s93
    %p107 = scmp.eq.s32.totalorder %s17, 1
    %p108 = por %p106, %p107
    %p110 = scmp.ne.s32.totalorder %s93, %s109
    %p111 = scmp.eq.s32.totalorder %s17, 0
    %p112 = por %p110, %p111
    %s113 = ssub.s32 %s11, %s18
    %p114 = scmp.eq.s32.totalorder %s113, 0
    %s116 = sadd.s32 %s115, 1
    %s117 = scalar_select %p114, %s115, %s116
    %p120 = pneg %p114
    %p121 = scmp.eq.s32.totalorder %s11, 1
    %p122 = por %p120, %p121
    %p123 = scmp.ne.s32.totalorder %s115, %s118
    %p124 = scmp.eq.s32.totalorder %s11, 0
    %p125 = por %p123, %p124
    %p126 = scmp.ne.s32.totalorder %s115, %s118
    %p127 = scmp.eq.s32.totalorder %s16, 1
    %p128 = por %p126, %p127
    %p129 = scmp.ne.s32.totalorder %s118, %s119
    %p130 = scmp.eq.s32.totalorder %s16, 0
    %p131 = por %p129, %p130
    %p132 = scmp.ne.s32.totalorder %s118, %s119
    %p133 = scmp.eq.s32.totalorder %s17, 1
    %p134 = por %p132, %p133
    %p136 = scmp.ne.s32.totalorder %s119, %s135
    %p137 = scmp.eq.s32.totalorder %s17, 0
    %p138 = por %p136, %p137
    %p139 = scmp.le.s32.totalorder 1, %s11
    %p140 = scmp.lt.s32.totalorder %s11, 3
    %p141 = pnand %p139, %p140
    %p142 = pneg %p141
    // Predicated region
    $region9: #{netd_forward.9} parent=5 // pred_check
      _
    $region10: #{netd_forward.9} parent=5 // pred_check_branch
      %144 = sbr.rel (%p141) target = $region12
    $region11: #{netd_forward.9} parent=5 // pred_region
      %s145 = ssub.s32 %s11, 1
      // Predicated region
      $region13: #{netd_forward.9} parent=11 // pred_check
        %p146 = pneg %p58
      $region14: #{netd_forward.9} parent=11 // pred_check_branch
        %148 = sbr.rel (%p146) target = $region16
      $region15: #{netd_forward.9} parent=11 // pred_region
        _
      $region16: #{netd_forward.9} parent=11 // pred_fallthru
        _
      // Predicated region
      $region17: #{netd_forward.9} parent=11 // pred_check
        %p149 = pneg %p79
      $region18: #{netd_forward.9} parent=11 // pred_check_branch
        %151 = sbr.rel (%p149) target = $region20
      $region19: #{netd_forward.9} parent=11 // pred_region
        _
      $region20: #{netd_forward.9} parent=11 // pred_fallthru
        _
    $region12: #{netd_forward.9} parent=5 // pred_fallthru
      _
    %p152 = scmp.lt.s32.totalorder %s11, 2
    // Predicated region
    $region21: #{netd_forward.9} parent=5 // pred_check
      %p153 = pneg %p152
    $region22: #{netd_forward.9} parent=5 // pred_check_branch
      %155 = sbr.rel (%p153) target = $region24
    $region23: #{netd_forward.9} parent=5 // pred_region
      // Predicated region
      $region25: #{netd_forward.9} parent=23 // pred_check
        %p156 = pneg %p31
      $region26: #{netd_forward.9} parent=23 // pred_check_branch
        %158 = sbr.rel (%p156) target = $region28
      $region27: #{netd_forward.9} parent=23 // pred_region
        %p159 = scmp.lt.s32.totalorder %s11, 1
        %s160 = scalar_select %p159, %s11, 1
        %s161 = smul.addr %s160, 8
        %s162 = smul.addr %s161, 8
        %s163 = scalar_lea.vmem %s0, %s162
      $region28: #{netd_forward.9} parent=23 // pred_fallthru
        _
    $region24: #{netd_forward.9} parent=5 // pred_fallthru
      _
    %p164 = scmp.le.s32.totalorder 1, %s11
    %p165 = scmp.lt.s32.totalorder %s11, 3
    %p166 = pnand %p164, %p165
    %p167 = pneg %p166
    // Predicated region
    $region29: #{netd_forward.9} parent=5 // pred_check
      _
    $region30: #{netd_forward.9} parent=5 // pred_check_branch
      %169 = sbr.rel (%p166) target = $region32
    $region31: #{netd_forward.9} parent=5 // pred_region
      %s170 = ssub.s32 %s11, 1
      %p171 = scmp.lt.s32.totalorder %s16, 1
      %s172 = scalar_select %p171, %s16, 1
      %s173 = smul.addr %s172, 8
      %s174 = smul.addr %s173, 8
      %s175 = scalar_lea.vmem %s0, %s174
      %p176 = pneg %p37
      %p177 = pneg %p34
      %p178 = pneg %p58
      %p179 = pneg %p55
      %p180 = pneg %p79
      %p181 = pneg %p76
      %p182 = pneg %p105
      %p183 = pneg %p102
      %p184 = scmp.lt.s32.totalorder %s16, 1
      %s185 = scalar_select %p184, %s16, 1
      %s186 = smul.addr %s185, 8
      %s187 = smul.addr %s186, 8
      %s188 = scalar_lea.vmem %s3, %s187
      %p189 = pneg %p131
      %p190 = pneg %p128
      %p191 = scmp.lt.s32.totalorder %s16, 1
      %s192 = scalar_select %p191, %s16, 1
      %s193 = smul.addr %s192, 2
      %s194 = scalar_lea.vmem %s4, %s193
      %p195 = scmp.lt.s32.totalorder %s16, 1
      %s196 = scalar_select %p195, %s16, 1
      %s197 = smul.addr %s196, 8
      %s198 = smul.addr %s197, 8
      %s199 = scalar_lea.vmem %s0, %s198
      %p200 = scmp.lt.s32.totalorder %s16, 1
      %s201 = scalar_select %p200, %s16, 1
      %s202 = smul.addr %s201, 8
      %s203 = smul.addr %s202, 8
      %s204 = scalar_lea.vmem %s3, %s203
      %p205 = scmp.lt.s32.totalorder %s16, 1
      %s206 = scalar_select %p205, %s16, 1
      %s207 = smul.addr %s206, 2
      %s208 = scalar_lea.vmem %s4, %s207
      %v210 = vld [vmem:[%s199] sm:$0xff]
      %v211 = vld [vmem:[%s199 + $0x8] sm:$0xff]
      %v212 = vld [vmem:[%s199 + $0x10] sm:$0xff]
      %v213 = vld [vmem:[%s199 + $0x18] sm:$0xff]
      %v214 = vld [vmem:[%s199 + $0x20] sm:$0xff]
      %v215 = vld [vmem:[%s199 + $0x28] sm:$0xff]
      %v216 = vld [vmem:[%s199 + $0x30] sm:$0xff]
      %v217 = vld [vmem:[%s199 + $0x38] sm:$0xff]
      %v218 = vpack.c.bf16 %v210, %v210
      %v219 = vpack.c.bf16 %v211, %v211
      %v220 = vpack.c.bf16 %v212, %v212
      %v221 = vpack.c.bf16 %v213, %v213
      %v222 = vpack.c.bf16 %v214, %v214
      %v223 = vpack.c.bf16 %v215, %v215
      %v224 = vpack.c.bf16 %v216, %v216
      %v225 = vpack.c.bf16 %v217, %v217
      %v227 = vshrl.u32 0, 16
      %v229 = vrot.slane %v227, 7
      %v230 = vshll.u32 0, 16
      %v232 = vor.u32 %v229, %v230
      %v234 = vshrl.u32 %v218, 16
      %v236 = vrot.slane %v234, 7
      %v237 = vshll.u32 %v218, 16
      %v239 = vor.u32 %v236, %v237
      %v241 = vshrl.u32 %v219, 16
      %v243 = vrot.slane %v241, 7
      %v244 = vshll.u32 %v219, 16
      %v246 = vor.u32 %v243, %v244
      %v248 = vshrl.u32 %v220, 16
      %v250 = vrot.slane %v248, 7
      %v251 = vshll.u32 %v220, 16
      %v253 = vor.u32 %v250, %v251
      %v255 = vshrl.u32 %v221, 16
      %v257 = vrot.slane %v255, 7
      %v258 = vshll.u32 %v221, 16
      %v260 = vor.u32 %v257, %v258
      %v262 = vshrl.u32 %v222, 16
      %v264 = vrot.slane %v262, 7
      %v265 = vshll.u32 %v222, 16
      %v267 = vor.u32 %v264, %v265
      %v269 = vshrl.u32 %v223, 16
      %v271 = vrot.slane %v269, 7
      %v272 = vshll.u32 %v223, 16
      %v274 = vor.u32 %v271, %v272
      %v276 = vshrl.u32 %v224, 16
      %v278 = vrot.slane %v276, 7
      %v279 = vshll.u32 %v224, 16
      %v281 = vor.u32 %v278, %v279
      %v283 = vshrl.u32 %v225, 16
      %v285 = vrot.slane %v283, 7
      %v286 = vshll.u32 %v225, 16
      %v288 = vor.u32 %v285, %v286
      %vm298 = vcmask 1040384
      %vm299 = vsmask.f32 256
      %vm300 = vmand %vm298, %vm299
      %v301 = vsel %vm300, 0, %v232
      %v302 = vsel %vm300, 0, %v239
      %v303 = vsel %vm300, 0, %v246
      %v304 = vsel %vm300, 0, %v253
      %v305 = vsel %vm300, 0, %v260
      %v306 = vsel %vm300, 0, %v267
      %v307 = vsel %vm300, 0, %v274
      %v308 = vsel %vm300, 0, %v281
      %v309 = vsel %vm300, 0, %v288
      %vm310 = vcmask 1044480
      %vm311 = vsmask.f32 4352
      %vm312 = vmand %vm310, %vm311
      %v313 = vsel %vm312, %v301, 0
      %v314 = vsel %vm312, %v302, 0
      %v315 = vsel %vm312, %v303, 0
      %v316 = vsel %vm312, %v304, 0
      %v317 = vsel %vm312, %v305, 0
      %v318 = vsel %vm312, %v306, 0
      %v319 = vsel %vm312, %v307, 0
      %v320 = vsel %vm312, %v308, 0
      %v321 = vsel %vm312, %v309, 0
      %v323 = vshrl.u32 %v313, 16
      %v325 = vshll.u32 %v313, 16
      %v327 = vrot.slane %v325, 1
      %v328 = vor.u32 %v323, %v327
      %v330 = vshrl.u32 %v314, 16
      %v332 = vshll.u32 %v314, 16
      %v334 = vrot.slane %v332, 1
      %v335 = vor.u32 %v330, %v334
      %v337 = vshrl.u32 %v315, 16
      %v339 = vshll.u32 %v315, 16
      %v341 = vrot.slane %v339, 1
      %v342 = vor.u32 %v337, %v341
      %v344 = vshrl.u32 %v316, 16
      %v346 = vshll.u32 %v316, 16
      %v348 = vrot.slane %v346, 1
      %v349 = vor.u32 %v344, %v348
      %v351 = vshrl.u32 %v317, 16
      %v353 = vshll.u32 %v317, 16
      %v355 = vrot.slane %v353, 1
      %v356 = vor.u32 %v351, %v355
      %v358 = vshrl.u32 %v318, 16
      %v360 = vshll.u32 %v318, 16
      %v362 = vrot.slane %v360, 1
      %v363 = vor.u32 %v358, %v362
      %v365 = vshrl.u32 %v319, 16
      %v367 = vshll.u32 %v319, 16
      %v369 = vrot.slane %v367, 1
      %v370 = vor.u32 %v365, %v369
      %v372 = vshrl.u32 %v320, 16
      %v374 = vshll.u32 %v320, 16
      %v376 = vrot.slane %v374, 1
      %v377 = vor.u32 %v372, %v376
      %378 = vrot.lane.b32.xlu0 %v328, 32
      %v379 = vpop.permute.xlu0 %378
      %380 = vrot.lane.b32.xlu0 %v335, 32
      %v381 = vpop.permute.xlu0 %380
      %382 = vrot.lane.b32.xlu0 %v342, 32
      %v383 = vpop.permute.xlu0 %382
      %384 = vrot.lane.b32.xlu0 %v349, 32
      %v385 = vpop.permute.xlu0 %384
      %386 = vrot.lane.b32.xlu0 %v356, 32
      %v387 = vpop.permute.xlu0 %386
      %388 = vrot.lane.b32.xlu0 %v363, 32
      %v389 = vpop.permute.xlu0 %388
      %390 = vrot.lane.b32.xlu0 %v370, 32
      %v391 = vpop.permute.xlu0 %390
      %392 = vrot.lane.b32.xlu0 %v377, 32
      %v393 = vpop.permute.xlu0 %392
      %v402 = vrot.slane %v313, 1
      %v403 = vrot.slane %v314, 1
      %v404 = vrot.slane %v315, 1
      %v405 = vrot.slane %v316, 1
      %v406 = vrot.slane %v317, 1
      %v407 = vrot.slane %v318, 1
      %v408 = vrot.slane %v319, 1
      %v409 = vrot.slane %v320, 1
      %410 = vrot.lane.b32.xlu0 %v402, 64
      %v411 = vpop.permute.xlu0 %410
      %412 = vrot.lane.b32.xlu0 %v403, 64
      %v413 = vpop.permute.xlu0 %412
      %414 = vrot.lane.b32.xlu0 %v404, 64
      %v415 = vpop.permute.xlu0 %414
      %416 = vrot.lane.b32.xlu0 %v405, 64
      %v417 = vpop.permute.xlu0 %416
      %418 = vrot.lane.b32.xlu0 %v406, 64
      %v419 = vpop.permute.xlu0 %418
      %420 = vrot.lane.b32.xlu0 %v407, 64
      %v421 = vpop.permute.xlu0 %420
      %422 = vrot.lane.b32.xlu0 %v408, 64
      %v423 = vpop.permute.xlu0 %422
      %424 = vrot.lane.b32.xlu0 %v409, 64
      %v425 = vpop.permute.xlu0 %424
      %427 = vrot.lane.b32.xlu0 %v314, 96
      %v428 = vpop.permute.xlu0 %427
      %429 = vrot.lane.b32.xlu0 %v315, 96
      %v430 = vpop.permute.xlu0 %429
      %431 = vrot.lane.b32.xlu0 %v316, 96
      %v432 = vpop.permute.xlu0 %431
      %433 = vrot.lane.b32.xlu0 %v317, 96
      %v434 = vpop.permute.xlu0 %433
      %435 = vrot.lane.b32.xlu0 %v318, 96
      %v436 = vpop.permute.xlu0 %435
      %437 = vrot.lane.b32.xlu0 %v319, 96
      %v438 = vpop.permute.xlu0 %437
      %439 = vrot.lane.b32.xlu0 %v320, 96
      %v440 = vpop.permute.xlu0 %439
      %441 = vrot.lane.b32.xlu0 %v321, 96
      %v442 = vpop.permute.xlu0 %441
      %v444 = vshrl.u32 %v321, 16
      %v446 = vshll.u32 %v321, 16
      %v448 = vrot.slane %v446, 1
      %v449 = vor.u32 %v444, %v448
      %v450 = vrot.slane %v321, 1
      %451 = vrot.lane.b32.xlu0 %v403, 32
      %v452 = vpop.permute.xlu0 %451
      %453 = vrot.lane.b32.xlu0 %v404, 32
      %v454 = vpop.permute.xlu0 %453
      %455 = vrot.lane.b32.xlu0 %v405, 32
      %v456 = vpop.permute.xlu0 %455
      %457 = vrot.lane.b32.xlu0 %v406, 32
      %v458 = vpop.permute.xlu0 %457
      %459 = vrot.lane.b32.xlu0 %v407, 32
      %v460 = vpop.permute.xlu0 %459
      %461 = vrot.lane.b32.xlu0 %v408, 32
      %v462 = vpop.permute.xlu0 %461
      %463 = vrot.lane.b32.xlu0 %v409, 32
      %v464 = vpop.permute.xlu0 %463
      %465 = vrot.lane.b32.xlu0 %v450, 32
      %v466 = vpop.permute.xlu0 %465
      %467 = vrot.lane.b32.xlu0 %v315, 64
      %v468 = vpop.permute.xlu0 %467
      %469 = vrot.lane.b32.xlu0 %v316, 64
      %v470 = vpop.permute.xlu0 %469
      %471 = vrot.lane.b32.xlu0 %v317, 64
      %v472 = vpop.permute.xlu0 %471
      %473 = vrot.lane.b32.xlu0 %v318, 64
      %v474 = vpop.permute.xlu0 %473
      %475 = vrot.lane.b32.xlu0 %v319, 64
      %v476 = vpop.permute.xlu0 %475
      %477 = vrot.lane.b32.xlu0 %v320, 64
      %v478 = vpop.permute.xlu0 %477
      %479 = vrot.lane.b32.xlu0 %v321, 64
      %v480 = vpop.permute.xlu0 %479
      %481 = vrot.lane.b32.xlu0 %v313, 64
      %v482 = vpop.permute.xlu0 %481
      %483 = vrot.lane.b32.xlu0 %v342, 96
      %v484 = vpop.permute.xlu0 %483
      %485 = vrot.lane.b32.xlu0 %v349, 96
      %v486 = vpop.permute.xlu0 %485
      %487 = vrot.lane.b32.xlu0 %v356, 96
      %v488 = vpop.permute.xlu0 %487
      %489 = vrot.lane.b32.xlu0 %v363, 96
      %v490 = vpop.permute.xlu0 %489
      %491 = vrot.lane.b32.xlu0 %v370, 96
      %v492 = vpop.permute.xlu0 %491
      %493 = vrot.lane.b32.xlu0 %v377, 96
      %v494 = vpop.permute.xlu0 %493
      %495 = vrot.lane.b32.xlu0 %v449, 96
      %v496 = vpop.permute.xlu0 %495
      %497 = vrot.lane.b32.xlu0 %v328, 96
      %v498 = vpop.permute.xlu0 %497
      %vm499 = vcmask 261120
      %v501 = vsel %vm499, %v313, %v379
      %v503 = vsel %vm499, %v314, %v381
      %v505 = vsel %vm499, %v315, %v383
      %v507 = vsel %vm499, %v316, %v385
      %v509 = vsel %vm499, %v317, %v387
      %v511 = vsel %vm499, %v318, %v389
      %v513 = vsel %vm499, %v319, %v391
      %v515 = vsel %vm499, %v320, %v393
      %vm516 = vcmask 523264
      %v518 = vsel %vm516, %v501, %v411
      %v520 = vsel %vm516, %v503, %v413
      %v522 = vsel %vm516, %v505, %v415
      %v524 = vsel %vm516, %v507, %v417
      %v526 = vsel %vm516, %v509, %v419
      %v528 = vsel %vm516, %v511, %v421
      %v530 = vsel %vm516, %v513, %v423
      %v532 = vsel %vm516, %v515, %v425
      %vm533 = vcmask 785408
      %v535 = vsel %vm533, %v518, %v428
      %v537 = vsel %vm533, %v520, %v430
      %v539 = vsel %vm533, %v522, %v432
      %v541 = vsel %vm533, %v524, %v434
      %v543 = vsel %vm533, %v526, %v436
      %v545 = vsel %vm533, %v528, %v438
      %v547 = vsel %vm533, %v530, %v440
      %v549 = vsel %vm533, %v532, %v442
      %v552 = vsel %vm499, %v335, %v452
      %v555 = vsel %vm499, %v342, %v454
      %v558 = vsel %vm499, %v349, %v456
      %v561 = vsel %vm499, %v356, %v458
      %v564 = vsel %vm499, %v363, %v460
      %v567 = vsel %vm499, %v370, %v462
      %v570 = vsel %vm499, %v377, %v464
      %v573 = vsel %vm499, %v449, %v466
      %v575 = vsel %vm516, %v552, %v468
      %v577 = vsel %vm516, %v555, %v470
      %v579 = vsel %vm516, %v558, %v472
      %v581 = vsel %vm516, %v561, %v474
      %v583 = vsel %vm516, %v564, %v476
      %v585 = vsel %vm516, %v567, %v478
      %v587 = vsel %vm516, %v570, %v480
      %v589 = vsel %vm516, %v573, %v482
      %v591 = vsel %vm533, %v575, %v484
      %v593 = vsel %vm533, %v577, %v486
      %v595 = vsel %vm533, %v579, %v488
      %v597 = vsel %vm533, %v581, %v490
      %v599 = vsel %vm533, %v583, %v492
      %v601 = vsel %vm533, %v585, %v494
      %v603 = vsel %vm533, %v587, %v496
      %v605 = vsel %vm533, %v589, %v498
      %v622 = vunpack.c.l.b16 %v535
      %v623 = vunpack.c.l.b16 %v591
      %v624 = vunpack.c.l.b16 %v404
      %v625 = vunpack.c.l.b16 %v537
      %v626 = vunpack.c.l.b16 %v593
      %v627 = vunpack.c.l.b16 %v405
      %v628 = vunpack.c.l.b16 %v539
      %v629 = vunpack.c.l.b16 %v595
      %v630 = vunpack.c.l.b16 %v406
      %v631 = vunpack.c.l.b16 %v541
      %v632 = vunpack.c.l.b16 %v597
      %v633 = vunpack.c.l.b16 %v407
      %v634 = vunpack.c.l.b16 %v543
      %v635 = vunpack.c.l.b16 %v599
      %v636 = vunpack.c.l.b16 %v408
      %v637 = vunpack.c.l.b16 %v545
      %v638 = vunpack.c.l.b16 %v601
      %v639 = vunpack.c.l.b16 %v409
      %v640 = vunpack.c.l.b16 %v547
      %v641 = vunpack.c.l.b16 %v603
      %v642 = vunpack.c.l.b16 %v450
      %v643 = vunpack.c.l.b16 %v549
      %v644 = vunpack.c.l.b16 %v605
      %v645 = vunpack.c.l.b16 %v402
      %v646 = vld [vmem:[%s1] sm:$0xf]
      %v647 = vld [vmem:[%s1 + $0x4] sm:$0xf]
      %v648 = vld [vmem:[%s1 + $0x8] sm:$0xf]
      %v649 = vld [vmem:[%s1 + $0xc] sm:$0xf]
      %v650 = vld [vmem:[%s1 + $0x10] sm:$0xf]
      %v651 = vld [vmem:[%s1 + $0x14] sm:$0xf]
      %v652 = vld [vmem:[%s1 + $0x18] sm:$0xf]
      %v653 = vld [vmem:[%s1 + $0x1c] sm:$0xf]
      %v654 = vld [vmem:[%s1 + $0x20] sm:$0xf]
      %v655 = vld [vmem:[%s1 + $0x24] sm:$0xf]
      %v656 = vld [vmem:[%s1 + $0x28] sm:$0xf]
      %v657 = vld [vmem:[%s1 + $0x2c] sm:$0xf]
      %v658 = vld [vmem:[%s1 + $0x30] sm:$0xf]
      %v659 = vld [vmem:[%s1 + $0x34] sm:$0xf]
      %v660 = vld [vmem:[%s1 + $0x38] sm:$0xf]
      %v661 = vld [vmem:[%s1 + $0x3c] sm:$0xf]
      %v662 = vld [vmem:[%s1 + $0x40] sm:$0xf]
      %v663 = vld [vmem:[%s1 + $0x44] sm:$0xf]
      %v664 = vld [vmem:[%s1 + $0x48] sm:$0xf]
      %v665 = vld [vmem:[%s1 + $0x4c] sm:$0xf]
      %v666 = vld [vmem:[%s1 + $0x50] sm:$0xf]
      %v667 = vld [vmem:[%s1 + $0x54] sm:$0xf]
      %v668 = vld [vmem:[%s1 + $0x58] sm:$0xf]
      %v669 = vld [vmem:[%s1 + $0x5c] sm:$0xf]
      %v670 = vld [vmem:[%s1 + $0x60] sm:$0xf]
      %v671 = vld [vmem:[%s1 + $0x64] sm:$0xf]
      %v672 = vld [vmem:[%s1 + $0x68] sm:$0xf]
      %v673 = vld [vmem:[%s1 + $0x6c] sm:$0xf]
      %v674 = vld [vmem:[%s1 + $0x70] sm:$0xf]
      %v675 = vld [vmem:[%s1 + $0x74] sm:$0xf]
      %v676 = vld [vmem:[%s1 + $0x78] sm:$0xf]
      %v677 = vld [vmem:[%s1 + $0x7c] sm:$0xf]
      %v678 = vld [vmem:[%s1 + $0x80] sm:$0xf]
      %v679 = vld [vmem:[%s1 + $0x84] sm:$0xf]
      %v680 = vld [vmem:[%s1 + $0x88] sm:$0xf]
      %v681 = vld [vmem:[%s1 + $0x8c] sm:$0xf]
      %v682 = vld [vmem:[%s2] sm:$0x1]
      %v684 = vlaneseq
      %v685 = vshrl.u32 %v684, 7
      %v686 = vsub.s32 0, %v685
      %v687 = vrot.slane %v682, %v686
      %v689 = vpack.c.b16 %v625, %v622
      %v690 = vpack.c.b16 %v626, %v623
      %v691 = vpack.c.b16 %v627, %v624
      %v692 = vpack.c.b16 %v631, %v628
      %v693 = vpack.c.b16 %v632, %v629
      %v694 = vpack.c.b16 %v633, %v630
      %v695 = vpack.c.b16 %v637, %v634
      %v696 = vpack.c.b16 %v638, %v635
      %v697 = vpack.c.b16 %v639, %v636
      %v698 = vpack.c.b16 %v643, %v640
      %v699 = vpack.c.b16 %v644, %v641
      %v700 = vpack.c.b16 %v645, %v642
      %v745 = vunpack.c.l.b16 %v646
      %v746 = vunpack.c.l.b16 %v647
      %v747 = vunpack.c.l.b16 %v648
      %v748 = vunpack.c.l.b16 %v649
      %v749 = vunpack.c.l.b16 %v650
      %v750 = vunpack.c.l.b16 %v651
      %v751 = vunpack.c.l.b16 %v652
      %v752 = vunpack.c.l.b16 %v653
      %v753 = vunpack.c.l.b16 %v654
      %v754 = vunpack.c.l.b16 %v655
      %v755 = vunpack.c.l.b16 %v656
      %v756 = vunpack.c.l.b16 %v657
      %v757 = vunpack.c.l.b16 %v658
      %v758 = vunpack.c.l.b16 %v659
      %v759 = vunpack.c.l.b16 %v660
      %v760 = vunpack.c.l.b16 %v661
      %v761 = vunpack.c.l.b16 %v662
      %v762 = vunpack.c.l.b16 %v663
      %v763 = vunpack.c.l.b16 %v664
      %v764 = vunpack.c.l.b16 %v665
      %v765 = vunpack.c.l.b16 %v666
      %v766 = vunpack.c.l.b16 %v667
      %v767 = vunpack.c.l.b16 %v668
      %v768 = vunpack.c.l.b16 %v669
      %v769 = vunpack.c.l.b16 %v670
      %v770 = vunpack.c.l.b16 %v671
      %v771 = vunpack.c.l.b16 %v672
      %v772 = vunpack.c.l.b16 %v673
      %v773 = vunpack.c.l.b16 %v674
      %v774 = vunpack.c.l.b16 %v675
      %v775 = vunpack.c.l.b16 %v676
      %v776 = vunpack.c.l.b16 %v677
      %v777 = vunpack.c.l.b16 %v678
      %v778 = vunpack.c.l.b16 %v679
      %v779 = vunpack.c.l.b16 %v680
      %v780 = vunpack.c.l.b16 %v681
      %v781 = vpack.c.b16 %v746, %v745
      %v782 = vpack.c.b16 %v748, %v747
      %v783 = vpack.c.b16 %v750, %v749
      %v784 = vpack.c.b16 %v752, %v751
      %v785 = vpack.c.b16 %v754, %v753
      %v786 = vpack.c.b16 %v756, %v755
      %v787 = vpack.c.b16 %v758, %v757
      %v788 = vpack.c.b16 %v760, %v759
      %v789 = vpack.c.b16 %v762, %v761
      %v790 = vpack.c.b16 %v764, %v763
      %v791 = vpack.c.b16 %v766, %v765
      %v792 = vpack.c.b16 %v768, %v767
      %v793 = vpack.c.b16 %v770, %v769
      %v794 = vpack.c.b16 %v772, %v771
      %v795 = vpack.c.b16 %v774, %v773
      %v796 = vpack.c.b16 %v776, %v775
      %v797 = vpack.c.b16 %v778, %v777
      %v798 = vpack.c.b16 %v780, %v779
      %v818 = vsel %vm499, %v691, 0
      %v821 = vsel %vm499, %v694, 0
      %v824 = vsel %vm499, %v697, 0
      %v827 = vsel %vm499, %v700, 0
      %829 = vmatprep.subr.bf16.mxu0 0
      %830 = vmatpush1.bf16.msra.mxu0 %v781
      %831 = vmatprep.subr.bf16.mxu0 0
      %832 = vmatpush1.bf16.msra.mxu0 %v782
      %833 = vmatprep.subr.bf16.mxu0 0
      %834 = vmatpush1.bf16.msra.mxu0 %v783
      %835 = vmatprep.subr.bf16.mxu0 0
      %836 = vmatpush1.bf16.msra.mxu0 %v784
      %837 = vmatprep.subr.bf16.mxu0 0
      %838 = vmatpush1.bf16.msra.mxu0 %v785
      %839 = vmatprep.subr.bf16.mxu0 0
      %840 = vmatpush1.bf16.msra.mxu0 %v786
      %841 = vmatprep.subr.bf16.mxu0 0
      %842 = vmatpush1.bf16.msra.mxu0 %v787
      %843 = vmatprep.subr.bf16.mxu0 0
      %844 = vmatpush1.bf16.msra.mxu0 %v788
      %845 = vmatprep.subr.bf16.mxu0 0
      %846 = vmatpush1.bf16.msra.mxu0 %v789
      %847 = vmatprep.subr.bf16.mxu0 0
      %848 = vmatpush1.bf16.msra.mxu0 %v790
      %849 = vmatprep.subr.bf16.mxu0 0
      %850 = vmatpush1.bf16.msra.mxu0 %v791
      %851 = vmatprep.subr.bf16.mxu0 0
      %852 = vmatpush1.bf16.msra.mxu0 %v792
      %853 = vmatprep.subr.bf16.mxu0 0
      %854 = vmatpush1.bf16.msra.mxu0 %v793
      %855 = vmatprep.subr.bf16.mxu0 0
      %856 = vmatpush1.bf16.msra.mxu0 %v794
      %857 = vmatprep.subr.bf16.mxu0 0
      %858 = vmatpush1.bf16.msra.mxu0 %v795
      %859 = vmatprep.subr.bf16.mxu0 0
      %860 = vmatpush1.bf16.msra.mxu0 %v796
      %861 = vmatprep.mubr.bf16.mxu0 %v690
      %862 = vmatmul.mubr.bf16.gmra.mrb[0].mxu0 %v689
      %v863 = vpop.f32.mrb[0].mxu0
      %v864 = vadd.f32 %v687, %v863
      %v865 = vpop.f32.mrb[0].mxu0
      %v866 = vpop.f32.mrb[0].mxu0
      %v867 = vadd.f32 %v687, %v866
      %v868 = vpop.f32.mrb[0].mxu0
      %869 = vmatprep.mubr.bf16.mxu0 %v693
      %870 = vmatmul.mubr.bf16.gmra.mrb[0].mxu0 %v692
      %v871 = vpop.f32.mrb[0].mxu0
      %v872 = vadd.f32 %v687, %v871
      %v873 = vpop.f32.mrb[0].mxu0
      %v874 = vpop.f32.mrb[0].mxu0
      %v875 = vadd.f32 %v687, %v874
      %v876 = vpop.f32.mrb[0].mxu0
      %877 = vmatprep.mubr.bf16.mxu0 %v696
      %878 = vmatmul.mubr.bf16.gmra.mrb[0].mxu0 %v695
      %v879 = vpop.f32.mrb[0].mxu0
      %v880 = vadd.f32 %v687, %v879
      %v881 = vpop.f32.mrb[0].mxu0
      %v882 = vpop.f32.mrb[0].mxu0
      %v883 = vadd.f32 %v687, %v882
      %v884 = vpop.f32.mrb[0].mxu0
      %885 = vmatprep.mubr.bf16.mxu0 %v699
      %886 = vmatmul.mubr.bf16.gmra.mrb[0].mxu0 %v698
      %v887 = vpop.f32.mrb[0].mxu0
      %v888 = vadd.f32 %v687, %v887
      %v889 = vpop.f32.mrb[0].mxu0
      %v890 = vpop.f32.mrb[0].mxu0
      %v891 = vadd.f32 %v687, %v890
      %v892 = vpop.f32.mrb[0].mxu0
      %893 = vdwg.mxu0
      %894 = vmatprep.subr.bf16.mxu0 0
      %895 = vmatpush1.bf16.msra.mxu0 %v797
      %896 = vmatprep.subr.bf16.mxu0 0
      %897 = vmatpush1.bf16.msra.mxu0 %v798
      %898 = vmatprep.subr.bf16.mxu0 0
      %899 = vmatpush1.bf16.msra.mxu0 0
      %900 = vmatprep.subr.bf16.mxu0 0
      %901 = vmatpush1.bf16.msra.mxu0 0
      %902 = vmatprep.subr.bf16.mxu0 0
      %903 = vmatpush1.bf16.msra.mxu0 0
      %904 = vmatprep.subr.bf16.mxu0 0
      %905 = vmatpush1.bf16.msra.mxu0 0
      %906 = vmatprep.subr.bf16.mxu0 0
      %907 = vmatpush1.bf16.msra.mxu0 0
      %908 = vmatprep.subr.bf16.mxu0 0
      %909 = vmatpush1.bf16.msra.mxu0 0
      %910 = vmatprep.subr.bf16.mxu0 0
      %911 = vmatpush1.bf16.msra.mxu0 0
      %912 = vmatprep.subr.bf16.mxu0 0
      %913 = vmatpush1.bf16.msra.mxu0 0
      %914 = vmatprep.subr.bf16.mxu0 0
      %915 = vmatpush1.bf16.msra.mxu0 0
      %916 = vmatprep.subr.bf16.mxu0 0
      %917 = vmatpush1.bf16.msra.mxu0 0
      %918 = vmatprep.subr.bf16.mxu0 0
      %919 = vmatpush1.bf16.msra.mxu0 0
      %920 = vmatprep.subr.bf16.mxu0 0
      %921 = vmatpush1.bf16.msra.mxu0 0
      %922 = vmatprep.subr.bf16.mxu0 0
      %923 = vmatpush1.bf16.msra.mxu0 0
      %924 = vmatprep.subr.bf16.mxu0 0
      %925 = vmatpush1.bf16.msra.mxu0 0
      %926 = vmatprep.mubr.bf16.mxu0 0
      %927 = vmatmul.mubr.bf16.gmra.mrb[0].mxu0 %v818
      %v928 = vpop.f32.mrb[0].mxu0
      %v929 = vadd.f32 %v864, %v928
      %v930 = vpop.f32.mrb[0].mxu0
      %v931 = vpop.f32.mrb[0].mxu0
      %v932 = vadd.f32 %v867, %v931
      %v933 = vpop.f32.mrb[0].mxu0
      %934 = vmatprep.mubr.bf16.mxu0 0
      %935 = vmatmul.mubr.bf16.gmra.mrb[0].mxu0 %v821
      %v936 = vpop.f32.mrb[0].mxu0
      %v937 = vadd.f32 %v872, %v936
      %v938 = vpop.f32.mrb[0].mxu0
      %v939 = vpop.f32.mrb[0].mxu0
      %v940 = vadd.f32 %v875, %v939
      %v941 = vpop.f32.mrb[0].mxu0
      %942 = vmatprep.mubr.bf16.mxu0 0
      %943 = vmatmul.mubr.bf16.gmra.mrb[0].mxu0 %v824
      %v944 = vpop.f32.mrb[0].mxu0
      %v945 = vadd.f32 %v880, %v944
      %v946 = vpop.f32.mrb[0].mxu0
      %v947 = vpop.f32.mrb[0].mxu0
      %v948 = vadd.f32 %v883, %v947
      %v949 = vpop.f32.mrb[0].mxu0
      %950 = vmatprep.mubr.bf16.mxu0 0
      %951 = vmatmul.mubr.bf16.gmra.mrb[0].mxu0 %v827
      %v952 = vpop.f32.mrb[0].mxu0
      %v953 = vadd.f32 %v888, %v952
      %v954 = vpop.f32.mrb[0].mxu0
      %v955 = vpop.f32.mrb[0].mxu0
      %v956 = vadd.f32 %v891, %v955
      %v957 = vpop.f32.mrb[0].mxu0
      %958 = vdwg.mxu0
      %v959 = vsel %vm499, %v929, 0.0
      %v960 = vsel %vm499, %v932, 0.0
      %v961 = vadd.f32 %v959, %v960
      %v962 = vsel %vm499, %v937, 0.0
      %v963 = vadd.f32 %v961, %v962
      %v964 = vsel %vm499, %v940, 0.0
      %v965 = vadd.f32 %v963, %v964
      %v966 = vsel %vm499, %v945, 0.0
      %v967 = vadd.f32 %v965, %v966
      %v968 = vsel %vm499, %v948, 0.0
      %v969 = vadd.f32 %v967, %v968
      %v970 = vsel %vm499, %v953, 0.0
      %v971 = vadd.f32 %v969, %v970
      %v972 = vsel %vm499, %v956, 0.0
      %v973 = vadd.f32 %v971, %v972
      %v974 = vrot.slane %v973, 4
      %v975 = vadd.f32 %v973, %v974
      %v976 = vrot.slane %v975, 2
      %v977 = vadd.f32 %v975, %v976
      %v978 = vrot.slane %v977, 1
      %v979 = vadd.f32 %v977, %v978
      %v980 = vmul.f32 %v929, %v929
      %v981 = vmul.f32 %v932, %v932
      %v982 = vmul.f32 %v937, %v937
      %v983 = vmul.f32 %v940, %v940
      %v984 = vmul.f32 %v945, %v945
      %v985 = vmul.f32 %v948, %v948
      %v986 = vmul.f32 %v953, %v953
      %v987 = vmul.f32 %v956, %v956
      %v988 = vsel %vm499, %v980, 0.0
      %v989 = vsel %vm499, %v981, 0.0
      %v990 = vadd.f32 %v988, %v989
      %v991 = vsel %vm499, %v982, 0.0
      %v992 = vadd.f32 %v990, %v991
      %v993 = vsel %vm499, %v983, 0.0
      %v994 = vadd.f32 %v992, %v993
      %v995 = vsel %vm499, %v984, 0.0
      %v996 = vadd.f32 %v994, %v995
      %v997 = vsel %vm499, %v985, 0.0
      %v998 = vadd.f32 %v996, %v997
      %v999 = vsel %vm499, %v986, 0.0
      %v1000 = vadd.f32 %v998, %v999
      %v1001 = vsel %vm499, %v987, 0.0
      %v1002 = vadd.f32 %v1000, %v1001
      %v1003 = vrot.slane %v1002, 4
      %v1004 = vadd.f32 %v1002, %v1003
      %v1005 = vrot.slane %v1004, 2
      %v1006 = vadd.f32 %v1004, %v1005
      %v1007 = vrot.slane %v1006, 1
      %v1008 = vadd.f32 %v1006, %v1007
      %vm1009 = vcmask 1040384
      %v1010 = vsel %vm1009, %v979, %v1008
      %vm1011 = vcmask 254976
      %1012 = vst.msk [vmem:[%s208] sm:$0x3] %vm1011, %v1010
      %1013 = vst.msk [vmem:[%s204] sm:$0xff] %vm499, %v929
      %1014 = vst.msk [vmem:[%s204 + $0x8] sm:$0xff] %vm499, %v932
      %1015 = vst.msk [vmem:[%s204 + $0x10] sm:$0xff] %vm499, %v937
      %1016 = vst.msk [vmem:[%s204 + $0x18] sm:$0xff] %vm499, %v940
      %1017 = vst.msk [vmem:[%s204 + $0x20] sm:$0xff] %vm499, %v945
      %1018 = vst.msk [vmem:[%s204 + $0x28] sm:$0xff] %vm499, %v948
      %1019 = vst.msk [vmem:[%s204 + $0x30] sm:$0xff] %vm499, %v953
      %1020 = vst.msk [vmem:[%s204 + $0x38] sm:$0xff] %vm499, %v956
      %p1021 = scmp.lt.s32.totalorder %s16, 1
      %s1022 = scalar_select %p1021, %s16, 1
      %s1023 = smul.addr %s1022, 8
      %s1024 = smul.addr %s1023, 8
      %s1025 = scalar_lea.vmem %s3, %s1024
      %p1026 = scmp.lt.s32.totalorder %s16, 1
      %s1027 = scalar_select %p1026, %s16, 1
      %s1028 = smul.addr %s1027, 2
      %s1029 = scalar_lea.vmem %s4, %s1028
      // Predicated region
      $region33: #{netd_forward.9} parent=31 // pred_check
        %p1030 = pneg %p102
      $region34: #{netd_forward.9} parent=31 // pred_check_branch
        %1032 = sbr.rel (%p1030) target = $region36
      $region35: #{netd_forward.9} parent=31 // pred_region
        _
      $region36: #{netd_forward.9} parent=31 // pred_fallthru
        _
      // Predicated region
      $region37: #{netd_forward.9} parent=31 // pred_check
        %p1033 = pneg %p128
      $region38: #{netd_forward.9} parent=31 // pred_check_branch
        %1035 = sbr.rel (%p1033) target = $region40
      $region39: #{netd_forward.9} parent=31 // pred_region
        _
      $region40: #{netd_forward.9} parent=31 // pred_fallthru
        _
    $region32: #{netd_forward.9} parent=5 // pred_fallthru
      _
    %p1036 = scmp.le.s32.totalorder 2, %s11
    // Predicated region
    $region41: #{netd_forward.9} parent=5 // pred_check
      %p1037 = pneg %p1036
    $region42: #{netd_forward.9} parent=5 // pred_check_branch
      %1039 = sbr.rel (%p1037) target = $region44
    $region43: #{netd_forward.9} parent=5 // pred_region
      %s1040 = ssub.s32 %s11, 2
      // Predicated region
      $region45: #{netd_forward.9} parent=43 // pred_check
        %p1041 = pneg %p108
      $region46: #{netd_forward.9} parent=43 // pred_check_branch
        %1043 = sbr.rel (%p1041) target = $region48
      $region47: #{netd_forward.9} parent=43 // pred_region
        %p1044 = scmp.lt.s32.totalorder %s17, 1
        %s1045 = scalar_select %p1044, %s17, 1
        %s1046 = smul.addr %s1045, 8
        %s1047 = smul.addr %s1046, 8
        %s1048 = scalar_lea.vmem %s3, %s1047
      $region48: #{netd_forward.9} parent=43 // pred_fallthru
        _
      // Predicated region
      $region49: #{netd_forward.9} parent=43 // pred_check
        %p1049 = pneg %p134
      $region50: #{netd_forward.9} parent=43 // pred_check_branch
        %1051 = sbr.rel (%p1049) target = $region52
      $region51: #{netd_forward.9} parent=43 // pred_region
        %p1052 = scmp.lt.s32.totalorder %s17, 1
        %s1053 = scalar_select %p1052, %s17, 1
        %s1054 = smul.addr %s1053, 2
        %s1055 = scalar_lea.vmem %s4, %s1054
      $region52: #{netd_forward.9} parent=43 // pred_fallthru
        _
    $region44: #{netd_forward.9} parent=5 // pred_fallthru
      _
  $region6: #{netd_forward.9} parent=0 // loop_footer
    %s15 = sadd.s32 1, %s11
  $region7: #{netd_forward.9} parent=0 // loop_footer_branch
    %10 = sbr.rel target = $region3
  $region8: #{netd_forward.9} parent=0 // loop_exit
    _

// kernel: netd_forward.10
$region0: #{netd_forward.10}
  #allocation0 [shape = 'u32[]', space=smem, size = 0x4, offset = 0x4, fixed_abs, tag = 'smem constant byte address 0x4 - core index']
  #allocation1 [shape = 'u32[144,128]{1,0:T(1,128)}', space=vmem, size = 0x12000, scoped, tag = 'internal scratch']
  %s0 = inlined_call_operand.vmem [shape: f32[2,8,8,32], index: 0, kind: input, shape index: {}]
  %s1 = inlined_call_operand.vmem [shape: f32[1,32], index: 1, kind: input, shape index: {}]
  %s2 = inlined_call_operand.vmem [shape: f32[1,32], index: 2, kind: input, shape index: {}]
  %s3 = inlined_call_operand.vmem [shape: bf16[288,32], index: 3, kind: input, shape index: {}]
  %s4 = inlined_call_operand.vmem [shape: f32[1,32], index: 4, kind: input, shape index: {}]
  %s5 = inlined_call_operand.vmem [shape: f32[2,8,8,32], index: 5, kind: output, shape index: {0}]
  %s6 = inlined_call_operand.vmem [shape: f32[2,2,32], index: 6, kind: output, shape index: {1}]
  %7 = xla_tuple %s5, %s6
  %s8 = sld [smem:[#allocation0]]
  $region61: #{netd_forward.10} parent=0
    _
  %s10 = ssub.s32 1, %s8
  %s11 = scalar_select 0, %s10, %s8
  loop: start=0, step=1, limit=4
  $region2: #{netd_forward.10} parent=0 // loop_pre_header
    _
  $region3: #{netd_forward.10} parent=0 // loop_header
    %s13 = sphi 0, %s17
    %p14 = scmp.ge.s32.totalorder %s13, 4
    %s23 = sphi 0, %s25
    %s26 = sphi 0, %s23
    %s27 = sphi 0, %s26
    %s43 = sphi 0, %s27
    %s47 = sphi 0, %s47
    %s49 = sphi 0, %s47
    %s50 = sphi 0, %s49
    %s64 = sphi 0, %s50
    %s68 = sphi 0, %s68
    %s70 = sphi 0, %s68
    %s71 = sphi 0, %s70
    %s85 = sphi 0, %s71
    %s89 = sphi 0, %s89
    %s91 = sphi 0, %s89
    %s92 = sphi 0, %s91
    %s106 = sphi 0, %s92
    %s110 = sphi 0, %s110
    %s112 = sphi 0, %s110
    %s113 = sphi 0, %s112
    %s127 = sphi 0, %s113
    %s133 = sphi 0, %s135
    %s136 = sphi 0, %s133
    %s137 = sphi 0, %s136
    %s153 = sphi 0, %s137
    %s159 = sphi 0, %s161
    %s162 = sphi 0, %s159
    %s163 = sphi 0, %s162
    %s179 = sphi 0, %s163
  $region4: #{netd_forward.10} parent=0 // loop_header_branch
    %16 = sbr.rel (%p14) target = $region8
  $region5: #{netd_forward.10} parent=0 // loop_body
    %s18 = ssub.s32 %s13, 1
    %s19 = ssub.s32 %s13, 2
    %s20 = sadd.s32 %s13, 1
    %s21 = ssub.s32 %s13, %s20
    %p22 = scmp.eq.s32.totalorder %s21, 0
    %s24 = sadd.s32 %s23, 1
    %s25 = scalar_select %p22, %s23, %s24
    %p28 = pneg %p22
    %p29 = scmp.eq.s32.totalorder %s13, 1
    %p30 = por %p28, %p29
    %p31 = scmp.ne.s32.totalorder %s23, %s26
    %p32 = scmp.eq.s32.totalorder %s13, 0
    %p33 = por %p31, %p32
    %p34 = scmp.ne.s32.totalorder %s23, %s26
    %p35 = scmp.eq.s32.totalorder %s18, 1
    %p36 = por %p34, %p35
    %p37 = scmp.ne.s32.totalorder %s26, %s27
    %p38 = scmp.eq.s32.totalorder %s18, 0
    %p39 = por %p37, %p38
    %p40 = scmp.ne.s32.totalorder %s26, %s27
    %p41 = scmp.eq.s32.totalorder %s19, 1
    %p42 = por %p40, %p41
    %p44 = scmp.ne.s32.totalorder %s27, %s43
    %p45 = scmp.eq.s32.totalorder %s19, 0
    %p46 = por %p44, %p45
    %s48 = sadd.s32 %s47, 1
    %p51 = scmp.eq.s32.totalorder %s13, 1
    %p52 = scmp.ne.s32.totalorder %s47, %s49
    %p53 = scmp.eq.s32.totalorder %s13, 0
    %p54 = por %p52, %p53
    %p55 = scmp.ne.s32.totalorder %s47, %s49
    %p56 = scmp.eq.s32.totalorder %s18, 1
    %p57 = por %p55, %p56
    %p58 = scmp.ne.s32.totalorder %s49, %s50
    %p59 = scmp.eq.s32.totalorder %s18, 0
    %p60 = por %p58, %p59
    %p61 = scmp.ne.s32.totalorder %s49, %s50
    %p62 = scmp.eq.s32.totalorder %s19, 1
    %p63 = por %p61, %p62
    %p65 = scmp.ne.s32.totalorder %s50, %s64
    %p66 = scmp.eq.s32.totalorder %s19, 0
    %p67 = por %p65, %p66
    %s69 = sadd.s32 %s68, 1
    %p72 = scmp.eq.s32.totalorder %s13, 1
    %p73 = scmp.ne.s32.totalorder %s68, %s70
    %p74 = scmp.eq.s32.totalorder %s13, 0
    %p75 = por %p73, %p74
    %p76 = scmp.ne.s32.totalorder %s68, %s70
    %p77 = scmp.eq.s32.totalorder %s18, 1
    %p78 = por %p76, %p77
    %p79 = scmp.ne.s32.totalorder %s70, %s71
    %p80 = scmp.eq.s32.totalorder %s18, 0
    %p81 = por %p79, %p80
    %p82 = scmp.ne.s32.totalorder %s70, %s71
    %p83 = scmp.eq.s32.totalorder %s19, 1
    %p84 = por %p82, %p83
    %p86 = scmp.ne.s32.totalorder %s71, %s85
    %p87 = scmp.eq.s32.totalorder %s19, 0
    %p88 = por %p86, %p87
    %s90 = sadd.s32 %s89, 1
    %p93 = scmp.eq.s32.totalorder %s13, 1
    %p94 = scmp.ne.s32.totalorder %s89, %s91
    %p95 = scmp.eq.s32.totalorder %s13, 0
    %p96 = por %p94, %p95
    %p97 = scmp.ne.s32.totalorder %s89, %s91
    %p98 = scmp.eq.s32.totalorder %s18, 1
    %p99 = por %p97, %p98
    %p100 = scmp.ne.s32.totalorder %s91, %s92
    %p101 = scmp.eq.s32.totalorder %s18, 0
    %p102 = por %p100, %p101
    %p103 = scmp.ne.s32.totalorder %s91, %s92
    %p104 = scmp.eq.s32.totalorder %s19, 1
    %p105 = por %p103, %p104
    %p107 = scmp.ne.s32.totalorder %s92, %s106
    %p108 = scmp.eq.s32.totalorder %s19, 0
    %p109 = por %p107, %p108
    %s111 = sadd.s32 %s110, 1
    %p114 = scmp.eq.s32.totalorder %s13, 1
    %p115 = scmp.ne.s32.totalorder %s110, %s112
    %p116 = scmp.eq.s32.totalorder %s13, 0
    %p117 = por %p115, %p116
    %p118 = scmp.ne.s32.totalorder %s110, %s112
    %p119 = scmp.eq.s32.totalorder %s18, 1
    %p120 = por %p118, %p119
    %p121 = scmp.ne.s32.totalorder %s112, %s113
    %p122 = scmp.eq.s32.totalorder %s18, 0
    %p123 = por %p121, %p122
    %p124 = scmp.ne.s32.totalorder %s112, %s113
    %p125 = scmp.eq.s32.totalorder %s19, 1
    %p126 = por %p124, %p125
    %p128 = scmp.ne.s32.totalorder %s113, %s127
    %p129 = scmp.eq.s32.totalorder %s19, 0
    %p130 = por %p128, %p129
    %s131 = ssub.s32 %s13, %s20
    %p132 = scmp.eq.s32.totalorder %s131, 0
    %s134 = sadd.s32 %s133, 1
    %s135 = scalar_select %p132, %s133, %s134
    %p138 = pneg %p132
    %p139 = scmp.eq.s32.totalorder %s13, 1
    %p140 = por %p138, %p139
    %p141 = scmp.ne.s32.totalorder %s133, %s136
    %p142 = scmp.eq.s32.totalorder %s13, 0
    %p143 = por %p141, %p142
    %p144 = scmp.ne.s32.totalorder %s133, %s136
    %p145 = scmp.eq.s32.totalorder %s18, 1
    %p146 = por %p144, %p145
    %p147 = scmp.ne.s32.totalorder %s136, %s137
    %p148 = scmp.eq.s32.totalorder %s18, 0
    %p149 = por %p147, %p148
    %p150 = scmp.ne.s32.totalorder %s136, %s137
    %p151 = scmp.eq.s32.totalorder %s19, 1
    %p152 = por %p150, %p151
    %p154 = scmp.ne.s32.totalorder %s137, %s153
    %p155 = scmp.eq.s32.totalorder %s19, 0
    %p156 = por %p154, %p155
    %s157 = ssub.s32 %s13, %s20
    %p158 = scmp.eq.s32.totalorder %s157, 0
    %s160 = sadd.s32 %s159, 1
    %s161 = scalar_select %p158, %s159, %s160
    %p164 = pneg %p158
    %p165 = scmp.eq.s32.totalorder %s13, 1
    %p166 = por %p164, %p165
    %p167 = scmp.ne.s32.totalorder %s159, %s162
    %p168 = scmp.eq.s32.totalorder %s13, 0
    %p169 = por %p167, %p168
    %p170 = scmp.ne.s32.totalorder %s159, %s162
    %p171 = scmp.eq.s32.totalorder %s18, 1
    %p172 = por %p170, %p171
    %p173 = scmp.ne.s32.totalorder %s162, %s163
    %p174 = scmp.eq.s32.totalorder %s18, 0
    %p175 = por %p173, %p174
    %p176 = scmp.ne.s32.totalorder %s162, %s163
    %p177 = scmp.eq.s32.totalorder %s19, 1
    %p178 = por %p176, %p177
    %p180 = scmp.ne.s32.totalorder %s163, %s179
    %p181 = scmp.eq.s32.totalorder %s19, 0
    %p182 = por %p180, %p181
    %p183 = scmp.le.s32.totalorder 1, %s13
    %p184 = scmp.lt.s32.totalorder %s13, 3
    %p185 = pnand %p183, %p184
    %p186 = pneg %p185
    // Predicated region
    $region9: #{netd_forward.10} parent=5 // pred_check
      _
    $region10: #{netd_forward.10} parent=5 // pred_check_branch
      %188 = sbr.rel (%p185) target = $region12
    $region11: #{netd_forward.10} parent=5 // pred_region
      %s189 = ssub.s32 %s13, 1
      // Predicated region
      $region13: #{netd_forward.10} parent=11 // pred_check
        %p190 = pneg %p60
      $region14: #{netd_forward.10} parent=11 // pred_check_branch
        %192 = sbr.rel (%p190) target = $region16
      $region15: #{netd_forward.10} parent=11 // pred_region
        _
      $region16: #{netd_forward.10} parent=11 // pred_fallthru
        _
      // Predicated region
      $region17: #{netd_forward.10} parent=11 // pred_check
        %p193 = pneg %p81
      $region18: #{netd_forward.10} parent=11 // pred_check_branch
        %195 = sbr.rel (%p193) target = $region20
      $region19: #{netd_forward.10} parent=11 // pred_region
        _
      $region20: #{netd_forward.10} parent=11 // pred_fallthru
        _
      // Predicated region
      $region21: #{netd_forward.10} parent=11 // pred_check
        %p196 = pneg %p102
      $region22: #{netd_forward.10} parent=11 // pred_check_branch
        %198 = sbr.rel (%p196) target = $region24
      $region23: #{netd_forward.10} parent=11 // pred_region
        _
      $region24: #{netd_forward.10} parent=11 // pred_fallthru
        _
      // Predicated region
      $region25: #{netd_forward.10} parent=11 // pred_check
        %p199 = pneg %p123
      $region26: #{netd_forward.10} parent=11 // pred_check_branch
        %201 = sbr.rel (%p199) target = $region28
      $region27: #{netd_forward.10} parent=11 // pred_region
        _
      $region28: #{netd_forward.10} parent=11 // pred_fallthru
        _
    $region12: #{netd_forward.10} parent=5 // pred_fallthru
      _
    %p202 = scmp.lt.s32.totalorder %s13, 2
    // Predicated region
    $region29: #{netd_forward.10} parent=5 // pred_check
      %p203 = pneg %p202
    $region30: #{netd_forward.10} parent=5 // pred_check_branch
      %205 = sbr.rel (%p203) target = $region32
    $region31: #{netd_forward.10} parent=5 // pred_region
      // Predicated region
      $region33: #{netd_forward.10} parent=31 // pred_check
        %p206 = pneg %p33
      $region34: #{netd_forward.10} parent=31 // pred_check_branch
        %208 = sbr.rel (%p206) target = $region36
      $region35: #{netd_forward.10} parent=31 // pred_region
        %p209 = scmp.lt.s32.totalorder %s13, 1
        %s210 = scalar_select %p209, %s13, 1
        %s211 = smul.addr %s210, 8
        %s212 = smul.addr %s211, 8
        %s213 = scalar_lea.vmem %s0, %s212
      $region36: #{netd_forward.10} parent=31 // pred_fallthru
        _
    $region32: #{netd_forward.10} parent=5 // pred_fallthru
      _
    %p214 = scmp.le.s32.totalorder 1, %s13
    %p215 = scmp.lt.s32.totalorder %s13, 3
    %p216 = pnand %p214, %p215
    %p217 = pneg %p216
    // Predicated region
    $region37: #{netd_forward.10} parent=5 // pred_check
      _
    $region38: #{netd_forward.10} parent=5 // pred_check_branch
      %219 = sbr.rel (%p216) target = $region40
    $region39: #{netd_forward.10} parent=5 // pred_region
      %s220 = ssub.s32 %s13, 1
      %p221 = scmp.lt.s32.totalorder %s18, 1
      %s222 = scalar_select %p221, %s18, 1
      %s223 = smul.addr %s222, 8
      %s224 = smul.addr %s223, 8
      %s225 = scalar_lea.vmem %s0, %s224
      %p226 = pneg %p39
      %p227 = pneg %p36
      %p228 = pneg %p60
      %p229 = pneg %p57
      %p230 = pneg %p81
      %p231 = pneg %p78
      %p232 = pneg %p102
      %p233 = pneg %p99
      %p234 = pneg %p123
      %p235 = pneg %p120
      %p236 = pneg %p149
      %p237 = pneg %p146
      %p238 = scmp.lt.s32.totalorder %s18, 1
      %s239 = scalar_select %p238, %s18, 1
      %s240 = smul.addr %s239, 8
      %s241 = smul.addr %s240, 8
      %s242 = scalar_lea.vmem %s5, %s241
      %p243 = pneg %p175
      %p244 = pneg %p172
      %p245 = scmp.lt.s32.totalorder %s18, 1
      %s246 = scalar_select %p245, %s18, 1
      %s247 = smul.addr %s246, 2
      %s248 = scalar_lea.vmem %s6, %s247
      %p249 = scmp.lt.s32.totalorder %s18, 1
      %s250 = scalar_select %p249, %s18, 1
      %s251 = smul.addr %s250, 8
      %s252 = smul.addr %s251, 8
      %s253 = scalar_lea.vmem %s0, %s252
      %p254 = scmp.lt.s32.totalorder %s18, 1
      %s255 = scalar_select %p254, %s18, 1
      %s256 = smul.addr %s255, 8
      %s257 = smul.addr %s256, 8
      %s258 = scalar_lea.vmem %s5, %s257
      %p259 = scmp.lt.s32.totalorder %s18, 1
      %s260 = scalar_select %p259, %s18, 1
      %s261 = smul.addr %s260, 2
      %s262 = scalar_lea.vmem %s6, %s261
      %v264 = vld [vmem:[%s253] sm:$0xff]
      %v265 = vld [vmem:[%s253 + $0x8] sm:$0xff]
      %v266 = vld [vmem:[%s253 + $0x10] sm:$0xff]
      %v267 = vld [vmem:[%s253 + $0x18] sm:$0xff]
      %v268 = vld [vmem:[%s253 + $0x20] sm:$0xff]
      %v269 = vld [vmem:[%s253 + $0x28] sm:$0xff]
      %v270 = vld [vmem:[%s253 + $0x30] sm:$0xff]
      %v271 = vld [vmem:[%s253 + $0x38] sm:$0xff]
      %v272 = vld [vmem:[%s1] sm:$0x1]
      %v274 = vlaneseq
      %v275 = vshrl.u32 %v274, 7
      %v276 = vsub.s32 0, %v275
      %v277 = vrot.slane %v272, %v276
      %v279 = vmul.f32 %v264, %v277
      %v280 = vmul.f32 %v265, %v277
      %v281 = vmul.f32 %v266, %v277
      %v282 = vmul.f32 %v267, %v277
      %v283 = vmul.f32 %v268, %v277
      %v284 = vmul.f32 %v269, %v277
      %v285 = vmul.f32 %v270, %v277
      %v286 = vmul.f32 %v271, %v277
      %v287 = vld [vmem:[%s2] sm:$0x1]
      %v289 = vlaneseq
      %v290 = vshrl.u32 %v289, 7
      %v291 = vsub.s32 0, %v290
      %v292 = vrot.slane %v287, %v291
      %v294 = vadd.f32 %v279, %v292
      %v295 = vadd.f32 %v280, %v292
      %v296 = vadd.f32 %v281, %v292
      %v297 = vadd.f32 %v282, %v292
      %v298 = vadd.f32 %v283, %v292
      %v299 = vadd.f32 %v284, %v292
      %v300 = vadd.f32 %v285, %v292
      %v301 = vadd.f32 %v286, %v292
      %vm302 = vcmp.gt.f32.partialorder %v294, 0.0
      %vm303 = vcmp.gt.f32.partialorder %v295, 0.0
      %vm304 = vcmp.gt.f32.partialorder %v296, 0.0
      %vm305 = vcmp.gt.f32.partialorder %v297, 0.0
      %vm306 = vcmp.gt.f32.partialorder %v298, 0.0
      %vm307 = vcmp.gt.f32.partialorder %v299, 0.0
      %vm308 = vcmp.gt.f32.partialorder %v300, 0.0
      %vm309 = vcmp.gt.f32.partialorder %v301, 0.0
      %v310 = vmul.f32 %v294, 0.2
      %v311 = vmul.f32 %v295, 0.2
      %v312 = vmul.f32 %v296, 0.2
      %v313 = vmul.f32 %v297, 0.2
      %v314 = vmul.f32 %v298, 0.2
      %v315 = vmul.f32 %v299, 0.2
      %v316 = vmul.f32 %v300, 0.2
      %v317 = vmul.f32 %v301, 0.2
      %v318 = vsel %vm302, %v294, %v310
      %v319 = vsel %vm303, %v295, %v311
      %v320 = vsel %vm304, %v296, %v312
      %v321 = vsel %vm305, %v297, %v313
      %v322 = vsel %vm306, %v298, %v314
      %v323 = vsel %vm307, %v299, %v315
      %v324 = vsel %vm308, %v300, %v316
      %v325 = vsel %vm309, %v301, %v317
      %v326 = vpack.c.bf16 %v318, %v318
      %v327 = vpack.c.bf16 %v319, %v319
      %v328 = vpack.c.bf16 %v320, %v320
      %v329 = vpack.c.bf16 %v321, %v321
      %v330 = vpack.c.bf16 %v322, %v322
      %v331 = vpack.c.bf16 %v323, %v323
      %v332 = vpack.c.bf16 %v324, %v324
      %v333 = vpack.c.bf16 %v325, %v325
      %v335 = vshrl.u32 0, 16
      %v337 = vrot.slane %v335, 7
      %v338 = vshll.u32 0, 16
      %v340 = vor.u32 %v337, %v338
      %v342 = vshrl.u32 %v326, 16
      %v344 = vrot.slane %v342, 7
      %v345 = vshll.u32 %v326, 16
      %v347 = vor.u32 %v344, %v345
      %v349 = vshrl.u32 %v327, 16
      %v351 = vrot.slane %v349, 7
      %v352 = vshll.u32 %v327, 16
      %v354 = vor.u32 %v351, %v352
      %v356 = vshrl.u32 %v328, 16
      %v358 = vrot.slane %v356, 7
      %v359 = vshll.u32 %v328, 16
      %v361 = vor.u32 %v358, %v359
      %v363 = vshrl.u32 %v329, 16
      %v365 = vrot.slane %v363, 7
      %v366 = vshll.u32 %v329, 16
      %v368 = vor.u32 %v365, %v366
      %v370 = vshrl.u32 %v330, 16
      %v372 = vrot.slane %v370, 7
      %v373 = vshll.u32 %v330, 16
      %v375 = vor.u32 %v372, %v373
      %v377 = vshrl.u32 %v331, 16
      %v379 = vrot.slane %v377, 7
      %v380 = vshll.u32 %v331, 16
      %v382 = vor.u32 %v379, %v380
      %v384 = vshrl.u32 %v332, 16
      %v386 = vrot.slane %v384, 7
      %v387 = vshll.u32 %v332, 16
      %v389 = vor.u32 %v386, %v387
      %v391 = vshrl.u32 %v333, 16
      %v393 = vrot.slane %v391, 7
      %v394 = vshll.u32 %v333, 16
      %v396 = vor.u32 %v393, %v394
      %vm406 = vcmask 1040384
      %vm407 = vsmask.f32 256
      %vm408 = vmand %vm406, %vm407
      %v409 = vsel %vm408, 0, %v340
      %v410 = vsel %vm408, 0, %v347
      %v411 = vsel %vm408, 0, %v354
      %v412 = vsel %vm408, 0, %v361
      %v413 = vsel %vm408, 0, %v368
      %v414 = vsel %vm408, 0, %v375
      %v415 = vsel %vm408, 0, %v382
      %v416 = vsel %vm408, 0, %v389
      %v417 = vsel %vm408, 0, %v396
      %vm418 = vcmask 1044480
      %vm419 = vsmask.f32 4352
      %vm420 = vmand %vm418, %vm419
      %v421 = vsel %vm420, %v409, 0
      %v422 = vsel %vm420, %v410, 0
      %v423 = vsel %vm420, %v411, 0
      %v424 = vsel %vm420, %v412, 0
      %v425 = vsel %vm420, %v413, 0
      %v426 = vsel %vm420, %v414, 0
      %v427 = vsel %vm420, %v415, 0
      %v428 = vsel %vm420, %v416, 0
      %v429 = vsel %vm420, %v417, 0
      %v431 = vshrl.u32 %v421, 16
      %v433 = vshll.u32 %v421, 16
      %v435 = vrot.slane %v433, 1
      %v436 = vor.u32 %v431, %v435
      %v438 = vshrl.u32 %v422, 16
      %v440 = vshll.u32 %v422, 16
      %v442 = vrot.slane %v440, 1
      %v443 = vor.u32 %v438, %v442
      %v445 = vshrl.u32 %v423, 16
      %v447 = vshll.u32 %v423, 16
      %v449 = vrot.slane %v447, 1
      %v450 = vor.u32 %v445, %v449
      %v452 = vshrl.u32 %v424, 16
      %v454 = vshll.u32 %v424, 16
      %v456 = vrot.slane %v454, 1
      %v457 = vor.u32 %v452, %v456
      %v459 = vshrl.u32 %v425, 16
      %v461 = vshll.u32 %v425, 16
      %v463 = vrot.slane %v461, 1
      %v464 = vor.u32 %v459, %v463
      %v466 = vshrl.u32 %v426, 16
      %v468 = vshll.u32 %v426, 16
      %v470 = vrot.slane %v468, 1
      %v471 = vor.u32 %v466, %v470
      %v473 = vshrl.u32 %v427, 16
      %v475 = vshll.u32 %v427, 16
      %v477 = vrot.slane %v475, 1
      %v478 = vor.u32 %v473, %v477
      %v480 = vshrl.u32 %v428, 16
      %v482 = vshll.u32 %v428, 16
      %v484 = vrot.slane %v482, 1
      %v485 = vor.u32 %v480, %v484
      %486 = vrot.lane.b32.xlu0 %v436, 32
      %v487 = vpop.permute.xlu0 %486
      %488 = vrot.lane.b32.xlu0 %v443, 32
      %v489 = vpop.permute.xlu0 %488
      %490 = vrot.lane.b32.xlu0 %v450, 32
      %v491 = vpop.permute.xlu0 %490
      %492 = vrot.lane.b32.xlu0 %v457, 32
      %v493 = vpop.permute.xlu0 %492
      %494 = vrot.lane.b32.xlu0 %v464, 32
      %v495 = vpop.permute.xlu0 %494
      %496 = vrot.lane.b32.xlu0 %v471, 32
      %v497 = vpop.permute.xlu0 %496
      %498 = vrot.lane.b32.xlu0 %v478, 32
      %v499 = vpop.permute.xlu0 %498
      %500 = vrot.lane.b32.xlu0 %v485, 32
      %v501 = vpop.permute.xlu0 %500
      %v510 = vrot.slane %v421, 1
      %v511 = vrot.slane %v422, 1
      %v512 = vrot.slane %v423, 1
      %v513 = vrot.slane %v424, 1
      %v514 = vrot.slane %v425, 1
      %v515 = vrot.slane %v426, 1
      %v516 = vrot.slane %v427, 1
      %v517 = vrot.slane %v428, 1
      %518 = vrot.lane.b32.xlu0 %v510, 64
      %v519 = vpop.permute.xlu0 %518
      %520 = vrot.lane.b32.xlu0 %v511, 64
      %v521 = vpop.permute.xlu0 %520
      %522 = vrot.lane.b32.xlu0 %v512, 64
      %v523 = vpop.permute.xlu0 %522
      %524 = vrot.lane.b32.xlu0 %v513, 64
      %v525 = vpop.permute.xlu0 %524
      %526 = vrot.lane.b32.xlu0 %v514, 64
      %v527 = vpop.permute.xlu0 %526
      %528 = vrot.lane.b32.xlu0 %v515, 64
      %v529 = vpop.permute.xlu0 %528
      %530 = vrot.lane.b32.xlu0 %v516, 64
      %v531 = vpop.permute.xlu0 %530
      %532 = vrot.lane.b32.xlu0 %v517, 64
      %v533 = vpop.permute.xlu0 %532
      %535 = vrot.lane.b32.xlu0 %v422, 96
      %v536 = vpop.permute.xlu0 %535
      %537 = vrot.lane.b32.xlu0 %v423, 96
      %v538 = vpop.permute.xlu0 %537
      %539 = vrot.lane.b32.xlu0 %v424, 96
      %v540 = vpop.permute.xlu0 %539
      %541 = vrot.lane.b32.xlu0 %v425, 96
      %v542 = vpop.permute.xlu0 %541
      %543 = vrot.lane.b32.xlu0 %v426, 96
      %v544 = vpop.permute.xlu0 %543
      %545 = vrot.lane.b32.xlu0 %v427, 96
      %v546 = vpop.permute.xlu0 %545
      %547 = vrot.lane.b32.xlu0 %v428, 96
      %v548 = vpop.permute.xlu0 %547
      %549 = vrot.lane.b32.xlu0 %v429, 96
      %v550 = vpop.permute.xlu0 %549
      %v552 = vshrl.u32 %v429, 16
      %v554 = vshll.u32 %v429, 16
      %v556 = vrot.slane %v554, 1
      %v557 = vor.u32 %v552, %v556
      %v558 = vrot.slane %v429, 1
      %559 = vrot.lane.b32.xlu0 %v511, 32
      %v560 = vpop.permute.xlu0 %559
      %561 = vrot.lane.b32.xlu0 %v512, 32
      %v562 = vpop.permute.xlu0 %561
      %563 = vrot.lane.b32.xlu0 %v513, 32
      %v564 = vpop.permute.xlu0 %563
      %565 = vrot.lane.b32.xlu0 %v514, 32
      %v566 = vpop.permute.xlu0 %565
      %567 = vrot.lane.b32.xlu0 %v515, 32
      %v568 = vpop.permute.xlu0 %567
      %569 = vrot.lane.b32.xlu0 %v516, 32
      %v570 = vpop.permute.xlu0 %569
      %571 = vrot.lane.b32.xlu0 %v517, 32
      %v572 = vpop.permute.xlu0 %571
      %573 = vrot.lane.b32.xlu0 %v558, 32
      %v574 = vpop.permute.xlu0 %573
      %575 = vrot.lane.b32.xlu0 %v423, 64
      %v576 = vpop.permute.xlu0 %575
      %577 = vrot.lane.b32.xlu0 %v424, 64
      %v578 = vpop.permute.xlu0 %577
      %579 = vrot.lane.b32.xlu0 %v425, 64
      %v580 = vpop.permute.xlu0 %579
      %581 = vrot.lane.b32.xlu0 %v426, 64
      %v582 = vpop.permute.xlu0 %581
      %583 = vrot.lane.b32.xlu0 %v427, 64
      %v584 = vpop.permute.xlu0 %583
      %585 = vrot.lane.b32.xlu0 %v428, 64
      %v586 = vpop.permute.xlu0 %585
      %587 = vrot.lane.b32.xlu0 %v429, 64
      %v588 = vpop.permute.xlu0 %587
      %589 = vrot.lane.b32.xlu0 %v421, 64
      %v590 = vpop.permute.xlu0 %589
      %591 = vrot.lane.b32.xlu0 %v450, 96
      %v592 = vpop.permute.xlu0 %591
      %593 = vrot.lane.b32.xlu0 %v457, 96
      %v594 = vpop.permute.xlu0 %593
      %595 = vrot.lane.b32.xlu0 %v464, 96
      %v596 = vpop.permute.xlu0 %595
      %597 = vrot.lane.b32.xlu0 %v471, 96
      %v598 = vpop.permute.xlu0 %597
      %599 = vrot.lane.b32.xlu0 %v478, 96
      %v600 = vpop.permute.xlu0 %599
      %601 = vrot.lane.b32.xlu0 %v485, 96
      %v602 = vpop.permute.xlu0 %601
      %603 = vrot.lane.b32.xlu0 %v557, 96
      %v604 = vpop.permute.xlu0 %603
      %605 = vrot.lane.b32.xlu0 %v436, 96
      %v606 = vpop.permute.xlu0 %605
      %vm607 = vcmask 261120
      %v609 = vsel %vm607, %v421, %v487
      %v611 = vsel %vm607, %v422, %v489
      %v613 = vsel %vm607, %v423, %v491
      %v615 = vsel %vm607, %v424, %v493
      %v617 = vsel %vm607, %v425, %v495
      %v619 = vsel %vm607, %v426, %v497
      %v621 = vsel %vm607, %v427, %v499
      %v623 = vsel %vm607, %v428, %v501
      %vm624 = vcmask 523264
      %v626 = vsel %vm624, %v609, %v519
      %v628 = vsel %vm624, %v611, %v521
      %v630 = vsel %vm624, %v613, %v523
      %v632 = vsel %vm624, %v615, %v525
      %v634 = vsel %vm624, %v617, %v527
      %v636 = vsel %vm624, %v619, %v529
      %v638 = vsel %vm624, %v621, %v531
      %v640 = vsel %vm624, %v623, %v533
      %vm641 = vcmask 785408
      %v643 = vsel %vm641, %v626, %v536
      %v645 = vsel %vm641, %v628, %v538
      %v647 = vsel %vm641, %v630, %v540
      %v649 = vsel %vm641, %v632, %v542
      %v651 = vsel %vm641, %v634, %v544
      %v653 = vsel %vm641, %v636, %v546
      %v655 = vsel %vm641, %v638, %v548
      %v657 = vsel %vm641, %v640, %v550
      %v660 = vsel %vm607, %v443, %v560
      %v663 = vsel %vm607, %v450, %v562
      %v666 = vsel %vm607, %v457, %v564
      %v669 = vsel %vm607, %v464, %v566
      %v672 = vsel %vm607, %v471, %v568
      %v675 = vsel %vm607, %v478, %v570
      %v678 = vsel %vm607, %v485, %v572
      %v681 = vsel %vm607, %v557, %v574
      %v683 = vsel %vm624, %v660, %v576
      %v685 = vsel %vm624, %v663, %v578
      %v687 = vsel %vm624, %v666, %v580
      %v689 = vsel %vm624, %v669, %v582
      %v691 = vsel %vm624, %v672, %v584
      %v693 = vsel %vm624, %v675, %v586
      %v695 = vsel %vm624, %v678, %v588
      %v697 = vsel %vm624, %v681, %v590
      %v699 = vsel %vm641, %v683, %v592
      %v701 = vsel %vm641, %v685, %v594
      %v703 = vsel %vm641, %v687, %v596
      %v705 = vsel %vm641, %v689, %v598
      %v707 = vsel %vm641, %v691, %v600
      %v709 = vsel %vm641, %v693, %v602
      %v711 = vsel %vm641, %v695, %v604
      %v713 = vsel %vm641, %v697, %v606
      %v730 = vunpack.c.l.b16 %v643
      %v731 = vunpack.c.l.b16 %v699
      %v732 = vunpack.c.l.b16 %v512
      %v733 = vunpack.c.l.b16 %v645
      %v734 = vunpack.c.l.b16 %v701
      %v735 = vunpack.c.l.b16 %v513
      %v736 = vunpack.c.l.b16 %v647
      %v737 = vunpack.c.l.b16 %v703
      %v738 = vunpack.c.l.b16 %v514
      %v739 = vunpack.c.l.b16 %v649
      %v740 = vunpack.c.l.b16 %v705
      %v741 = vunpack.c.l.b16 %v515
      %v742 = vunpack.c.l.b16 %v651
      %v743 = vunpack.c.l.b16 %v707
      %v744 = vunpack.c.l.b16 %v516
      %v745 = vunpack.c.l.b16 %v653
      %v746 = vunpack.c.l.b16 %v709
      %v747 = vunpack.c.l.b16 %v517
      %v748 = vunpack.c.l.b16 %v655
      %v749 = vunpack.c.l.b16 %v711
      %v750 = vunpack.c.l.b16 %v558
      %v751 = vunpack.c.l.b16 %v657
      %v752 = vunpack.c.l.b16 %v713
      %v753 = vunpack.c.l.b16 %v510
      %v754 = vld [vmem:[%s3] sm:$0xf]
      %v755 = vld [vmem:[%s3 + $0x4] sm:$0xf]
      %v756 = vld [vmem:[%s3 + $0x8] sm:$0xf]
      %v757 = vld [vmem:[%s3 + $0xc] sm:$0xf]
      %v758 = vld [vmem:[%s3 + $0x10] sm:$0xf]
      %v759 = vld [vmem:[%s3 + $0x14] sm:$0xf]
      %v760 = vld [vmem:[%s3 + $0x18] sm:$0xf]
      %v761 = vld [vmem:[%s3 + $0x1c] sm:$0xf]
      %v762 = vld [vmem:[%s3 + $0x20] sm:$0xf]
      %v763 = vld [vmem:[%s3 + $0x24] sm:$0xf]
      %v764 = vld [vmem:[%s3 + $0x28] sm:$0xf]
      %v765 = vld [vmem:[%s3 + $0x2c] sm:$0xf]
      %v766 = vld [vmem:[%s3 + $0x30] sm:$0xf]
      %v767 = vld [vmem:[%s3 + $0x34] sm:$0xf]
      %v768 = vld [vmem:[%s3 + $0x38] sm:$0xf]
      %v769 = vld [vmem:[%s3 + $0x3c] sm:$0xf]
      %v770 = vld [vmem:[%s3 + $0x40] sm:$0xf]
      %v771 = vld [vmem:[%s3 + $0x44] sm:$0xf]
      %v772 = vld [vmem:[%s3 + $0x48] sm:$0xf]
      %v773 = vld [vmem:[%s3 + $0x4c] sm:$0xf]
      %v774 = vld [vmem:[%s3 + $0x50] sm:$0xf]
      %v775 = vld [vmem:[%s3 + $0x54] sm:$0xf]
      %v776 = vld [vmem:[%s3 + $0x58] sm:$0xf]
      %v777 = vld [vmem:[%s3 + $0x5c] sm:$0xf]
      %v778 = vld [vmem:[%s3 + $0x60] sm:$0xf]
      %v779 = vld [vmem:[%s3 + $0x64] sm:$0xf]
      %v780 = vld [vmem:[%s3 + $0x68] sm:$0xf]
      %v781 = vld [vmem:[%s3 + $0x6c] sm:$0xf]
      %v782 = vld [vmem:[%s3 + $0x70] sm:$0xf]
      %v783 = vld [vmem:[%s3 + $0x74] sm:$0xf]
      %v784 = vld [vmem:[%s3 + $0x78] sm:$0xf]
      %v785 = vld [vmem:[%s3 + $0x7c] sm:$0xf]
      %v786 = vld [vmem:[%s3 + $0x80] sm:$0xf]
      %v787 = vld [vmem:[%s3 + $0x84] sm:$0xf]
      %v788 = vld [vmem:[%s3 + $0x88] sm:$0xf]
      %v789 = vld [vmem:[%s3 + $0x8c] sm:$0xf]
      %v790 = vld [vmem:[%s4] sm:$0x1]
      %v792 = vlaneseq
      %v793 = vshrl.u32 %v792, 7
      %v794 = vsub.s32 0, %v793
      %v795 = vrot.slane %v790, %v794
      %v797 = vpack.c.b16 %v733, %v730
      %v798 = vpack.c.b16 %v734, %v731
      %v799 = vpack.c.b16 %v735, %v732
      %v800 = vpack.c.b16 %v739, %v736
      %v801 = vpack.c.b16 %v740, %v737
      %v802 = vpack.c.b16 %v741, %v738
      %v803 = vpack.c.b16 %v745, %v742
      %v804 = vpack.c.b16 %v746, %v743
      %v805 = vpack.c.b16 %v747, %v744
      %v806 = vpack.c.b16 %v751, %v748
      %v807 = vpack.c.b16 %v752, %v749
      %v808 = vpack.c.b16 %v753, %v750
      %v853 = vunpack.c.l.b16 %v754
      %v854 = vunpack.c.l.b16 %v755
      %v855 = vunpack.c.l.b16 %v756
      %v856 = vunpack.c.l.b16 %v757
      %v857 = vunpack.c.l.b16 %v758
      %v858 = vunpack.c.l.b16 %v759
      %v859 = vunpack.c.l.b16 %v760
      %v860 = vunpack.c.l.b16 %v761
      %v861 = vunpack.c.l.b16 %v762
      %v862 = vunpack.c.l.b16 %v763
      %v863 = vunpack.c.l.b16 %v764
      %v864 = vunpack.c.l.b16 %v765
      %v865 = vunpack.c.l.b16 %v766
      %v866 = vunpack.c.l.b16 %v767
      %v867 = vunpack.c.l.b16 %v768
      %v868 = vunpack.c.l.b16 %v769
      %v869 = vunpack.c.l.b16 %v770
      %v870 = vunpack.c.l.b16 %v771
      %v871 = vunpack.c.l.b16 %v772
      %v872 = vunpack.c.l.b16 %v773
      %v873 = vunpack.c.l.b16 %v774
      %v874 = vunpack.c.l.b16 %v775
      %v875 = vunpack.c.l.b16 %v776
      %v876 = vunpack.c.l.b16 %v777
      %v877 = vunpack.c.l.b16 %v778
      %v878 = vunpack.c.l.b16 %v779
      %v879 = vunpack.c.l.b16 %v780
      %v880 = vunpack.c.l.b16 %v781
      %v881 = vunpack.c.l.b16 %v782
      %v882 = vunpack.c.l.b16 %v783
      %v883 = vunpack.c.l.b16 %v784
      %v884 = vunpack.c.l.b16 %v785
      %v885 = vunpack.c.l.b16 %v786
      %v886 = vunpack.c.l.b16 %v787
      %v887 = vunpack.c.l.b16 %v788
      %v888 = vunpack.c.l.b16 %v789
      %v889 = vpack.c.b16 %v854, %v853
      %v890 = vpack.c.b16 %v856, %v855
      %v891 = vpack.c.b16 %v858, %v857
      %v892 = vpack.c.b16 %v860, %v859
      %v893 = vpack.c.b16 %v862, %v861
      %v894 = vpack.c.b16 %v864, %v863
      %v895 = vpack.c.b16 %v866, %v865
      %v896 = vpack.c.b16 %v868, %v867
      %v897 = vpack.c.b16 %v870, %v869
      %v898 = vpack.c.b16 %v872, %v871
      %v899 = vpack.c.b16 %v874, %v873
      %v900 = vpack.c.b16 %v876, %v875
      %v901 = vpack.c.b16 %v878, %v877
      %v902 = vpack.c.b16 %v880, %v879
      %v903 = vpack.c.b16 %v882, %v881
      %v904 = vpack.c.b16 %v884, %v883
      %v905 = vpack.c.b16 %v886, %v885
      %v906 = vpack.c.b16 %v888, %v887
      %v926 = vsel %vm607, %v799, 0
      %v929 = vsel %vm607, %v802, 0
      %v932 = vsel %vm607, %v805, 0
      %v935 = vsel %vm607, %v808, 0
      %937 = vmatprep.subr.bf16.mxu0 0
      %938 = vmatpush1.bf16.msra.mxu0 %v889
      %939 = vmatprep.subr.bf16.mxu0 0
      %940 = vmatpush1.bf16.msra.mxu0 %v890
      %941 = vmatprep.subr.bf16.mxu0 0
      %942 = vmatpush1.bf16.msra.mxu0 %v891
      %943 = vmatprep.subr.bf16.mxu0 0
      %944 = vmatpush1.bf16.msra.mxu0 %v892
      %945 = vmatprep.subr.bf16.mxu0 0
      %946 = vmatpush1.bf16.msra.mxu0 %v893
      %947 = vmatprep.subr.bf16.mxu0 0
      %948 = vmatpush1.bf16.msra.mxu0 %v894
      %949 = vmatprep.subr.bf16.mxu0 0
      %950 = vmatpush1.bf16.msra.mxu0 %v895
      %951 = vmatprep.subr.bf16.mxu0 0
      %952 = vmatpush1.bf16.msra.mxu0 %v896
      %953 = vmatprep.subr.bf16.mxu0 0
      %954 = vmatpush1.bf16.msra.mxu0 %v897
      %955 = vmatprep.subr.bf16.mxu0 0
      %956 = vmatpush1.bf16.msra.mxu0 %v898
      %957 = vmatprep.subr.bf16.mxu0 0
      %958 = vmatpush1.bf16.msra.mxu0 %v899
      %959 = vmatprep.subr.bf16.mxu0 0
      %960 = vmatpush1.bf16.msra.mxu0 %v900
      %961 = vmatprep.subr.bf16.mxu0 0
      %962 = vmatpush1.bf16.msra.mxu0 %v901
      %963 = vmatprep.subr.bf16.mxu0 0
      %964 = vmatpush1.bf16.msra.mxu0 %v902
      %965 = vmatprep.subr.bf16.mxu0 0
      %966 = vmatpush1.bf16.msra.mxu0 %v903
      %967 = vmatprep.subr.bf16.mxu0 0
      %968 = vmatpush1.bf16.msra.mxu0 %v904
      %969 = vmatprep.mubr.bf16.mxu0 %v798
      %970 = vmatmul.mubr.bf16.gmra.mrb[0].mxu0 %v797
      %v971 = vpop.f32.mrb[0].mxu0
      %v972 = vadd.f32 %v795, %v971
      %v973 = vpop.f32.mrb[0].mxu0
      %v974 = vpop.f32.mrb[0].mxu0
      %v975 = vadd.f32 %v795, %v974
      %v976 = vpop.f32.mrb[0].mxu0
      %977 = vmatprep.mubr.bf16.mxu0 %v801
      %978 = vmatmul.mubr.bf16.gmra.mrb[0].mxu0 %v800
      %v979 = vpop.f32.mrb[0].mxu0
      %v980 = vadd.f32 %v795, %v979
      %v981 = vpop.f32.mrb[0].mxu0
      %v982 = vpop.f32.mrb[0].mxu0
      %v983 = vadd.f32 %v795, %v982
      %v984 = vpop.f32.mrb[0].mxu0
      %985 = vmatprep.mubr.bf16.mxu0 %v804
      %986 = vmatmul.mubr.bf16.gmra.mrb[0].mxu0 %v803
      %v987 = vpop.f32.mrb[0].mxu0
      %v988 = vadd.f32 %v795, %v987
      %v989 = vpop.f32.mrb[0].mxu0
      %v990 = vpop.f32.mrb[0].mxu0
      %v991 = vadd.f32 %v795, %v990
      %v992 = vpop.f32.mrb[0].mxu0
      %993 = vmatprep.mubr.bf16.mxu0 %v807
      %994 = vmatmul.mubr.bf16.gmra.mrb[0].mxu0 %v806
      %v995 = vpop.f32.mrb[0].mxu0
      %v996 = vadd.f32 %v795, %v995
      %v997 = vpop.f32.mrb[0].mxu0
      %v998 = vpop.f32.mrb[0].mxu0
      %v999 = vadd.f32 %v795, %v998
      %v1000 = vpop.f32.mrb[0].mxu0
      %1001 = vdwg.mxu0
      %1002 = vmatprep.subr.bf16.mxu0 0
      %1003 = vmatpush1.bf16.msra.mxu0 %v905
      %1004 = vmatprep.subr.bf16.mxu0 0
      %1005 = vmatpush1.bf16.msra.mxu0 %v906
      %1006 = vmatprep.subr.bf16.mxu0 0
      %1007 = vmatpush1.bf16.msra.mxu0 0
      %1008 = vmatprep.subr.bf16.mxu0 0
      %1009 = vmatpush1.bf16.msra.mxu0 0
      %1010 = vmatprep.subr.bf16.mxu0 0
      %1011 = vmatpush1.bf16.msra.mxu0 0
      %1012 = vmatprep.subr.bf16.mxu0 0
      %1013 = vmatpush1.bf16.msra.mxu0 0
      %1014 = vmatprep.subr.bf16.mxu0 0
      %1015 = vmatpush1.bf16.msra.mxu0 0
      %1016 = vmatprep.subr.bf16.mxu0 0
      %1017 = vmatpush1.bf16.msra.mxu0 0
      %1018 = vmatprep.subr.bf16.mxu0 0
      %1019 = vmatpush1.bf16.msra.mxu0 0
      %1020 = vmatprep.subr.bf16.mxu0 0
      %1021 = vmatpush1.bf16.msra.mxu0 0
      %1022 = vmatprep.subr.bf16.mxu0 0
      %1023 = vmatpush1.bf16.msra.mxu0 0
      %1024 = vmatprep.subr.bf16.mxu0 0
      %1025 = vmatpush1.bf16.msra.mxu0 0
      %1026 = vmatprep.subr.bf16.mxu0 0
      %1027 = vmatpush1.bf16.msra.mxu0 0
      %1028 = vmatprep.subr.bf16.mxu0 0
      %1029 = vmatpush1.bf16.msra.mxu0 0
      %1030 = vmatprep.subr.bf16.mxu0 0
      %1031 = vmatpush1.bf16.msra.mxu0 0
      %1032 = vmatprep.subr.bf16.mxu0 0
      %1033 = vmatpush1.bf16.msra.mxu0 0
      %1034 = vmatprep.mubr.bf16.mxu0 0
      %1035 = vmatmul.mubr.bf16.gmra.mrb[0].mxu0 %v926
      %v1036 = vpop.f32.mrb[0].mxu0
      %v1037 = vadd.f32 %v972, %v1036
      %v1038 = vpop.f32.mrb[0].mxu0
      %v1039 = vpop.f32.mrb[0].mxu0
      %v1040 = vadd.f32 %v975, %v1039
      %v1041 = vpop.f32.mrb[0].mxu0
      %1042 = vmatprep.mubr.bf16.mxu0 0
      %1043 = vmatmul.mubr.bf16.gmra.mrb[0].mxu0 %v929
      %v1044 = vpop.f32.mrb[0].mxu0
      %v1045 = vadd.f32 %v980, %v1044
      %v1046 = vpop.f32.mrb[0].mxu0
      %v1047 = vpop.f32.mrb[0].mxu0
      %v1048 = vadd.f32 %v983, %v1047
      %v1049 = vpop.f32.mrb[0].mxu0
      %1050 = vmatprep.mubr.bf16.mxu0 0
      %1051 = vmatmul.mubr.bf16.gmra.mrb[0].mxu0 %v932
      %v1052 = vpop.f32.mrb[0].mxu0
      %v1053 = vadd.f32 %v988, %v1052
      %v1054 = vpop.f32.mrb[0].mxu0
      %v1055 = vpop.f32.mrb[0].mxu0
      %v1056 = vadd.f32 %v991, %v1055
      %v1057 = vpop.f32.mrb[0].mxu0
      %1058 = vmatprep.mubr.bf16.mxu0 0
      %1059 = vmatmul.mubr.bf16.gmra.mrb[0].mxu0 %v935
      %v1060 = vpop.f32.mrb[0].mxu0
      %v1061 = vadd.f32 %v996, %v1060
      %v1062 = vpop.f32.mrb[0].mxu0
      %v1063 = vpop.f32.mrb[0].mxu0
      %v1064 = vadd.f32 %v999, %v1063
      %v1065 = vpop.f32.mrb[0].mxu0
      %1066 = vdwg.mxu0
      %v1067 = vsel %vm607, %v1037, 0.0
      %v1068 = vsel %vm607, %v1040, 0.0
      %v1069 = vadd.f32 %v1067, %v1068
      %v1070 = vsel %vm607, %v1045, 0.0
      %v1071 = vadd.f32 %v1069, %v1070
      %v1072 = vsel %vm607, %v1048, 0.0
      %v1073 = vadd.f32 %v1071, %v1072
      %v1074 = vsel %vm607, %v1053, 0.0
      %v1075 = vadd.f32 %v1073, %v1074
      %v1076 = vsel %vm607, %v1056, 0.0
      %v1077 = vadd.f32 %v1075, %v1076
      %v1078 = vsel %vm607, %v1061, 0.0
      %v1079 = vadd.f32 %v1077, %v1078
      %v1080 = vsel %vm607, %v1064, 0.0
      %v1081 = vadd.f32 %v1079, %v1080
      %v1082 = vrot.slane %v1081, 4
      %v1083 = vadd.f32 %v1081, %v1082
      %v1084 = vrot.slane %v1083, 2
      %v1085 = vadd.f32 %v1083, %v1084
      %v1086 = vrot.slane %v1085, 1
      %v1087 = vadd.f32 %v1085, %v1086
      %v1088 = vmul.f32 %v1037, %v1037
      %v1089 = vmul.f32 %v1040, %v1040
      %v1090 = vmul.f32 %v1045, %v1045
      %v1091 = vmul.f32 %v1048, %v1048
      %v1092 = vmul.f32 %v1053, %v1053
      %v1093 = vmul.f32 %v1056, %v1056
      %v1094 = vmul.f32 %v1061, %v1061
      %v1095 = vmul.f32 %v1064, %v1064
      %v1096 = vsel %vm607, %v1088, 0.0
      %v1097 = vsel %vm607, %v1089, 0.0
      %v1098 = vadd.f32 %v1096, %v1097
      %v1099 = vsel %vm607, %v1090, 0.0
      %v1100 = vadd.f32 %v1098, %v1099
      %v1101 = vsel %vm607, %v1091, 0.0
      %v1102 = vadd.f32 %v1100, %v1101
      %v1103 = vsel %vm607, %v1092, 0.0
      %v1104 = vadd.f32 %v1102, %v1103
      %v1105 = vsel %vm607, %v1093, 0.0
      %v1106 = vadd.f32 %v1104, %v1105
      %v1107 = vsel %vm607, %v1094, 0.0
      %v1108 = vadd.f32 %v1106, %v1107
      %v1109 = vsel %vm607, %v1095, 0.0
      %v1110 = vadd.f32 %v1108, %v1109
      %v1111 = vrot.slane %v1110, 4
      %v1112 = vadd.f32 %v1110, %v1111
      %v1113 = vrot.slane %v1112, 2
      %v1114 = vadd.f32 %v1112, %v1113
      %v1115 = vrot.slane %v1114, 1
      %v1116 = vadd.f32 %v1114, %v1115
      %vm1117 = vcmask 1040384
      %v1118 = vsel %vm1117, %v1087, %v1116
      %vm1119 = vcmask 254976
      %1120 = vst.msk [vmem:[%s262] sm:$0x3] %vm1119, %v1118
      %1121 = vst.msk [vmem:[%s258] sm:$0xff] %vm607, %v1037
      %1122 = vst.msk [vmem:[%s258 + $0x8] sm:$0xff] %vm607, %v1040
      %1123 = vst.msk [vmem:[%s258 + $0x10] sm:$0xff] %vm607, %v1045
      %1124 = vst.msk [vmem:[%s258 + $0x18] sm:$0xff] %vm607, %v1048
      %1125 = vst.msk [vmem:[%s258 + $0x20] sm:$0xff] %vm607, %v1053
      %1126 = vst.msk [vmem:[%s258 + $0x28] sm:$0xff] %vm607, %v1056
      %1127 = vst.msk [vmem:[%s258 + $0x30] sm:$0xff] %vm607, %v1061
      %1128 = vst.msk [vmem:[%s258 + $0x38] sm:$0xff] %vm607, %v1064
      %p1129 = scmp.lt.s32.totalorder %s18, 1
      %s1130 = scalar_select %p1129, %s18, 1
      %s1131 = smul.addr %s1130, 8
      %s1132 = smul.addr %s1131, 8
      %s1133 = scalar_lea.vmem %s5, %s1132
      %p1134 = scmp.lt.s32.totalorder %s18, 1
      %s1135 = scalar_select %p1134, %s18, 1
      %s1136 = smul.addr %s1135, 2
      %s1137 = scalar_lea.vmem %s6, %s1136
      // Predicated region
      $region41: #{netd_forward.10} parent=39 // pred_check
        %p1138 = pneg %p146
      $region42: #{netd_forward.10} parent=39 // pred_check_branch
        %1140 = sbr.rel (%p1138) target = $region44
      $region43: #{netd_forward.10} parent=39 // pred_region
        _
      $region44: #{netd_forward.10} parent=39 // pred_fallthru
        _
      // Predicated region
      $region45: #{netd_forward.10} parent=39 // pred_check
        %p1141 = pneg %p172
      $region46: #{netd_forward.10} parent=39 // pred_check_branch
        %1143 = sbr.rel (%p1141) target = $region48
      $region47: #{netd_forward.10} parent=39 // pred_region
        _
      $region48: #{netd_forward.10} parent=39 // pred_fallthru
        _
    $region40: #{netd_forward.10} parent=5 // pred_fallthru
      _
    %p1144 = scmp.le.s32.totalorder 2, %s13
    // Predicated region
    $region49: #{netd_forward.10} parent=5 // pred_check
      %p1145 = pneg %p1144
    $region50: #{netd_forward.10} parent=5 // pred_check_branch
      %1147 = sbr.rel (%p1145) target = $region52
    $region51: #{netd_forward.10} parent=5 // pred_region
      %s1148 = ssub.s32 %s13, 2
      // Predicated region
      $region53: #{netd_forward.10} parent=51 // pred_check
        %p1149 = pneg %p152
      $region54: #{netd_forward.10} parent=51 // pred_check_branch
        %1151 = sbr.rel (%p1149) target = $region56
      $region55: #{netd_forward.10} parent=51 // pred_region
        %p1152 = scmp.lt.s32.totalorder %s19, 1
        %s1153 = scalar_select %p1152, %s19, 1
        %s1154 = smul.addr %s1153, 8
        %s1155 = smul.addr %s1154, 8
        %s1156 = scalar_lea.vmem %s5, %s1155
      $region56: #{netd_forward.10} parent=51 // pred_fallthru
        _
      // Predicated region
      $region57: #{netd_forward.10} parent=51 // pred_check
        %p1157 = pneg %p178
      $region58: #{netd_forward.10} parent=51 // pred_check_branch
        %1159 = sbr.rel (%p1157) target = $region60
      $region59: #{netd_forward.10} parent=51 // pred_region
        %p1160 = scmp.lt.s32.totalorder %s19, 1
        %s1161 = scalar_select %p1160, %s19, 1
        %s1162 = smul.addr %s1161, 2
        %s1163 = scalar_lea.vmem %s6, %s1162
      $region60: #{netd_forward.10} parent=51 // pred_fallthru
        _
    $region52: #{netd_forward.10} parent=5 // pred_fallthru
      _
  $region6: #{netd_forward.10} parent=0 // loop_footer
    %s17 = sadd.s32 1, %s13
  $region7: #{netd_forward.10} parent=0 // loop_footer_branch
    %12 = sbr.rel target = $region3
  $region8: #{netd_forward.10} parent=0 // loop_exit
    _

// kernel: netd_forward.8
$region0: #{netd_forward.8}
  #allocation0 [shape = 'u32[]', space=smem, size = 0x4, offset = 0x4, fixed_abs, tag = 'smem constant byte address 0x4 - core index']
  #allocation1 [shape = 'u32[144,128]{1,0:T(1,128)}', space=vmem, size = 0x12000, scoped, tag = 'internal scratch']
  %s0 = inlined_call_operand.vmem [shape: f32[2,8,8,12], index: 0, kind: input, shape index: {}]
  %s1 = inlined_call_operand.vmem [shape: bf16[27,32], index: 1, kind: input, shape index: {}]
  %s2 = inlined_call_operand.vmem [shape: bf16[288,32], index: 2, kind: input, shape index: {}]
  %s3 = inlined_call_operand.vmem [shape: f32[2,8,8,32], index: 3, kind: output, shape index: {}]
  %s4 = sld [smem:[#allocation0]]
  $region45: #{netd_forward.8} parent=0
    _
  %s6 = ssub.s32 1, %s4
  %s7 = scalar_select 0, %s6, %s4
  loop: start=0, step=1, limit=4
  $region2: #{netd_forward.8} parent=0 // loop_pre_header
    _
  $region3: #{netd_forward.8} parent=0 // loop_header
    %s9 = sphi 0, %s13
    %p10 = scmp.ge.s32.totalorder %s9, 4
    %s19 = sphi 0, %s21
    %s22 = sphi 0, %s19
    %s23 = sphi 0, %s22
    %s39 = sphi 0, %s23
    %s43 = sphi 0, %s43
    %s45 = sphi 0, %s43
    %s46 = sphi 0, %s45
    %s60 = sphi 0, %s46
    %s64 = sphi 0, %s64
    %s66 = sphi 0, %s64
    %s67 = sphi 0, %s66
    %s81 = sphi 0, %s67
    %s87 = sphi 0, %s89
    %s90 = sphi 0, %s87
    %s91 = sphi 0, %s90
    %s107 = sphi 0, %s91
  $region4: #{netd_forward.8} parent=0 // loop_header_branch
    %12 = sbr.rel (%p10) target = $region8
  $region5: #{netd_forward.8} parent=0 // loop_body
    %s14 = ssub.s32 %s9, 1
    %s15 = ssub.s32 %s9, 2
    %s16 = sadd.s32 %s9, 1
    %s17 = ssub.s32 %s9, %s16
    %p18 = scmp.eq.s32.totalorder %s17, 0
    %s20 = sadd.s32 %s19, 1
    %s21 = scalar_select %p18, %s19, %s20
    %p24 = pneg %p18
    %p25 = scmp.eq.s32.totalorder %s9, 1
    %p26 = por %p24, %p25
    %p27 = scmp.ne.s32.totalorder %s19, %s22
    %p28 = scmp.eq.s32.totalorder %s9, 0
    %p29 = por %p27, %p28
    %p30 = scmp.ne.s32.totalorder %s19, %s22
    %p31 = scmp.eq.s32.totalorder %s14, 1
    %p32 = por %p30, %p31
    %p33 = scmp.ne.s32.totalorder %s22, %s23
    %p34 = scmp.eq.s32.totalorder %s14, 0
    %p35 = por %p33, %p34
    %p36 = scmp.ne.s32.totalorder %s22, %s23
    %p37 = scmp.eq.s32.totalorder %s15, 1
    %p38 = por %p36, %p37
    %p40 = scmp.ne.s32.totalorder %s23, %s39
    %p41 = scmp.eq.s32.totalorder %s15, 0
    %p42 = por %p40, %p41
    %s44 = sadd.s32 %s43, 1
    %p47 = scmp.eq.s32.totalorder %s9, 1
    %p48 = scmp.ne.s32.totalorder %s43, %s45
    %p49 = scmp.eq.s32.totalorder %s9, 0
    %p50 = por %p48, %p49
    %p51 = scmp.ne.s32.totalorder %s43, %s45
    %p52 = scmp.eq.s32.totalorder %s14, 1
    %p53 = por %p51, %p52
    %p54 = scmp.ne.s32.totalorder %s45, %s46
    %p55 = scmp.eq.s32.totalorder %s14, 0
    %p56 = por %p54, %p55
    %p57 = scmp.ne.s32.totalorder %s45, %s46
    %p58 = scmp.eq.s32.totalorder %s15, 1
    %p59 = por %p57, %p58
    %p61 = scmp.ne.s32.totalorder %s46, %s60
    %p62 = scmp.eq.s32.totalorder %s15, 0
    %p63 = por %p61, %p62
    %s65 = sadd.s32 %s64, 1
    %p68 = scmp.eq.s32.totalorder %s9, 1
    %p69 = scmp.ne.s32.totalorder %s64, %s66
    %p70 = scmp.eq.s32.totalorder %s9, 0
    %p71 = por %p69, %p70
    %p72 = scmp.ne.s32.totalorder %s64, %s66
    %p73 = scmp.eq.s32.totalorder %s14, 1
    %p74 = por %p72, %p73
    %p75 = scmp.ne.s32.totalorder %s66, %s67
    %p76 = scmp.eq.s32.totalorder %s14, 0
    %p77 = por %p75, %p76
    %p78 = scmp.ne.s32.totalorder %s66, %s67
    %p79 = scmp.eq.s32.totalorder %s15, 1
    %p80 = por %p78, %p79
    %p82 = scmp.ne.s32.totalorder %s67, %s81
    %p83 = scmp.eq.s32.totalorder %s15, 0
    %p84 = por %p82, %p83
    %s85 = ssub.s32 %s9, %s16
    %p86 = scmp.eq.s32.totalorder %s85, 0
    %s88 = sadd.s32 %s87, 1
    %s89 = scalar_select %p86, %s87, %s88
    %p92 = pneg %p86
    %p93 = scmp.eq.s32.totalorder %s9, 1
    %p94 = por %p92, %p93
    %p95 = scmp.ne.s32.totalorder %s87, %s90
    %p96 = scmp.eq.s32.totalorder %s9, 0
    %p97 = por %p95, %p96
    %p98 = scmp.ne.s32.totalorder %s87, %s90
    %p99 = scmp.eq.s32.totalorder %s14, 1
    %p100 = por %p98, %p99
    %p101 = scmp.ne.s32.totalorder %s90, %s91
    %p102 = scmp.eq.s32.totalorder %s14, 0
    %p103 = por %p101, %p102
    %p104 = scmp.ne.s32.totalorder %s90, %s91
    %p105 = scmp.eq.s32.totalorder %s15, 1
    %p106 = por %p104, %p105
    %p108 = scmp.ne.s32.totalorder %s91, %s107
    %p109 = scmp.eq.s32.totalorder %s15, 0
    %p110 = por %p108, %p109
    %p111 = scmp.le.s32.totalorder 1, %s9
    %p112 = scmp.lt.s32.totalorder %s9, 3
    %p113 = pnand %p111, %p112
    %p114 = pneg %p113
    // Predicated region
    $region9: #{netd_forward.8} parent=5 // pred_check
      _
    $region10: #{netd_forward.8} parent=5 // pred_check_branch
      %116 = sbr.rel (%p113) target = $region12
    $region11: #{netd_forward.8} parent=5 // pred_region
      %s117 = ssub.s32 %s9, 1
      // Predicated region
      $region13: #{netd_forward.8} parent=11 // pred_check
        %p118 = pneg %p56
      $region14: #{netd_forward.8} parent=11 // pred_check_branch
        %120 = sbr.rel (%p118) target = $region16
      $region15: #{netd_forward.8} parent=11 // pred_region
        _
      $region16: #{netd_forward.8} parent=11 // pred_fallthru
        _
      // Predicated region
      $region17: #{netd_forward.8} parent=11 // pred_check
        %p121 = pneg %p77
      $region18: #{netd_forward.8} parent=11 // pred_check_branch
        %123 = sbr.rel (%p121) target = $region20
      $region19: #{netd_forward.8} parent=11 // pred_region
        _
      $region20: #{netd_forward.8} parent=11 // pred_fallthru
        _
    $region12: #{netd_forward.8} parent=5 // pred_fallthru
      _
    %p124 = scmp.lt.s32.totalorder %s9, 2
    // Predicated region
    $region21: #{netd_forward.8} parent=5 // pred_check
      %p125 = pneg %p124
    $region22: #{netd_forward.8} parent=5 // pred_check_branch
      %127 = sbr.rel (%p125) target = $region24
    $region23: #{netd_forward.8} parent=5 // pred_region
      // Predicated region
      $region25: #{netd_forward.8} parent=23 // pred_check
        %p128 = pneg %p29
      $region26: #{netd_forward.8} parent=23 // pred_check_branch
        %130 = sbr.rel (%p128) target = $region28
      $region27: #{netd_forward.8} parent=23 // pred_region
        %p131 = scmp.lt.s32.totalorder %s9, 1
        %s132 = scalar_select %p131, %s9, 1
        %s133 = smul.addr %s132, 8
        %s134 = smul.addr %s133, 8
        %s135 = scalar_lea.vmem %s0, %s134
      $region28: #{netd_forward.8} parent=23 // pred_fallthru
        _
    $region24: #{netd_forward.8} parent=5 // pred_fallthru
      _
    %p136 = scmp.le.s32.totalorder 1, %s9
    %p137 = scmp.lt.s32.totalorder %s9, 3
    %p138 = pnand %p136, %p137
    %p139 = pneg %p138
    // Predicated region
    $region29: #{netd_forward.8} parent=5 // pred_check
      _
    $region30: #{netd_forward.8} parent=5 // pred_check_branch
      %141 = sbr.rel (%p138) target = $region32
    $region31: #{netd_forward.8} parent=5 // pred_region
      %s142 = ssub.s32 %s9, 1
      %p143 = scmp.lt.s32.totalorder %s14, 1
      %s144 = scalar_select %p143, %s14, 1
      %s145 = smul.addr %s144, 8
      %s146 = smul.addr %s145, 8
      %s147 = scalar_lea.vmem %s0, %s146
      %p148 = pneg %p35
      %p149 = pneg %p32
      %p150 = pneg %p56
      %p151 = pneg %p53
      %p152 = pneg %p77
      %p153 = pneg %p74
      %p154 = pneg %p103
      %p155 = pneg %p100
      %p156 = scmp.lt.s32.totalorder %s14, 1
      %s157 = scalar_select %p156, %s14, 1
      %s158 = smul.addr %s157, 8
      %s159 = smul.addr %s158, 8
      %s160 = scalar_lea.vmem %s3, %s159
      %p161 = scmp.lt.s32.totalorder %s14, 1
      %s162 = scalar_select %p161, %s14, 1
      %s163 = smul.addr %s162, 8
      %s164 = smul.addr %s163, 8
      %s165 = scalar_lea.vmem %s0, %s164
      %p166 = scmp.lt.s32.totalorder %s14, 1
      %s167 = scalar_select %p166, %s14, 1
      %s168 = smul.addr %s167, 8
      %s169 = smul.addr %s168, 8
      %s170 = scalar_lea.vmem %s3, %s169
      %v172 = vld [vmem:[%s165] sm:$0xff]
      %v173 = vld [vmem:[%s165 + $0x8] sm:$0xff]
      %v174 = vld [vmem:[%s165 + $0x10] sm:$0xff]
      %v175 = vld [vmem:[%s165 + $0x18] sm:$0xff]
      %v176 = vld [vmem:[%s165 + $0x20] sm:$0xff]
      %v177 = vld [vmem:[%s165 + $0x28] sm:$0xff]
      %v178 = vld [vmem:[%s165 + $0x30] sm:$0xff]
      %v179 = vld [vmem:[%s165 + $0x38] sm:$0xff]
      %v180 = vpack.c.bf16 %v172, %v172
      %v181 = vpack.c.bf16 %v173, %v173
      %v182 = vpack.c.bf16 %v174, %v174
      %v183 = vpack.c.bf16 %v175, %v175
      %v184 = vpack.c.bf16 %v176, %v176
      %v185 = vpack.c.bf16 %v177, %v177
      %v186 = vpack.c.bf16 %v178, %v178
      %v187 = vpack.c.bf16 %v179, %v179
      %195 = vrot.lane.b32.xlu0 %v180, 119
      %v196 = vpop.permute.xlu0 %195
      %197 = vrot.lane.b32.xlu0 %v181, 119
      %v198 = vpop.permute.xlu0 %197
      %199 = vrot.lane.b32.xlu0 %v182, 119
      %v200 = vpop.permute.xlu0 %199
      %201 = vrot.lane.b32.xlu0 %v183, 119
      %v202 = vpop.permute.xlu0 %201
      %203 = vrot.lane.b32.xlu0 %v184, 119
      %v204 = vpop.permute.xlu0 %203
      %205 = vrot.lane.b32.xlu0 %v185, 119
      %v206 = vpop.permute.xlu0 %205
      %207 = vrot.lane.b32.xlu0 %v186, 119
      %v208 = vpop.permute.xlu0 %207
      %v210 = vshrl.u32 0, 16
      %v212 = vrot.slane %v210, 7
      %v213 = vshll.u32 0, 16
      %v215 = vor.u32 %v212, %v213
      %v217 = vshrl.u32 %v196, 16
      %v219 = vrot.slane %v217, 7
      %v220 = vshll.u32 %v196, 16
      %v222 = vor.u32 %v219, %v220
      %v224 = vshrl.u32 %v198, 16
      %v226 = vrot.slane %v224, 7
      %v227 = vshll.u32 %v198, 16
      %v229 = vor.u32 %v226, %v227
      %v231 = vshrl.u32 %v200, 16
      %v233 = vrot.slane %v231, 7
      %v234 = vshll.u32 %v200, 16
      %v236 = vor.u32 %v233, %v234
      %v238 = vshrl.u32 %v202, 16
      %v240 = vrot.slane %v238, 7
      %v241 = vshll.u32 %v202, 16
      %v243 = vor.u32 %v240, %v241
      %v245 = vshrl.u32 %v204, 16
      %v247 = vrot.slane %v245, 7
      %v248 = vshll.u32 %v204, 16
      %v250 = vor.u32 %v247, %v248
      %v252 = vshrl.u32 %v206, 16
      %v254 = vrot.slane %v252, 7
      %v255 = vshll.u32 %v206, 16
      %v257 = vor.u32 %v254, %v255
      %v259 = vshrl.u32 %v208, 16
      %v261 = vrot.slane %v259, 7
      %v262 = vshll.u32 %v208, 16
      %v264 = vor.u32 %v261, %v262
      %vm273 = vcmask 1040384
      %vm274 = vsmask.f32 256
      %vm275 = vmand %vm273, %vm274
      %v276 = vsel %vm275, 0, %v215
      %v277 = vsel %vm275, 0, %v222
      %v278 = vsel %vm275, 0, %v229
      %v279 = vsel %vm275, 0, %v236
      %v280 = vsel %vm275, 0, %v243
      %v281 = vsel %vm275, 0, %v250
      %v282 = vsel %vm275, 0, %v257
      %v283 = vsel %vm275, 0, %v264
      %284 = vrot.lane.b32.xlu0 %v180, 122
      %v285 = vpop.permute.xlu0 %284
      %286 = vrot.lane.b32.xlu0 %v181, 122
      %v287 = vpop.permute.xlu0 %286
      %288 = vrot.lane.b32.xlu0 %v182, 122
      %v289 = vpop.permute.xlu0 %288
      %290 = vrot.lane.b32.xlu0 %v183, 122
      %v291 = vpop.permute.xlu0 %290
      %292 = vrot.lane.b32.xlu0 %v184, 122
      %v293 = vpop.permute.xlu0 %292
      %294 = vrot.lane.b32.xlu0 %v185, 122
      %v295 = vpop.permute.xlu0 %294
      %296 = vrot.lane.b32.xlu0 %v186, 122
      %v297 = vpop.permute.xlu0 %296
      %v299 = vshrl.u32 %v180, 16
      %v301 = vrot.slane %v299, 7
      %v302 = vshll.u32 %v180, 16
      %v304 = vor.u32 %v301, %v302
      %v306 = vshrl.u32 %v181, 16
      %v308 = vrot.slane %v306, 7
      %v309 = vshll.u32 %v181, 16
      %v311 = vor.u32 %v308, %v309
      %v313 = vshrl.u32 %v182, 16
      %v315 = vrot.slane %v313, 7
      %v316 = vshll.u32 %v182, 16
      %v318 = vor.u32 %v315, %v316
      %v320 = vshrl.u32 %v183, 16
      %v322 = vrot.slane %v320, 7
      %v323 = vshll.u32 %v183, 16
      %v325 = vor.u32 %v322, %v323
      %v327 = vshrl.u32 %v184, 16
      %v329 = vrot.slane %v327, 7
      %v330 = vshll.u32 %v184, 16
      %v332 = vor.u32 %v329, %v330
      %v334 = vshrl.u32 %v185, 16
      %v336 = vrot.slane %v334, 7
      %v337 = vshll.u32 %v185, 16
      %v339 = vor.u32 %v336, %v337
      %v341 = vshrl.u32 %v186, 16
      %v343 = vrot.slane %v341, 7
      %v344 = vshll.u32 %v186, 16
      %v346 = vor.u32 %v343, %v344
      %v348 = vshrl.u32 %v187, 16
      %v350 = vrot.slane %v348, 7
      %v351 = vshll.u32 %v187, 16
      %v353 = vor.u32 %v350, %v351
      %354 = vrot.lane.b32.xlu0 %v304, 125
      %v355 = vpop.permute.xlu0 %354
      %356 = vrot.lane.b32.xlu0 %v311, 125
      %v357 = vpop.permute.xlu0 %356
      %358 = vrot.lane.b32.xlu0 %v318, 125
      %v359 = vpop.permute.xlu0 %358
      %360 = vrot.lane.b32.xlu0 %v325, 125
      %v361 = vpop.permute.xlu0 %360
      %362 = vrot.lane.b32.xlu0 %v332, 125
      %v363 = vpop.permute.xlu0 %362
      %364 = vrot.lane.b32.xlu0 %v339, 125
      %v365 = vpop.permute.xlu0 %364
      %366 = vrot.lane.b32.xlu0 %v346, 125
      %v367 = vpop.permute.xlu0 %366
      %368 = vrot.lane.b32.xlu0 %v353, 125
      %v369 = vpop.permute.xlu0 %368
      %v378 = vsel %vm275, 0, %v355
      %v379 = vsel %vm275, 0, %v357
      %v380 = vsel %vm275, 0, %v359
      %v381 = vsel %vm275, 0, %v361
      %v382 = vsel %vm275, 0, %v363
      %v383 = vsel %vm275, 0, %v365
      %v384 = vsel %vm275, 0, %v367
      %v385 = vsel %vm275, 0, %v369
      %386 = vrot.lane.b32.xlu0 %v304, 119
      %v387 = vpop.permute.xlu0 %386
      %388 = vrot.lane.b32.xlu0 %v311, 119
      %v389 = vpop.permute.xlu0 %388
      %390 = vrot.lane.b32.xlu0 %v318, 119
      %v391 = vpop.permute.xlu0 %390
      %392 = vrot.lane.b32.xlu0 %v325, 119
      %v393 = vpop.permute.xlu0 %392
      %394 = vrot.lane.b32.xlu0 %v332, 119
      %v395 = vpop.permute.xlu0 %394
      %396 = vrot.lane.b32.xlu0 %v339, 119
      %v397 = vpop.permute.xlu0 %396
      %398 = vrot.lane.b32.xlu0 %v346, 119
      %v399 = vpop.permute.xlu0 %398
      %400 = vrot.lane.b32.xlu0 %v353, 119
      %v401 = vpop.permute.xlu0 %400
      %v410 = vsel %vm275, 0, %v387
      %v411 = vsel %vm275, 0, %v389
      %v412 = vsel %vm275, 0, %v391
      %v413 = vsel %vm275, 0, %v393
      %v414 = vsel %vm275, 0, %v395
      %v415 = vsel %vm275, 0, %v397
      %v416 = vsel %vm275, 0, %v399
      %v417 = vsel %vm275, 0, %v401
      %419 = vrot.lane.b32.xlu0 0, 3
      %v420 = vpop.permute.xlu0 %419
      %421 = vrot.lane.b32.xlu0 %v285, 3
      %v422 = vpop.permute.xlu0 %421
      %423 = vrot.lane.b32.xlu0 %v287, 3
      %v424 = vpop.permute.xlu0 %423
      %425 = vrot.lane.b32.xlu0 %v289, 3
      %v426 = vpop.permute.xlu0 %425
      %427 = vrot.lane.b32.xlu0 %v291, 3
      %v428 = vpop.permute.xlu0 %427
      %429 = vrot.lane.b32.xlu0 %v293, 3
      %v430 = vpop.permute.xlu0 %429
      %431 = vrot.lane.b32.xlu0 %v295, 3
      %v432 = vpop.permute.xlu0 %431
      %433 = vrot.lane.b32.xlu0 %v297, 3
      %v434 = vpop.permute.xlu0 %433
      %435 = vrot.lane.b32.xlu0 0, 6
      %v436 = vpop.permute.xlu0 %435
      %437 = vrot.lane.b32.xlu0 %v196, 6
      %v438 = vpop.permute.xlu0 %437
      %439 = vrot.lane.b32.xlu0 %v198, 6
      %v440 = vpop.permute.xlu0 %439
      %441 = vrot.lane.b32.xlu0 %v200, 6
      %v442 = vpop.permute.xlu0 %441
      %443 = vrot.lane.b32.xlu0 %v202, 6
      %v444 = vpop.permute.xlu0 %443
      %445 = vrot.lane.b32.xlu0 %v204, 6
      %v446 = vpop.permute.xlu0 %445
      %447 = vrot.lane.b32.xlu0 %v206, 6
      %v448 = vpop.permute.xlu0 %447
      %449 = vrot.lane.b32.xlu0 %v208, 6
      %v450 = vpop.permute.xlu0 %449
      %459 = vrot.lane.b32.xlu0 %v378, 9
      %v460 = vpop.permute.xlu0 %459
      %461 = vrot.lane.b32.xlu0 %v379, 9
      %v462 = vpop.permute.xlu0 %461
      %463 = vrot.lane.b32.xlu0 %v380, 9
      %v464 = vpop.permute.xlu0 %463
      %465 = vrot.lane.b32.xlu0 %v381, 9
      %v466 = vpop.permute.xlu0 %465
      %467 = vrot.lane.b32.xlu0 %v382, 9
      %v468 = vpop.permute.xlu0 %467
      %469 = vrot.lane.b32.xlu0 %v383, 9
      %v470 = vpop.permute.xlu0 %469
      %471 = vrot.lane.b32.xlu0 %v384, 9
      %v472 = vpop.permute.xlu0 %471
      %473 = vrot.lane.b32.xlu0 %v385, 9
      %v474 = vpop.permute.xlu0 %473
      %476 = vrot.lane.b32.xlu0 %v180, 12
      %v477 = vpop.permute.xlu0 %476
      %478 = vrot.lane.b32.xlu0 %v181, 12
      %v479 = vpop.permute.xlu0 %478
      %480 = vrot.lane.b32.xlu0 %v182, 12
      %v481 = vpop.permute.xlu0 %480
      %482 = vrot.lane.b32.xlu0 %v183, 12
      %v483 = vpop.permute.xlu0 %482
      %484 = vrot.lane.b32.xlu0 %v184, 12
      %v485 = vpop.permute.xlu0 %484
      %486 = vrot.lane.b32.xlu0 %v185, 12
      %v487 = vpop.permute.xlu0 %486
      %488 = vrot.lane.b32.xlu0 %v186, 12
      %v489 = vpop.permute.xlu0 %488
      %490 = vrot.lane.b32.xlu0 %v187, 12
      %v491 = vpop.permute.xlu0 %490
      %500 = vrot.lane.b32.xlu0 %v410, 18
      %v501 = vpop.permute.xlu0 %500
      %502 = vrot.lane.b32.xlu0 %v411, 18
      %v503 = vpop.permute.xlu0 %502
      %504 = vrot.lane.b32.xlu0 %v412, 18
      %v505 = vpop.permute.xlu0 %504
      %506 = vrot.lane.b32.xlu0 %v413, 18
      %v507 = vpop.permute.xlu0 %506
      %508 = vrot.lane.b32.xlu0 %v414, 18
      %v509 = vpop.permute.xlu0 %508
      %510 = vrot.lane.b32.xlu0 %v415, 18
      %v511 = vpop.permute.xlu0 %510
      %512 = vrot.lane.b32.xlu0 %v416, 18
      %v513 = vpop.permute.xlu0 %512
      %514 = vrot.lane.b32.xlu0 %v417, 18
      %v515 = vpop.permute.xlu0 %514
      %516 = vrot.lane.b32.xlu0 %v180, 15
      %v517 = vpop.permute.xlu0 %516
      %518 = vrot.lane.b32.xlu0 %v181, 15
      %v519 = vpop.permute.xlu0 %518
      %520 = vrot.lane.b32.xlu0 %v182, 15
      %v521 = vpop.permute.xlu0 %520
      %522 = vrot.lane.b32.xlu0 %v183, 15
      %v523 = vpop.permute.xlu0 %522
      %524 = vrot.lane.b32.xlu0 %v184, 15
      %v525 = vpop.permute.xlu0 %524
      %526 = vrot.lane.b32.xlu0 %v185, 15
      %v527 = vpop.permute.xlu0 %526
      %528 = vrot.lane.b32.xlu0 %v186, 15
      %v529 = vpop.permute.xlu0 %528
      %530 = vrot.lane.b32.xlu0 %v187, 15
      %v531 = vpop.permute.xlu0 %530
      %vm532 = vcmask 23552
      %v535 = vsel %vm532, %v276, %v420
      %v538 = vsel %vm532, %v277, %v422
      %v541 = vsel %vm532, %v278, %v424
      %v544 = vsel %vm532, %v279, %v426
      %v547 = vsel %vm532, %v280, %v428
      %v550 = vsel %vm532, %v281, %v430
      %v553 = vsel %vm532, %v282, %v432
      %v556 = vsel %vm532, %v283, %v434
      %vm557 = vcmask 48128
      %v559 = vsel %vm557, %v535, %v436
      %v561 = vsel %vm557, %v538, %v438
      %v563 = vsel %vm557, %v541, %v440
      %v565 = vsel %vm557, %v544, %v442
      %v567 = vsel %vm557, %v547, %v444
      %v569 = vsel %vm557, %v550, %v446
      %v571 = vsel %vm557, %v553, %v448
      %v573 = vsel %vm557, %v556, %v450
      %vm574 = vcmask 72704
      %v576 = vsel %vm574, %v559, %v460
      %v578 = vsel %vm574, %v561, %v462
      %v580 = vsel %vm574, %v563, %v464
      %v582 = vsel %vm574, %v565, %v466
      %v584 = vsel %vm574, %v567, %v468
      %v586 = vsel %vm574, %v569, %v470
      %v588 = vsel %vm574, %v571, %v472
      %v590 = vsel %vm574, %v573, %v474
      %vm591 = vcmask 97280
      %v593 = vsel %vm591, %v576, %v477
      %v595 = vsel %vm591, %v578, %v479
      %v597 = vsel %vm591, %v580, %v481
      %v599 = vsel %vm591, %v582, %v483
      %v601 = vsel %vm591, %v584, %v485
      %v603 = vsel %vm591, %v586, %v487
      %v605 = vsel %vm591, %v588, %v489
      %v607 = vsel %vm591, %v590, %v491
      %vm608 = vcmask 121856
      %v609 = vsel %vm608, %v593, %v477
      %v610 = vsel %vm608, %v595, %v479
      %v611 = vsel %vm608, %v597, %v481
      %v612 = vsel %vm608, %v599, %v483
      %v613 = vsel %vm608, %v601, %v485
      %v614 = vsel %vm608, %v603, %v487
      %v615 = vsel %vm608, %v605, %v489
      %v616 = vsel %vm608, %v607, %v491
      %vm617 = vcmask 146432
      %v619 = vsel %vm617, %v609, %v501
      %v621 = vsel %vm617, %v610, %v503
      %v623 = vsel %vm617, %v611, %v505
      %v625 = vsel %vm617, %v612, %v507
      %v627 = vsel %vm617, %v613, %v509
      %v629 = vsel %vm617, %v614, %v511
      %v631 = vsel %vm617, %v615, %v513
      %v633 = vsel %vm617, %v616, %v515
      %vm634 = vcmask 171008
      %v636 = vsel %vm634, %v619, %v517
      %v638 = vsel %vm634, %v621, %v519
      %v640 = vsel %vm634, %v623, %v521
      %v642 = vsel %vm634, %v625, %v523
      %v644 = vsel %vm634, %v627, %v525
      %v646 = vsel %vm634, %v629, %v527
      %v648 = vsel %vm634, %v631, %v529
      %v650 = vsel %vm634, %v633, %v531
      %vm651 = vcmask 195584
      %v652 = vsel %vm651, %v636, %v517
      %v653 = vsel %vm651, %v638, %v519
      %v654 = vsel %vm651, %v640, %v521
      %v655 = vsel %vm651, %v642, %v523
      %v656 = vsel %vm651, %v644, %v525
      %v657 = vsel %vm651, %v646, %v527
      %v658 = vsel %vm651, %v648, %v529
      %v659 = vsel %vm651, %v650, %v531
      %v660 = vld [vmem:[%s1] sm:$0xf]
      %v661 = vld [vmem:[%s1 + $0x4] sm:$0xf]
      %v662 = vld [vmem:[%s1 + $0x8] sm:$0xf]
      %v663 = vld [vmem:[%s1 + $0xc] sm:$0x3]
      %v672 = vunpack.c.l.b16 %v652
      %v673 = vunpack.c.l.b16 %v653
      %v674 = vunpack.c.l.b16 %v654
      %v675 = vunpack.c.l.b16 %v655
      %v676 = vunpack.c.l.b16 %v656
      %v677 = vunpack.c.l.b16 %v657
      %v678 = vunpack.c.l.b16 %v658
      %v679 = vunpack.c.l.b16 %v659
      %v680 = vpack.c.b16 %v673, %v672
      %v681 = vpack.c.b16 %v675, %v674
      %v682 = vpack.c.b16 %v677, %v676
      %v683 = vpack.c.b16 %v679, %v678
      %v688 = vunpack.c.l.b16 %v660
      %v689 = vunpack.c.l.b16 %v661
      %v690 = vunpack.c.l.b16 %v662
      %v691 = vunpack.c.l.b16 %v663
      %v692 = vpack.c.b16 %v689, %v688
      %v693 = vpack.c.b16 %v691, %v690
      %vm695 = vcmask 220160
      %v697 = vsel %vm695, %v680, 0
      %v700 = vsel %vm695, %v681, 0
      %v703 = vsel %vm695, %v682, 0
      %v706 = vsel %vm695, %v683, 0
      %vm708 = vcmask 1044480
      %vm709 = vcmask 1045504
      %v710 = vsel %vm708, 4294967295, 65535
      %v711 = vsel %vm709, %v710, 0
      %v713 = vand.u32 %v693, %v711
      %715 = vmatprep.subr.bf16.mxu0 0
      %716 = vmatpush1.bf16.msra.mxu0 %v692
      %717 = vmatprep.subr.bf16.mxu0 0
      %718 = vmatpush1.bf16.msra.mxu0 %v713
      %719 = vmatprep.subr.bf16.mxu0 0
      %720 = vmatpush1.bf16.msra.mxu0 0
      %721 = vmatprep.subr.bf16.mxu0 0
      %722 = vmatpush1.bf16.msra.mxu0 0
      %723 = vmatprep.subr.bf16.mxu0 0
      %724 = vmatpush1.bf16.msra.mxu0 0
      %725 = vmatprep.subr.bf16.mxu0 0
      %726 = vmatpush1.bf16.msra.mxu0 0
      %727 = vmatprep.subr.bf16.mxu0 0
      %728 = vmatpush1.bf16.msra.mxu0 0
      %729 = vmatprep.subr.bf16.mxu0 0
      %730 = vmatpush1.bf16.msra.mxu0 0
      %731 = vmatprep.subr.bf16.mxu0 0
      %732 = vmatpush1.bf16.msra.mxu0 0
      %733 = vmatprep.subr.bf16.mxu0 0
      %734 = vmatpush1.bf16.msra.mxu0 0
      %735 = vmatprep.subr.bf16.mxu0 0
      %736 = vmatpush1.bf16.msra.mxu0 0
      %737 = vmatprep.subr.bf16.mxu0 0
      %738 = vmatpush1.bf16.msra.mxu0 0
      %739 = vmatprep.subr.bf16.mxu0 0
      %740 = vmatpush1.bf16.msra.mxu0 0
      %741 = vmatprep.subr.bf16.mxu0 0
      %742 = vmatpush1.bf16.msra.mxu0 0
      %743 = vmatprep.subr.bf16.mxu0 0
      %744 = vmatpush1.bf16.msra.mxu0 0
      %745 = vmatprep.subr.bf16.mxu0 0
      %746 = vmatpush1.bf16.msra.mxu0 0
      %747 = vmatprep.mubr.bf16.mxu0 0
      %748 = vmatmul.mubr.bf16.gmra.mrb[0].mxu0 %v697
      %v749 = vpop.f32.mrb[0].mxu0
      %v750 = vadd.f32 0.0, %v749
      %v751 = vpop.f32.mrb[0].mxu0
      %v752 = vpop.f32.mrb[0].mxu0
      %v753 = vadd.f32 0.0, %v752
      %v754 = vpop.f32.mrb[0].mxu0
      %755 = vmatprep.mubr.bf16.mxu0 0
      %756 = vmatmul.mubr.bf16.gmra.mrb[0].mxu0 %v700
      %v757 = vpop.f32.mrb[0].mxu0
      %v758 = vadd.f32 0.0, %v757
      %v759 = vpop.f32.mrb[0].mxu0
      %v760 = vpop.f32.mrb[0].mxu0
      %v761 = vadd.f32 0.0, %v760
      %v762 = vpop.f32.mrb[0].mxu0
      %763 = vmatprep.mubr.bf16.mxu0 0
      %764 = vmatmul.mubr.bf16.gmra.mrb[0].mxu0 %v703
      %v765 = vpop.f32.mrb[0].mxu0
      %v766 = vadd.f32 0.0, %v765
      %v767 = vpop.f32.mrb[0].mxu0
      %v768 = vpop.f32.mrb[0].mxu0
      %v769 = vadd.f32 0.0, %v768
      %v770 = vpop.f32.mrb[0].mxu0
      %771 = vmatprep.mubr.bf16.mxu0 0
      %772 = vmatmul.mubr.bf16.gmra.mrb[0].mxu0 %v706
      %v773 = vpop.f32.mrb[0].mxu0
      %v774 = vadd.f32 0.0, %v773
      %v775 = vpop.f32.mrb[0].mxu0
      %v776 = vpop.f32.mrb[0].mxu0
      %v777 = vadd.f32 0.0, %v776
      %v778 = vpop.f32.mrb[0].mxu0
      %779 = vdwg.mxu0
      %vm780 = vcmp.gt.f32.partialorder %v750, 0.0
      %vm781 = vcmp.gt.f32.partialorder %v753, 0.0
      %vm782 = vcmp.gt.f32.partialorder %v758, 0.0
      %vm783 = vcmp.gt.f32.partialorder %v761, 0.0
      %vm784 = vcmp.gt.f32.partialorder %v766, 0.0
      %vm785 = vcmp.gt.f32.partialorder %v769, 0.0
      %vm786 = vcmp.gt.f32.partialorder %v774, 0.0
      %vm787 = vcmp.gt.f32.partialorder %v777, 0.0
      %v788 = vmul.f32 %v750, 0.2
      %v789 = vmul.f32 %v753, 0.2
      %v790 = vmul.f32 %v758, 0.2
      %v791 = vmul.f32 %v761, 0.2
      %v792 = vmul.f32 %v766, 0.2
      %v793 = vmul.f32 %v769, 0.2
      %v794 = vmul.f32 %v774, 0.2
      %v795 = vmul.f32 %v777, 0.2
      %v796 = vsel %vm780, %v750, %v788
      %v797 = vsel %vm781, %v753, %v789
      %v798 = vsel %vm782, %v758, %v790
      %v799 = vsel %vm783, %v761, %v791
      %v800 = vsel %vm784, %v766, %v792
      %v801 = vsel %vm785, %v769, %v793
      %v802 = vsel %vm786, %v774, %v794
      %v803 = vsel %vm787, %v777, %v795
      %v804 = vpack.c.bf16 %v796, %v796
      %v805 = vpack.c.bf16 %v797, %v797
      %v806 = vpack.c.bf16 %v798, %v798
      %v807 = vpack.c.bf16 %v799, %v799
      %v808 = vpack.c.bf16 %v800, %v800
      %v809 = vpack.c.bf16 %v801, %v801
      %v810 = vpack.c.bf16 %v802, %v802
      %v811 = vpack.c.bf16 %v803, %v803
      %v813 = vshrl.u32 %v804, 16
      %v815 = vrot.slane %v813, 7
      %v816 = vshll.u32 %v804, 16
      %v818 = vor.u32 %v815, %v816
      %v820 = vshrl.u32 %v805, 16
      %v822 = vrot.slane %v820, 7
      %v823 = vshll.u32 %v805, 16
      %v825 = vor.u32 %v822, %v823
      %v827 = vshrl.u32 %v806, 16
      %v829 = vrot.slane %v827, 7
      %v830 = vshll.u32 %v806, 16
      %v832 = vor.u32 %v829, %v830
      %v834 = vshrl.u32 %v807, 16
      %v836 = vrot.slane %v834, 7
      %v837 = vshll.u32 %v807, 16
      %v839 = vor.u32 %v836, %v837
      %v841 = vshrl.u32 %v808, 16
      %v843 = vrot.slane %v841, 7
      %v844 = vshll.u32 %v808, 16
      %v846 = vor.u32 %v843, %v844
      %v848 = vshrl.u32 %v809, 16
      %v850 = vrot.slane %v848, 7
      %v851 = vshll.u32 %v809, 16
      %v853 = vor.u32 %v850, %v851
      %v855 = vshrl.u32 %v810, 16
      %v857 = vrot.slane %v855, 7
      %v858 = vshll.u32 %v810, 16
      %v860 = vor.u32 %v857, %v858
      %v862 = vshrl.u32 %v811, 16
      %v864 = vrot.slane %v862, 7
      %v865 = vshll.u32 %v811, 16
      %v867 = vor.u32 %v864, %v865
      %v876 = vsel %vm275, 0, %v818
      %v877 = vsel %vm275, 0, %v825
      %v878 = vsel %vm275, 0, %v832
      %v879 = vsel %vm275, 0, %v839
      %v880 = vsel %vm275, 0, %v846
      %v881 = vsel %vm275, 0, %v853
      %v882 = vsel %vm275, 0, %v860
      %v883 = vsel %vm275, 0, %v867
      %vm884 = vcmask 1044480
      %vm885 = vsmask.f32 4352
      %vm886 = vmand %vm884, %vm885
      %v887 = vsel %vm886, %v276, 0
      %v888 = vsel %vm886, %v876, 0
      %v889 = vsel %vm886, %v877, 0
      %v890 = vsel %vm886, %v878, 0
      %v891 = vsel %vm886, %v879, 0
      %v892 = vsel %vm886, %v880, 0
      %v893 = vsel %vm886, %v881, 0
      %v894 = vsel %vm886, %v882, 0
      %v895 = vsel %vm886, %v883, 0
      %v897 = vshrl.u32 %v887, 16
      %v899 = vshll.u32 %v887, 16
      %v901 = vrot.slane %v899, 1
      %v902 = vor.u32 %v897, %v901
      %v904 = vshrl.u32 %v888, 16
      %v906 = vshll.u32 %v888, 16
      %v908 = vrot.slane %v906, 1
      %v909 = vor.u32 %v904, %v908
      %v911 = vshrl.u32 %v889, 16
      %v913 = vshll.u32 %v889, 16
      %v915 = vrot.slane %v913, 1
      %v916 = vor.u32 %v911, %v915
      %v918 = vshrl.u32 %v890, 16
      %v920 = vshll.u32 %v890, 16
      %v922 = vrot.slane %v920, 1
      %v923 = vor.u32 %v918, %v922
      %v925 = vshrl.u32 %v891, 16
      %v927 = vshll.u32 %v891, 16
      %v929 = vrot.slane %v927, 1
      %v930 = vor.u32 %v925, %v929
      %v932 = vshrl.u32 %v892, 16
      %v934 = vshll.u32 %v892, 16
      %v936 = vrot.slane %v934, 1
      %v937 = vor.u32 %v932, %v936
      %v939 = vshrl.u32 %v893, 16
      %v941 = vshll.u32 %v893, 16
      %v943 = vrot.slane %v941, 1
      %v944 = vor.u32 %v939, %v943
      %v946 = vshrl.u32 %v894, 16
      %v948 = vshll.u32 %v894, 16
      %v950 = vrot.slane %v948, 1
      %v951 = vor.u32 %v946, %v950
      %952 = vrot.lane.b32.xlu0 %v902, 32
      %v953 = vpop.permute.xlu0 %952
      %954 = vrot.lane.b32.xlu0 %v909, 32
      %v955 = vpop.permute.xlu0 %954
      %956 = vrot.lane.b32.xlu0 %v916, 32
      %v957 = vpop.permute.xlu0 %956
      %958 = vrot.lane.b32.xlu0 %v923, 32
      %v959 = vpop.permute.xlu0 %958
      %960 = vrot.lane.b32.xlu0 %v930, 32
      %v961 = vpop.permute.xlu0 %960
      %962 = vrot.lane.b32.xlu0 %v937, 32
      %v963 = vpop.permute.xlu0 %962
      %964 = vrot.lane.b32.xlu0 %v944, 32
      %v965 = vpop.permute.xlu0 %964
      %966 = vrot.lane.b32.xlu0 %v951, 32
      %v967 = vpop.permute.xlu0 %966
      %v976 = vrot.slane %v887, 1
      %v977 = vrot.slane %v888, 1
      %v978 = vrot.slane %v889, 1
      %v979 = vrot.slane %v890, 1
      %v980 = vrot.slane %v891, 1
      %v981 = vrot.slane %v892, 1
      %v982 = vrot.slane %v893, 1
      %v983 = vrot.slane %v894, 1
      %984 = vrot.lane.b32.xlu0 %v976, 64
      %v985 = vpop.permute.xlu0 %984
      %986 = vrot.lane.b32.xlu0 %v977, 64
      %v987 = vpop.permute.xlu0 %986
      %988 = vrot.lane.b32.xlu0 %v978, 64
      %v989 = vpop.permute.xlu0 %988
      %990 = vrot.lane.b32.xlu0 %v979, 64
      %v991 = vpop.permute.xlu0 %990
      %992 = vrot.lane.b32.xlu0 %v980, 64
      %v993 = vpop.permute.xlu0 %992
      %994 = vrot.lane.b32.xlu0 %v981, 64
      %v995 = vpop.permute.xlu0 %994
      %996 = vrot.lane.b32.xlu0 %v982, 64
      %v997 = vpop.permute.xlu0 %996
      %998 = vrot.lane.b32.xlu0 %v983, 64
      %v999 = vpop.permute.xlu0 %998
      %1001 = vrot.lane.b32.xlu0 %v888, 96
      %v1002 = vpop.permute.xlu0 %1001
      %1003 = vrot.lane.b32.xlu0 %v889, 96
      %v1004 = vpop.permute.xlu0 %1003
      %1005 = vrot.lane.b32.xlu0 %v890, 96
      %v1006 = vpop.permute.xlu0 %1005
      %1007 = vrot.lane.b32.xlu0 %v891, 96
      %v1008 = vpop.permute.xlu0 %1007
      %1009 = vrot.lane.b32.xlu0 %v892, 96
      %v1010 = vpop.permute.xlu0 %1009
      %1011 = vrot.lane.b32.xlu0 %v893, 96
      %v1012 = vpop.permute.xlu0 %1011
      %1013 = vrot.lane.b32.xlu0 %v894, 96
      %v1014 = vpop.permute.xlu0 %1013
      %1015 = vrot.lane.b32.xlu0 %v895, 96
      %v1016 = vpop.permute.xlu0 %1015
      %v1018 = vshrl.u32 %v895, 16
      %v1020 = vshll.u32 %v895, 16
      %v1022 = vrot.slane %v1020, 1
      %v1023 = vor.u32 %v1018, %v1022
      %v1024 = vrot.slane %v895, 1
      %1025 = vrot.lane.b32.xlu0 %v977, 32
      %v1026 = vpop.permute.xlu0 %1025
      %1027 = vrot.lane.b32.xlu0 %v978, 32
      %v1028 = vpop.permute.xlu0 %1027
      %1029 = vrot.lane.b32.xlu0 %v979, 32
      %v1030 = vpop.permute.xlu0 %1029
      %1031 = vrot.lane.b32.xlu0 %v980, 32
      %v1032 = vpop.permute.xlu0 %1031
      %1033 = vrot.lane.b32.xlu0 %v981, 32
      %v1034 = vpop.permute.xlu0 %1033
      %1035 = vrot.lane.b32.xlu0 %v982, 32
      %v1036 = vpop.permute.xlu0 %1035
      %1037 = vrot.lane.b32.xlu0 %v983, 32
      %v1038 = vpop.permute.xlu0 %1037
      %1039 = vrot.lane.b32.xlu0 %v1024, 32
      %v1040 = vpop.permute.xlu0 %1039
      %1041 = vrot.lane.b32.xlu0 %v889, 64
      %v1042 = vpop.permute.xlu0 %1041
      %1043 = vrot.lane.b32.xlu0 %v890, 64
      %v1044 = vpop.permute.xlu0 %1043
      %1045 = vrot.lane.b32.xlu0 %v891, 64
      %v1046 = vpop.permute.xlu0 %1045
      %1047 = vrot.lane.b32.xlu0 %v892, 64
      %v1048 = vpop.permute.xlu0 %1047
      %1049 = vrot.lane.b32.xlu0 %v893, 64
      %v1050 = vpop.permute.xlu0 %1049
      %1051 = vrot.lane.b32.xlu0 %v894, 64
      %v1052 = vpop.permute.xlu0 %1051
      %1053 = vrot.lane.b32.xlu0 %v895, 64
      %v1054 = vpop.permute.xlu0 %1053
      %1055 = vrot.lane.b32.xlu0 %v887, 64
      %v1056 = vpop.permute.xlu0 %1055
      %1057 = vrot.lane.b32.xlu0 %v916, 96
      %v1058 = vpop.permute.xlu0 %1057
      %1059 = vrot.lane.b32.xlu0 %v923, 96
      %v1060 = vpop.permute.xlu0 %1059
      %1061 = vrot.lane.b32.xlu0 %v930, 96
      %v1062 = vpop.permute.xlu0 %1061
      %1063 = vrot.lane.b32.xlu0 %v937, 96
      %v1064 = vpop.permute.xlu0 %1063
      %1065 = vrot.lane.b32.xlu0 %v944, 96
      %v1066 = vpop.permute.xlu0 %1065
      %1067 = vrot.lane.b32.xlu0 %v951, 96
      %v1068 = vpop.permute.xlu0 %1067
      %1069 = vrot.lane.b32.xlu0 %v1023, 96
      %v1070 = vpop.permute.xlu0 %1069
      %1071 = vrot.lane.b32.xlu0 %v902, 96
      %v1072 = vpop.permute.xlu0 %1071
      %vm1073 = vcmask 261120
      %v1075 = vsel %vm1073, %v887, %v953
      %v1077 = vsel %vm1073, %v888, %v955
      %v1079 = vsel %vm1073, %v889, %v957
      %v1081 = vsel %vm1073, %v890, %v959
      %v1083 = vsel %vm1073, %v891, %v961
      %v1085 = vsel %vm1073, %v892, %v963
      %v1087 = vsel %vm1073, %v893, %v965
      %v1089 = vsel %vm1073, %v894, %v967
      %vm1090 = vcmask 523264
      %v1092 = vsel %vm1090, %v1075, %v985
      %v1094 = vsel %vm1090, %v1077, %v987
      %v1096 = vsel %vm1090, %v1079, %v989
      %v1098 = vsel %vm1090, %v1081, %v991
      %v1100 = vsel %vm1090, %v1083, %v993
      %v1102 = vsel %vm1090, %v1085, %v995
      %v1104 = vsel %vm1090, %v1087, %v997
      %v1106 = vsel %vm1090, %v1089, %v999
      %vm1107 = vcmask 785408
      %v1109 = vsel %vm1107, %v1092, %v1002
      %v1111 = vsel %vm1107, %v1094, %v1004
      %v1113 = vsel %vm1107, %v1096, %v1006
      %v1115 = vsel %vm1107, %v1098, %v1008
      %v1117 = vsel %vm1107, %v1100, %v1010
      %v1119 = vsel %vm1107, %v1102, %v1012
      %v1121 = vsel %vm1107, %v1104, %v1014
      %v1123 = vsel %vm1107, %v1106, %v1016
      %v1126 = vsel %vm1073, %v909, %v1026
      %v1129 = vsel %vm1073, %v916, %v1028
      %v1132 = vsel %vm1073, %v923, %v1030
      %v1135 = vsel %vm1073, %v930, %v1032
      %v1138 = vsel %vm1073, %v937, %v1034
      %v1141 = vsel %vm1073, %v944, %v1036
      %v1144 = vsel %vm1073, %v951, %v1038
      %v1147 = vsel %vm1073, %v1023, %v1040
      %v1149 = vsel %vm1090, %v1126, %v1042
      %v1151 = vsel %vm1090, %v1129, %v1044
      %v1153 = vsel %vm1090, %v1132, %v1046
      %v1155 = vsel %vm1090, %v1135, %v1048
      %v1157 = vsel %vm1090, %v1138, %v1050
      %v1159 = vsel %vm1090, %v1141, %v1052
      %v1161 = vsel %vm1090, %v1144, %v1054
      %v1163 = vsel %vm1090, %v1147, %v1056
      %v1165 = vsel %vm1107, %v1149, %v1058
      %v1167 = vsel %vm1107, %v1151, %v1060
      %v1169 = vsel %vm1107, %v1153, %v1062
      %v1171 = vsel %vm1107, %v1155, %v1064
      %v1173 = vsel %vm1107, %v1157, %v1066
      %v1175 = vsel %vm1107, %v1159, %v1068
      %v1177 = vsel %vm1107, %v1161, %v1070
      %v1179 = vsel %vm1107, %v1163, %v1072
      %v1196 = vunpack.c.l.b16 %v1109
      %v1197 = vunpack.c.l.b16 %v1165
      %v1198 = vunpack.c.l.b16 %v978
      %v1199 = vunpack.c.l.b16 %v1111
      %v1200 = vunpack.c.l.b16 %v1167
      %v1201 = vunpack.c.l.b16 %v979
      %v1202 = vunpack.c.l.b16 %v1113
      %v1203 = vunpack.c.l.b16 %v1169
      %v1204 = vunpack.c.l.b16 %v980
      %v1205 = vunpack.c.l.b16 %v1115
      %v1206 = vunpack.c.l.b16 %v1171
      %v1207 = vunpack.c.l.b16 %v981
      %v1208 = vunpack.c.l.b16 %v1117
      %v1209 = vunpack.c.l.b16 %v1173
      %v1210 = vunpack.c.l.b16 %v982
      %v1211 = vunpack.c.l.b16 %v1119
      %v1212 = vunpack.c.l.b16 %v1175
      %v1213 = vunpack.c.l.b16 %v983
      %v1214 = vunpack.c.l.b16 %v1121
      %v1215 = vunpack.c.l.b16 %v1177
      %v1216 = vunpack.c.l.b16 %v1024
      %v1217 = vunpack.c.l.b16 %v1123
      %v1218 = vunpack.c.l.b16 %v1179
      %v1219 = vunpack.c.l.b16 %v976
      %v1220 = vld [vmem:[%s2] sm:$0xf]
      %v1221 = vld [vmem:[%s2 + $0x4] sm:$0xf]
      %v1222 = vld [vmem:[%s2 + $0x8] sm:$0xf]
      %v1223 = vld [vmem:[%s2 + $0xc] sm:$0xf]
      %v1224 = vld [vmem:[%s2 + $0x10] sm:$0xf]
      %v1225 = vld [vmem:[%s2 + $0x14] sm:$0xf]
      %v1226 = vld [vmem:[%s2 + $0x18] sm:$0xf]
      %v1227 = vld [vmem:[%s2 + $0x1c] sm:$0xf]
      %v1228 = vld [vmem:[%s2 + $0x20] sm:$0xf]
      %v1229 = vld [vmem:[%s2 + $0x24] sm:$0xf]
      %v1230 = vld [vmem:[%s2 + $0x28] sm:$0xf]
      %v1231 = vld [vmem:[%s2 + $0x2c] sm:$0xf]
      %v1232 = vld [vmem:[%s2 + $0x30] sm:$0xf]
      %v1233 = vld [vmem:[%s2 + $0x34] sm:$0xf]
      %v1234 = vld [vmem:[%s2 + $0x38] sm:$0xf]
      %v1235 = vld [vmem:[%s2 + $0x3c] sm:$0xf]
      %v1236 = vld [vmem:[%s2 + $0x40] sm:$0xf]
      %v1237 = vld [vmem:[%s2 + $0x44] sm:$0xf]
      %v1238 = vld [vmem:[%s2 + $0x48] sm:$0xf]
      %v1239 = vld [vmem:[%s2 + $0x4c] sm:$0xf]
      %v1240 = vld [vmem:[%s2 + $0x50] sm:$0xf]
      %v1241 = vld [vmem:[%s2 + $0x54] sm:$0xf]
      %v1242 = vld [vmem:[%s2 + $0x58] sm:$0xf]
      %v1243 = vld [vmem:[%s2 + $0x5c] sm:$0xf]
      %v1244 = vld [vmem:[%s2 + $0x60] sm:$0xf]
      %v1245 = vld [vmem:[%s2 + $0x64] sm:$0xf]
      %v1246 = vld [vmem:[%s2 + $0x68] sm:$0xf]
      %v1247 = vld [vmem:[%s2 + $0x6c] sm:$0xf]
      %v1248 = vld [vmem:[%s2 + $0x70] sm:$0xf]
      %v1249 = vld [vmem:[%s2 + $0x74] sm:$0xf]
      %v1250 = vld [vmem:[%s2 + $0x78] sm:$0xf]
      %v1251 = vld [vmem:[%s2 + $0x7c] sm:$0xf]
      %v1252 = vld [vmem:[%s2 + $0x80] sm:$0xf]
      %v1253 = vld [vmem:[%s2 + $0x84] sm:$0xf]
      %v1254 = vld [vmem:[%s2 + $0x88] sm:$0xf]
      %v1255 = vld [vmem:[%s2 + $0x8c] sm:$0xf]
      %v1256 = vpack.c.b16 %v1199, %v1196
      %v1257 = vpack.c.b16 %v1200, %v1197
      %v1258 = vpack.c.b16 %v1201, %v1198
      %v1259 = vpack.c.b16 %v1205, %v1202
      %v1260 = vpack.c.b16 %v1206, %v1203
      %v1261 = vpack.c.b16 %v1207, %v1204
      %v1262 = vpack.c.b16 %v1211, %v1208
      %v1263 = vpack.c.b16 %v1212, %v1209
      %v1264 = vpack.c.b16 %v1213, %v1210
      %v1265 = vpack.c.b16 %v1217, %v1214
      %v1266 = vpack.c.b16 %v1218, %v1215
      %v1267 = vpack.c.b16 %v1219, %v1216
      %v1312 = vunpack.c.l.b16 %v1220
      %v1313 = vunpack.c.l.b16 %v1221
      %v1314 = vunpack.c.l.b16 %v1222
      %v1315 = vunpack.c.l.b16 %v1223
      %v1316 = vunpack.c.l.b16 %v1224
      %v1317 = vunpack.c.l.b16 %v1225
      %v1318 = vunpack.c.l.b16 %v1226
      %v1319 = vunpack.c.l.b16 %v1227
      %v1320 = vunpack.c.l.b16 %v1228
      %v1321 = vunpack.c.l.b16 %v1229
      %v1322 = vunpack.c.l.b16 %v1230
      %v1323 = vunpack.c.l.b16 %v1231
      %v1324 = vunpack.c.l.b16 %v1232
      %v1325 = vunpack.c.l.b16 %v1233
      %v1326 = vunpack.c.l.b16 %v1234
      %v1327 = vunpack.c.l.b16 %v1235
      %v1328 = vunpack.c.l.b16 %v1236
      %v1329 = vunpack.c.l.b16 %v1237
      %v1330 = vunpack.c.l.b16 %v1238
      %v1331 = vunpack.c.l.b16 %v1239
      %v1332 = vunpack.c.l.b16 %v1240
      %v1333 = vunpack.c.l.b16 %v1241
      %v1334 = vunpack.c.l.b16 %v1242
      %v1335 = vunpack.c.l.b16 %v1243
      %v1336 = vunpack.c.l.b16 %v1244
      %v1337 = vunpack.c.l.b16 %v1245
      %v1338 = vunpack.c.l.b16 %v1246
      %v1339 = vunpack.c.l.b16 %v1247
      %v1340 = vunpack.c.l.b16 %v1248
      %v1341 = vunpack.c.l.b16 %v1249
      %v1342 = vunpack.c.l.b16 %v1250
      %v1343 = vunpack.c.l.b16 %v1251
      %v1344 = vunpack.c.l.b16 %v1252
      %v1345 = vunpack.c.l.b16 %v1253
      %v1346 = vunpack.c.l.b16 %v1254
      %v1347 = vunpack.c.l.b16 %v1255
      %v1348 = vpack.c.b16 %v1313, %v1312
      %v1349 = vpack.c.b16 %v1315, %v1314
      %v1350 = vpack.c.b16 %v1317, %v1316
      %v1351 = vpack.c.b16 %v1319, %v1318
      %v1352 = vpack.c.b16 %v1321, %v1320
      %v1353 = vpack.c.b16 %v1323, %v1322
      %v1354 = vpack.c.b16 %v1325, %v1324
      %v1355 = vpack.c.b16 %v1327, %v1326
      %v1356 = vpack.c.b16 %v1329, %v1328
      %v1357 = vpack.c.b16 %v1331, %v1330
      %v1358 = vpack.c.b16 %v1333, %v1332
      %v1359 = vpack.c.b16 %v1335, %v1334
      %v1360 = vpack.c.b16 %v1337, %v1336
      %v1361 = vpack.c.b16 %v1339, %v1338
      %v1362 = vpack.c.b16 %v1341, %v1340
      %v1363 = vpack.c.b16 %v1343, %v1342
      %v1364 = vpack.c.b16 %v1345, %v1344
      %v1365 = vpack.c.b16 %v1347, %v1346
      %v1385 = vsel %vm1073, %v1258, 0
      %v1388 = vsel %vm1073, %v1261, 0
      %v1391 = vsel %vm1073, %v1264, 0
      %v1394 = vsel %vm1073, %v1267, 0
      %1396 = vmatprep.subr.bf16.mxu0 0
      %1397 = vmatpush1.bf16.msra.mxu0 %v1348
      %1398 = vmatprep.subr.bf16.mxu0 0
      %1399 = vmatpush1.bf16.msra.mxu0 %v1349
      %1400 = vmatprep.subr.bf16.mxu0 0
      %1401 = vmatpush1.bf16.msra.mxu0 %v1350
      %1402 = vmatprep.subr.bf16.mxu0 0
      %1403 = vmatpush1.bf16.msra.mxu0 %v1351
      %1404 = vmatprep.subr.bf16.mxu0 0
      %1405 = vmatpush1.bf16.msra.mxu0 %v1352
      %1406 = vmatprep.subr.bf16.mxu0 0
      %1407 = vmatpush1.bf16.msra.mxu0 %v1353
      %1408 = vmatprep.subr.bf16.mxu0 0
      %1409 = vmatpush1.bf16.msra.mxu0 %v1354
      %1410 = vmatprep.subr.bf16.mxu0 0
      %1411 = vmatpush1.bf16.msra.mxu0 %v1355
      %1412 = vmatprep.subr.bf16.mxu0 0
      %1413 = vmatpush1.bf16.msra.mxu0 %v1356
      %1414 = vmatprep.subr.bf16.mxu0 0
      %1415 = vmatpush1.bf16.msra.mxu0 %v1357
      %1416 = vmatprep.subr.bf16.mxu0 0
      %1417 = vmatpush1.bf16.msra.mxu0 %v1358
      %1418 = vmatprep.subr.bf16.mxu0 0
      %1419 = vmatpush1.bf16.msra.mxu0 %v1359
      %1420 = vmatprep.subr.bf16.mxu0 0
      %1421 = vmatpush1.bf16.msra.mxu0 %v1360
      %1422 = vmatprep.subr.bf16.mxu0 0
      %1423 = vmatpush1.bf16.msra.mxu0 %v1361
      %1424 = vmatprep.subr.bf16.mxu0 0
      %1425 = vmatpush1.bf16.msra.mxu0 %v1362
      %1426 = vmatprep.subr.bf16.mxu0 0
      %1427 = vmatpush1.bf16.msra.mxu0 %v1363
      %1428 = vmatprep.mubr.bf16.mxu0 %v1257
      %1429 = vmatmul.mubr.bf16.gmra.mrb[0].mxu0 %v1256
      %v1430 = vpop.f32.mrb[0].mxu0
      %v1431 = vadd.f32 0.0, %v1430
      %v1432 = vpop.f32.mrb[0].mxu0
      %v1433 = vpop.f32.mrb[0].mxu0
      %v1434 = vadd.f32 0.0, %v1433
      %v1435 = vpop.f32.mrb[0].mxu0
      %1436 = vmatprep.mubr.bf16.mxu0 %v1260
      %1437 = vmatmul.mubr.bf16.gmra.mrb[0].mxu0 %v1259
      %v1438 = vpop.f32.mrb[0].mxu0
      %v1439 = vadd.f32 0.0, %v1438
      %v1440 = vpop.f32.mrb[0].mxu0
      %v1441 = vpop.f32.mrb[0].mxu0
      %v1442 = vadd.f32 0.0, %v1441
      %v1443 = vpop.f32.mrb[0].mxu0
      %1444 = vmatprep.mubr.bf16.mxu0 %v1263
      %1445 = vmatmul.mubr.bf16.gmra.mrb[0].mxu0 %v1262
      %v1446 = vpop.f32.mrb[0].mxu0
      %v1447 = vadd.f32 0.0, %v1446
      %v1448 = vpop.f32.mrb[0].mxu0
      %v1449 = vpop.f32.mrb[0].mxu0
      %v1450 = vadd.f32 0.0, %v1449
      %v1451 = vpop.f32.mrb[0].mxu0
      %1452 = vmatprep.mubr.bf16.mxu0 %v1266
      %1453 = vmatmul.mubr.bf16.gmra.mrb[0].mxu0 %v1265
      %v1454 = vpop.f32.mrb[0].mxu0
      %v1455 = vadd.f32 0.0, %v1454
      %v1456 = vpop.f32.mrb[0].mxu0
      %v1457 = vpop.f32.mrb[0].mxu0
      %v1458 = vadd.f32 0.0, %v1457
      %v1459 = vpop.f32.mrb[0].mxu0
      %1460 = vdwg.mxu0
      %1461 = vmatprep.subr.bf16.mxu0 0
      %1462 = vmatpush1.bf16.msra.mxu0 %v1364
      %1463 = vmatprep.subr.bf16.mxu0 0
      %1464 = vmatpush1.bf16.msra.mxu0 %v1365
      %1465 = vmatprep.subr.bf16.mxu0 0
      %1466 = vmatpush1.bf16.msra.mxu0 0
      %1467 = vmatprep.subr.bf16.mxu0 0
      %1468 = vmatpush1.bf16.msra.mxu0 0
      %1469 = vmatprep.subr.bf16.mxu0 0
      %1470 = vmatpush1.bf16.msra.mxu0 0
      %1471 = vmatprep.subr.bf16.mxu0 0
      %1472 = vmatpush1.bf16.msra.mxu0 0
      %1473 = vmatprep.subr.bf16.mxu0 0
      %1474 = vmatpush1.bf16.msra.mxu0 0
      %1475 = vmatprep.subr.bf16.mxu0 0
      %1476 = vmatpush1.bf16.msra.mxu0 0
      %1477 = vmatprep.subr.bf16.mxu0 0
      %1478 = vmatpush1.bf16.msra.mxu0 0
      %1479 = vmatprep.subr.bf16.mxu0 0
      %1480 = vmatpush1.bf16.msra.mxu0 0
      %1481 = vmatprep.subr.bf16.mxu0 0
      %1482 = vmatpush1.bf16.msra.mxu0 0
      %1483 = vmatprep.subr.bf16.mxu0 0
      %1484 = vmatpush1.bf16.msra.mxu0 0
      %1485 = vmatprep.subr.bf16.mxu0 0
      %1486 = vmatpush1.bf16.msra.mxu0 0
      %1487 = vmatprep.subr.bf16.mxu0 0
      %1488 = vmatpush1.bf16.msra.mxu0 0
      %1489 = vmatprep.subr.bf16.mxu0 0
      %1490 = vmatpush1.bf16.msra.mxu0 0
      %1491 = vmatprep.subr.bf16.mxu0 0
      %1492 = vmatpush1.bf16.msra.mxu0 0
      %1493 = vmatprep.mubr.bf16.mxu0 0
      %1494 = vmatmul.mubr.bf16.gmra.mrb[0].mxu0 %v1385
      %v1495 = vpop.f32.mrb[0].mxu0
      %v1496 = vadd.f32 %v1431, %v1495
      %v1497 = vpop.f32.mrb[0].mxu0
      %v1498 = vpop.f32.mrb[0].mxu0
      %v1499 = vadd.f32 %v1434, %v1498
      %v1500 = vpop.f32.mrb[0].mxu0
      %1501 = vmatprep.mubr.bf16.mxu0 0
      %1502 = vmatmul.mubr.bf16.gmra.mrb[0].mxu0 %v1388
      %v1503 = vpop.f32.mrb[0].mxu0
      %v1504 = vadd.f32 %v1439, %v1503
      %v1505 = vpop.f32.mrb[0].mxu0
      %v1506 = vpop.f32.mrb[0].mxu0
      %v1507 = vadd.f32 %v1442, %v1506
      %v1508 = vpop.f32.mrb[0].mxu0
      %1509 = vmatprep.mubr.bf16.mxu0 0
      %1510 = vmatmul.mubr.bf16.gmra.mrb[0].mxu0 %v1391
      %v1511 = vpop.f32.mrb[0].mxu0
      %v1512 = vadd.f32 %v1447, %v1511
      %v1513 = vpop.f32.mrb[0].mxu0
      %v1514 = vpop.f32.mrb[0].mxu0
      %v1515 = vadd.f32 %v1450, %v1514
      %v1516 = vpop.f32.mrb[0].mxu0
      %1517 = vmatprep.mubr.bf16.mxu0 0
      %1518 = vmatmul.mubr.bf16.gmra.mrb[0].mxu0 %v1394
      %v1519 = vpop.f32.mrb[0].mxu0
      %v1520 = vadd.f32 %v1455, %v1519
      %v1521 = vpop.f32.mrb[0].mxu0
      %v1522 = vpop.f32.mrb[0].mxu0
      %v1523 = vadd.f32 %v1458, %v1522
      %v1524 = vpop.f32.mrb[0].mxu0
      %1525 = vdwg.mxu0
      %vm1526 = vcmp.gt.f32.partialorder %v1496, 0.0
      %vm1527 = vcmp.gt.f32.partialorder %v1499, 0.0
      %vm1528 = vcmp.gt.f32.partialorder %v1504, 0.0
      %vm1529 = vcmp.gt.f32.partialorder %v1507, 0.0
      %vm1530 = vcmp.gt.f32.partialorder %v1512, 0.0
      %vm1531 = vcmp.gt.f32.partialorder %v1515, 0.0
      %vm1532 = vcmp.gt.f32.partialorder %v1520, 0.0
      %vm1533 = vcmp.gt.f32.partialorder %v1523, 0.0
      %v1534 = vmul.f32 %v1496, 0.2
      %v1535 = vmul.f32 %v1499, 0.2
      %v1536 = vmul.f32 %v1504, 0.2
      %v1537 = vmul.f32 %v1507, 0.2
      %v1538 = vmul.f32 %v1512, 0.2
      %v1539 = vmul.f32 %v1515, 0.2
      %v1540 = vmul.f32 %v1520, 0.2
      %v1541 = vmul.f32 %v1523, 0.2
      %v1542 = vsel %vm1526, %v1496, %v1534
      %v1543 = vsel %vm1527, %v1499, %v1535
      %v1544 = vsel %vm1528, %v1504, %v1536
      %v1545 = vsel %vm1529, %v1507, %v1537
      %v1546 = vsel %vm1530, %v1512, %v1538
      %v1547 = vsel %vm1531, %v1515, %v1539
      %v1548 = vsel %vm1532, %v1520, %v1540
      %v1549 = vsel %vm1533, %v1523, %v1541
      %1550 = vst.msk [vmem:[%s170] sm:$0xff] %vm1073, %v1542
      %1551 = vst.msk [vmem:[%s170 + $0x8] sm:$0xff] %vm1073, %v1543
      %1552 = vst.msk [vmem:[%s170 + $0x10] sm:$0xff] %vm1073, %v1544
      %1553 = vst.msk [vmem:[%s170 + $0x18] sm:$0xff] %vm1073, %v1545
      %1554 = vst.msk [vmem:[%s170 + $0x20] sm:$0xff] %vm1073, %v1546
      %1555 = vst.msk [vmem:[%s170 + $0x28] sm:$0xff] %vm1073, %v1547
      %1556 = vst.msk [vmem:[%s170 + $0x30] sm:$0xff] %vm1073, %v1548
      %1557 = vst.msk [vmem:[%s170 + $0x38] sm:$0xff] %vm1073, %v1549
      %p1558 = scmp.lt.s32.totalorder %s14, 1
      %s1559 = scalar_select %p1558, %s14, 1
      %s1560 = smul.addr %s1559, 8
      %s1561 = smul.addr %s1560, 8
      %s1562 = scalar_lea.vmem %s3, %s1561
      // Predicated region
      $region33: #{netd_forward.8} parent=31 // pred_check
        %p1563 = pneg %p100
      $region34: #{netd_forward.8} parent=31 // pred_check_branch
        %1565 = sbr.rel (%p1563) target = $region36
      $region35: #{netd_forward.8} parent=31 // pred_region
        _
      $region36: #{netd_forward.8} parent=31 // pred_fallthru
        _
    $region32: #{netd_forward.8} parent=5 // pred_fallthru
      _
    %p1566 = scmp.le.s32.totalorder 2, %s9
    // Predicated region
    $region37: #{netd_forward.8} parent=5 // pred_check
      %p1567 = pneg %p1566
    $region38: #{netd_forward.8} parent=5 // pred_check_branch
      %1569 = sbr.rel (%p1567) target = $region40
    $region39: #{netd_forward.8} parent=5 // pred_region
      %s1570 = ssub.s32 %s9, 2
      // Predicated region
      $region41: #{netd_forward.8} parent=39 // pred_check
        %p1571 = pneg %p106
      $region42: #{netd_forward.8} parent=39 // pred_check_branch
        %1573 = sbr.rel (%p1571) target = $region44
      $region43: #{netd_forward.8} parent=39 // pred_region
        %p1574 = scmp.lt.s32.totalorder %s15, 1
        %s1575 = scalar_select %p1574, %s15, 1
        %s1576 = smul.addr %s1575, 8
        %s1577 = smul.addr %s1576, 8
        %s1578 = scalar_lea.vmem %s3, %s1577
      $region44: #{netd_forward.8} parent=39 // pred_fallthru
        _
    $region40: #{netd_forward.8} parent=5 // pred_fallthru
      _
  $region6: #{netd_forward.8} parent=0 // loop_footer
    %s13 = sadd.s32 1, %s9
  $region7: #{netd_forward.8} parent=0 // loop_footer_branch
    %8 = sbr.rel target = $region3
  $region8: #{netd_forward.8} parent=0 // loop_exit
    _

// kernel: netd_forward.11
$region0: #{netd_forward.11}
  #allocation0 [shape = 'u32[]', space=smem, size = 0x4, offset = 0x4, fixed_abs, tag = 'smem constant byte address 0x4 - core index']
  #allocation1 [shape = 'u32[144,128]{1,0:T(1,128)}', space=vmem, size = 0x12000, scoped, tag = 'internal scratch']
  %s0 = inlined_call_operand.vmem [shape: f32[2,4,4,128], index: 0, kind: input, shape index: {}]
  %s1 = inlined_call_operand.vmem [shape: f32[1,128], index: 1, kind: input, shape index: {}]
  %s2 = inlined_call_operand.vmem [shape: f32[1,128], index: 2, kind: input, shape index: {}]
  %s3 = inlined_call_operand.vmem [shape: f32[2,4,4,128], index: 3, kind: input, shape index: {}]
  %s4 = inlined_call_operand.vmem [shape: bf16[288,64], index: 4, kind: input, shape index: {}]
  %s5 = inlined_call_operand.vmem [shape: f32[2,4,4,64], index: 5, kind: output, shape index: {0}]
  %s6 = inlined_call_operand.vmem [shape: f32[2,2,64], index: 6, kind: output, shape index: {1}]
  %7 = xla_tuple %s5, %s6
  %s8 = sld [smem:[#allocation0]]
  $region61: #{netd_forward.11} parent=0
    _
  %s10 = ssub.s32 1, %s8
  %s11 = scalar_select 0, %s10, %s8
  loop: start=0, step=1, limit=4
  $region2: #{netd_forward.11} parent=0 // loop_pre_header
    _
  $region3: #{netd_forward.11} parent=0 // loop_header
    %s13 = sphi 0, %s17
    %p14 = scmp.ge.s32.totalorder %s13, 4
    %s23 = sphi 0, %s25
    %s26 = sphi 0, %s23
    %s27 = sphi 0, %s26
    %s43 = sphi 0, %s27
    %s47 = sphi 0, %s47
    %s49 = sphi 0, %s47
    %s50 = sphi 0, %s49
    %s64 = sphi 0, %s50
    %s68 = sphi 0, %s68
    %s70 = sphi 0, %s68
    %s71 = sphi 0, %s70
    %s85 = sphi 0, %s71
    %s91 = sphi 0, %s93
    %s94 = sphi 0, %s91
    %s95 = sphi 0, %s94
    %s111 = sphi 0, %s95
    %s115 = sphi 0, %s115
    %s117 = sphi 0, %s115
    %s118 = sphi 0, %s117
    %s132 = sphi 0, %s118
    %s138 = sphi 0, %s140
    %s141 = sphi 0, %s138
    %s142 = sphi 0, %s141
    %s158 = sphi 0, %s142
    %s164 = sphi 0, %s166
    %s167 = sphi 0, %s164
    %s168 = sphi 0, %s167
    %s184 = sphi 0, %s168
  $region4: #{netd_forward.11} parent=0 // loop_header_branch
    %16 = sbr.rel (%p14) target = $region8
  $region5: #{netd_forward.11} parent=0 // loop_body
    %s18 = ssub.s32 %s13, 1
    %s19 = ssub.s32 %s13, 2
    %s20 = sadd.s32 %s13, 1
    %s21 = ssub.s32 %s13, %s20
    %p22 = scmp.eq.s32.totalorder %s21, 0
    %s24 = sadd.s32 %s23, 1
    %s25 = scalar_select %p22, %s23, %s24
    %p28 = pneg %p22
    %p29 = scmp.eq.s32.totalorder %s13, 1
    %p30 = por %p28, %p29
    %p31 = scmp.ne.s32.totalorder %s23, %s26
    %p32 = scmp.eq.s32.totalorder %s13, 0
    %p33 = por %p31, %p32
    %p34 = scmp.ne.s32.totalorder %s23, %s26
    %p35 = scmp.eq.s32.totalorder %s18, 1
    %p36 = por %p34, %p35
    %p37 = scmp.ne.s32.totalorder %s26, %s27
    %p38 = scmp.eq.s32.totalorder %s18, 0
    %p39 = por %p37, %p38
    %p40 = scmp.ne.s32.totalorder %s26, %s27
    %p41 = scmp.eq.s32.totalorder %s19, 1
    %p42 = por %p40, %p41
    %p44 = scmp.ne.s32.totalorder %s27, %s43
    %p45 = scmp.eq.s32.totalorder %s19, 0
    %p46 = por %p44, %p45
    %s48 = sadd.s32 %s47, 1
    %p51 = scmp.eq.s32.totalorder %s13, 1
    %p52 = scmp.ne.s32.totalorder %s47, %s49
    %p53 = scmp.eq.s32.totalorder %s13, 0
    %p54 = por %p52, %p53
    %p55 = scmp.ne.s32.totalorder %s47, %s49
    %p56 = scmp.eq.s32.totalorder %s18, 1
    %p57 = por %p55, %p56
    %p58 = scmp.ne.s32.totalorder %s49, %s50
    %p59 = scmp.eq.s32.totalorder %s18, 0
    %p60 = por %p58, %p59
    %p61 = scmp.ne.s32.totalorder %s49, %s50
    %p62 = scmp.eq.s32.totalorder %s19, 1
    %p63 = por %p61, %p62
    %p65 = scmp.ne.s32.totalorder %s50, %s64
    %p66 = scmp.eq.s32.totalorder %s19, 0
    %p67 = por %p65, %p66
    %s69 = sadd.s32 %s68, 1
    %p72 = scmp.eq.s32.totalorder %s13, 1
    %p73 = scmp.ne.s32.totalorder %s68, %s70
    %p74 = scmp.eq.s32.totalorder %s13, 0
    %p75 = por %p73, %p74
    %p76 = scmp.ne.s32.totalorder %s68, %s70
    %p77 = scmp.eq.s32.totalorder %s18, 1
    %p78 = por %p76, %p77
    %p79 = scmp.ne.s32.totalorder %s70, %s71
    %p80 = scmp.eq.s32.totalorder %s18, 0
    %p81 = por %p79, %p80
    %p82 = scmp.ne.s32.totalorder %s70, %s71
    %p83 = scmp.eq.s32.totalorder %s19, 1
    %p84 = por %p82, %p83
    %p86 = scmp.ne.s32.totalorder %s71, %s85
    %p87 = scmp.eq.s32.totalorder %s19, 0
    %p88 = por %p86, %p87
    %s89 = ssub.s32 %s13, %s20
    %p90 = scmp.eq.s32.totalorder %s89, 0
    %s92 = sadd.s32 %s91, 1
    %s93 = scalar_select %p90, %s91, %s92
    %p96 = pneg %p90
    %p97 = scmp.eq.s32.totalorder %s13, 1
    %p98 = por %p96, %p97
    %p99 = scmp.ne.s32.totalorder %s91, %s94
    %p100 = scmp.eq.s32.totalorder %s13, 0
    %p101 = por %p99, %p100
    %p102 = scmp.ne.s32.totalorder %s91, %s94
    %p103 = scmp.eq.s32.totalorder %s18, 1
    %p104 = por %p102, %p103
    %p105 = scmp.ne.s32.totalorder %s94, %s95
    %p106 = scmp.eq.s32.totalorder %s18, 0
    %p107 = por %p105, %p106
    %p108 = scmp.ne.s32.totalorder %s94, %s95
    %p109 = scmp.eq.s32.totalorder %s19, 1
    %p110 = por %p108, %p109
    %p112 = scmp.ne.s32.totalorder %s95, %s111
    %p113 = scmp.eq.s32.totalorder %s19, 0
    %p114 = por %p112, %p113
    %s116 = sadd.s32 %s115, 1
    %p119 = scmp.eq.s32.totalorder %s13, 1
    %p120 = scmp.ne.s32.totalorder %s115, %s117
    %p121 = scmp.eq.s32.totalorder %s13, 0
    %p122 = por %p120, %p121
    %p123 = scmp.ne.s32.totalorder %s115, %s117
    %p124 = scmp.eq.s32.totalorder %s18, 1
    %p125 = por %p123, %p124
    %p126 = scmp.ne.s32.totalorder %s117, %s118
    %p127 = scmp.eq.s32.totalorder %s18, 0
    %p128 = por %p126, %p127
    %p129 = scmp.ne.s32.totalorder %s117, %s118
    %p130 = scmp.eq.s32.totalorder %s19, 1
    %p131 = por %p129, %p130
    %p133 = scmp.ne.s32.totalorder %s118, %s132
    %p134 = scmp.eq.s32.totalorder %s19, 0
    %p135 = por %p133, %p134
    %s136 = ssub.s32 %s13, %s20
    %p137 = scmp.eq.s32.totalorder %s136, 0
    %s139 = sadd.s32 %s138, 1
    %s140 = scalar_select %p137, %s138, %s139
    %p143 = pneg %p137
    %p144 = scmp.eq.s32.totalorder %s13, 1
    %p145 = por %p143, %p144
    %p146 = scmp.ne.s32.totalorder %s138, %s141
    %p147 = scmp.eq.s32.totalorder %s13, 0
    %p148 = por %p146, %p147
    %p149 = scmp.ne.s32.totalorder %s138, %s141
    %p150 = scmp.eq.s32.totalorder %s18, 1
    %p151 = por %p149, %p150
    %p152 = scmp.ne.s32.totalorder %s141, %s142
    %p153 = scmp.eq.s32.totalorder %s18, 0
    %p154 = por %p152, %p153
    %p155 = scmp.ne.s32.totalorder %s141, %s142
    %p156 = scmp.eq.s32.totalorder %s19, 1
    %p157 = por %p155, %p156
    %p159 = scmp.ne.s32.totalorder %s142, %s158
    %p160 = scmp.eq.s32.totalorder %s19, 0
    %p161 = por %p159, %p160
    %s162 = ssub.s32 %s13, %s20
    %p163 = scmp.eq.s32.totalorder %s162, 0
    %s165 = sadd.s32 %s164, 1
    %s166 = scalar_select %p163, %s164, %s165
    %p169 = pneg %p163
    %p170 = scmp.eq.s32.totalorder %s13, 1
    %p171 = por %p169, %p170
    %p172 = scmp.ne.s32.totalorder %s164, %s167
    %p173 = scmp.eq.s32.totalorder %s13, 0
    %p174 = por %p172, %p173
    %p175 = scmp.ne.s32.totalorder %s164, %s167
    %p176 = scmp.eq.s32.totalorder %s18, 1
    %p177 = por %p175, %p176
    %p178 = scmp.ne.s32.totalorder %s167, %s168
    %p179 = scmp.eq.s32.totalorder %s18, 0
    %p180 = por %p178, %p179
    %p181 = scmp.ne.s32.totalorder %s167, %s168
    %p182 = scmp.eq.s32.totalorder %s19, 1
    %p183 = por %p181, %p182
    %p185 = scmp.ne.s32.totalorder %s168, %s184
    %p186 = scmp.eq.s32.totalorder %s19, 0
    %p187 = por %p185, %p186
    %p188 = scmp.le.s32.totalorder 1, %s13
    %p189 = scmp.lt.s32.totalorder %s13, 3
    %p190 = pnand %p188, %p189
    %p191 = pneg %p190
    // Predicated region
    $region9: #{netd_forward.11} parent=5 // pred_check
      _
    $region10: #{netd_forward.11} parent=5 // pred_check_branch
      %193 = sbr.rel (%p190) target = $region12
    $region11: #{netd_forward.11} parent=5 // pred_region
      %s194 = ssub.s32 %s13, 1
      // Predicated region
      $region13: #{netd_forward.11} parent=11 // pred_check
        %p195 = pneg %p60
      $region14: #{netd_forward.11} parent=11 // pred_check_branch
        %197 = sbr.rel (%p195) target = $region16
      $region15: #{netd_forward.11} parent=11 // pred_region
        _
      $region16: #{netd_forward.11} parent=11 // pred_fallthru
        _
      // Predicated region
      $region17: #{netd_forward.11} parent=11 // pred_check
        %p198 = pneg %p81
      $region18: #{netd_forward.11} parent=11 // pred_check_branch
        %200 = sbr.rel (%p198) target = $region20
      $region19: #{netd_forward.11} parent=11 // pred_region
        _
      $region20: #{netd_forward.11} parent=11 // pred_fallthru
        _
      // Predicated region
      $region21: #{netd_forward.11} parent=11 // pred_check
        %p201 = pneg %p128
      $region22: #{netd_forward.11} parent=11 // pred_check_branch
        %203 = sbr.rel (%p201) target = $region24
      $region23: #{netd_forward.11} parent=11 // pred_region
        _
      $region24: #{netd_forward.11} parent=11 // pred_fallthru
        _
    $region12: #{netd_forward.11} parent=5 // pred_fallthru
      _
    %p204 = scmp.lt.s32.totalorder %s13, 2
    // Predicated region
    $region25: #{netd_forward.11} parent=5 // pred_check
      %p205 = pneg %p204
    $region26: #{netd_forward.11} parent=5 // pred_check_branch
      %207 = sbr.rel (%p205) target = $region28
    $region27: #{netd_forward.11} parent=5 // pred_region
      // Predicated region
      $region29: #{netd_forward.11} parent=27 // pred_check
        %p208 = pneg %p33
      $region30: #{netd_forward.11} parent=27 // pred_check_branch
        %210 = sbr.rel (%p208) target = $region32
      $region31: #{netd_forward.11} parent=27 // pred_region
        %p211 = scmp.lt.s32.totalorder %s13, 1
        %s212 = scalar_select %p211, %s13, 1
        %s213 = smul.addr %s212, 4
        %s214 = smul.addr %s213, 4
        %s215 = scalar_lea.vmem %s0, %s214
      $region32: #{netd_forward.11} parent=27 // pred_fallthru
        _
      // Predicated region
      $region33: #{netd_forward.11} parent=27 // pred_check
        %p216 = pneg %p101
      $region34: #{netd_forward.11} parent=27 // pred_check_branch
        %218 = sbr.rel (%p216) target = $region36
      $region35: #{netd_forward.11} parent=27 // pred_region
        %p219 = scmp.lt.s32.totalorder %s13, 1
        %s220 = scalar_select %p219, %s13, 1
        %s221 = smul.addr %s220, 4
        %s222 = smul.addr %s221, 4
        %s223 = scalar_lea.vmem %s3, %s222
      $region36: #{netd_forward.11} parent=27 // pred_fallthru
        _
    $region28: #{netd_forward.11} parent=5 // pred_fallthru
      _
    %p224 = scmp.le.s32.totalorder 1, %s13
    %p225 = scmp.lt.s32.totalorder %s13, 3
    %p226 = pnand %p224, %p225
    %p227 = pneg %p226
    // Predicated region
    $region37: #{netd_forward.11} parent=5 // pred_check
      _
    $region38: #{netd_forward.11} parent=5 // pred_check_branch
      %229 = sbr.rel (%p226) target = $region40
    $region39: #{netd_forward.11} parent=5 // pred_region
      %s230 = ssub.s32 %s13, 1
      %p231 = scmp.lt.s32.totalorder %s18, 1
      %s232 = scalar_select %p231, %s18, 1
      %s233 = smul.addr %s232, 4
      %s234 = smul.addr %s233, 4
      %s235 = scalar_lea.vmem %s0, %s234
      %p236 = pneg %p39
      %p237 = pneg %p36
      %p238 = pneg %p60
      %p239 = pneg %p57
      %p240 = pneg %p81
      %p241 = pneg %p78
      %p242 = scmp.lt.s32.totalorder %s18, 1
      %s243 = scalar_select %p242, %s18, 1
      %s244 = smul.addr %s243, 4
      %s245 = smul.addr %s244, 4
      %s246 = scalar_lea.vmem %s3, %s245
      %p247 = pneg %p107
      %p248 = pneg %p104
      %p249 = pneg %p128
      %p250 = pneg %p125
      %p251 = pneg %p154
      %p252 = pneg %p151
      %p253 = scmp.lt.s32.totalorder %s18, 1
      %s254 = scalar_select %p253, %s18, 1
      %s255 = smul.addr %s254, 4
      %s256 = smul.addr %s255, 4
      %s257 = scalar_lea.vmem %s5, %s256
      %p258 = pneg %p180
      %p259 = pneg %p177
      %p260 = scmp.lt.s32.totalorder %s18, 1
      %s261 = scalar_select %p260, %s18, 1
      %s262 = smul.addr %s261, 2
      %s263 = scalar_lea.vmem %s6, %s262
      %p264 = scmp.lt.s32.totalorder %s18, 1
      %s265 = scalar_select %p264, %s18, 1
      %s266 = smul.addr %s265, 4
      %s267 = smul.addr %s266, 4
      %s268 = scalar_lea.vmem %s0, %s267
      %p269 = scmp.lt.s32.totalorder %s18, 1
      %s270 = scalar_select %p269, %s18, 1
      %s271 = smul.addr %s270, 4
      %s272 = smul.addr %s271, 4
      %s273 = scalar_lea.vmem %s3, %s272
      %p274 = scmp.lt.s32.totalorder %s18, 1
      %s275 = scalar_select %p274, %s18, 1
      %s276 = smul.addr %s275, 4
      %s277 = smul.addr %s276, 4
      %s278 = scalar_lea.vmem %s5, %s277
      %p279 = scmp.lt.s32.totalorder %s18, 1
      %s280 = scalar_select %p279, %s18, 1
      %s281 = smul.addr %s280, 2
      %s282 = scalar_lea.vmem %s6, %s281
      %v284 = vld [vmem:[%s268] sm:$0xf]
      %v285 = vld [vmem:[%s268 + $0x4] sm:$0xf]
      %v286 = vld [vmem:[%s268 + $0x8] sm:$0xf]
      %v287 = vld [vmem:[%s268 + $0xc] sm:$0xf]
      %v288 = vld [vmem:[%s1] sm:$0x1]
      %v290 = vlaneseq
      %v291 = vshrl.u32 %v290, 7
      %v292 = vsub.s32 0, %v291
      %v293 = vrot.slane %v288, %v292
      %v295 = vmul.f32 %v284, %v293
      %v296 = vmul.f32 %v285, %v293
      %v297 = vmul.f32 %v286, %v293
      %v298 = vmul.f32 %v287, %v293
      %v299 = vld [vmem:[%s2] sm:$0x1]
      %v301 = vlaneseq
      %v302 = vshrl.u32 %v301, 7
      %v303 = vsub.s32 0, %v302
      %v304 = vrot.slane %v299, %v303
      %v306 = vadd.f32 %v295, %v304
      %v307 = vadd.f32 %v296, %v304
      %v308 = vadd.f32 %v297, %v304
      %v309 = vadd.f32 %v298, %v304
      %v310 = vld [vmem:[%s273] sm:$0xf]
      %v311 = vld [vmem:[%s273 + $0x4] sm:$0xf]
      %v312 = vld [vmem:[%s273 + $0x8] sm:$0xf]
      %v313 = vld [vmem:[%s273 + $0xc] sm:$0xf]
      %v314 = vmul.f32 %v306, 0.1
      %v315 = vmul.f32 %v307, 0.1
      %v316 = vmul.f32 %v308, 0.1
      %v317 = vmul.f32 %v309, 0.1
      %v318 = vadd.f32 %v310, %v314
      %v319 = vadd.f32 %v311, %v315
      %v320 = vadd.f32 %v312, %v316
      %v321 = vadd.f32 %v313, %v317
      %v322 = vpack.c.bf16 %v318, %v318
      %v323 = vpack.c.bf16 %v319, %v319
      %v324 = vpack.c.bf16 %v320, %v320
      %v325 = vpack.c.bf16 %v321, %v321
      %329 = vrot.lane.b32.xlu0 %v322, 32
      %v330 = vpop.permute.xlu0 %329
      %331 = vrot.lane.b32.xlu0 %v323, 32
      %v332 = vpop.permute.xlu0 %331
      %333 = vrot.lane.b32.xlu0 %v324, 32
      %v334 = vpop.permute.xlu0 %333
      %v336 = vshrl.u32 0, 16
      %v338 = vrot.slane %v336, 7
      %v339 = vshll.u32 0, 16
      %v341 = vor.u32 %v338, %v339
      %v343 = vshrl.u32 %v330, 16
      %v345 = vrot.slane %v343, 7
      %v346 = vshll.u32 %v330, 16
      %v348 = vor.u32 %v345, %v346
      %v350 = vshrl.u32 %v332, 16
      %v352 = vrot.slane %v350, 7
      %v353 = vshll.u32 %v332, 16
      %v355 = vor.u32 %v352, %v353
      %v357 = vshrl.u32 %v334, 16
      %v359 = vrot.slane %v357, 7
      %v360 = vshll.u32 %v334, 16
      %v362 = vor.u32 %v359, %v360
      %vm367 = vcmask 1040384
      %vm368 = vsmask.f32 256
      %vm369 = vmand %vm367, %vm368
      %v370 = vsel %vm369, 0, %v341
      %v371 = vsel %vm369, 0, %v348
      %v372 = vsel %vm369, 0, %v355
      %v373 = vsel %vm369, 0, %v362
      %374 = vrot.lane.b32.xlu0 %v322, 64
      %v375 = vpop.permute.xlu0 %374
      %376 = vrot.lane.b32.xlu0 %v323, 64
      %v377 = vpop.permute.xlu0 %376
      %378 = vrot.lane.b32.xlu0 %v324, 64
      %v379 = vpop.permute.xlu0 %378
      %v381 = vshrl.u32 %v322, 16
      %v383 = vrot.slane %v381, 7
      %v384 = vshll.u32 %v322, 16
      %v386 = vor.u32 %v383, %v384
      %v388 = vshrl.u32 %v323, 16
      %v390 = vrot.slane %v388, 7
      %v391 = vshll.u32 %v323, 16
      %v393 = vor.u32 %v390, %v391
      %v395 = vshrl.u32 %v324, 16
      %v397 = vrot.slane %v395, 7
      %v398 = vshll.u32 %v324, 16
      %v400 = vor.u32 %v397, %v398
      %v402 = vshrl.u32 %v325, 16
      %v404 = vrot.slane %v402, 7
      %v405 = vshll.u32 %v325, 16
      %v407 = vor.u32 %v404, %v405
      %408 = vrot.lane.b32.xlu0 %v386, 96
      %v409 = vpop.permute.xlu0 %408
      %410 = vrot.lane.b32.xlu0 %v393, 96
      %v411 = vpop.permute.xlu0 %410
      %412 = vrot.lane.b32.xlu0 %v400, 96
      %v413 = vpop.permute.xlu0 %412
      %414 = vrot.lane.b32.xlu0 %v407, 96
      %v415 = vpop.permute.xlu0 %414
      %v420 = vsel %vm369, 0, %v409
      %v421 = vsel %vm369, 0, %v411
      %v422 = vsel %vm369, 0, %v413
      %v423 = vsel %vm369, 0, %v415
      %424 = vrot.lane.b32.xlu0 %v386, 32
      %v425 = vpop.permute.xlu0 %424
      %426 = vrot.lane.b32.xlu0 %v393, 32
      %v427 = vpop.permute.xlu0 %426
      %428 = vrot.lane.b32.xlu0 %v400, 32
      %v429 = vpop.permute.xlu0 %428
      %430 = vrot.lane.b32.xlu0 %v407, 32
      %v431 = vpop.permute.xlu0 %430
      %v436 = vsel %vm369, 0, %v425
      %v437 = vsel %vm369, 0, %v427
      %v438 = vsel %vm369, 0, %v429
      %v439 = vsel %vm369, 0, %v431
      %441 = vrot.lane.b32.xlu0 0, 32
      %v442 = vpop.permute.xlu0 %441
      %443 = vrot.lane.b32.xlu0 %v375, 32
      %v444 = vpop.permute.xlu0 %443
      %445 = vrot.lane.b32.xlu0 %v377, 32
      %v446 = vpop.permute.xlu0 %445
      %447 = vrot.lane.b32.xlu0 %v379, 32
      %v448 = vpop.permute.xlu0 %447
      %449 = vrot.lane.b32.xlu0 0, 64
      %v450 = vpop.permute.xlu0 %449
      %451 = vrot.lane.b32.xlu0 %v330, 64
      %v452 = vpop.permute.xlu0 %451
      %453 = vrot.lane.b32.xlu0 %v332, 64
      %v454 = vpop.permute.xlu0 %453
      %455 = vrot.lane.b32.xlu0 %v334, 64
      %v456 = vpop.permute.xlu0 %455
      %461 = vrot.lane.b32.xlu0 %v420, 96
      %v462 = vpop.permute.xlu0 %461
      %463 = vrot.lane.b32.xlu0 %v421, 96
      %v464 = vpop.permute.xlu0 %463
      %465 = vrot.lane.b32.xlu0 %v422, 96
      %v466 = vpop.permute.xlu0 %465
      %467 = vrot.lane.b32.xlu0 %v423, 96
      %v468 = vpop.permute.xlu0 %467
      %473 = vrot.lane.b32.xlu0 %v436, 64
      %v474 = vpop.permute.xlu0 %473
      %475 = vrot.lane.b32.xlu0 %v437, 64
      %v476 = vpop.permute.xlu0 %475
      %477 = vrot.lane.b32.xlu0 %v438, 64
      %v478 = vpop.permute.xlu0 %477
      %479 = vrot.lane.b32.xlu0 %v439, 64
      %v480 = vpop.permute.xlu0 %479
      %482 = vrot.lane.b32.xlu0 %v325, 32
      %v483 = vpop.permute.xlu0 %482
      %vm484 = vcmask 261120
      %v487 = vsel %vm484, %v370, %v442
      %v490 = vsel %vm484, %v371, %v444
      %v493 = vsel %vm484, %v372, %v446
      %v496 = vsel %vm484, %v373, %v448
      %vm497 = vcmask 523264
      %v499 = vsel %vm497, %v487, %v450
      %v501 = vsel %vm497, %v490, %v452
      %v503 = vsel %vm497, %v493, %v454
      %v505 = vsel %vm497, %v496, %v456
      %vm506 = vcmask 785408
      %v508 = vsel %vm506, %v499, %v462
      %v510 = vsel %vm506, %v501, %v464
      %v512 = vsel %vm506, %v503, %v466
      %v514 = vsel %vm506, %v505, %v468
      %v516 = vsel %vm497, %v322, %v474
      %v518 = vsel %vm497, %v323, %v476
      %v520 = vsel %vm497, %v324, %v478
      %v522 = vsel %vm497, %v325, %v480
      %v523 = vsel %vm506, %v516, %v330
      %v524 = vsel %vm506, %v518, %v332
      %v525 = vsel %vm506, %v520, %v334
      %v527 = vsel %vm506, %v522, %v483
      %v536 = vcombine.low %v508, %v523
      %v538 = vunpack.c.l.s4 1983009808
      %v539 = vunpack.c.0.s8 %v538
      %v540 = vlaneseq
      %v541 = vshrl.u32 %v540, 7
      %v542 = vsub.s32 %v539, %v541
      %v543 = vrot.slane %v536, %v542
      %v545 = vunpack.c.l.s4 1983009808
      %v546 = vunpack.c.0.s8 %v545
      %v547 = vlaneseq
      %v548 = vshrl.u32 %v547, 7
      %v549 = vsub.s32 %v546, %v548
      %v550 = vrot.slane %v330, %v549
      %v551 = vcombine.low %v543, %v550
      %v552 = vcombine.low %v510, %v524
      %v554 = vunpack.c.l.s4 1983009808
      %v555 = vunpack.c.0.s8 %v554
      %v556 = vlaneseq
      %v557 = vshrl.u32 %v556, 7
      %v558 = vsub.s32 %v555, %v557
      %v559 = vrot.slane %v552, %v558
      %v561 = vunpack.c.l.s4 1983009808
      %v562 = vunpack.c.0.s8 %v561
      %v563 = vlaneseq
      %v564 = vshrl.u32 %v563, 7
      %v565 = vsub.s32 %v562, %v564
      %v566 = vrot.slane %v332, %v565
      %v567 = vcombine.low %v559, %v566
      %v568 = vcombine.low %v512, %v525
      %v570 = vunpack.c.l.s4 1983009808
      %v571 = vunpack.c.0.s8 %v570
      %v572 = vlaneseq
      %v573 = vshrl.u32 %v572, 7
      %v574 = vsub.s32 %v571, %v573
      %v575 = vrot.slane %v568, %v574
      %v577 = vunpack.c.l.s4 1983009808
      %v578 = vunpack.c.0.s8 %v577
      %v579 = vlaneseq
      %v580 = vshrl.u32 %v579, 7
      %v581 = vsub.s32 %v578, %v580
      %v582 = vrot.slane %v334, %v581
      %v583 = vcombine.low %v575, %v582
      %v584 = vcombine.low %v514, %v527
      %v586 = vunpack.c.l.s4 1983009808
      %v587 = vunpack.c.0.s8 %v586
      %v588 = vlaneseq
      %v589 = vshrl.u32 %v588, 7
      %v590 = vsub.s32 %v587, %v589
      %v591 = vrot.slane %v584, %v590
      %v593 = vunpack.c.l.s4 1983009808
      %v594 = vunpack.c.0.s8 %v593
      %v595 = vlaneseq
      %v596 = vshrl.u32 %v595, 7
      %v597 = vsub.s32 %v594, %v596
      %v598 = vrot.slane %v483, %v597
      %v599 = vcombine.low %v591, %v598
      %v600 = vld [vmem:[%s4] sm:$0xf]
      %v601 = vld [vmem:[%s4 + $0x4] sm:$0xf]
      %v602 = vld [vmem:[%s4 + $0x8] sm:$0xf]
      %v603 = vld [vmem:[%s4 + $0xc] sm:$0xf]
      %v604 = vld [vmem:[%s4 + $0x10] sm:$0xf]
      %v605 = vld [vmem:[%s4 + $0x14] sm:$0xf]
      %v606 = vld [vmem:[%s4 + $0x18] sm:$0xf]
      %v607 = vld [vmem:[%s4 + $0x1c] sm:$0xf]
      %v608 = vld [vmem:[%s4 + $0x20] sm:$0xf]
      %v609 = vld [vmem:[%s4 + $0x24] sm:$0xf]
      %v610 = vld [vmem:[%s4 + $0x28] sm:$0xf]
      %v611 = vld [vmem:[%s4 + $0x2c] sm:$0xf]
      %v612 = vld [vmem:[%s4 + $0x30] sm:$0xf]
      %v613 = vld [vmem:[%s4 + $0x34] sm:$0xf]
      %v614 = vld [vmem:[%s4 + $0x38] sm:$0xf]
      %v615 = vld [vmem:[%s4 + $0x3c] sm:$0xf]
      %v616 = vld [vmem:[%s4 + $0x40] sm:$0xf]
      %v617 = vld [vmem:[%s4 + $0x44] sm:$0xf]
      %v618 = vld [vmem:[%s4 + $0x48] sm:$0xf]
      %v619 = vld [vmem:[%s4 + $0x4c] sm:$0xf]
      %v620 = vld [vmem:[%s4 + $0x50] sm:$0xf]
      %v621 = vld [vmem:[%s4 + $0x54] sm:$0xf]
      %v622 = vld [vmem:[%s4 + $0x58] sm:$0xf]
      %v623 = vld [vmem:[%s4 + $0x5c] sm:$0xf]
      %v624 = vld [vmem:[%s4 + $0x60] sm:$0xf]
      %v625 = vld [vmem:[%s4 + $0x64] sm:$0xf]
      %v626 = vld [vmem:[%s4 + $0x68] sm:$0xf]
      %v627 = vld [vmem:[%s4 + $0x6c] sm:$0xf]
      %v628 = vld [vmem:[%s4 + $0x70] sm:$0xf]
      %v629 = vld [vmem:[%s4 + $0x74] sm:$0xf]
      %v630 = vld [vmem:[%s4 + $0x78] sm:$0xf]
      %v631 = vld [vmem:[%s4 + $0x7c] sm:$0xf]
      %v632 = vld [vmem:[%s4 + $0x80] sm:$0xf]
      %v633 = vld [vmem:[%s4 + $0x84] sm:$0xf]
      %v634 = vld [vmem:[%s4 + $0x88] sm:$0xf]
      %v635 = vld [vmem:[%s4 + $0x8c] sm:$0xf]
      %v636 = vcombine.low %v551, %v567
      %v637 = vcombine.high %v551, %v567
      %v638 = vcombine.low %v583, %v599
      %v639 = vcombine.high %v583, %v599
      %v641 = vunpack.c.l.s4 1983009808
      %v642 = vunpack.c.0.s8 %v641
      %v643 = vlaneseq
      %v644 = vshrl.u32 %v643, 7
      %v645 = vsub.s32 %v642, %v644
      %v646 = vrot.slane %v636, %v645
      %v648 = vunpack.c.l.s4 1983009808
      %v649 = vunpack.c.0.s8 %v648
      %v650 = vlaneseq
      %v651 = vshrl.u32 %v650, 7
      %v652 = vsub.s32 %v649, %v651
      %v653 = vrot.slane %v637, %v652
      %v655 = vunpack.c.l.s4 1983009808
      %v656 = vunpack.c.0.s8 %v655
      %v657 = vlaneseq
      %v658 = vshrl.u32 %v657, 7
      %v659 = vsub.s32 %v656, %v658
      %v660 = vrot.slane %v638, %v659
      %v662 = vunpack.c.l.s4 1983009808
      %v663 = vunpack.c.0.s8 %v662
      %v664 = vlaneseq
      %v665 = vshrl.u32 %v664, 7
      %v666 = vsub.s32 %v663, %v665
      %v667 = vrot.slane %v639, %v666
      %v668 = vcombine.low %v646, %v660
      %v669 = vcombine.high %v646, %v660
      %v670 = vcombine.low %v653, %v667
      %v709 = vunpack.c.l.b16 %v600
      %v710 = vunpack.c.l.b16 %v601
      %v711 = vunpack.c.l.b16 %v602
      %v712 = vunpack.c.l.b16 %v603
      %v713 = vunpack.c.l.b16 %v604
      %v714 = vunpack.c.l.b16 %v605
      %v715 = vunpack.c.l.b16 %v606
      %v716 = vunpack.c.l.b16 %v607
      %v717 = vunpack.c.l.b16 %v608
      %v718 = vunpack.c.l.b16 %v609
      %v719 = vunpack.c.l.b16 %v610
      %v720 = vunpack.c.l.b16 %v611
      %v721 = vunpack.c.l.b16 %v612
      %v722 = vunpack.c.l.b16 %v613
      %v723 = vunpack.c.l.b16 %v614
      %v724 = vunpack.c.l.b16 %v615
      %v725 = vunpack.c.l.b16 %v616
      %v726 = vunpack.c.l.b16 %v617
      %v727 = vunpack.c.l.b16 %v618
      %v728 = vunpack.c.l.b16 %v619
      %v729 = vunpack.c.l.b16 %v620
      %v730 = vunpack.c.l.b16 %v621
      %v731 = vunpack.c.l.b16 %v622
      %v732 = vunpack.c.l.b16 %v623
      %v733 = vunpack.c.l.b16 %v624
      %v734 = vunpack.c.l.b16 %v625
      %v735 = vunpack.c.l.b16 %v626
      %v736 = vunpack.c.l.b16 %v627
      %v737 = vunpack.c.l.b16 %v628
      %v738 = vunpack.c.l.b16 %v629
      %v739 = vunpack.c.l.b16 %v630
      %v740 = vunpack.c.l.b16 %v631
      %v741 = vunpack.c.l.b16 %v632
      %v742 = vunpack.c.l.b16 %v633
      %v743 = vunpack.c.l.b16 %v634
      %v744 = vunpack.c.l.b16 %v635
      %v745 = vpack.c.b16 %v710, %v709
      %v746 = vpack.c.b16 %v712, %v711
      %v747 = vpack.c.b16 %v714, %v713
      %v748 = vpack.c.b16 %v716, %v715
      %v749 = vpack.c.b16 %v718, %v717
      %v750 = vpack.c.b16 %v720, %v719
      %v751 = vpack.c.b16 %v722, %v721
      %v752 = vpack.c.b16 %v724, %v723
      %v753 = vpack.c.b16 %v726, %v725
      %v754 = vpack.c.b16 %v728, %v727
      %v755 = vpack.c.b16 %v730, %v729
      %v756 = vpack.c.b16 %v732, %v731
      %v757 = vpack.c.b16 %v734, %v733
      %v758 = vpack.c.b16 %v736, %v735
      %v759 = vpack.c.b16 %v738, %v737
      %v760 = vpack.c.b16 %v740, %v739
      %v761 = vpack.c.b16 %v742, %v741
      %v762 = vpack.c.b16 %v744, %v743
      %v782 = vsel %vm484, %v670, 0
      %784 = vmatprep.subr.bf16.mxu0 0
      %785 = vmatpush1.bf16.msra.mxu0 %v745
      %786 = vmatprep.subr.bf16.mxu0 0
      %787 = vmatpush1.bf16.msra.mxu0 %v746
      %788 = vmatprep.subr.bf16.mxu0 0
      %789 = vmatpush1.bf16.msra.mxu0 %v747
      %790 = vmatprep.subr.bf16.mxu0 0
      %791 = vmatpush1.bf16.msra.mxu0 %v748
      %792 = vmatprep.subr.bf16.mxu0 0
      %793 = vmatpush1.bf16.msra.mxu0 %v749
      %794 = vmatprep.subr.bf16.mxu0 0
      %795 = vmatpush1.bf16.msra.mxu0 %v750
      %796 = vmatprep.subr.bf16.mxu0 0
      %797 = vmatpush1.bf16.msra.mxu0 %v751
      %798 = vmatprep.subr.bf16.mxu0 0
      %799 = vmatpush1.bf16.msra.mxu0 %v752
      %800 = vmatprep.subr.bf16.mxu0 0
      %801 = vmatpush1.bf16.msra.mxu0 %v753
      %802 = vmatprep.subr.bf16.mxu0 0
      %803 = vmatpush1.bf16.msra.mxu0 %v754
      %804 = vmatprep.subr.bf16.mxu0 0
      %805 = vmatpush1.bf16.msra.mxu0 %v755
      %806 = vmatprep.subr.bf16.mxu0 0
      %807 = vmatpush1.bf16.msra.mxu0 %v756
      %808 = vmatprep.subr.bf16.mxu0 0
      %809 = vmatpush1.bf16.msra.mxu0 %v757
      %810 = vmatprep.subr.bf16.mxu0 0
      %811 = vmatpush1.bf16.msra.mxu0 %v758
      %812 = vmatprep.subr.bf16.mxu0 0
      %813 = vmatpush1.bf16.msra.mxu0 %v759
      %814 = vmatprep.subr.bf16.mxu0 0
      %815 = vmatpush1.bf16.msra.mxu0 %v760
      %816 = vmatprep.mubr.bf16.mxu0 %v669
      %817 = vmatmul.mubr.bf16.gmra.mrb[0].mxu0 %v668
      %v818 = vpop.f32.mrb[0].mxu0
      %v819 = vadd.f32 0.0, %v818
      %v820 = vpop.f32.mrb[0].mxu0
      %v821 = vpop.f32.mrb[0].mxu0
      %v822 = vadd.f32 0.0, %v821
      %v823 = vpop.f32.mrb[0].mxu0
      %824 = vdwg.mxu0
      %825 = vmatprep.subr.bf16.mxu0 0
      %826 = vmatpush1.bf16.msra.mxu0 %v761
      %827 = vmatprep.subr.bf16.mxu0 0
      %828 = vmatpush1.bf16.msra.mxu0 %v762
      %829 = vmatprep.subr.bf16.mxu0 0
      %830 = vmatpush1.bf16.msra.mxu0 0
      %831 = vmatprep.subr.bf16.mxu0 0
      %832 = vmatpush1.bf16.msra.mxu0 0
      %833 = vmatprep.subr.bf16.mxu0 0
      %834 = vmatpush1.bf16.msra.mxu0 0
      %835 = vmatprep.subr.bf16.mxu0 0
      %836 = vmatpush1.bf16.msra.mxu0 0
      %837 = vmatprep.subr.bf16.mxu0 0
      %838 = vmatpush1.bf16.msra.mxu0 0
      %839 = vmatprep.subr.bf16.mxu0 0
      %840 = vmatpush1.bf16.msra.mxu0 0
      %841 = vmatprep.subr.bf16.mxu0 0
      %842 = vmatpush1.bf16.msra.mxu0 0
      %843 = vmatprep.subr.bf16.mxu0 0
      %844 = vmatpush1.bf16.msra.mxu0 0
      %845 = vmatprep.subr.bf16.mxu0 0
      %846 = vmatpush1.bf16.msra.mxu0 0
      %847 = vmatprep.subr.bf16.mxu0 0
      %848 = vmatpush1.bf16.msra.mxu0 0
      %849 = vmatprep.subr.bf16.mxu0 0
      %850 = vmatpush1.bf16.msra.mxu0 0
      %851 = vmatprep.subr.bf16.mxu0 0
      %852 = vmatpush1.bf16.msra.mxu0 0
      %853 = vmatprep.subr.bf16.mxu0 0
      %854 = vmatpush1.bf16.msra.mxu0 0
      %855 = vmatprep.subr.bf16.mxu0 0
      %856 = vmatpush1.bf16.msra.mxu0 0
      %857 = vmatprep.mubr.bf16.mxu0 0
      %858 = vmatmul.mubr.bf16.gmra.mrb[0].mxu0 %v782
      %v859 = vpop.f32.mrb[0].mxu0
      %v860 = vadd.f32 %v819, %v859
      %v861 = vpop.f32.mrb[0].mxu0
      %v862 = vpop.f32.mrb[0].mxu0
      %v863 = vadd.f32 %v822, %v862
      %v864 = vpop.f32.mrb[0].mxu0
      %865 = vdwg.mxu0
      %v866 = vsel %vm497, %v860, 0.0
      %v867 = vsel %vm497, %v863, 0.0
      %v868 = vadd.f32 %v866, %v867
      %v869 = vrot.slane %v868, 4
      %v870 = vadd.f32 %v868, %v869
      %v871 = vrot.slane %v870, 2
      %v872 = vadd.f32 %v870, %v871
      %v873 = vrot.slane %v872, 1
      %v874 = vadd.f32 %v872, %v873
      %v875 = vmul.f32 %v860, %v860
      %v876 = vmul.f32 %v863, %v863
      %v877 = vsel %vm497, %v875, 0.0
      %v878 = vsel %vm497, %v876, 0.0
      %v879 = vadd.f32 %v877, %v878
      %v880 = vrot.slane %v879, 4
      %v881 = vadd.f32 %v879, %v880
      %v882 = vrot.slane %v881, 2
      %v883 = vadd.f32 %v881, %v882
      %v884 = vrot.slane %v883, 1
      %v885 = vadd.f32 %v883, %v884
      %vm886 = vcmask 1040384
      %v887 = vsel %vm886, %v874, %v885
      %vm888 = vcmask 517120
      %889 = vst.msk [vmem:[%s282] sm:$0x3] %vm888, %v887
      %v892 = vcombine.high %v860, %v860
      %v893 = vcombine.high %v863, %v863
      %vm896 = vcmask 519168
      %897 = vst.msk [vmem:[%s278] sm:$0xf] %vm896, %v860
      %898 = vst.msk [vmem:[%s278 + $0x4] sm:$0xf] %vm896, %v892
      %899 = vst.msk [vmem:[%s278 + $0x8] sm:$0xf] %vm896, %v863
      %900 = vst.msk [vmem:[%s278 + $0xc] sm:$0xf] %vm896, %v893
      %p901 = scmp.lt.s32.totalorder %s18, 1
      %s902 = scalar_select %p901, %s18, 1
      %s903 = smul.addr %s902, 4
      %s904 = smul.addr %s903, 4
      %s905 = scalar_lea.vmem %s5, %s904
      %p906 = scmp.lt.s32.totalorder %s18, 1
      %s907 = scalar_select %p906, %s18, 1
      %s908 = smul.addr %s907, 2
      %s909 = scalar_lea.vmem %s6, %s908
      // Predicated region
      $region41: #{netd_forward.11} parent=39 // pred_check
        %p910 = pneg %p151
      $region42: #{netd_forward.11} parent=39 // pred_check_branch
        %912 = sbr.rel (%p910) target = $region44
      $region43: #{netd_forward.11} parent=39 // pred_region
        _
      $region44: #{netd_forward.11} parent=39 // pred_fallthru
        _
      // Predicated region
      $region45: #{netd_forward.11} parent=39 // pred_check
        %p913 = pneg %p177
      $region46: #{netd_forward.11} parent=39 // pred_check_branch
        %915 = sbr.rel (%p913) target = $region48
      $region47: #{netd_forward.11} parent=39 // pred_region
        _
      $region48: #{netd_forward.11} parent=39 // pred_fallthru
        _
    $region40: #{netd_forward.11} parent=5 // pred_fallthru
      _
    %p916 = scmp.le.s32.totalorder 2, %s13
    // Predicated region
    $region49: #{netd_forward.11} parent=5 // pred_check
      %p917 = pneg %p916
    $region50: #{netd_forward.11} parent=5 // pred_check_branch
      %919 = sbr.rel (%p917) target = $region52
    $region51: #{netd_forward.11} parent=5 // pred_region
      %s920 = ssub.s32 %s13, 2
      // Predicated region
      $region53: #{netd_forward.11} parent=51 // pred_check
        %p921 = pneg %p157
      $region54: #{netd_forward.11} parent=51 // pred_check_branch
        %923 = sbr.rel (%p921) target = $region56
      $region55: #{netd_forward.11} parent=51 // pred_region
        %p924 = scmp.lt.s32.totalorder %s19, 1
        %s925 = scalar_select %p924, %s19, 1
        %s926 = smul.addr %s925, 4
        %s927 = smul.addr %s926, 4
        %s928 = scalar_lea.vmem %s5, %s927
      $region56: #{netd_forward.11} parent=51 // pred_fallthru
        _
      // Predicated region
      $region57: #{netd_forward.11} parent=51 // pred_check
        %p929 = pneg %p183
      $region58: #{netd_forward.11} parent=51 // pred_check_branch
        %931 = sbr.rel (%p929) target = $region60
      $region59: #{netd_forward.11} parent=51 // pred_region
        %p932 = scmp.lt.s32.totalorder %s19, 1
        %s933 = scalar_select %p932, %s19, 1
        %s934 = smul.addr %s933, 2
        %s935 = scalar_lea.vmem %s6, %s934
      $region60: #{netd_forward.11} parent=51 // pred_fallthru
        _
    $region52: #{netd_forward.11} parent=5 // pred_fallthru
      _
  $region6: #{netd_forward.11} parent=0 // loop_footer
    %s17 = sadd.s32 1, %s13
  $region7: #{netd_forward.11} parent=0 // loop_footer_branch
    %12 = sbr.rel target = $region3
  $region8: #{netd_forward.11} parent=0 // loop_exit
    _

// kernel: netd_forward.12
$region0: #{netd_forward.12}
  #allocation0 [shape = 'u32[]', space=smem, size = 0x4, offset = 0x4, fixed_abs, tag = 'smem constant byte address 0x4 - core index']
  #allocation1 [shape = 'u32[144,128]{1,0:T(1,128)}', space=vmem, size = 0x12000, scoped, tag = 'internal scratch']
  %s0 = inlined_call_operand.vmem [shape: f32[2,4,4,64], index: 0, kind: input, shape index: {}]
  %s1 = inlined_call_operand.vmem [shape: f32[1,64], index: 1, kind: input, shape index: {}]
  %s2 = inlined_call_operand.vmem [shape: f32[1,64], index: 2, kind: input, shape index: {}]
  %s3 = inlined_call_operand.vmem [shape: bf16[576,64], index: 3, kind: input, shape index: {}]
  %s4 = inlined_call_operand.vmem [shape: f32[1,64], index: 4, kind: input, shape index: {}]
  %s5 = inlined_call_operand.vmem [shape: f32[2,4,4,64], index: 5, kind: output, shape index: {0}]
  %s6 = inlined_call_operand.vmem [shape: f32[2,4,4,64], index: 6, kind: output, shape index: {1}]
  %s7 = inlined_call_operand.vmem [shape: f32[2,2,64], index: 7, kind: output, shape index: {2}]
  %8 = xla_tuple %s5, %s6, %s7
  %s9 = sld [smem:[#allocation0]]
  $region69: #{netd_forward.12} parent=0
    _
  %s11 = ssub.s32 1, %s9
  %s12 = scalar_select 0, %s11, %s9
  loop: start=0, step=1, limit=4
  $region2: #{netd_forward.12} parent=0 // loop_pre_header
    _
  $region3: #{netd_forward.12} parent=0 // loop_header
    %s14 = sphi 0, %s18
    %p15 = scmp.ge.s32.totalorder %s14, 4
    %s24 = sphi 0, %s26
    %s27 = sphi 0, %s24
    %s28 = sphi 0, %s27
    %s44 = sphi 0, %s28
    %s48 = sphi 0, %s48
    %s50 = sphi 0, %s48
    %s51 = sphi 0, %s50
    %s65 = sphi 0, %s51
    %s69 = sphi 0, %s69
    %s71 = sphi 0, %s69
    %s72 = sphi 0, %s71
    %s86 = sphi 0, %s72
    %s90 = sphi 0, %s90
    %s92 = sphi 0, %s90
    %s93 = sphi 0, %s92
    %s107 = sphi 0, %s93
    %s111 = sphi 0, %s111
    %s113 = sphi 0, %s111
    %s114 = sphi 0, %s113
    %s128 = sphi 0, %s114
    %s134 = sphi 0, %s136
    %s137 = sphi 0, %s134
    %s138 = sphi 0, %s137
    %s154 = sphi 0, %s138
    %s160 = sphi 0, %s162
    %s163 = sphi 0, %s160
    %s164 = sphi 0, %s163
    %s180 = sphi 0, %s164
    %s186 = sphi 0, %s188
    %s189 = sphi 0, %s186
    %s190 = sphi 0, %s189
    %s206 = sphi 0, %s190
  $region4: #{netd_forward.12} parent=0 // loop_header_branch
    %17 = sbr.rel (%p15) target = $region8
  $region5: #{netd_forward.12} parent=0 // loop_body
    %s19 = ssub.s32 %s14, 1
    %s20 = ssub.s32 %s14, 2
    %s21 = sadd.s32 %s14, 1
    %s22 = ssub.s32 %s14, %s21
    %p23 = scmp.eq.s32.totalorder %s22, 0
    %s25 = sadd.s32 %s24, 1
    %s26 = scalar_select %p23, %s24, %s25
    %p29 = pneg %p23
    %p30 = scmp.eq.s32.totalorder %s14, 1
    %p31 = por %p29, %p30
    %p32 = scmp.ne.s32.totalorder %s24, %s27
    %p33 = scmp.eq.s32.totalorder %s14, 0
    %p34 = por %p32, %p33
    %p35 = scmp.ne.s32.totalorder %s24, %s27
    %p36 = scmp.eq.s32.totalorder %s19, 1
    %p37 = por %p35, %p36
    %p38 = scmp.ne.s32.totalorder %s27, %s28
    %p39 = scmp.eq.s32.totalorder %s19, 0
    %p40 = por %p38, %p39
    %p41 = scmp.ne.s32.totalorder %s27, %s28
    %p42 = scmp.eq.s32.totalorder %s20, 1
    %p43 = por %p41, %p42
    %p45 = scmp.ne.s32.totalorder %s28, %s44
    %p46 = scmp.eq.s32.totalorder %s20, 0
    %p47 = por %p45, %p46
    %s49 = sadd.s32 %s48, 1
    %p52 = scmp.eq.s32.totalorder %s14, 1
    %p53 = scmp.ne.s32.totalorder %s48, %s50
    %p54 = scmp.eq.s32.totalorder %s14, 0
    %p55 = por %p53, %p54
    %p56 = scmp.ne.s32.totalorder %s48, %s50
    %p57 = scmp.eq.s32.totalorder %s19, 1
    %p58 = por %p56, %p57
    %p59 = scmp.ne.s32.totalorder %s50, %s51
    %p60 = scmp.eq.s32.totalorder %s19, 0
    %p61 = por %p59, %p60
    %p62 = scmp.ne.s32.totalorder %s50, %s51
    %p63 = scmp.eq.s32.totalorder %s20, 1
    %p64 = por %p62, %p63
    %p66 = scmp.ne.s32.totalorder %s51, %s65
    %p67 = scmp.eq.s32.totalorder %s20, 0
    %p68 = por %p66, %p67
    %s70 = sadd.s32 %s69, 1
    %p73 = scmp.eq.s32.totalorder %s14, 1
    %p74 = scmp.ne.s32.totalorder %s69, %s71
    %p75 = scmp.eq.s32.totalorder %s14, 0
    %p76 = por %p74, %p75
    %p77 = scmp.ne.s32.totalorder %s69, %s71
    %p78 = scmp.eq.s32.totalorder %s19, 1
    %p79 = por %p77, %p78
    %p80 = scmp.ne.s32.totalorder %s71, %s72
    %p81 = scmp.eq.s32.totalorder %s19, 0
    %p82 = por %p80, %p81
    %p83 = scmp.ne.s32.totalorder %s71, %s72
    %p84 = scmp.eq.s32.totalorder %s20, 1
    %p85 = por %p83, %p84
    %p87 = scmp.ne.s32.totalorder %s72, %s86
    %p88 = scmp.eq.s32.totalorder %s20, 0
    %p89 = por %p87, %p88
    %s91 = sadd.s32 %s90, 1
    %p94 = scmp.eq.s32.totalorder %s14, 1
    %p95 = scmp.ne.s32.totalorder %s90, %s92
    %p96 = scmp.eq.s32.totalorder %s14, 0
    %p97 = por %p95, %p96
    %p98 = scmp.ne.s32.totalorder %s90, %s92
    %p99 = scmp.eq.s32.totalorder %s19, 1
    %p100 = por %p98, %p99
    %p101 = scmp.ne.s32.totalorder %s92, %s93
    %p102 = scmp.eq.s32.totalorder %s19, 0
    %p103 = por %p101, %p102
    %p104 = scmp.ne.s32.totalorder %s92, %s93
    %p105 = scmp.eq.s32.totalorder %s20, 1
    %p106 = por %p104, %p105
    %p108 = scmp.ne.s32.totalorder %s93, %s107
    %p109 = scmp.eq.s32.totalorder %s20, 0
    %p110 = por %p108, %p109
    %s112 = sadd.s32 %s111, 1
    %p115 = scmp.eq.s32.totalorder %s14, 1
    %p116 = scmp.ne.s32.totalorder %s111, %s113
    %p117 = scmp.eq.s32.totalorder %s14, 0
    %p118 = por %p116, %p117
    %p119 = scmp.ne.s32.totalorder %s111, %s113
    %p120 = scmp.eq.s32.totalorder %s19, 1
    %p121 = por %p119, %p120
    %p122 = scmp.ne.s32.totalorder %s113, %s114
    %p123 = scmp.eq.s32.totalorder %s19, 0
    %p124 = por %p122, %p123
    %p125 = scmp.ne.s32.totalorder %s113, %s114
    %p126 = scmp.eq.s32.totalorder %s20, 1
    %p127 = por %p125, %p126
    %p129 = scmp.ne.s32.totalorder %s114, %s128
    %p130 = scmp.eq.s32.totalorder %s20, 0
    %p131 = por %p129, %p130
    %s132 = ssub.s32 %s14, %s21
    %p133 = scmp.eq.s32.totalorder %s132, 0
    %s135 = sadd.s32 %s134, 1
    %s136 = scalar_select %p133, %s134, %s135
    %p139 = pneg %p133
    %p140 = scmp.eq.s32.totalorder %s14, 1
    %p141 = por %p139, %p140
    %p142 = scmp.ne.s32.totalorder %s134, %s137
    %p143 = scmp.eq.s32.totalorder %s14, 0
    %p144 = por %p142, %p143
    %p145 = scmp.ne.s32.totalorder %s134, %s137
    %p146 = scmp.eq.s32.totalorder %s19, 1
    %p147 = por %p145, %p146
    %p148 = scmp.ne.s32.totalorder %s137, %s138
    %p149 = scmp.eq.s32.totalorder %s19, 0
    %p150 = por %p148, %p149
    %p151 = scmp.ne.s32.totalorder %s137, %s138
    %p152 = scmp.eq.s32.totalorder %s20, 1
    %p153 = por %p151, %p152
    %p155 = scmp.ne.s32.totalorder %s138, %s154
    %p156 = scmp.eq.s32.totalorder %s20, 0
    %p157 = por %p155, %p156
    %s158 = ssub.s32 %s14, %s21
    %p159 = scmp.eq.s32.totalorder %s158, 0
    %s161 = sadd.s32 %s160, 1
    %s162 = scalar_select %p159, %s160, %s161
    %p165 = pneg %p159
    %p166 = scmp.eq.s32.totalorder %s14, 1
    %p167 = por %p165, %p166
    %p168 = scmp.ne.s32.totalorder %s160, %s163
    %p169 = scmp.eq.s32.totalorder %s14, 0
    %p170 = por %p168, %p169
    %p171 = scmp.ne.s32.totalorder %s160, %s163
    %p172 = scmp.eq.s32.totalorder %s19, 1
    %p173 = por %p171, %p172
    %p174 = scmp.ne.s32.totalorder %s163, %s164
    %p175 = scmp.eq.s32.totalorder %s19, 0
    %p176 = por %p174, %p175
    %p177 = scmp.ne.s32.totalorder %s163, %s164
    %p178 = scmp.eq.s32.totalorder %s20, 1
    %p179 = por %p177, %p178
    %p181 = scmp.ne.s32.totalorder %s164, %s180
    %p182 = scmp.eq.s32.totalorder %s20, 0
    %p183 = por %p181, %p182
    %s184 = ssub.s32 %s14, %s21
    %p185 = scmp.eq.s32.totalorder %s184, 0
    %s187 = sadd.s32 %s186, 1
    %s188 = scalar_select %p185, %s186, %s187
    %p191 = pneg %p185
    %p192 = scmp.eq.s32.totalorder %s14, 1
    %p193 = por %p191, %p192
    %p194 = scmp.ne.s32.totalorder %s186, %s189
    %p195 = scmp.eq.s32.totalorder %s14, 0
    %p196 = por %p194, %p195
    %p197 = scmp.ne.s32.totalorder %s186, %s189
    %p198 = scmp.eq.s32.totalorder %s19, 1
    %p199 = por %p197, %p198
    %p200 = scmp.ne.s32.totalorder %s189, %s190
    %p201 = scmp.eq.s32.totalorder %s19, 0
    %p202 = por %p200, %p201
    %p203 = scmp.ne.s32.totalorder %s189, %s190
    %p204 = scmp.eq.s32.totalorder %s20, 1
    %p205 = por %p203, %p204
    %p207 = scmp.ne.s32.totalorder %s190, %s206
    %p208 = scmp.eq.s32.totalorder %s20, 0
    %p209 = por %p207, %p208
    %p210 = scmp.le.s32.totalorder 1, %s14
    %p211 = scmp.lt.s32.totalorder %s14, 3
    %p212 = pnand %p210, %p211
    %p213 = pneg %p212
    // Predicated region
    $region9: #{netd_forward.12} parent=5 // pred_check
      _
    $region10: #{netd_forward.12} parent=5 // pred_check_branch
      %215 = sbr.rel (%p212) target = $region12
    $region11: #{netd_forward.12} parent=5 // pred_region
      %s216 = ssub.s32 %s14, 1
      // Predicated region
      $region13: #{netd_forward.12} parent=11 // pred_check
        %p217 = pneg %p61
      $region14: #{netd_forward.12} parent=11 // pred_check_branch
        %219 = sbr.rel (%p217) target = $region16
      $region15: #{netd_forward.12} parent=11 // pred_region
        _
      $region16: #{netd_forward.12} parent=11 // pred_fallthru
        _
      // Predicated region
      $region17: #{netd_forward.12} parent=11 // pred_check
        %p220 = pneg %p82
      $region18: #{netd_forward.12} parent=11 // pred_check_branch
        %222 = sbr.rel (%p220) target = $region20
      $region19: #{netd_forward.12} parent=11 // pred_region
        _
      $region20: #{netd_forward.12} parent=11 // pred_fallthru
        _
      // Predicated region
      $region21: #{netd_forward.12} parent=11 // pred_check
        %p223 = pneg %p103
      $region22: #{netd_forward.12} parent=11 // pred_check_branch
        %225 = sbr.rel (%p223) target = $region24
      $region23: #{netd_forward.12} parent=11 // pred_region
        _
      $region24: #{netd_forward.12} parent=11 // pred_fallthru
        _
      // Predicated region
      $region25: #{netd_forward.12} parent=11 // pred_check
        %p226 = pneg %p124
      $region26: #{netd_forward.12} parent=11 // pred_check_branch
        %228 = sbr.rel (%p226) target = $region28
      $region27: #{netd_forward.12} parent=11 // pred_region
        _
      $region28: #{netd_forward.12} parent=11 // pred_fallthru
        _
    $region12: #{netd_forward.12} parent=5 // pred_fallthru
      _
    %p229 = scmp.lt.s32.totalorder %s14, 2
    // Predicated region
    $region29: #{netd_forward.12} parent=5 // pred_check
      %p230 = pneg %p229
    $region30: #{netd_forward.12} parent=5 // pred_check_branch
      %232 = sbr.rel (%p230) target = $region32
    $region31: #{netd_forward.12} parent=5 // pred_region
      // Predicated region
      $region33: #{netd_forward.12} parent=31 // pred_check
        %p233 = pneg %p34
      $region34: #{netd_forward.12} parent=31 // pred_check_branch
        %235 = sbr.rel (%p233) target = $region36
      $region35: #{netd_forward.12} parent=31 // pred_region
        %p236 = scmp.lt.s32.totalorder %s14, 1
        %s237 = scalar_select %p236, %s14, 1
        %s238 = smul.addr %s237, 4
        %s239 = smul.addr %s238, 4
        %s240 = scalar_lea.vmem %s0, %s239
      $region36: #{netd_forward.12} parent=31 // pred_fallthru
        _
    $region32: #{netd_forward.12} parent=5 // pred_fallthru
      _
    %p241 = scmp.le.s32.totalorder 1, %s14
    %p242 = scmp.lt.s32.totalorder %s14, 3
    %p243 = pnand %p241, %p242
    %p244 = pneg %p243
    // Predicated region
    $region37: #{netd_forward.12} parent=5 // pred_check
      _
    $region38: #{netd_forward.12} parent=5 // pred_check_branch
      %246 = sbr.rel (%p243) target = $region40
    $region39: #{netd_forward.12} parent=5 // pred_region
      %s247 = ssub.s32 %s14, 1
      %p248 = scmp.lt.s32.totalorder %s19, 1
      %s249 = scalar_select %p248, %s19, 1
      %s250 = smul.addr %s249, 4
      %s251 = smul.addr %s250, 4
      %s252 = scalar_lea.vmem %s0, %s251
      %p253 = pneg %p40
      %p254 = pneg %p37
      %p255 = pneg %p61
      %p256 = pneg %p58
      %p257 = pneg %p82
      %p258 = pneg %p79
      %p259 = pneg %p103
      %p260 = pneg %p100
      %p261 = pneg %p124
      %p262 = pneg %p121
      %p263 = pneg %p150
      %p264 = pneg %p147
      %p265 = scmp.lt.s32.totalorder %s19, 1
      %s266 = scalar_select %p265, %s19, 1
      %s267 = smul.addr %s266, 4
      %s268 = smul.addr %s267, 4
      %s269 = scalar_lea.vmem %s5, %s268
      %p270 = pneg %p176
      %p271 = pneg %p173
      %p272 = scmp.lt.s32.totalorder %s19, 1
      %s273 = scalar_select %p272, %s19, 1
      %s274 = smul.addr %s273, 4
      %s275 = smul.addr %s274, 4
      %s276 = scalar_lea.vmem %s6, %s275
      %p277 = pneg %p202
      %p278 = pneg %p199
      %p279 = scmp.lt.s32.totalorder %s19, 1
      %s280 = scalar_select %p279, %s19, 1
      %s281 = smul.addr %s280, 2
      %s282 = scalar_lea.vmem %s7, %s281
      %p283 = scmp.lt.s32.totalorder %s19, 1
      %s284 = scalar_select %p283, %s19, 1
      %s285 = smul.addr %s284, 4
      %s286 = smul.addr %s285, 4
      %s287 = scalar_lea.vmem %s0, %s286
      %p288 = scmp.lt.s32.totalorder %s19, 1
      %s289 = scalar_select %p288, %s19, 1
      %s290 = smul.addr %s289, 4
      %s291 = smul.addr %s290, 4
      %s292 = scalar_lea.vmem %s5, %s291
      %p293 = scmp.lt.s32.totalorder %s19, 1
      %s294 = scalar_select %p293, %s19, 1
      %s295 = smul.addr %s294, 4
      %s296 = smul.addr %s295, 4
      %s297 = scalar_lea.vmem %s6, %s296
      %p298 = scmp.lt.s32.totalorder %s19, 1
      %s299 = scalar_select %p298, %s19, 1
      %s300 = smul.addr %s299, 2
      %s301 = scalar_lea.vmem %s7, %s300
      %v303 = vld [vmem:[%s287] sm:$0xf]
      %v304 = vld [vmem:[%s287 + $0x4] sm:$0xf]
      %v305 = vld [vmem:[%s287 + $0x8] sm:$0xf]
      %v306 = vld [vmem:[%s287 + $0xc] sm:$0xf]
      %v307 = vld [vmem:[%s1] sm:$0x1]
      %v309 = vlaneseq
      %v310 = vshrl.u32 %v309, 7
      %v311 = vsub.s32 0, %v310
      %v312 = vrot.slane %v307, %v311
      %v314 = vmul.f32 %v303, %v312
      %v315 = vmul.f32 %v304, %v312
      %v316 = vmul.f32 %v305, %v312
      %v317 = vmul.f32 %v306, %v312
      %v318 = vld [vmem:[%s2] sm:$0x1]
      %v320 = vlaneseq
      %v321 = vshrl.u32 %v320, 7
      %v322 = vsub.s32 0, %v321
      %v323 = vrot.slane %v318, %v322
      %v325 = vadd.f32 %v314, %v323
      %v326 = vadd.f32 %v315, %v323
      %v327 = vadd.f32 %v316, %v323
      %v328 = vadd.f32 %v317, %v323
      %vm329 = vcmp.gt.f32.partialorder %v325, 0.0
      %vm330 = vcmp.gt.f32.partialorder %v326, 0.0
      %vm331 = vcmp.gt.f32.partialorder %v327, 0.0
      %vm332 = vcmp.gt.f32.partialorder %v328, 0.0
      %v333 = vmul.f32 %v325, 0.2
      %v334 = vmul.f32 %v326, 0.2
      %v335 = vmul.f32 %v327, 0.2
      %v336 = vmul.f32 %v328, 0.2
      %v337 = vsel %vm329, %v325, %v333
      %v338 = vsel %vm330, %v326, %v334
      %v339 = vsel %vm331, %v327, %v335
      %v340 = vsel %vm332, %v328, %v336
      %vm341 = vcmask 519168
      %342 = vst.msk [vmem:[%s297] sm:$0xf] %vm341, %v337
      %343 = vst.msk [vmem:[%s297 + $0x4] sm:$0xf] %vm341, %v338
      %344 = vst.msk [vmem:[%s297 + $0x8] sm:$0xf] %vm341, %v339
      %345 = vst.msk [vmem:[%s297 + $0xc] sm:$0xf] %vm341, %v340
      %v346 = vpack.c.bf16 %v337, %v337
      %v347 = vpack.c.bf16 %v338, %v338
      %v348 = vpack.c.bf16 %v339, %v339
      %v349 = vpack.c.bf16 %v340, %v340
      %v351 = vshrl.u32 0, 16
      %v353 = vrot.slane %v351, 7
      %v354 = vshll.u32 0, 16
      %v356 = vor.u32 %v353, %v354
      %v358 = vshrl.u32 %v346, 16
      %v360 = vrot.slane %v358, 7
      %v361 = vshll.u32 %v346, 16
      %v363 = vor.u32 %v360, %v361
      %v365 = vshrl.u32 %v347, 16
      %v367 = vrot.slane %v365, 7
      %v368 = vshll.u32 %v347, 16
      %v370 = vor.u32 %v367, %v368
      %v372 = vshrl.u32 %v348, 16
      %v374 = vrot.slane %v372, 7
      %v375 = vshll.u32 %v348, 16
      %v377 = vor.u32 %v374, %v375
      %v379 = vshrl.u32 %v349, 16
      %v381 = vrot.slane %v379, 7
      %v382 = vshll.u32 %v349, 16
      %v384 = vor.u32 %v381, %v382
      %vm390 = vcmask 1040384
      %vm391 = vsmask.f32 256
      %vm392 = vmand %vm390, %vm391
      %v393 = vsel %vm392, 0, %v356
      %v394 = vsel %vm392, 0, %v363
      %v395 = vsel %vm392, 0, %v370
      %v396 = vsel %vm392, 0, %v377
      %v397 = vsel %vm392, 0, %v384
      %vm398 = vcmask 1042432
      %vm399 = vsmask.f32 2304
      %vm400 = vmand %vm398, %vm399
      %v401 = vsel %vm400, %v393, 0
      %v402 = vsel %vm400, %v394, 0
      %v403 = vsel %vm400, %v395, 0
      %v404 = vsel %vm400, %v396, 0
      %v405 = vsel %vm400, %v397, 0
      %v407 = vshrl.u32 %v401, 16
      %v409 = vshll.u32 %v401, 16
      %v411 = vrot.slane %v409, 1
      %v412 = vor.u32 %v407, %v411
      %v414 = vshrl.u32 %v402, 16
      %v416 = vshll.u32 %v402, 16
      %v418 = vrot.slane %v416, 1
      %v419 = vor.u32 %v414, %v418
      %v421 = vshrl.u32 %v403, 16
      %v423 = vshll.u32 %v403, 16
      %v425 = vrot.slane %v423, 1
      %v426 = vor.u32 %v421, %v425
      %v428 = vshrl.u32 %v404, 16
      %v430 = vshll.u32 %v404, 16
      %v432 = vrot.slane %v430, 1
      %v433 = vor.u32 %v428, %v432
      %434 = vrot.lane.b32.xlu0 %v412, 64
      %v435 = vpop.permute.xlu0 %434
      %436 = vrot.lane.b32.xlu0 %v419, 64
      %v437 = vpop.permute.xlu0 %436
      %438 = vrot.lane.b32.xlu0 %v426, 64
      %v439 = vpop.permute.xlu0 %438
      %440 = vrot.lane.b32.xlu0 %v433, 64
      %v441 = vpop.permute.xlu0 %440
      %v446 = vrot.slane %v401, 1
      %v447 = vrot.slane %v402, 1
      %v448 = vrot.slane %v403, 1
      %v449 = vrot.slane %v404, 1
      %451 = vrot.lane.b32.xlu0 %v402, 64
      %v452 = vpop.permute.xlu0 %451
      %453 = vrot.lane.b32.xlu0 %v403, 64
      %v454 = vpop.permute.xlu0 %453
      %455 = vrot.lane.b32.xlu0 %v404, 64
      %v456 = vpop.permute.xlu0 %455
      %457 = vrot.lane.b32.xlu0 %v405, 64
      %v458 = vpop.permute.xlu0 %457
      %v460 = vshrl.u32 %v405, 16
      %v462 = vshll.u32 %v405, 16
      %v464 = vrot.slane %v462, 1
      %v465 = vor.u32 %v460, %v464
      %v466 = vrot.slane %v405, 1
      %467 = vrot.lane.b32.xlu0 %v447, 64
      %v468 = vpop.permute.xlu0 %467
      %469 = vrot.lane.b32.xlu0 %v448, 64
      %v470 = vpop.permute.xlu0 %469
      %471 = vrot.lane.b32.xlu0 %v449, 64
      %v472 = vpop.permute.xlu0 %471
      %473 = vrot.lane.b32.xlu0 %v466, 64
      %v474 = vpop.permute.xlu0 %473
      %475 = vrot.lane.b32.xlu0 %v465, 64
      %v476 = vpop.permute.xlu0 %475
      %vm477 = vcmask 523264
      %v479 = vsel %vm477, %v401, %v435
      %v481 = vsel %vm477, %v402, %v437
      %v483 = vsel %vm477, %v403, %v439
      %v485 = vsel %vm477, %v404, %v441
      %v488 = vsel %vm477, %v446, %v452
      %v491 = vsel %vm477, %v447, %v454
      %v494 = vsel %vm477, %v448, %v456
      %v497 = vsel %vm477, %v449, %v458
      %v500 = vsel %vm477, %v419, %v468
      %v503 = vsel %vm477, %v426, %v470
      %v506 = vsel %vm477, %v433, %v472
      %v509 = vsel %vm477, %v465, %v474
      %v511 = vsel %vm477, %v405, %v476
      %v525 = vcombine.low %v479, %v488
      %v526 = vcombine.low %v500, %v483
      %v528 = vunpack.c.l.s4 1983009808
      %v529 = vunpack.c.0.s8 %v528
      %v530 = vlaneseq
      %v531 = vshrl.u32 %v530, 7
      %v532 = vsub.s32 %v529, %v531
      %v533 = vrot.slane %v525, %v532
      %v535 = vunpack.c.l.s4 1983009808
      %v536 = vunpack.c.0.s8 %v535
      %v537 = vlaneseq
      %v538 = vshrl.u32 %v537, 7
      %v539 = vsub.s32 %v536, %v538
      %v540 = vrot.slane %v526, %v539
      %v541 = vcombine.low %v533, %v540
      %v543 = vunpack.c.l.s4 1983009808
      %v544 = vunpack.c.0.s8 %v543
      %v545 = vlaneseq
      %v546 = vshrl.u32 %v545, 7
      %v547 = vsub.s32 %v544, %v546
      %v548 = vrot.slane %v448, %v547
      %v549 = vcombine.low %v481, %v491
      %v550 = vcombine.low %v503, %v485
      %v552 = vunpack.c.l.s4 1983009808
      %v553 = vunpack.c.0.s8 %v552
      %v554 = vlaneseq
      %v555 = vshrl.u32 %v554, 7
      %v556 = vsub.s32 %v553, %v555
      %v557 = vrot.slane %v549, %v556
      %v559 = vunpack.c.l.s4 1983009808
      %v560 = vunpack.c.0.s8 %v559
      %v561 = vlaneseq
      %v562 = vshrl.u32 %v561, 7
      %v563 = vsub.s32 %v560, %v562
      %v564 = vrot.slane %v550, %v563
      %v565 = vcombine.low %v557, %v564
      %v567 = vunpack.c.l.s4 1983009808
      %v568 = vunpack.c.0.s8 %v567
      %v569 = vlaneseq
      %v570 = vshrl.u32 %v569, 7
      %v571 = vsub.s32 %v568, %v570
      %v572 = vrot.slane %v449, %v571
      %v573 = vcombine.low %v483, %v494
      %v574 = vcombine.low %v506, %v511
      %v576 = vunpack.c.l.s4 1983009808
      %v577 = vunpack.c.0.s8 %v576
      %v578 = vlaneseq
      %v579 = vshrl.u32 %v578, 7
      %v580 = vsub.s32 %v577, %v579
      %v581 = vrot.slane %v573, %v580
      %v583 = vunpack.c.l.s4 1983009808
      %v584 = vunpack.c.0.s8 %v583
      %v585 = vlaneseq
      %v586 = vshrl.u32 %v585, 7
      %v587 = vsub.s32 %v584, %v586
      %v588 = vrot.slane %v574, %v587
      %v589 = vcombine.low %v581, %v588
      %v591 = vunpack.c.l.s4 1983009808
      %v592 = vunpack.c.0.s8 %v591
      %v593 = vlaneseq
      %v594 = vshrl.u32 %v593, 7
      %v595 = vsub.s32 %v592, %v594
      %v596 = vrot.slane %v466, %v595
      %v597 = vcombine.low %v485, %v497
      %v598 = vcombine.low %v509, %v479
      %v600 = vunpack.c.l.s4 1983009808
      %v601 = vunpack.c.0.s8 %v600
      %v602 = vlaneseq
      %v603 = vshrl.u32 %v602, 7
      %v604 = vsub.s32 %v601, %v603
      %v605 = vrot.slane %v597, %v604
      %v607 = vunpack.c.l.s4 1983009808
      %v608 = vunpack.c.0.s8 %v607
      %v609 = vlaneseq
      %v610 = vshrl.u32 %v609, 7
      %v611 = vsub.s32 %v608, %v610
      %v612 = vrot.slane %v598, %v611
      %v613 = vcombine.low %v605, %v612
      %v615 = vunpack.c.l.s4 1983009808
      %v616 = vunpack.c.0.s8 %v615
      %v617 = vlaneseq
      %v618 = vshrl.u32 %v617, 7
      %v619 = vsub.s32 %v616, %v618
      %v620 = vrot.slane %v446, %v619
      %v621 = vld [vmem:[%s3] sm:$0xf]
      %v622 = vld [vmem:[%s3 + $0x4] sm:$0xf]
      %v623 = vld [vmem:[%s3 + $0x8] sm:$0xf]
      %v624 = vld [vmem:[%s3 + $0xc] sm:$0xf]
      %v625 = vld [vmem:[%s3 + $0x10] sm:$0xf]
      %v626 = vld [vmem:[%s3 + $0x14] sm:$0xf]
      %v627 = vld [vmem:[%s3 + $0x18] sm:$0xf]
      %v628 = vld [vmem:[%s3 + $0x1c] sm:$0xf]
      %v629 = vld [vmem:[%s3 + $0x20] sm:$0xf]
      %v630 = vld [vmem:[%s3 + $0x24] sm:$0xf]
      %v631 = vld [vmem:[%s3 + $0x28] sm:$0xf]
      %v632 = vld [vmem:[%s3 + $0x2c] sm:$0xf]
      %v633 = vld [vmem:[%s3 + $0x30] sm:$0xf]
      %v634 = vld [vmem:[%s3 + $0x34] sm:$0xf]
      %v635 = vld [vmem:[%s3 + $0x38] sm:$0xf]
      %v636 = vld [vmem:[%s3 + $0x3c] sm:$0xf]
      %v637 = vld [vmem:[%s3 + $0x40] sm:$0xf]
      %v638 = vld [vmem:[%s3 + $0x44] sm:$0xf]
      %v639 = vld [vmem:[%s3 + $0x48] sm:$0xf]
      %v640 = vld [vmem:[%s3 + $0x4c] sm:$0xf]
      %v641 = vld [vmem:[%s3 + $0x50] sm:$0xf]
      %v642 = vld [vmem:[%s3 + $0x54] sm:$0xf]
      %v643 = vld [vmem:[%s3 + $0x58] sm:$0xf]
      %v644 = vld [vmem:[%s3 + $0x5c] sm:$0xf]
      %v645 = vld [vmem:[%s3 + $0x60] sm:$0xf]
      %v646 = vld [vmem:[%s3 + $0x64] sm:$0xf]
      %v647 = vld [vmem:[%s3 + $0x68] sm:$0xf]
      %v648 = vld [vmem:[%s3 + $0x6c] sm:$0xf]
      %v649 = vld [vmem:[%s3 + $0x70] sm:$0xf]
      %v650 = vld [vmem:[%s3 + $0x74] sm:$0xf]
      %v651 = vld [vmem:[%s3 + $0x78] sm:$0xf]
      %v652 = vld [vmem:[%s3 + $0x7c] sm:$0xf]
      %v653 = vld [vmem:[%s3 + $0x80] sm:$0xf]
      %v654 = vld [vmem:[%s3 + $0x84] sm:$0xf]
      %v655 = vld [vmem:[%s3 + $0x88] sm:$0xf]
      %v656 = vld [vmem:[%s3 + $0x8c] sm:$0xf]
      %v657 = vld [vmem:[%s3 + $0x90] sm:$0xf]
      %v658 = vld [vmem:[%s3 + $0x94] sm:$0xf]
      %v659 = vld [vmem:[%s3 + $0x98] sm:$0xf]
      %v660 = vld [vmem:[%s3 + $0x9c] sm:$0xf]
      %v661 = vld [vmem:[%s3 + $0xa0] sm:$0xf]
      %v662 = vld [vmem:[%s3 + $0xa4] sm:$0xf]
      %v663 = vld [vmem:[%s3 + $0xa8] sm:$0xf]
      %v664 = vld [vmem:[%s3 + $0xac] sm:$0xf]
      %v665 = vld [vmem:[%s3 + $0xb0] sm:$0xf]
      %v666 = vld [vmem:[%s3 + $0xb4] sm:$0xf]
      %v667 = vld [vmem:[%s3 + $0xb8] sm:$0xf]
      %v668 = vld [vmem:[%s3 + $0xbc] sm:$0xf]
      %v669 = vld [vmem:[%s3 + $0xc0] sm:$0xf]
      %v670 = vld [vmem:[%s3 + $0xc4] sm:$0xf]
      %v671 = vld [vmem:[%s3 + $0xc8] sm:$0xf]
      %v672 = vld [vmem:[%s3 + $0xcc] sm:$0xf]
      %v673 = vld [vmem:[%s3 + $0xd0] sm:$0xf]
      %v674 = vld [vmem:[%s3 + $0xd4] sm:$0xf]
      %v675 = vld [vmem:[%s3 + $0xd8] sm:$0xf]
      %v676 = vld [vmem:[%s3 + $0xdc] sm:$0xf]
      %v677 = vld [vmem:[%s3 + $0xe0] sm:$0xf]
      %v678 = vld [vmem:[%s3 + $0xe4] sm:$0xf]
      %v679 = vld [vmem:[%s3 + $0xe8] sm:$0xf]
      %v680 = vld [vmem:[%s3 + $0xec] sm:$0xf]
      %v681 = vld [vmem:[%s3 + $0xf0] sm:$0xf]
      %v682 = vld [vmem:[%s3 + $0xf4] sm:$0xf]
      %v683 = vld [vmem:[%s3 + $0xf8] sm:$0xf]
      %v684 = vld [vmem:[%s3 + $0xfc] sm:$0xf]
      %v685 = vld [vmem:[%s3 + $0x100] sm:$0xf]
      %v686 = vld [vmem:[%s3 + $0x104] sm:$0xf]
      %v687 = vld [vmem:[%s3 + $0x108] sm:$0xf]
      %v688 = vld [vmem:[%s3 + $0x10c] sm:$0xf]
      %v689 = vld [vmem:[%s3 + $0x110] sm:$0xf]
      %v690 = vld [vmem:[%s3 + $0x114] sm:$0xf]
      %v691 = vld [vmem:[%s3 + $0x118] sm:$0xf]
      %v692 = vld [vmem:[%s3 + $0x11c] sm:$0xf]
      %v693 = vld [vmem:[%s4] sm:$0x1]
      %v695 = vlaneseq
      %v696 = vshrl.u32 %v695, 7
      %v697 = vsub.s32 0, %v696
      %v698 = vrot.slane %v693, %v697
      %v700 = vcombine.low %v541, %v565
      %v701 = vcombine.high %v541, %v565
      %v702 = vcombine.low %v589, %v613
      %v703 = vcombine.high %v589, %v613
      %v705 = vunpack.c.l.s4 1983009808
      %v706 = vunpack.c.0.s8 %v705
      %v707 = vlaneseq
      %v708 = vshrl.u32 %v707, 7
      %v709 = vsub.s32 %v706, %v708
      %v710 = vrot.slane %v700, %v709
      %v712 = vunpack.c.l.s4 1983009808
      %v713 = vunpack.c.0.s8 %v712
      %v714 = vlaneseq
      %v715 = vshrl.u32 %v714, 7
      %v716 = vsub.s32 %v713, %v715
      %v717 = vrot.slane %v701, %v716
      %v719 = vunpack.c.l.s4 1983009808
      %v720 = vunpack.c.0.s8 %v719
      %v721 = vlaneseq
      %v722 = vshrl.u32 %v721, 7
      %v723 = vsub.s32 %v720, %v722
      %v724 = vrot.slane %v702, %v723
      %v726 = vunpack.c.l.s4 1983009808
      %v727 = vunpack.c.0.s8 %v726
      %v728 = vlaneseq
      %v729 = vshrl.u32 %v728, 7
      %v730 = vsub.s32 %v727, %v729
      %v731 = vrot.slane %v703, %v730
      %v732 = vcombine.low %v710, %v724
      %v733 = vcombine.high %v710, %v724
      %v734 = vcombine.low %v717, %v731
      %v735 = vcombine.high %v717, %v731
      %v736 = vcombine.low %v548, %v572
      %v737 = vcombine.low %v596, %v620
      %v739 = vunpack.c.l.s4 1983009808
      %v740 = vunpack.c.0.s8 %v739
      %v741 = vlaneseq
      %v742 = vshrl.u32 %v741, 7
      %v743 = vsub.s32 %v740, %v742
      %v744 = vrot.slane %v736, %v743
      %v746 = vunpack.c.l.s4 1983009808
      %v747 = vunpack.c.0.s8 %v746
      %v748 = vlaneseq
      %v749 = vshrl.u32 %v748, 7
      %v750 = vsub.s32 %v747, %v749
      %v751 = vrot.slane %v737, %v750
      %v752 = vcombine.low %v744, %v751
      %v829 = vunpack.c.l.b16 %v621
      %v830 = vunpack.c.l.b16 %v622
      %v831 = vunpack.c.l.b16 %v623
      %v832 = vunpack.c.l.b16 %v624
      %v833 = vunpack.c.l.b16 %v625
      %v834 = vunpack.c.l.b16 %v626
      %v835 = vunpack.c.l.b16 %v627
      %v836 = vunpack.c.l.b16 %v628
      %v837 = vunpack.c.l.b16 %v629
      %v838 = vunpack.c.l.b16 %v630
      %v839 = vunpack.c.l.b16 %v631
      %v840 = vunpack.c.l.b16 %v632
      %v841 = vunpack.c.l.b16 %v633
      %v842 = vunpack.c.l.b16 %v634
      %v843 = vunpack.c.l.b16 %v635
      %v844 = vunpack.c.l.b16 %v636
      %v845 = vunpack.c.l.b16 %v637
      %v846 = vunpack.c.l.b16 %v638
      %v847 = vunpack.c.l.b16 %v639
      %v848 = vunpack.c.l.b16 %v640
      %v849 = vunpack.c.l.b16 %v641
      %v850 = vunpack.c.l.b16 %v642
      %v851 = vunpack.c.l.b16 %v643
      %v852 = vunpack.c.l.b16 %v644
      %v853 = vunpack.c.l.b16 %v645
      %v854 = vunpack.c.l.b16 %v646
      %v855 = vunpack.c.l.b16 %v647
      %v856 = vunpack.c.l.b16 %v648
      %v857 = vunpack.c.l.b16 %v649
      %v858 = vunpack.c.l.b16 %v650
      %v859 = vunpack.c.l.b16 %v651
      %v860 = vunpack.c.l.b16 %v652
      %v861 = vunpack.c.l.b16 %v653
      %v862 = vunpack.c.l.b16 %v654
      %v863 = vunpack.c.l.b16 %v655
      %v864 = vunpack.c.l.b16 %v656
      %v865 = vunpack.c.l.b16 %v657
      %v866 = vunpack.c.l.b16 %v658
      %v867 = vunpack.c.l.b16 %v659
      %v868 = vunpack.c.l.b16 %v660
      %v869 = vunpack.c.l.b16 %v661
      %v870 = vunpack.c.l.b16 %v662
      %v871 = vunpack.c.l.b16 %v663
      %v872 = vunpack.c.l.b16 %v664
      %v873 = vunpack.c.l.b16 %v665
      %v874 = vunpack.c.l.b16 %v666
      %v875 = vunpack.c.l.b16 %v667
      %v876 = vunpack.c.l.b16 %v668
      %v877 = vunpack.c.l.b16 %v669
      %v878 = vunpack.c.l.b16 %v670
      %v879 = vunpack.c.l.b16 %v671
      %v880 = vunpack.c.l.b16 %v672
      %v881 = vunpack.c.l.b16 %v673
      %v882 = vunpack.c.l.b16 %v674
      %v883 = vunpack.c.l.b16 %v675
      %v884 = vunpack.c.l.b16 %v676
      %v885 = vunpack.c.l.b16 %v677
      %v886 = vunpack.c.l.b16 %v678
      %v887 = vunpack.c.l.b16 %v679
      %v888 = vunpack.c.l.b16 %v680
      %v889 = vunpack.c.l.b16 %v681
      %v890 = vunpack.c.l.b16 %v682
      %v891 = vunpack.c.l.b16 %v683
      %v892 = vunpack.c.l.b16 %v684
      %v893 = vunpack.c.l.b16 %v685
      %v894 = vunpack.c.l.b16 %v686
      %v895 = vunpack.c.l.b16 %v687
      %v896 = vunpack.c.l.b16 %v688
      %v897 = vunpack.c.l.b16 %v689
      %v898 = vunpack.c.l.b16 %v690
      %v899 = vunpack.c.l.b16 %v691
      %v900 = vunpack.c.l.b16 %v692
      %v901 = vpack.c.b16 %v830, %v829
      %v902 = vpack.c.b16 %v832, %v831
      %v903 = vpack.c.b16 %v834, %v833
      %v904 = vpack.c.b16 %v836, %v835
      %v905 = vpack.c.b16 %v838, %v837
      %v906 = vpack.c.b16 %v840, %v839
      %v907 = vpack.c.b16 %v842, %v841
      %v908 = vpack.c.b16 %v844, %v843
      %v909 = vpack.c.b16 %v846, %v845
      %v910 = vpack.c.b16 %v848, %v847
      %v911 = vpack.c.b16 %v850, %v849
      %v912 = vpack.c.b16 %v852, %v851
      %v913 = vpack.c.b16 %v854, %v853
      %v914 = vpack.c.b16 %v856, %v855
      %v915 = vpack.c.b16 %v858, %v857
      %v916 = vpack.c.b16 %v860, %v859
      %v917 = vpack.c.b16 %v862, %v861
      %v918 = vpack.c.b16 %v864, %v863
      %v919 = vpack.c.b16 %v866, %v865
      %v920 = vpack.c.b16 %v868, %v867
      %v921 = vpack.c.b16 %v870, %v869
      %v922 = vpack.c.b16 %v872, %v871
      %v923 = vpack.c.b16 %v874, %v873
      %v924 = vpack.c.b16 %v876, %v875
      %v925 = vpack.c.b16 %v878, %v877
      %v926 = vpack.c.b16 %v880, %v879
      %v927 = vpack.c.b16 %v882, %v881
      %v928 = vpack.c.b16 %v884, %v883
      %v929 = vpack.c.b16 %v886, %v885
      %v930 = vpack.c.b16 %v888, %v887
      %v931 = vpack.c.b16 %v890, %v889
      %v932 = vpack.c.b16 %v892, %v891
      %v933 = vpack.c.b16 %v894, %v893
      %v934 = vpack.c.b16 %v896, %v895
      %v935 = vpack.c.b16 %v898, %v897
      %v936 = vpack.c.b16 %v900, %v899
      %v974 = vsel %vm477, %v752, 0
      %976 = vmatprep.subr.bf16.mxu0 0
      %977 = vmatpush1.bf16.msra.mxu0 %v901
      %978 = vmatprep.subr.bf16.mxu0 0
      %979 = vmatpush1.bf16.msra.mxu0 %v902
      %980 = vmatprep.subr.bf16.mxu0 0
      %981 = vmatpush1.bf16.msra.mxu0 %v903
      %982 = vmatprep.subr.bf16.mxu0 0
      %983 = vmatpush1.bf16.msra.mxu0 %v904
      %984 = vmatprep.subr.bf16.mxu0 0
      %985 = vmatpush1.bf16.msra.mxu0 %v905
      %986 = vmatprep.subr.bf16.mxu0 0
      %987 = vmatpush1.bf16.msra.mxu0 %v906
      %988 = vmatprep.subr.bf16.mxu0 0
      %989 = vmatpush1.bf16.msra.mxu0 %v907
      %990 = vmatprep.subr.bf16.mxu0 0
      %991 = vmatpush1.bf16.msra.mxu0 %v908
      %992 = vmatprep.subr.bf16.mxu0 0
      %993 = vmatpush1.bf16.msra.mxu0 %v909
      %994 = vmatprep.subr.bf16.mxu0 0
      %995 = vmatpush1.bf16.msra.mxu0 %v910
      %996 = vmatprep.subr.bf16.mxu0 0
      %997 = vmatpush1.bf16.msra.mxu0 %v911
      %998 = vmatprep.subr.bf16.mxu0 0
      %999 = vmatpush1.bf16.msra.mxu0 %v912
      %1000 = vmatprep.subr.bf16.mxu0 0
      %1001 = vmatpush1.bf16.msra.mxu0 %v913
      %1002 = vmatprep.subr.bf16.mxu0 0
      %1003 = vmatpush1.bf16.msra.mxu0 %v914
      %1004 = vmatprep.subr.bf16.mxu0 0
      %1005 = vmatpush1.bf16.msra.mxu0 %v915
      %1006 = vmatprep.subr.bf16.mxu0 0
      %1007 = vmatpush1.bf16.msra.mxu0 %v916
      %1008 = vmatprep.mubr.bf16.mxu0 %v733
      %1009 = vmatmul.mubr.bf16.gmra.mrb[0].mxu0 %v732
      %v1010 = vpop.f32.mrb[0].mxu0
      %v1011 = vadd.f32 %v698, %v1010
      %v1012 = vpop.f32.mrb[0].mxu0
      %v1013 = vpop.f32.mrb[0].mxu0
      %v1014 = vadd.f32 %v698, %v1013
      %v1015 = vpop.f32.mrb[0].mxu0
      %1016 = vdwg.mxu0
      %1017 = vmatprep.subr.bf16.mxu0 0
      %1018 = vmatpush1.bf16.msra.mxu0 %v917
      %1019 = vmatprep.subr.bf16.mxu0 0
      %1020 = vmatpush1.bf16.msra.mxu0 %v918
      %1021 = vmatprep.subr.bf16.mxu0 0
      %1022 = vmatpush1.bf16.msra.mxu0 %v919
      %1023 = vmatprep.subr.bf16.mxu0 0
      %1024 = vmatpush1.bf16.msra.mxu0 %v920
      %1025 = vmatprep.subr.bf16.mxu0 0
      %1026 = vmatpush1.bf16.msra.mxu0 %v921
      %1027 = vmatprep.subr.bf16.mxu0 0
      %1028 = vmatpush1.bf16.msra.mxu0 %v922
      %1029 = vmatprep.subr.bf16.mxu0 0
      %1030 = vmatpush1.bf16.msra.mxu0 %v923
      %1031 = vmatprep.subr.bf16.mxu0 0
      %1032 = vmatpush1.bf16.msra.mxu0 %v924
      %1033 = vmatprep.subr.bf16.mxu0 0
      %1034 = vmatpush1.bf16.msra.mxu0 %v925
      %1035 = vmatprep.subr.bf16.mxu0 0
      %1036 = vmatpush1.bf16.msra.mxu0 %v926
      %1037 = vmatprep.subr.bf16.mxu0 0
      %1038 = vmatpush1.bf16.msra.mxu0 %v927
      %1039 = vmatprep.subr.bf16.mxu0 0
      %1040 = vmatpush1.bf16.msra.mxu0 %v928
      %1041 = vmatprep.subr.bf16.mxu0 0
      %1042 = vmatpush1.bf16.msra.mxu0 %v929
      %1043 = vmatprep.subr.bf16.mxu0 0
      %1044 = vmatpush1.bf16.msra.mxu0 %v930
      %1045 = vmatprep.subr.bf16.mxu0 0
      %1046 = vmatpush1.bf16.msra.mxu0 %v931
      %1047 = vmatprep.subr.bf16.mxu0 0
      %1048 = vmatpush1.bf16.msra.mxu0 %v932
      %1049 = vmatprep.mubr.bf16.mxu0 %v735
      %1050 = vmatmul.mubr.bf16.gmra.mrb[0].mxu0 %v734
      %v1051 = vpop.f32.mrb[0].mxu0
      %v1052 = vadd.f32 %v1011, %v1051
      %v1053 = vpop.f32.mrb[0].mxu0
      %v1054 = vpop.f32.mrb[0].mxu0
      %v1055 = vadd.f32 %v1014, %v1054
      %v1056 = vpop.f32.mrb[0].mxu0
      %1057 = vdwg.mxu0
      %1058 = vmatprep.subr.bf16.mxu0 0
      %1059 = vmatpush1.bf16.msra.mxu0 %v933
      %1060 = vmatprep.subr.bf16.mxu0 0
      %1061 = vmatpush1.bf16.msra.mxu0 %v934
      %1062 = vmatprep.subr.bf16.mxu0 0
      %1063 = vmatpush1.bf16.msra.mxu0 %v935
      %1064 = vmatprep.subr.bf16.mxu0 0
      %1065 = vmatpush1.bf16.msra.mxu0 %v936
      %1066 = vmatprep.subr.bf16.mxu0 0
      %1067 = vmatpush1.bf16.msra.mxu0 0
      %1068 = vmatprep.subr.bf16.mxu0 0
      %1069 = vmatpush1.bf16.msra.mxu0 0
      %1070 = vmatprep.subr.bf16.mxu0 0
      %1071 = vmatpush1.bf16.msra.mxu0 0
      %1072 = vmatprep.subr.bf16.mxu0 0
      %1073 = vmatpush1.bf16.msra.mxu0 0
      %1074 = vmatprep.subr.bf16.mxu0 0
      %1075 = vmatpush1.bf16.msra.mxu0 0
      %1076 = vmatprep.subr.bf16.mxu0 0
      %1077 = vmatpush1.bf16.msra.mxu0 0
      %1078 = vmatprep.subr.bf16.mxu0 0
      %1079 = vmatpush1.bf16.msra.mxu0 0
      %1080 = vmatprep.subr.bf16.mxu0 0
      %1081 = vmatpush1.bf16.msra.mxu0 0
      %1082 = vmatprep.subr.bf16.mxu0 0
      %1083 = vmatpush1.bf16.msra.mxu0 0
      %1084 = vmatprep.subr.bf16.mxu0 0
      %1085 = vmatpush1.bf16.msra.mxu0 0
      %1086 = vmatprep.subr.bf16.mxu0 0
      %1087 = vmatpush1.bf16.msra.mxu0 0
      %1088 = vmatprep.subr.bf16.mxu0 0
      %1089 = vmatpush1.bf16.msra.mxu0 0
      %1090 = vmatprep.mubr.bf16.mxu0 0
      %1091 = vmatmul.mubr.bf16.gmra.mrb[0].mxu0 %v974
      %v1092 = vpop.f32.mrb[0].mxu0
      %v1093 = vadd.f32 %v1052, %v1092
      %v1094 = vpop.f32.mrb[0].mxu0
      %v1095 = vpop.f32.mrb[0].mxu0
      %v1096 = vadd.f32 %v1055, %v1095
      %v1097 = vpop.f32.mrb[0].mxu0
      %1098 = vdwg.mxu0
      %v1099 = vsel %vm477, %v1093, 0.0
      %v1100 = vsel %vm477, %v1096, 0.0
      %v1101 = vadd.f32 %v1099, %v1100
      %v1102 = vrot.slane %v1101, 4
      %v1103 = vadd.f32 %v1101, %v1102
      %v1104 = vrot.slane %v1103, 2
      %v1105 = vadd.f32 %v1103, %v1104
      %v1106 = vrot.slane %v1105, 1
      %v1107 = vadd.f32 %v1105, %v1106
      %v1108 = vmul.f32 %v1093, %v1093
      %v1109 = vmul.f32 %v1096, %v1096
      %v1110 = vsel %vm477, %v1108, 0.0
      %v1111 = vsel %vm477, %v1109, 0.0
      %v1112 = vadd.f32 %v1110, %v1111
      %v1113 = vrot.slane %v1112, 4
      %v1114 = vadd.f32 %v1112, %v1113
      %v1115 = vrot.slane %v1114, 2
      %v1116 = vadd.f32 %v1114, %v1115
      %v1117 = vrot.slane %v1116, 1
      %v1118 = vadd.f32 %v1116, %v1117
      %vm1119 = vcmask 1040384
      %v1120 = vsel %vm1119, %v1107, %v1118
      %vm1121 = vcmask 517120
      %1122 = vst.msk [vmem:[%s301] sm:$0x3] %vm1121, %v1120
      %v1125 = vcombine.high %v1093, %v1093
      %v1126 = vcombine.high %v1096, %v1096
      %1129 = vst.msk [vmem:[%s292] sm:$0xf] %vm341, %v1093
      %1130 = vst.msk [vmem:[%s292 + $0x4] sm:$0xf] %vm341, %v1125
      %1131 = vst.msk [vmem:[%s292 + $0x8] sm:$0xf] %vm341, %v1096
      %1132 = vst.msk [vmem:[%s292 + $0xc] sm:$0xf] %vm341, %v1126
      %p1133 = scmp.lt.s32.totalorder %s19, 1
      %s1134 = scalar_select %p1133, %s19, 1
      %s1135 = smul.addr %s1134, 4
      %s1136 = smul.addr %s1135, 4
      %s1137 = scalar_lea.vmem %s5, %s1136
      %p1138 = scmp.lt.s32.totalorder %s19, 1
      %s1139 = scalar_select %p1138, %s19, 1
      %s1140 = smul.addr %s1139, 4
      %s1141 = smul.addr %s1140, 4
      %s1142 = scalar_lea.vmem %s6, %s1141
      %p1143 = scmp.lt.s32.totalorder %s19, 1
      %s1144 = scalar_select %p1143, %s19, 1
      %s1145 = smul.addr %s1144, 2
      %s1146 = scalar_lea.vmem %s7, %s1145
      // Predicated region
      $region41: #{netd_forward.12} parent=39 // pred_check
        %p1147 = pneg %p147
      $region42: #{netd_forward.12} parent=39 // pred_check_branch
        %1149 = sbr.rel (%p1147) target = $region44
      $region43: #{netd_forward.12} parent=39 // pred_region
        _
      $region44: #{netd_forward.12} parent=39 // pred_fallthru
        _
      // Predicated region
      $region45: #{netd_forward.12} parent=39 // pred_check
        %p1150 = pneg %p173
      $region46: #{netd_forward.12} parent=39 // pred_check_branch
        %1152 = sbr.rel (%p1150) target = $region48
      $region47: #{netd_forward.12} parent=39 // pred_region
        _
      $region48: #{netd_forward.12} parent=39 // pred_fallthru
        _
      // Predicated region
      $region49: #{netd_forward.12} parent=39 // pred_check
        %p1153 = pneg %p199
      $region50: #{netd_forward.12} parent=39 // pred_check_branch
        %1155 = sbr.rel (%p1153) target = $region52
      $region51: #{netd_forward.12} parent=39 // pred_region
        _
      $region52: #{netd_forward.12} parent=39 // pred_fallthru
        _
    $region40: #{netd_forward.12} parent=5 // pred_fallthru
      _
    %p1156 = scmp.le.s32.totalorder 2, %s14
    // Predicated region
    $region53: #{netd_forward.12} parent=5 // pred_check
      %p1157 = pneg %p1156
    $region54: #{netd_forward.12} parent=5 // pred_check_branch
      %1159 = sbr.rel (%p1157) target = $region56
    $region55: #{netd_forward.12} parent=5 // pred_region
      %s1160 = ssub.s32 %s14, 2
      // Predicated region
      $region57: #{netd_forward.12} parent=55 // pred_check
        %p1161 = pneg %p153
      $region58: #{netd_forward.12} parent=55 // pred_check_branch
        %1163 = sbr.rel (%p1161) target = $region60
      $region59: #{netd_forward.12} parent=55 // pred_region
        %p1164 = scmp.lt.s32.totalorder %s20, 1
        %s1165 = scalar_select %p1164, %s20, 1
        %s1166 = smul.addr %s1165, 4
        %s1167 = smul.addr %s1166, 4
        %s1168 = scalar_lea.vmem %s5, %s1167
      $region60: #{netd_forward.12} parent=55 // pred_fallthru
        _
      // Predicated region
      $region61: #{netd_forward.12} parent=55 // pred_check
        %p1169 = pneg %p179
      $region62: #{netd_forward.12} parent=55 // pred_check_branch
        %1171 = sbr.rel (%p1169) target = $region64
      $region63: #{netd_forward.12} parent=55 // pred_region
        %p1172 = scmp.lt.s32.totalorder %s20, 1
        %s1173 = scalar_select %p1172, %s20, 1
        %s1174 = smul.addr %s1173, 4
        %s1175 = smul.addr %s1174, 4
        %s1176 = scalar_lea.vmem %s6, %s1175
      $region64: #{netd_forward.12} parent=55 // pred_fallthru
        _
      // Predicated region
      $region65: #{netd_forward.12} parent=55 // pred_check
        %p1177 = pneg %p205
      $region66: #{netd_forward.12} parent=55 // pred_check_branch
        %1179 = sbr.rel (%p1177) target = $region68
      $region67: #{netd_forward.12} parent=55 // pred_region
        %p1180 = scmp.lt.s32.totalorder %s20, 1
        %s1181 = scalar_select %p1180, %s20, 1
        %s1182 = smul.addr %s1181, 2
        %s1183 = scalar_lea.vmem %s7, %s1182
      $region68: #{netd_forward.12} parent=55 // pred_fallthru
        _
    $region56: #{netd_forward.12} parent=5 // pred_fallthru
      _
  $region6: #{netd_forward.12} parent=0 // loop_footer
    %s18 = sadd.s32 1, %s14
  $region7: #{netd_forward.12} parent=0 // loop_footer_branch
    %13 = sbr.rel target = $region3
  $region8: #{netd_forward.12} parent=0 // loop_exit
    _

// kernel: netd_forward.13
$region0: #{netd_forward.13}
  #allocation0 [shape = 'u32[]', space=smem, size = 0x4, offset = 0x4, fixed_abs, tag = 'smem constant byte address 0x4 - core index']
  #allocation1 [shape = 'u32[144,128]{1,0:T(1,128)}', space=vmem, size = 0x12000, scoped, tag = 'internal scratch']
  %s0 = inlined_call_operand.vmem [shape: f32[2,4,4,64], index: 0, kind: input, shape index: {}]
  %s1 = inlined_call_operand.vmem [shape: f32[1,64], index: 1, kind: input, shape index: {}]
  %s2 = inlined_call_operand.vmem [shape: f32[1,64], index: 2, kind: input, shape index: {}]
  %s3 = inlined_call_operand.vmem [shape: bf16[576,64], index: 3, kind: input, shape index: {}]
  %s4 = inlined_call_operand.vmem [shape: f32[1,64], index: 4, kind: input, shape index: {}]
  %s5 = inlined_call_operand.vmem [shape: f32[2,4,4,64], index: 5, kind: output, shape index: {0}]
  %s6 = inlined_call_operand.vmem [shape: f32[2,2,64], index: 6, kind: output, shape index: {1}]
  %7 = xla_tuple %s5, %s6
  %s8 = sld [smem:[#allocation0]]
  $region61: #{netd_forward.13} parent=0
    _
  %s10 = ssub.s32 1, %s8
  %s11 = scalar_select 0, %s10, %s8
  loop: start=0, step=1, limit=4
  $region2: #{netd_forward.13} parent=0 // loop_pre_header
    _
  $region3: #{netd_forward.13} parent=0 // loop_header
    %s13 = sphi 0, %s17
    %p14 = scmp.ge.s32.totalorder %s13, 4
    %s23 = sphi 0, %s25
    %s26 = sphi 0, %s23
    %s27 = sphi 0, %s26
    %s43 = sphi 0, %s27
    %s47 = sphi 0, %s47
    %s49 = sphi 0, %s47
    %s50 = sphi 0, %s49
    %s64 = sphi 0, %s50
    %s68 = sphi 0, %s68
    %s70 = sphi 0, %s68
    %s71 = sphi 0, %s70
    %s85 = sphi 0, %s71
    %s89 = sphi 0, %s89
    %s91 = sphi 0, %s89
    %s92 = sphi 0, %s91
    %s106 = sphi 0, %s92
    %s110 = sphi 0, %s110
    %s112 = sphi 0, %s110
    %s113 = sphi 0, %s112
    %s127 = sphi 0, %s113
    %s133 = sphi 0, %s135
    %s136 = sphi 0, %s133
    %s137 = sphi 0, %s136
    %s153 = sphi 0, %s137
    %s159 = sphi 0, %s161
    %s162 = sphi 0, %s159
    %s163 = sphi 0, %s162
    %s179 = sphi 0, %s163
  $region4: #{netd_forward.13} parent=0 // loop_header_branch
    %16 = sbr.rel (%p14) target = $region8
  $region5: #{netd_forward.13} parent=0 // loop_body
    %s18 = ssub.s32 %s13, 1
    %s19 = ssub.s32 %s13, 2
    %s20 = sadd.s32 %s13, 1
    %s21 = ssub.s32 %s13, %s20
    %p22 = scmp.eq.s32.totalorder %s21, 0
    %s24 = sadd.s32 %s23, 1
    %s25 = scalar_select %p22, %s23, %s24
    %p28 = pneg %p22
    %p29 = scmp.eq.s32.totalorder %s13, 1
    %p30 = por %p28, %p29
    %p31 = scmp.ne.s32.totalorder %s23, %s26
    %p32 = scmp.eq.s32.totalorder %s13, 0
    %p33 = por %p31, %p32
    %p34 = scmp.ne.s32.totalorder %s23, %s26
    %p35 = scmp.eq.s32.totalorder %s18, 1
    %p36 = por %p34, %p35
    %p37 = scmp.ne.s32.totalorder %s26, %s27
    %p38 = scmp.eq.s32.totalorder %s18, 0
    %p39 = por %p37, %p38
    %p40 = scmp.ne.s32.totalorder %s26, %s27
    %p41 = scmp.eq.s32.totalorder %s19, 1
    %p42 = por %p40, %p41
    %p44 = scmp.ne.s32.totalorder %s27, %s43
    %p45 = scmp.eq.s32.totalorder %s19, 0
    %p46 = por %p44, %p45
    %s48 = sadd.s32 %s47, 1
    %p51 = scmp.eq.s32.totalorder %s13, 1
    %p52 = scmp.ne.s32.totalorder %s47, %s49
    %p53 = scmp.eq.s32.totalorder %s13, 0
    %p54 = por %p52, %p53
    %p55 = scmp.ne.s32.totalorder %s47, %s49
    %p56 = scmp.eq.s32.totalorder %s18, 1
    %p57 = por %p55, %p56
    %p58 = scmp.ne.s32.totalorder %s49, %s50
    %p59 = scmp.eq.s32.totalorder %s18, 0
    %p60 = por %p58, %p59
    %p61 = scmp.ne.s32.totalorder %s49, %s50
    %p62 = scmp.eq.s32.totalorder %s19, 1
    %p63 = por %p61, %p62
    %p65 = scmp.ne.s32.totalorder %s50, %s64
    %p66 = scmp.eq.s32.totalorder %s19, 0
    %p67 = por %p65, %p66
    %s69 = sadd.s32 %s68, 1
    %p72 = scmp.eq.s32.totalorder %s13, 1
    %p73 = scmp.ne.s32.totalorder %s68, %s70
    %p74 = scmp.eq.s32.totalorder %s13, 0
    %p75 = por %p73, %p74
    %p76 = scmp.ne.s32.totalorder %s68, %s70
    %p77 = scmp.eq.s32.totalorder %s18, 1
    %p78 = por %p76, %p77
    %p79 = scmp.ne.s32.totalorder %s70, %s71
    %p80 = scmp.eq.s32.totalorder %s18, 0
    %p81 = por %p79, %p80
    %p82 = scmp.ne.s32.totalorder %s70, %s71
    %p83 = scmp.eq.s32.totalorder %s19, 1
    %p84 = por %p82, %p83
    %p86 = scmp.ne.s32.totalorder %s71, %s85
    %p87 = scmp.eq.s32.totalorder %s19, 0
    %p88 = por %p86, %p87
    %s90 = sadd.s32 %s89, 1
    %p93 = scmp.eq.s32.totalorder %s13, 1
    %p94 = scmp.ne.s32.totalorder %s89, %s91
    %p95 = scmp.eq.s32.totalorder %s13, 0
    %p96 = por %p94, %p95
    %p97 = scmp.ne.s32.totalorder %s89, %s91
    %p98 = scmp.eq.s32.totalorder %s18, 1
    %p99 = por %p97, %p98
    %p100 = scmp.ne.s32.totalorder %s91, %s92
    %p101 = scmp.eq.s32.totalorder %s18, 0
    %p102 = por %p100, %p101
    %p103 = scmp.ne.s32.totalorder %s91, %s92
    %p104 = scmp.eq.s32.totalorder %s19, 1
    %p105 = por %p103, %p104
    %p107 = scmp.ne.s32.totalorder %s92, %s106
    %p108 = scmp.eq.s32.totalorder %s19, 0
    %p109 = por %p107, %p108
    %s111 = sadd.s32 %s110, 1
    %p114 = scmp.eq.s32.totalorder %s13, 1
    %p115 = scmp.ne.s32.totalorder %s110, %s112
    %p116 = scmp.eq.s32.totalorder %s13, 0
    %p117 = por %p115, %p116
    %p118 = scmp.ne.s32.totalorder %s110, %s112
    %p119 = scmp.eq.s32.totalorder %s18, 1
    %p120 = por %p118, %p119
    %p121 = scmp.ne.s32.totalorder %s112, %s113
    %p122 = scmp.eq.s32.totalorder %s18, 0
    %p123 = por %p121, %p122
    %p124 = scmp.ne.s32.totalorder %s112, %s113
    %p125 = scmp.eq.s32.totalorder %s19, 1
    %p126 = por %p124, %p125
    %p128 = scmp.ne.s32.totalorder %s113, %s127
    %p129 = scmp.eq.s32.totalorder %s19, 0
    %p130 = por %p128, %p129
    %s131 = ssub.s32 %s13, %s20
    %p132 = scmp.eq.s32.totalorder %s131, 0
    %s134 = sadd.s32 %s133, 1
    %s135 = scalar_select %p132, %s133, %s134
    %p138 = pneg %p132
    %p139 = scmp.eq.s32.totalorder %s13, 1
    %p140 = por %p138, %p139
    %p141 = scmp.ne.s32.totalorder %s133, %s136
    %p142 = scmp.eq.s32.totalorder %s13, 0
    %p143 = por %p141, %p142
    %p144 = scmp.ne.s32.totalorder %s133, %s136
    %p145 = scmp.eq.s32.totalorder %s18, 1
    %p146 = por %p144, %p145
    %p147 = scmp.ne.s32.totalorder %s136, %s137
    %p148 = scmp.eq.s32.totalorder %s18, 0
    %p149 = por %p147, %p148
    %p150 = scmp.ne.s32.totalorder %s136, %s137
    %p151 = scmp.eq.s32.totalorder %s19, 1
    %p152 = por %p150, %p151
    %p154 = scmp.ne.s32.totalorder %s137, %s153
    %p155 = scmp.eq.s32.totalorder %s19, 0
    %p156 = por %p154, %p155
    %s157 = ssub.s32 %s13, %s20
    %p158 = scmp.eq.s32.totalorder %s157, 0
    %s160 = sadd.s32 %s159, 1
    %s161 = scalar_select %p158, %s159, %s160
    %p164 = pneg %p158
    %p165 = scmp.eq.s32.totalorder %s13, 1
    %p166 = por %p164, %p165
    %p167 = scmp.ne.s32.totalorder %s159, %s162
    %p168 = scmp.eq.s32.totalorder %s13, 0
    %p169 = por %p167, %p168
    %p170 = scmp.ne.s32.totalorder %s159, %s162
    %p171 = scmp.eq.s32.totalorder %s18, 1
    %p172 = por %p170, %p171
    %p173 = scmp.ne.s32.totalorder %s162, %s163
    %p174 = scmp.eq.s32.totalorder %s18, 0
    %p175 = por %p173, %p174
    %p176 = scmp.ne.s32.totalorder %s162, %s163
    %p177 = scmp.eq.s32.totalorder %s19, 1
    %p178 = por %p176, %p177
    %p180 = scmp.ne.s32.totalorder %s163, %s179
    %p181 = scmp.eq.s32.totalorder %s19, 0
    %p182 = por %p180, %p181
    %p183 = scmp.le.s32.totalorder 1, %s13
    %p184 = scmp.lt.s32.totalorder %s13, 3
    %p185 = pnand %p183, %p184
    %p186 = pneg %p185
    // Predicated region
    $region9: #{netd_forward.13} parent=5 // pred_check
      _
    $region10: #{netd_forward.13} parent=5 // pred_check_branch
      %188 = sbr.rel (%p185) target = $region12
    $region11: #{netd_forward.13} parent=5 // pred_region
      %s189 = ssub.s32 %s13, 1
      // Predicated region
      $region13: #{netd_forward.13} parent=11 // pred_check
        %p190 = pneg %p60
      $region14: #{netd_forward.13} parent=11 // pred_check_branch
        %192 = sbr.rel (%p190) target = $region16
      $region15: #{netd_forward.13} parent=11 // pred_region
        _
      $region16: #{netd_forward.13} parent=11 // pred_fallthru
        _
      // Predicated region
      $region17: #{netd_forward.13} parent=11 // pred_check
        %p193 = pneg %p81
      $region18: #{netd_forward.13} parent=11 // pred_check_branch
        %195 = sbr.rel (%p193) target = $region20
      $region19: #{netd_forward.13} parent=11 // pred_region
        _
      $region20: #{netd_forward.13} parent=11 // pred_fallthru
        _
      // Predicated region
      $region21: #{netd_forward.13} parent=11 // pred_check
        %p196 = pneg %p102
      $region22: #{netd_forward.13} parent=11 // pred_check_branch
        %198 = sbr.rel (%p196) target = $region24
      $region23: #{netd_forward.13} parent=11 // pred_region
        _
      $region24: #{netd_forward.13} parent=11 // pred_fallthru
        _
      // Predicated region
      $region25: #{netd_forward.13} parent=11 // pred_check
        %p199 = pneg %p123
      $region26: #{netd_forward.13} parent=11 // pred_check_branch
        %201 = sbr.rel (%p199) target = $region28
      $region27: #{netd_forward.13} parent=11 // pred_region
        _
      $region28: #{netd_forward.13} parent=11 // pred_fallthru
        _
    $region12: #{netd_forward.13} parent=5 // pred_fallthru
      _
    %p202 = scmp.lt.s32.totalorder %s13, 2
    // Predicated region
    $region29: #{netd_forward.13} parent=5 // pred_check
      %p203 = pneg %p202
    $region30: #{netd_forward.13} parent=5 // pred_check_branch
      %205 = sbr.rel (%p203) target = $region32
    $region31: #{netd_forward.13} parent=5 // pred_region
      // Predicated region
      $region33: #{netd_forward.13} parent=31 // pred_check
        %p206 = pneg %p33
      $region34: #{netd_forward.13} parent=31 // pred_check_branch
        %208 = sbr.rel (%p206) target = $region36
      $region35: #{netd_forward.13} parent=31 // pred_region
        %p209 = scmp.lt.s32.totalorder %s13, 1
        %s210 = scalar_select %p209, %s13, 1
        %s211 = smul.addr %s210, 4
        %s212 = smul.addr %s211, 4
        %s213 = scalar_lea.vmem %s0, %s212
      $region36: #{netd_forward.13} parent=31 // pred_fallthru
        _
    $region32: #{netd_forward.13} parent=5 // pred_fallthru
      _
    %p214 = scmp.le.s32.totalorder 1, %s13
    %p215 = scmp.lt.s32.totalorder %s13, 3
    %p216 = pnand %p214, %p215
    %p217 = pneg %p216
    // Predicated region
    $region37: #{netd_forward.13} parent=5 // pred_check
      _
    $region38: #{netd_forward.13} parent=5 // pred_check_branch
      %219 = sbr.rel (%p216) target = $region40
    $region39: #{netd_forward.13} parent=5 // pred_region
      %s220 = ssub.s32 %s13, 1
      %p221 = scmp.lt.s32.totalorder %s18, 1
      %s222 = scalar_select %p221, %s18, 1
      %s223 = smul.addr %s222, 4
      %s224 = smul.addr %s223, 4
      %s225 = scalar_lea.vmem %s0, %s224
      %p226 = pneg %p39
      %p227 = pneg %p36
      %p228 = pneg %p60
      %p229 = pneg %p57
      %p230 = pneg %p81
      %p231 = pneg %p78
      %p232 = pneg %p102
      %p233 = pneg %p99
      %p234 = pneg %p123
      %p235 = pneg %p120
      %p236 = pneg %p149
      %p237 = pneg %p146
      %p238 = scmp.lt.s32.totalorder %s18, 1
      %s239 = scalar_select %p238, %s18, 1
      %s240 = smul.addr %s239, 4
      %s241 = smul.addr %s240, 4
      %s242 = scalar_lea.vmem %s5, %s241
      %p243 = pneg %p175
      %p244 = pneg %p172
      %p245 = scmp.lt.s32.totalorder %s18, 1
      %s246 = scalar_select %p245, %s18, 1
      %s247 = smul.addr %s246, 2
      %s248 = scalar_lea.vmem %s6, %s247
      %p249 = scmp.lt.s32.totalorder %s18, 1
      %s250 = scalar_select %p249, %s18, 1
      %s251 = smul.addr %s250, 4
      %s252 = smul.addr %s251, 4
      %s253 = scalar_lea.vmem %s0, %s252
      %p254 = scmp.lt.s32.totalorder %s18, 1
      %s255 = scalar_select %p254, %s18, 1
      %s256 = smul.addr %s255, 4
      %s257 = smul.addr %s256, 4
      %s258 = scalar_lea.vmem %s5, %s257
      %p259 = scmp.lt.s32.totalorder %s18, 1
      %s260 = scalar_select %p259, %s18, 1
      %s261 = smul.addr %s260, 2
      %s262 = scalar_lea.vmem %s6, %s261
      %v264 = vld [vmem:[%s253] sm:$0xf]
      %v265 = vld [vmem:[%s253 + $0x4] sm:$0xf]
      %v266 = vld [vmem:[%s253 + $0x8] sm:$0xf]
      %v267 = vld [vmem:[%s253 + $0xc] sm:$0xf]
      %v268 = vld [vmem:[%s1] sm:$0x1]
      %v270 = vlaneseq
      %v271 = vshrl.u32 %v270, 7
      %v272 = vsub.s32 0, %v271
      %v273 = vrot.slane %v268, %v272
      %v275 = vmul.f32 %v264, %v273
      %v276 = vmul.f32 %v265, %v273
      %v277 = vmul.f32 %v266, %v273
      %v278 = vmul.f32 %v267, %v273
      %v279 = vld [vmem:[%s2] sm:$0x1]
      %v281 = vlaneseq
      %v282 = vshrl.u32 %v281, 7
      %v283 = vsub.s32 0, %v282
      %v284 = vrot.slane %v279, %v283
      %v286 = vadd.f32 %v275, %v284
      %v287 = vadd.f32 %v276, %v284
      %v288 = vadd.f32 %v277, %v284
      %v289 = vadd.f32 %v278, %v284
      %vm290 = vcmp.gt.f32.partialorder %v286, 0.0
      %vm291 = vcmp.gt.f32.partialorder %v287, 0.0
      %vm292 = vcmp.gt.f32.partialorder %v288, 0.0
      %vm293 = vcmp.gt.f32.partialorder %v289, 0.0
      %v294 = vmul.f32 %v286, 0.2
      %v295 = vmul.f32 %v287, 0.2
      %v296 = vmul.f32 %v288, 0.2
      %v297 = vmul.f32 %v289, 0.2
      %v298 = vsel %vm290, %v286, %v294
      %v299 = vsel %vm291, %v287, %v295
      %v300 = vsel %vm292, %v288, %v296
      %v301 = vsel %vm293, %v289, %v297
      %v302 = vpack.c.bf16 %v298, %v298
      %v303 = vpack.c.bf16 %v299, %v299
      %v304 = vpack.c.bf16 %v300, %v300
      %v305 = vpack.c.bf16 %v301, %v301
      %v307 = vshrl.u32 0, 16
      %v309 = vrot.slane %v307, 7
      %v310 = vshll.u32 0, 16
      %v312 = vor.u32 %v309, %v310
      %v314 = vshrl.u32 %v302, 16
      %v316 = vrot.slane %v314, 7
      %v317 = vshll.u32 %v302, 16
      %v319 = vor.u32 %v316, %v317
      %v321 = vshrl.u32 %v303, 16
      %v323 = vrot.slane %v321, 7
      %v324 = vshll.u32 %v303, 16
      %v326 = vor.u32 %v323, %v324
      %v328 = vshrl.u32 %v304, 16
      %v330 = vrot.slane %v328, 7
      %v331 = vshll.u32 %v304, 16
      %v333 = vor.u32 %v330, %v331
      %v335 = vshrl.u32 %v305, 16
      %v337 = vrot.slane %v335, 7
      %v338 = vshll.u32 %v305, 16
      %v340 = vor.u32 %v337, %v338
      %vm346 = vcmask 1040384
      %vm347 = vsmask.f32 256
      %vm348 = vmand %vm346, %vm347
      %v349 = vsel %vm348, 0, %v312
      %v350 = vsel %vm348, 0, %v319
      %v351 = vsel %vm348, 0, %v326
      %v352 = vsel %vm348, 0, %v333
      %v353 = vsel %vm348, 0, %v340
      %vm354 = vcmask 1042432
      %vm355 = vsmask.f32 2304
      %vm356 = vmand %vm354, %vm355
      %v357 = vsel %vm356, %v349, 0
      %v358 = vsel %vm356, %v350, 0
      %v359 = vsel %vm356, %v351, 0
      %v360 = vsel %vm356, %v352, 0
      %v361 = vsel %vm356, %v353, 0
      %v363 = vshrl.u32 %v357, 16
      %v365 = vshll.u32 %v357, 16
      %v367 = vrot.slane %v365, 1
      %v368 = vor.u32 %v363, %v367
      %v370 = vshrl.u32 %v358, 16
      %v372 = vshll.u32 %v358, 16
      %v374 = vrot.slane %v372, 1
      %v375 = vor.u32 %v370, %v374
      %v377 = vshrl.u32 %v359, 16
      %v379 = vshll.u32 %v359, 16
      %v381 = vrot.slane %v379, 1
      %v382 = vor.u32 %v377, %v381
      %v384 = vshrl.u32 %v360, 16
      %v386 = vshll.u32 %v360, 16
      %v388 = vrot.slane %v386, 1
      %v389 = vor.u32 %v384, %v388
      %390 = vrot.lane.b32.xlu0 %v368, 64
      %v391 = vpop.permute.xlu0 %390
      %392 = vrot.lane.b32.xlu0 %v375, 64
      %v393 = vpop.permute.xlu0 %392
      %394 = vrot.lane.b32.xlu0 %v382, 64
      %v395 = vpop.permute.xlu0 %394
      %396 = vrot.lane.b32.xlu0 %v389, 64
      %v397 = vpop.permute.xlu0 %396
      %v402 = vrot.slane %v357, 1
      %v403 = vrot.slane %v358, 1
      %v404 = vrot.slane %v359, 1
      %v405 = vrot.slane %v360, 1
      %407 = vrot.lane.b32.xlu0 %v358, 64
      %v408 = vpop.permute.xlu0 %407
      %409 = vrot.lane.b32.xlu0 %v359, 64
      %v410 = vpop.permute.xlu0 %409
      %411 = vrot.lane.b32.xlu0 %v360, 64
      %v412 = vpop.permute.xlu0 %411
      %413 = vrot.lane.b32.xlu0 %v361, 64
      %v414 = vpop.permute.xlu0 %413
      %v416 = vshrl.u32 %v361, 16
      %v418 = vshll.u32 %v361, 16
      %v420 = vrot.slane %v418, 1
      %v421 = vor.u32 %v416, %v420
      %v422 = vrot.slane %v361, 1
      %423 = vrot.lane.b32.xlu0 %v403, 64
      %v424 = vpop.permute.xlu0 %423
      %425 = vrot.lane.b32.xlu0 %v404, 64
      %v426 = vpop.permute.xlu0 %425
      %427 = vrot.lane.b32.xlu0 %v405, 64
      %v428 = vpop.permute.xlu0 %427
      %429 = vrot.lane.b32.xlu0 %v422, 64
      %v430 = vpop.permute.xlu0 %429
      %431 = vrot.lane.b32.xlu0 %v421, 64
      %v432 = vpop.permute.xlu0 %431
      %vm433 = vcmask 523264
      %v435 = vsel %vm433, %v357, %v391
      %v437 = vsel %vm433, %v358, %v393
      %v439 = vsel %vm433, %v359, %v395
      %v441 = vsel %vm433, %v360, %v397
      %v444 = vsel %vm433, %v402, %v408
      %v447 = vsel %vm433, %v403, %v410
      %v450 = vsel %vm433, %v404, %v412
      %v453 = vsel %vm433, %v405, %v414
      %v456 = vsel %vm433, %v375, %v424
      %v459 = vsel %vm433, %v382, %v426
      %v462 = vsel %vm433, %v389, %v428
      %v465 = vsel %vm433, %v421, %v430
      %v467 = vsel %vm433, %v361, %v432
      %v481 = vcombine.low %v435, %v444
      %v482 = vcombine.low %v456, %v439
      %v484 = vunpack.c.l.s4 1983009808
      %v485 = vunpack.c.0.s8 %v484
      %v486 = vlaneseq
      %v487 = vshrl.u32 %v486, 7
      %v488 = vsub.s32 %v485, %v487
      %v489 = vrot.slane %v481, %v488
      %v491 = vunpack.c.l.s4 1983009808
      %v492 = vunpack.c.0.s8 %v491
      %v493 = vlaneseq
      %v494 = vshrl.u32 %v493, 7
      %v495 = vsub.s32 %v492, %v494
      %v496 = vrot.slane %v482, %v495
      %v497 = vcombine.low %v489, %v496
      %v499 = vunpack.c.l.s4 1983009808
      %v500 = vunpack.c.0.s8 %v499
      %v501 = vlaneseq
      %v502 = vshrl.u32 %v501, 7
      %v503 = vsub.s32 %v500, %v502
      %v504 = vrot.slane %v404, %v503
      %v505 = vcombine.low %v437, %v447
      %v506 = vcombine.low %v459, %v441
      %v508 = vunpack.c.l.s4 1983009808
      %v509 = vunpack.c.0.s8 %v508
      %v510 = vlaneseq
      %v511 = vshrl.u32 %v510, 7
      %v512 = vsub.s32 %v509, %v511
      %v513 = vrot.slane %v505, %v512
      %v515 = vunpack.c.l.s4 1983009808
      %v516 = vunpack.c.0.s8 %v515
      %v517 = vlaneseq
      %v518 = vshrl.u32 %v517, 7
      %v519 = vsub.s32 %v516, %v518
      %v520 = vrot.slane %v506, %v519
      %v521 = vcombine.low %v513, %v520
      %v523 = vunpack.c.l.s4 1983009808
      %v524 = vunpack.c.0.s8 %v523
      %v525 = vlaneseq
      %v526 = vshrl.u32 %v525, 7
      %v527 = vsub.s32 %v524, %v526
      %v528 = vrot.slane %v405, %v527
      %v529 = vcombine.low %v439, %v450
      %v530 = vcombine.low %v462, %v467
      %v532 = vunpack.c.l.s4 1983009808
      %v533 = vunpack.c.0.s8 %v532
      %v534 = vlaneseq
      %v535 = vshrl.u32 %v534, 7
      %v536 = vsub.s32 %v533, %v535
      %v537 = vrot.slane %v529, %v536
      %v539 = vunpack.c.l.s4 1983009808
      %v540 = vunpack.c.0.s8 %v539
      %v541 = vlaneseq
      %v542 = vshrl.u32 %v541, 7
      %v543 = vsub.s32 %v540, %v542
      %v544 = vrot.slane %v530, %v543
      %v545 = vcombine.low %v537, %v544
      %v547 = vunpack.c.l.s4 1983009808
      %v548 = vunpack.c.0.s8 %v547
      %v549 = vlaneseq
      %v550 = vshrl.u32 %v549, 7
      %v551 = vsub.s32 %v548, %v550
      %v552 = vrot.slane %v422, %v551
      %v553 = vcombine.low %v441, %v453
      %v554 = vcombine.low %v465, %v435
      %v556 = vunpack.c.l.s4 1983009808
      %v557 = vunpack.c.0.s8 %v556
      %v558 = vlaneseq
      %v559 = vshrl.u32 %v558, 7
      %v560 = vsub.s32 %v557, %v559
      %v561 = vrot.slane %v553, %v560
      %v563 = vunpack.c.l.s4 1983009808
      %v564 = vunpack.c.0.s8 %v563
      %v565 = vlaneseq
      %v566 = vshrl.u32 %v565, 7
      %v567 = vsub.s32 %v564, %v566
      %v568 = vrot.slane %v554, %v567
      %v569 = vcombine.low %v561, %v568
      %v571 = vunpack.c.l.s4 1983009808
      %v572 = vunpack.c.0.s8 %v571
      %v573 = vlaneseq
      %v574 = vshrl.u32 %v573, 7
      %v575 = vsub.s32 %v572, %v574
      %v576 = vrot.slane %v402, %v575
      %v577 = vld [vmem:[%s3] sm:$0xf]
      %v578 = vld [vmem:[%s3 + $0x4] sm:$0xf]
      %v579 = vld [vmem:[%s3 + $0x8] sm:$0xf]
      %v580 = vld [vmem:[%s3 + $0xc] sm:$0xf]
      %v581 = vld [vmem:[%s3 + $0x10] sm:$0xf]
      %v582 = vld [vmem:[%s3 + $0x14] sm:$0xf]
      %v583 = vld [vmem:[%s3 + $0x18] sm:$0xf]
      %v584 = vld [vmem:[%s3 + $0x1c] sm:$0xf]
      %v585 = vld [vmem:[%s3 + $0x20] sm:$0xf]
      %v586 = vld [vmem:[%s3 + $0x24] sm:$0xf]
      %v587 = vld [vmem:[%s3 + $0x28] sm:$0xf]
      %v588 = vld [vmem:[%s3 + $0x2c] sm:$0xf]
      %v589 = vld [vmem:[%s3 + $0x30] sm:$0xf]
      %v590 = vld [vmem:[%s3 + $0x34] sm:$0xf]
      %v591 = vld [vmem:[%s3 + $0x38] sm:$0xf]
      %v592 = vld [vmem:[%s3 + $0x3c] sm:$0xf]
      %v593 = vld [vmem:[%s3 + $0x40] sm:$0xf]
      %v594 = vld [vmem:[%s3 + $0x44] sm:$0xf]
      %v595 = vld [vmem:[%s3 + $0x48] sm:$0xf]
      %v596 = vld [vmem:[%s3 + $0x4c] sm:$0xf]
      %v597 = vld [vmem:[%s3 + $0x50] sm:$0xf]
      %v598 = vld [vmem:[%s3 + $0x54] sm:$0xf]
      %v599 = vld [vmem:[%s3 + $0x58] sm:$0xf]
      %v600 = vld [vmem:[%s3 + $0x5c] sm:$0xf]
      %v601 = vld [vmem:[%s3 + $0x60] sm:$0xf]
      %v602 = vld [vmem:[%s3 + $0x64] sm:$0xf]
      %v603 = vld [vmem:[%s3 + $0x68] sm:$0xf]
      %v604 = vld [vmem:[%s3 + $0x6c] sm:$0xf]
      %v605 = vld [vmem:[%s3 + $0x70] sm:$0xf]
      %v606 = vld [vmem:[%s3 + $0x74] sm:$0xf]
      %v607 = vld [vmem:[%s3 + $0x78] sm:$0xf]
      %v608 = vld [vmem:[%s3 + $0x7c] sm:$0xf]
      %v609 = vld [vmem:[%s3 + $0x80] sm:$0xf]
      %v610 = vld [vmem:[%s3 + $0x84] sm:$0xf]
      %v611 = vld [vmem:[%s3 + $0x88] sm:$0xf]
      %v612 = vld [vmem:[%s3 + $0x8c] sm:$0xf]
      %v613 = vld [vmem:[%s3 + $0x90] sm:$0xf]
      %v614 = vld [vmem:[%s3 + $0x94] sm:$0xf]
      %v615 = vld [vmem:[%s3 + $0x98] sm:$0xf]
      %v616 = vld [vmem:[%s3 + $0x9c] sm:$0xf]
      %v617 = vld [vmem:[%s3 + $0xa0] sm:$0xf]
      %v618 = vld [vmem:[%s3 + $0xa4] sm:$0xf]
      %v619 = vld [vmem:[%s3 + $0xa8] sm:$0xf]
      %v620 = vld [vmem:[%s3 + $0xac] sm:$0xf]
      %v621 = vld [vmem:[%s3 + $0xb0] sm:$0xf]
      %v622 = vld [vmem:[%s3 + $0xb4] sm:$0xf]
      %v623 = vld [vmem:[%s3 + $0xb8] sm:$0xf]
      %v624 = vld [vmem:[%s3 + $0xbc] sm:$0xf]
      %v625 = vld [vmem:[%s3 + $0xc0] sm:$0xf]
      %v626 = vld [vmem:[%s3 + $0xc4] sm:$0xf]
      %v627 = vld [vmem:[%s3 + $0xc8] sm:$0xf]
      %v628 = vld [vmem:[%s3 + $0xcc] sm:$0xf]
      %v629 = vld [vmem:[%s3 + $0xd0] sm:$0xf]
      %v630 = vld [vmem:[%s3 + $0xd4] sm:$0xf]
      %v631 = vld [vmem:[%s3 + $0xd8] sm:$0xf]
      %v632 = vld [vmem:[%s3 + $0xdc] sm:$0xf]
      %v633 = vld [vmem:[%s3 + $0xe0] sm:$0xf]
      %v634 = vld [vmem:[%s3 + $0xe4] sm:$0xf]
      %v635 = vld [vmem:[%s3 + $0xe8] sm:$0xf]
      %v636 = vld [vmem:[%s3 + $0xec] sm:$0xf]
      %v637 = vld [vmem:[%s3 + $0xf0] sm:$0xf]
      %v638 = vld [vmem:[%s3 + $0xf4] sm:$0xf]
      %v639 = vld [vmem:[%s3 + $0xf8] sm:$0xf]
      %v640 = vld [vmem:[%s3 + $0xfc] sm:$0xf]
      %v641 = vld [vmem:[%s3 + $0x100] sm:$0xf]
      %v642 = vld [vmem:[%s3 + $0x104] sm:$0xf]
      %v643 = vld [vmem:[%s3 + $0x108] sm:$0xf]
      %v644 = vld [vmem:[%s3 + $0x10c] sm:$0xf]
      %v645 = vld [vmem:[%s3 + $0x110] sm:$0xf]
      %v646 = vld [vmem:[%s3 + $0x114] sm:$0xf]
      %v647 = vld [vmem:[%s3 + $0x118] sm:$0xf]
      %v648 = vld [vmem:[%s3 + $0x11c] sm:$0xf]
      %v649 = vld [vmem:[%s4] sm:$0x1]
      %v651 = vlaneseq
      %v652 = vshrl.u32 %v651, 7
      %v653 = vsub.s32 0, %v652
      %v654 = vrot.slane %v649, %v653
      %v656 = vcombine.low %v497, %v521
      %v657 = vcombine.high %v497, %v521
      %v658 = vcombine.low %v545, %v569
      %v659 = vcombine.high %v545, %v569
      %v661 = vunpack.c.l.s4 1983009808
      %v662 = vunpack.c.0.s8 %v661
      %v663 = vlaneseq
      %v664 = vshrl.u32 %v663, 7
      %v665 = vsub.s32 %v662, %v664
      %v666 = vrot.slane %v656, %v665
      %v668 = vunpack.c.l.s4 1983009808
      %v669 = vunpack.c.0.s8 %v668
      %v670 = vlaneseq
      %v671 = vshrl.u32 %v670, 7
      %v672 = vsub.s32 %v669, %v671
      %v673 = vrot.slane %v657, %v672
      %v675 = vunpack.c.l.s4 1983009808
      %v676 = vunpack.c.0.s8 %v675
      %v677 = vlaneseq
      %v678 = vshrl.u32 %v677, 7
      %v679 = vsub.s32 %v676, %v678
      %v680 = vrot.slane %v658, %v679
      %v682 = vunpack.c.l.s4 1983009808
      %v683 = vunpack.c.0.s8 %v682
      %v684 = vlaneseq
      %v685 = vshrl.u32 %v684, 7
      %v686 = vsub.s32 %v683, %v685
      %v687 = vrot.slane %v659, %v686
      %v688 = vcombine.low %v666, %v680
      %v689 = vcombine.high %v666, %v680
      %v690 = vcombine.low %v673, %v687
      %v691 = vcombine.high %v673, %v687
      %v692 = vcombine.low %v504, %v528
      %v693 = vcombine.low %v552, %v576
      %v695 = vunpack.c.l.s4 1983009808
      %v696 = vunpack.c.0.s8 %v695
      %v697 = vlaneseq
      %v698 = vshrl.u32 %v697, 7
      %v699 = vsub.s32 %v696, %v698
      %v700 = vrot.slane %v692, %v699
      %v702 = vunpack.c.l.s4 1983009808
      %v703 = vunpack.c.0.s8 %v702
      %v704 = vlaneseq
      %v705 = vshrl.u32 %v704, 7
      %v706 = vsub.s32 %v703, %v705
      %v707 = vrot.slane %v693, %v706
      %v708 = vcombine.low %v700, %v707
      %v785 = vunpack.c.l.b16 %v577
      %v786 = vunpack.c.l.b16 %v578
      %v787 = vunpack.c.l.b16 %v579
      %v788 = vunpack.c.l.b16 %v580
      %v789 = vunpack.c.l.b16 %v581
      %v790 = vunpack.c.l.b16 %v582
      %v791 = vunpack.c.l.b16 %v583
      %v792 = vunpack.c.l.b16 %v584
      %v793 = vunpack.c.l.b16 %v585
      %v794 = vunpack.c.l.b16 %v586
      %v795 = vunpack.c.l.b16 %v587
      %v796 = vunpack.c.l.b16 %v588
      %v797 = vunpack.c.l.b16 %v589
      %v798 = vunpack.c.l.b16 %v590
      %v799 = vunpack.c.l.b16 %v591
      %v800 = vunpack.c.l.b16 %v592
      %v801 = vunpack.c.l.b16 %v593
      %v802 = vunpack.c.l.b16 %v594
      %v803 = vunpack.c.l.b16 %v595
      %v804 = vunpack.c.l.b16 %v596
      %v805 = vunpack.c.l.b16 %v597
      %v806 = vunpack.c.l.b16 %v598
      %v807 = vunpack.c.l.b16 %v599
      %v808 = vunpack.c.l.b16 %v600
      %v809 = vunpack.c.l.b16 %v601
      %v810 = vunpack.c.l.b16 %v602
      %v811 = vunpack.c.l.b16 %v603
      %v812 = vunpack.c.l.b16 %v604
      %v813 = vunpack.c.l.b16 %v605
      %v814 = vunpack.c.l.b16 %v606
      %v815 = vunpack.c.l.b16 %v607
      %v816 = vunpack.c.l.b16 %v608
      %v817 = vunpack.c.l.b16 %v609
      %v818 = vunpack.c.l.b16 %v610
      %v819 = vunpack.c.l.b16 %v611
      %v820 = vunpack.c.l.b16 %v612
      %v821 = vunpack.c.l.b16 %v613
      %v822 = vunpack.c.l.b16 %v614
      %v823 = vunpack.c.l.b16 %v615
      %v824 = vunpack.c.l.b16 %v616
      %v825 = vunpack.c.l.b16 %v617
      %v826 = vunpack.c.l.b16 %v618
      %v827 = vunpack.c.l.b16 %v619
      %v828 = vunpack.c.l.b16 %v620
      %v829 = vunpack.c.l.b16 %v621
      %v830 = vunpack.c.l.b16 %v622
      %v831 = vunpack.c.l.b16 %v623
      %v832 = vunpack.c.l.b16 %v624
      %v833 = vunpack.c.l.b16 %v625
      %v834 = vunpack.c.l.b16 %v626
      %v835 = vunpack.c.l.b16 %v627
      %v836 = vunpack.c.l.b16 %v628
      %v837 = vunpack.c.l.b16 %v629
      %v838 = vunpack.c.l.b16 %v630
      %v839 = vunpack.c.l.b16 %v631
      %v840 = vunpack.c.l.b16 %v632
      %v841 = vunpack.c.l.b16 %v633
      %v842 = vunpack.c.l.b16 %v634
      %v843 = vunpack.c.l.b16 %v635
      %v844 = vunpack.c.l.b16 %v636
      %v845 = vunpack.c.l.b16 %v637
      %v846 = vunpack.c.l.b16 %v638
      %v847 = vunpack.c.l.b16 %v639
      %v848 = vunpack.c.l.b16 %v640
      %v849 = vunpack.c.l.b16 %v641
      %v850 = vunpack.c.l.b16 %v642
      %v851 = vunpack.c.l.b16 %v643
      %v852 = vunpack.c.l.b16 %v644
      %v853 = vunpack.c.l.b16 %v645
      %v854 = vunpack.c.l.b16 %v646
      %v855 = vunpack.c.l.b16 %v647
      %v856 = vunpack.c.l.b16 %v648
      %v857 = vpack.c.b16 %v786, %v785
      %v858 = vpack.c.b16 %v788, %v787
      %v859 = vpack.c.b16 %v790, %v789
      %v860 = vpack.c.b16 %v792, %v791
      %v861 = vpack.c.b16 %v794, %v793
      %v862 = vpack.c.b16 %v796, %v795
      %v863 = vpack.c.b16 %v798, %v797
      %v864 = vpack.c.b16 %v800, %v799
      %v865 = vpack.c.b16 %v802, %v801
      %v866 = vpack.c.b16 %v804, %v803
      %v867 = vpack.c.b16 %v806, %v805
      %v868 = vpack.c.b16 %v808, %v807
      %v869 = vpack.c.b16 %v810, %v809
      %v870 = vpack.c.b16 %v812, %v811
      %v871 = vpack.c.b16 %v814, %v813
      %v872 = vpack.c.b16 %v816, %v815
      %v873 = vpack.c.b16 %v818, %v817
      %v874 = vpack.c.b16 %v820, %v819
      %v875 = vpack.c.b16 %v822, %v821
      %v876 = vpack.c.b16 %v824, %v823
      %v877 = vpack.c.b16 %v826, %v825
      %v878 = vpack.c.b16 %v828, %v827
      %v879 = vpack.c.b16 %v830, %v829
      %v880 = vpack.c.b16 %v832, %v831
      %v881 = vpack.c.b16 %v834, %v833
      %v882 = vpack.c.b16 %v836, %v835
      %v883 = vpack.c.b16 %v838, %v837
      %v884 = vpack.c.b16 %v840, %v839
      %v885 = vpack.c.b16 %v842, %v841
      %v886 = vpack.c.b16 %v844, %v843
      %v887 = vpack.c.b16 %v846, %v845
      %v888 = vpack.c.b16 %v848, %v847
      %v889 = vpack.c.b16 %v850, %v849
      %v890 = vpack.c.b16 %v852, %v851
      %v891 = vpack.c.b16 %v854, %v853
      %v892 = vpack.c.b16 %v856, %v855
      %v930 = vsel %vm433, %v708, 0
      %932 = vmatprep.subr.bf16.mxu0 0
      %933 = vmatpush1.bf16.msra.mxu0 %v857
      %934 = vmatprep.subr.bf16.mxu0 0
      %935 = vmatpush1.bf16.msra.mxu0 %v858
      %936 = vmatprep.subr.bf16.mxu0 0
      %937 = vmatpush1.bf16.msra.mxu0 %v859
      %938 = vmatprep.subr.bf16.mxu0 0
      %939 = vmatpush1.bf16.msra.mxu0 %v860
      %940 = vmatprep.subr.bf16.mxu0 0
      %941 = vmatpush1.bf16.msra.mxu0 %v861
      %942 = vmatprep.subr.bf16.mxu0 0
      %943 = vmatpush1.bf16.msra.mxu0 %v862
      %944 = vmatprep.subr.bf16.mxu0 0
      %945 = vmatpush1.bf16.msra.mxu0 %v863
      %946 = vmatprep.subr.bf16.mxu0 0
      %947 = vmatpush1.bf16.msra.mxu0 %v864
      %948 = vmatprep.subr.bf16.mxu0 0
      %949 = vmatpush1.bf16.msra.mxu0 %v865
      %950 = vmatprep.subr.bf16.mxu0 0
      %951 = vmatpush1.bf16.msra.mxu0 %v866
      %952 = vmatprep.subr.bf16.mxu0 0
      %953 = vmatpush1.bf16.msra.mxu0 %v867
      %954 = vmatprep.subr.bf16.mxu0 0
      %955 = vmatpush1.bf16.msra.mxu0 %v868
      %956 = vmatprep.subr.bf16.mxu0 0
      %957 = vmatpush1.bf16.msra.mxu0 %v869
      %958 = vmatprep.subr.bf16.mxu0 0
      %959 = vmatpush1.bf16.msra.mxu0 %v870
      %960 = vmatprep.subr.bf16.mxu0 0
      %961 = vmatpush1.bf16.msra.mxu0 %v871
      %962 = vmatprep.subr.bf16.mxu0 0
      %963 = vmatpush1.bf16.msra.mxu0 %v872
      %964 = vmatprep.mubr.bf16.mxu0 %v689
      %965 = vmatmul.mubr.bf16.gmra.mrb[0].mxu0 %v688
      %v966 = vpop.f32.mrb[0].mxu0
      %v967 = vadd.f32 %v654, %v966
      %v968 = vpop.f32.mrb[0].mxu0
      %v969 = vpop.f32.mrb[0].mxu0
      %v970 = vadd.f32 %v654, %v969
      %v971 = vpop.f32.mrb[0].mxu0
      %972 = vdwg.mxu0
      %973 = vmatprep.subr.bf16.mxu0 0
      %974 = vmatpush1.bf16.msra.mxu0 %v873
      %975 = vmatprep.subr.bf16.mxu0 0
      %976 = vmatpush1.bf16.msra.mxu0 %v874
      %977 = vmatprep.subr.bf16.mxu0 0
      %978 = vmatpush1.bf16.msra.mxu0 %v875
      %979 = vmatprep.subr.bf16.mxu0 0
      %980 = vmatpush1.bf16.msra.mxu0 %v876
      %981 = vmatprep.subr.bf16.mxu0 0
      %982 = vmatpush1.bf16.msra.mxu0 %v877
      %983 = vmatprep.subr.bf16.mxu0 0
      %984 = vmatpush1.bf16.msra.mxu0 %v878
      %985 = vmatprep.subr.bf16.mxu0 0
      %986 = vmatpush1.bf16.msra.mxu0 %v879
      %987 = vmatprep.subr.bf16.mxu0 0
      %988 = vmatpush1.bf16.msra.mxu0 %v880
      %989 = vmatprep.subr.bf16.mxu0 0
      %990 = vmatpush1.bf16.msra.mxu0 %v881
      %991 = vmatprep.subr.bf16.mxu0 0
      %992 = vmatpush1.bf16.msra.mxu0 %v882
      %993 = vmatprep.subr.bf16.mxu0 0
      %994 = vmatpush1.bf16.msra.mxu0 %v883
      %995 = vmatprep.subr.bf16.mxu0 0
      %996 = vmatpush1.bf16.msra.mxu0 %v884
      %997 = vmatprep.subr.bf16.mxu0 0
      %998 = vmatpush1.bf16.msra.mxu0 %v885
      %999 = vmatprep.subr.bf16.mxu0 0
      %1000 = vmatpush1.bf16.msra.mxu0 %v886
      %1001 = vmatprep.subr.bf16.mxu0 0
      %1002 = vmatpush1.bf16.msra.mxu0 %v887
      %1003 = vmatprep.subr.bf16.mxu0 0
      %1004 = vmatpush1.bf16.msra.mxu0 %v888
      %1005 = vmatprep.mubr.bf16.mxu0 %v691
      %1006 = vmatmul.mubr.bf16.gmra.mrb[0].mxu0 %v690
      %v1007 = vpop.f32.mrb[0].mxu0
      %v1008 = vadd.f32 %v967, %v1007
      %v1009 = vpop.f32.mrb[0].mxu0
      %v1010 = vpop.f32.mrb[0].mxu0
      %v1011 = vadd.f32 %v970, %v1010
      %v1012 = vpop.f32.mrb[0].mxu0
      %1013 = vdwg.mxu0
      %1014 = vmatprep.subr.bf16.mxu0 0
      %1015 = vmatpush1.bf16.msra.mxu0 %v889
      %1016 = vmatprep.subr.bf16.mxu0 0
      %1017 = vmatpush1.bf16.msra.mxu0 %v890
      %1018 = vmatprep.subr.bf16.mxu0 0
      %1019 = vmatpush1.bf16.msra.mxu0 %v891
      %1020 = vmatprep.subr.bf16.mxu0 0
      %1021 = vmatpush1.bf16.msra.mxu0 %v892
      %1022 = vmatprep.subr.bf16.mxu0 0
      %1023 = vmatpush1.bf16.msra.mxu0 0
      %1024 = vmatprep.subr.bf16.mxu0 0
      %1025 = vmatpush1.bf16.msra.mxu0 0
      %1026 = vmatprep.subr.bf16.mxu0 0
      %1027 = vmatpush1.bf16.msra.mxu0 0
      %1028 = vmatprep.subr.bf16.mxu0 0
      %1029 = vmatpush1.bf16.msra.mxu0 0
      %1030 = vmatprep.subr.bf16.mxu0 0
      %1031 = vmatpush1.bf16.msra.mxu0 0
      %1032 = vmatprep.subr.bf16.mxu0 0
      %1033 = vmatpush1.bf16.msra.mxu0 0
      %1034 = vmatprep.subr.bf16.mxu0 0
      %1035 = vmatpush1.bf16.msra.mxu0 0
      %1036 = vmatprep.subr.bf16.mxu0 0
      %1037 = vmatpush1.bf16.msra.mxu0 0
      %1038 = vmatprep.subr.bf16.mxu0 0
      %1039 = vmatpush1.bf16.msra.mxu0 0
      %1040 = vmatprep.subr.bf16.mxu0 0
      %1041 = vmatpush1.bf16.msra.mxu0 0
      %1042 = vmatprep.subr.bf16.mxu0 0
      %1043 = vmatpush1.bf16.msra.mxu0 0
      %1044 = vmatprep.subr.bf16.mxu0 0
      %1045 = vmatpush1.bf16.msra.mxu0 0
      %1046 = vmatprep.mubr.bf16.mxu0 0
      %1047 = vmatmul.mubr.bf16.gmra.mrb[0].mxu0 %v930
      %v1048 = vpop.f32.mrb[0].mxu0
      %v1049 = vadd.f32 %v1008, %v1048
      %v1050 = vpop.f32.mrb[0].mxu0
      %v1051 = vpop.f32.mrb[0].mxu0
      %v1052 = vadd.f32 %v1011, %v1051
      %v1053 = vpop.f32.mrb[0].mxu0
      %1054 = vdwg.mxu0
      %v1055 = vsel %vm433, %v1049, 0.0
      %v1056 = vsel %vm433, %v1052, 0.0
      %v1057 = vadd.f32 %v1055, %v1056
      %v1058 = vrot.slane %v1057, 4
      %v1059 = vadd.f32 %v1057, %v1058
      %v1060 = vrot.slane %v1059, 2
      %v1061 = vadd.f32 %v1059, %v1060
      %v1062 = vrot.slane %v1061, 1
      %v1063 = vadd.f32 %v1061, %v1062
      %v1064 = vmul.f32 %v1049, %v1049
      %v1065 = vmul.f32 %v1052, %v1052
      %v1066 = vsel %vm433, %v1064, 0.0
      %v1067 = vsel %vm433, %v1065, 0.0
      %v1068 = vadd.f32 %v1066, %v1067
      %v1069 = vrot.slane %v1068, 4
      %v1070 = vadd.f32 %v1068, %v1069
      %v1071 = vrot.slane %v1070, 2
      %v1072 = vadd.f32 %v1070, %v1071
      %v1073 = vrot.slane %v1072, 1
      %v1074 = vadd.f32 %v1072, %v1073
      %vm1075 = vcmask 1040384
      %v1076 = vsel %vm1075, %v1063, %v1074
      %vm1077 = vcmask 517120
      %1078 = vst.msk [vmem:[%s262] sm:$0x3] %vm1077, %v1076
      %v1081 = vcombine.high %v1049, %v1049
      %v1082 = vcombine.high %v1052, %v1052
      %vm1085 = vcmask 519168
      %1086 = vst.msk [vmem:[%s258] sm:$0xf] %vm1085, %v1049
      %1087 = vst.msk [vmem:[%s258 + $0x4] sm:$0xf] %vm1085, %v1081
      %1088 = vst.msk [vmem:[%s258 + $0x8] sm:$0xf] %vm1085, %v1052
      %1089 = vst.msk [vmem:[%s258 + $0xc] sm:$0xf] %vm1085, %v1082
      %p1090 = scmp.lt.s32.totalorder %s18, 1
      %s1091 = scalar_select %p1090, %s18, 1
      %s1092 = smul.addr %s1091, 4
      %s1093 = smul.addr %s1092, 4
      %s1094 = scalar_lea.vmem %s5, %s1093
      %p1095 = scmp.lt.s32.totalorder %s18, 1
      %s1096 = scalar_select %p1095, %s18, 1
      %s1097 = smul.addr %s1096, 2
      %s1098 = scalar_lea.vmem %s6, %s1097
      // Predicated region
      $region41: #{netd_forward.13} parent=39 // pred_check
        %p1099 = pneg %p146
      $region42: #{netd_forward.13} parent=39 // pred_check_branch
        %1101 = sbr.rel (%p1099) target = $region44
      $region43: #{netd_forward.13} parent=39 // pred_region
        _
      $region44: #{netd_forward.13} parent=39 // pred_fallthru
        _
      // Predicated region
      $region45: #{netd_forward.13} parent=39 // pred_check
        %p1102 = pneg %p172
      $region46: #{netd_forward.13} parent=39 // pred_check_branch
        %1104 = sbr.rel (%p1102) target = $region48
      $region47: #{netd_forward.13} parent=39 // pred_region
        _
      $region48: #{netd_forward.13} parent=39 // pred_fallthru
        _
    $region40: #{netd_forward.13} parent=5 // pred_fallthru
      _
    %p1105 = scmp.le.s32.totalorder 2, %s13
    // Predicated region
    $region49: #{netd_forward.13} parent=5 // pred_check
      %p1106 = pneg %p1105
    $region50: #{netd_forward.13} parent=5 // pred_check_branch
      %1108 = sbr.rel (%p1106) target = $region52
    $region51: #{netd_forward.13} parent=5 // pred_region
      %s1109 = ssub.s32 %s13, 2
      // Predicated region
      $region53: #{netd_forward.13} parent=51 // pred_check
        %p1110 = pneg %p152
      $region54: #{netd_forward.13} parent=51 // pred_check_branch
        %1112 = sbr.rel (%p1110) target = $region56
      $region55: #{netd_forward.13} parent=51 // pred_region
        %p1113 = scmp.lt.s32.totalorder %s19, 1
        %s1114 = scalar_select %p1113, %s19, 1
        %s1115 = smul.addr %s1114, 4
        %s1116 = smul.addr %s1115, 4
        %s1117 = scalar_lea.vmem %s5, %s1116
      $region56: #{netd_forward.13} parent=51 // pred_fallthru
        _
      // Predicated region
      $region57: #{netd_forward.13} parent=51 // pred_check
        %p1118 = pneg %p178
      $region58: #{netd_forward.13} parent=51 // pred_check_branch
        %1120 = sbr.rel (%p1118) target = $region60
      $region59: #{netd_forward.13} parent=51 // pred_region
        %p1121 = scmp.lt.s32.totalorder %s19, 1
        %s1122 = scalar_select %p1121, %s19, 1
        %s1123 = smul.addr %s1122, 2
        %s1124 = scalar_lea.vmem %s6, %s1123
      $region60: #{netd_forward.13} parent=51 // pred_fallthru
        _
    $region52: #{netd_forward.13} parent=5 // pred_fallthru
      _
  $region6: #{netd_forward.13} parent=0 // loop_footer
    %s17 = sadd.s32 1, %s13
  $region7: #{netd_forward.13} parent=0 // loop_footer_branch
    %12 = sbr.rel target = $region3
  $region8: #{netd_forward.13} parent=0 // loop_exit
    _

// kernel: netd_forward.15
$region0: #{netd_forward.15}
  #allocation0 [shape = 'u32[]', space=smem, size = 0x4, offset = 0x4, fixed_abs, tag = 'smem constant byte address 0x4 - core index']
  #allocation1 [shape = 'u32[144,128]{1,0:T(1,128)}', space=vmem, size = 0x12000, scoped, tag = 'internal scratch']
  %s0 = inlined_call_operand.vmem [shape: f32[2,1,1,512], index: 0, kind: input, shape index: {}]
  %s1 = inlined_call_operand.vmem [shape: f32[1,512], index: 1, kind: input, shape index: {}]
  %s2 = inlined_call_operand.vmem [shape: f32[1,512], index: 2, kind: input, shape index: {}]
  %s3 = inlined_call_operand.vmem [shape: f32[1,1152], index: 3, kind: input, shape index: {}]
  %s4 = inlined_call_operand.vmem [shape: f32[2,1,1], index: 4, kind: output, shape index: {}]
  %s5 = sld [smem:[#allocation0]]
  $region49: #{netd_forward.15} parent=0
    _
  %s7 = ssub.s32 1, %s5
  %s8 = scalar_select 0, %s7, %s5
  loop: start=0, step=1, limit=4
  $region2: #{netd_forward.15} parent=0 // loop_pre_header
    _
  $region3: #{netd_forward.15} parent=0 // loop_header
    %s10 = sphi 0, %s14
    %p11 = scmp.ge.s32.totalorder %s10, 4
    %s20 = sphi 0, %s22
    %s23 = sphi 0, %s20
    %s24 = sphi 0, %s23
    %s40 = sphi 0, %s24
    %s44 = sphi 0, %s44
    %s46 = sphi 0, %s44
    %s47 = sphi 0, %s46
    %s61 = sphi 0, %s47
    %s65 = sphi 0, %s65
    %s67 = sphi 0, %s65
    %s68 = sphi 0, %s67
    %s82 = sphi 0, %s68
    %s86 = sphi 0, %s86
    %s88 = sphi 0, %s86
    %s89 = sphi 0, %s88
    %s103 = sphi 0, %s89
    %s109 = sphi 0, %s111
    %s112 = sphi 0, %s109
    %s113 = sphi 0, %s112
    %s129 = sphi 0, %s113
  $region4: #{netd_forward.15} parent=0 // loop_header_branch
    %13 = sbr.rel (%p11) target = $region8
  $region5: #{netd_forward.15} parent=0 // loop_body
    %s15 = ssub.s32 %s10, 1
    %s16 = ssub.s32 %s10, 2
    %s17 = sadd.s32 %s10, 1
    %s18 = ssub.s32 %s10, %s17
    %p19 = scmp.eq.s32.totalorder %s18, 0
    %s21 = sadd.s32 %s20, 1
    %s22 = scalar_select %p19, %s20, %s21
    %p25 = pneg %p19
    %p26 = scmp.eq.s32.totalorder %s10, 1
    %p27 = por %p25, %p26
    %p28 = scmp.ne.s32.totalorder %s20, %s23
    %p29 = scmp.eq.s32.totalorder %s10, 0
    %p30 = por %p28, %p29
    %p31 = scmp.ne.s32.totalorder %s20, %s23
    %p32 = scmp.eq.s32.totalorder %s15, 1
    %p33 = por %p31, %p32
    %p34 = scmp.ne.s32.totalorder %s23, %s24
    %p35 = scmp.eq.s32.totalorder %s15, 0
    %p36 = por %p34, %p35
    %p37 = scmp.ne.s32.totalorder %s23, %s24
    %p38 = scmp.eq.s32.totalorder %s16, 1
    %p39 = por %p37, %p38
    %p41 = scmp.ne.s32.totalorder %s24, %s40
    %p42 = scmp.eq.s32.totalorder %s16, 0
    %p43 = por %p41, %p42
    %s45 = sadd.s32 %s44, 1
    %p48 = scmp.eq.s32.totalorder %s10, 1
    %p49 = scmp.ne.s32.totalorder %s44, %s46
    %p50 = scmp.eq.s32.totalorder %s10, 0
    %p51 = por %p49, %p50
    %p52 = scmp.ne.s32.totalorder %s44, %s46
    %p53 = scmp.eq.s32.totalorder %s15, 1
    %p54 = por %p52, %p53
    %p55 = scmp.ne.s32.totalorder %s46, %s47
    %p56 = scmp.eq.s32.totalorder %s15, 0
    %p57 = por %p55, %p56
    %p58 = scmp.ne.s32.totalorder %s46, %s47
    %p59 = scmp.eq.s32.totalorder %s16, 1
    %p60 = por %p58, %p59
    %p62 = scmp.ne.s32.totalorder %s47, %s61
    %p63 = scmp.eq.s32.totalorder %s16, 0
    %p64 = por %p62, %p63
    %s66 = sadd.s32 %s65, 1
    %p69 = scmp.eq.s32.totalorder %s10, 1
    %p70 = scmp.ne.s32.totalorder %s65, %s67
    %p71 = scmp.eq.s32.totalorder %s10, 0
    %p72 = por %p70, %p71
    %p73 = scmp.ne.s32.totalorder %s65, %s67
    %p74 = scmp.eq.s32.totalorder %s15, 1
    %p75 = por %p73, %p74
    %p76 = scmp.ne.s32.totalorder %s67, %s68
    %p77 = scmp.eq.s32.totalorder %s15, 0
    %p78 = por %p76, %p77
    %p79 = scmp.ne.s32.totalorder %s67, %s68
    %p80 = scmp.eq.s32.totalorder %s16, 1
    %p81 = por %p79, %p80
    %p83 = scmp.ne.s32.totalorder %s68, %s82
    %p84 = scmp.eq.s32.totalorder %s16, 0
    %p85 = por %p83, %p84
    %s87 = sadd.s32 %s86, 1
    %p90 = scmp.eq.s32.totalorder %s10, 1
    %p91 = scmp.ne.s32.totalorder %s86, %s88
    %p92 = scmp.eq.s32.totalorder %s10, 0
    %p93 = por %p91, %p92
    %p94 = scmp.ne.s32.totalorder %s86, %s88
    %p95 = scmp.eq.s32.totalorder %s15, 1
    %p96 = por %p94, %p95
    %p97 = scmp.ne.s32.totalorder %s88, %s89
    %p98 = scmp.eq.s32.totalorder %s15, 0
    %p99 = por %p97, %p98
    %p100 = scmp.ne.s32.totalorder %s88, %s89
    %p101 = scmp.eq.s32.totalorder %s16, 1
    %p102 = por %p100, %p101
    %p104 = scmp.ne.s32.totalorder %s89, %s103
    %p105 = scmp.eq.s32.totalorder %s16, 0
    %p106 = por %p104, %p105
    %s107 = ssub.s32 %s10, %s17
    %p108 = scmp.eq.s32.totalorder %s107, 0
    %s110 = sadd.s32 %s109, 1
    %s111 = scalar_select %p108, %s109, %s110
    %p114 = pneg %p108
    %p115 = scmp.eq.s32.totalorder %s10, 1
    %p116 = por %p114, %p115
    %p117 = scmp.ne.s32.totalorder %s109, %s112
    %p118 = scmp.eq.s32.totalorder %s10, 0
    %p119 = por %p117, %p118
    %p120 = scmp.ne.s32.totalorder %s109, %s112
    %p121 = scmp.eq.s32.totalorder %s15, 1
    %p122 = por %p120, %p121
    %p123 = scmp.ne.s32.totalorder %s112, %s113
    %p124 = scmp.eq.s32.totalorder %s15, 0
    %p125 = por %p123, %p124
    %p126 = scmp.ne.s32.totalorder %s112, %s113
    %p127 = scmp.eq.s32.totalorder %s16, 1
    %p128 = por %p126, %p127
    %p130 = scmp.ne.s32.totalorder %s113, %s129
    %p131 = scmp.eq.s32.totalorder %s16, 0
    %p132 = por %p130, %p131
    %p133 = scmp.le.s32.totalorder 1, %s10
    %p134 = scmp.lt.s32.totalorder %s10, 3
    %p135 = pnand %p133, %p134
    %p136 = pneg %p135
    // Predicated region
    $region9: #{netd_forward.15} parent=5 // pred_check
      _
    $region10: #{netd_forward.15} parent=5 // pred_check_branch
      %138 = sbr.rel (%p135) target = $region12
    $region11: #{netd_forward.15} parent=5 // pred_region
      %s139 = ssub.s32 %s10, 1
      // Predicated region
      $region13: #{netd_forward.15} parent=11 // pred_check
        %p140 = pneg %p57
      $region14: #{netd_forward.15} parent=11 // pred_check_branch
        %142 = sbr.rel (%p140) target = $region16
      $region15: #{netd_forward.15} parent=11 // pred_region
        _
      $region16: #{netd_forward.15} parent=11 // pred_fallthru
        _
      // Predicated region
      $region17: #{netd_forward.15} parent=11 // pred_check
        %p143 = pneg %p78
      $region18: #{netd_forward.15} parent=11 // pred_check_branch
        %145 = sbr.rel (%p143) target = $region20
      $region19: #{netd_forward.15} parent=11 // pred_region
        _
      $region20: #{netd_forward.15} parent=11 // pred_fallthru
        _
      // Predicated region
      $region21: #{netd_forward.15} parent=11 // pred_check
        %p146 = pneg %p99
      $region22: #{netd_forward.15} parent=11 // pred_check_branch
        %148 = sbr.rel (%p146) target = $region24
      $region23: #{netd_forward.15} parent=11 // pred_region
        _
      $region24: #{netd_forward.15} parent=11 // pred_fallthru
        _
    $region12: #{netd_forward.15} parent=5 // pred_fallthru
      _
    %p149 = scmp.lt.s32.totalorder %s10, 2
    // Predicated region
    $region25: #{netd_forward.15} parent=5 // pred_check
      %p150 = pneg %p149
    $region26: #{netd_forward.15} parent=5 // pred_check_branch
      %152 = sbr.rel (%p150) target = $region28
    $region27: #{netd_forward.15} parent=5 // pred_region
      // Predicated region
      $region29: #{netd_forward.15} parent=27 // pred_check
        %p153 = pneg %p30
      $region30: #{netd_forward.15} parent=27 // pred_check_branch
        %155 = sbr.rel (%p153) target = $region32
      $region31: #{netd_forward.15} parent=27 // pred_region
        %p156 = scmp.lt.s32.totalorder %s10, 1
        %s157 = scalar_select %p156, %s10, 1
        %s158 = smul.addr %s157, 4
        %s159 = scalar_lea.vmem %s0, %s158
      $region32: #{netd_forward.15} parent=27 // pred_fallthru
        _
    $region28: #{netd_forward.15} parent=5 // pred_fallthru
      _
    %p160 = scmp.le.s32.totalorder 1, %s10
    %p161 = scmp.lt.s32.totalorder %s10, 3
    %p162 = pnand %p160, %p161
    %p163 = pneg %p162
    // Predicated region
    $region33: #{netd_forward.15} parent=5 // pred_check
      _
    $region34: #{netd_forward.15} parent=5 // pred_check_branch
      %165 = sbr.rel (%p162) target = $region36
    $region35: #{netd_forward.15} parent=5 // pred_region
      %s166 = ssub.s32 %s10, 1
      %p167 = scmp.lt.s32.totalorder %s15, 1
      %s168 = scalar_select %p167, %s15, 1
      %s169 = smul.addr %s168, 4
      %s170 = scalar_lea.vmem %s0, %s169
      %p171 = pneg %p36
      %p172 = pneg %p33
      %p173 = pneg %p57
      %p174 = pneg %p54
      %p175 = pneg %p78
      %p176 = pneg %p75
      %p177 = pneg %p99
      %p178 = pneg %p96
      %p179 = pneg %p125
      %p180 = pneg %p122
      %p181 = scmp.lt.s32.totalorder %s15, 1
      %s182 = scalar_select %p181, %s15, 1
      %s183 = scalar_lea.vmem %s4, %s182
      %p184 = scmp.lt.s32.totalorder %s15, 1
      %s185 = scalar_select %p184, %s15, 1
      %s186 = smul.addr %s185, 4
      %s187 = scalar_lea.vmem %s0, %s186
      %p188 = scmp.lt.s32.totalorder %s15, 1
      %s189 = scalar_select %p188, %s15, 1
      %s190 = scalar_lea.vmem %s4, %s189
      %v191 = vld [vmem:[%s187] sm:$0xf]
      %v192 = vld [vmem:[%s1] sm:$0xf]
      %v193 = vmul.f32 %v191, %v192
      %v194 = vld [vmem:[%s2] sm:$0xf]
      %v195 = vadd.f32 %v193, %v194
      %vm196 = vcmp.gt.f32.partialorder %v195, 0.0
      %v197 = vmul.f32 %v195, 0.2
      %v198 = vsel %vm196, %v195, %v197
      %v200 = vrot.slane 0.0, 7
      %vm202 = vcmask 1040384
      %v203 = vsel %vm202, 0.0, %v200
      %v205 = vlaneseq
      %v206 = vshrl.u32 %v205, 7
      %v207 = vsub.s32 1, %v206
      %v208 = vrot.slane %v198, %v207
      %v210 = vsel %vm202, 0.0, %v208
      %v211 = vlaneseq
      %v212 = vshrl.u32 %v211, 7
      %v213 = vsub.s32 3, %v212
      %v214 = vrot.slane %v198, %v213
      %v216 = vsel %vm202, 0.0, %v214
      %v217 = vlaneseq
      %v218 = vshrl.u32 %v217, 7
      %v219 = vsub.s32 2, %v218
      %v220 = vrot.slane %v198, %v219
      %v222 = vld [vmem:[%s3] sm:$0xff]
      %v223 = vld [vmem:[%s3 + $0x8] sm:$0x1]
      %v226 = vlaneseq
      %v227 = vshrl.u32 %v226, 7
      %v228 = vsub.s32 0, %v227
      %v229 = vrot.slane %v222, %v228
      %v230 = vlaneseq
      %v231 = vshrl.u32 %v230, 7
      %v232 = vsub.s32 1, %v231
      %v233 = vrot.slane %v222, %v232
      %v234 = vlaneseq
      %v235 = vshrl.u32 %v234, 7
      %v236 = vsub.s32 2, %v235
      %v237 = vrot.slane %v222, %v236
      %v238 = vlaneseq
      %v239 = vshrl.u32 %v238, 7
      %v240 = vsub.s32 3, %v239
      %v241 = vrot.slane %v222, %v240
      %v242 = vlaneseq
      %v243 = vshrl.u32 %v242, 7
      %v244 = vsub.s32 4, %v243
      %v245 = vrot.slane %v222, %v244
      %v246 = vlaneseq
      %v247 = vshrl.u32 %v246, 7
      %v248 = vsub.s32 5, %v247
      %v249 = vrot.slane %v222, %v248
      %v250 = vlaneseq
      %v251 = vshrl.u32 %v250, 7
      %v252 = vsub.s32 6, %v251
      %v253 = vrot.slane %v222, %v252
      %v254 = vlaneseq
      %v255 = vshrl.u32 %v254, 7
      %v256 = vsub.s32 7, %v255
      %v257 = vrot.slane %v222, %v256
      %v258 = vlaneseq
      %v259 = vshrl.u32 %v258, 7
      %v260 = vsub.s32 0, %v259
      %v261 = vrot.slane %v223, %v260
      %v271 = vmul.f32 %v203, %v229
      %v272 = vmul.f32 %v233, 0.0
      %v273 = vmul.f32 %v237, 0.0
      %v274 = vmul.f32 %v210, %v241
      %v275 = vmul.f32 %v198, %v245
      %v276 = vmul.f32 %v208, %v249
      %v277 = vmul.f32 %v216, %v253
      %v278 = vmul.f32 %v220, %v257
      %v279 = vmul.f32 %v214, %v261
      %v280 = vsel %vm202, %v271, 0.0
      %v281 = vsel %vm202, %v272, 0.0
      %v282 = vadd.f32 %v280, %v281
      %v283 = vsel %vm202, %v273, 0.0
      %v284 = vadd.f32 %v282, %v283
      %v285 = vsel %vm202, %v274, 0.0
      %v286 = vadd.f32 %v284, %v285
      %v287 = vsel %vm202, %v275, 0.0
      %v288 = vadd.f32 %v286, %v287
      %v289 = vsel %vm202, %v276, 0.0
      %v290 = vadd.f32 %v288, %v289
      %v291 = vsel %vm202, %v277, 0.0
      %v292 = vadd.f32 %v290, %v291
      %v293 = vsel %vm202, %v278, 0.0
      %v294 = vadd.f32 %v292, %v293
      %v295 = vsel %vm202, %v279, 0.0
      %v296 = vadd.f32 %v294, %v295
      %297 = vadd.xlane.f32.xlu0 %v296
      %v298 = vpop.xlane.xlu0 %297
      %v299 = vsub.f32 0.0, %v298
      %v300 = vmul.f32 %v299, 1.442695
      %v301 = vpow.pop %v300
      %v302 = vadd.f32 %v301, 1.0
      %v303 = vrcp.pop %v302
      %v304 = vmul.f32 1.0, %v303
      %vm305 = vcmask 0
      %306 = vst.msk [vmem:[%s190] sm:$0x1] %vm305, %v304
      %p307 = scmp.lt.s32.totalorder %s15, 1
      %s308 = scalar_select %p307, %s15, 1
      %s309 = scalar_lea.vmem %s4, %s308
      // Predicated region
      $region37: #{netd_forward.15} parent=35 // pred_check
        %p310 = pneg %p122
      $region38: #{netd_forward.15} parent=35 // pred_check_branch
        %312 = sbr.rel (%p310) target = $region40
      $region39: #{netd_forward.15} parent=35 // pred_region
        _
      $region40: #{netd_forward.15} parent=35 // pred_fallthru
        _
    $region36: #{netd_forward.15} parent=5 // pred_fallthru
      _
    %p313 = scmp.le.s32.totalorder 2, %s10
    // Predicated region
    $region41: #{netd_forward.15} parent=5 // pred_check
      %p314 = pneg %p313
    $region42: #{netd_forward.15} parent=5 // pred_check_branch
      %316 = sbr.rel (%p314) target = $region44
    $region43: #{netd_forward.15} parent=5 // pred_region
      %s317 = ssub.s32 %s10, 2
      // Predicated region
      $region45: #{netd_forward.15} parent=43 // pred_check
        %p318 = pneg %p128
      $region46: #{netd_forward.15} parent=43 // pred_check_branch
        %320 = sbr.rel (%p318) target = $region48
      $region47: #{netd_forward.15} parent=43 // pred_region
        %p321 = scmp.lt.s32.totalorder %s16, 1
        %s322 = scalar_select %p321, %s16, 1
        %s323 = scalar_lea.vmem %s4, %s322
      $region48: #{netd_forward.15} parent=43 // pred_fallthru
        _
    $region44: #{netd_forward.15} parent=5 // pred_fallthru
      _
  $region6: #{netd_forward.15} parent=0 // loop_footer
    %s14 = sadd.s32 1, %s10
  $region7: #{netd_forward.15} parent=0 // loop_footer_branch
    %9 = sbr.rel target = $region3
  $region8: #{netd_forward.15} parent=0 // loop_exit
    _

// kernel: netd_forward.14
$region0: #{netd_forward.14}
  #allocation0 [shape = 'u32[]', space=smem, size = 0x4, offset = 0x4, fixed_abs, tag = 'smem constant byte address 0x4 - core index']
  #allocation1 [shape = 'u32[144,128]{1,0:T(1,128)}', space=vmem, size = 0x12000, scoped, tag = 'internal scratch']
  %s0 = inlined_call_operand.vmem [shape: f32[2,2,2,256], index: 0, kind: input, shape index: {}]
  %s1 = inlined_call_operand.vmem [shape: f32[1,256], index: 1, kind: input, shape index: {}]
  %s2 = inlined_call_operand.vmem [shape: f32[1,256], index: 2, kind: input, shape index: {}]
  %s3 = inlined_call_operand.vmem [shape: f32[2,2,2,256], index: 3, kind: input, shape index: {}]
  %s4 = inlined_call_operand.vmem [shape: bf16[576,128], index: 4, kind: input, shape index: {}]
  %s5 = inlined_call_operand.vmem [shape: f32[2,2,2,128], index: 5, kind: output, shape index: {0}]
  %s6 = inlined_call_operand.vmem [shape: f32[2,2,128], index: 6, kind: output, shape index: {1}]
  %7 = xla_tuple %s5, %s6
  %s8 = sld [smem:[#allocation0]]
  $region61: #{netd_forward.14} parent=0
    _
  %s10 = ssub.s32 1, %s8
  %s11 = scalar_select 0, %s10, %s8
  loop: start=0, step=1, limit=4
  $region2: #{netd_forward.14} parent=0 // loop_pre_header
    _
  $region3: #{netd_forward.14} parent=0 // loop_header
    %s13 = sphi 0, %s17
    %p14 = scmp.ge.s32.totalorder %s13, 4
    %s23 = sphi 0, %s25
    %s26 = sphi 0, %s23
    %s27 = sphi 0, %s26
    %s43 = sphi 0, %s27
    %s47 = sphi 0, %s47
    %s49 = sphi 0, %s47
    %s50 = sphi 0, %s49
    %s64 = sphi 0, %s50
    %s68 = sphi 0, %s68
    %s70 = sphi 0, %s68
    %s71 = sphi 0, %s70
    %s85 = sphi 0, %s71
    %s91 = sphi 0, %s93
    %s94 = sphi 0, %s91
    %s95 = sphi 0, %s94
    %s111 = sphi 0, %s95
    %s115 = sphi 0, %s115
    %s117 = sphi 0, %s115
    %s118 = sphi 0, %s117
    %s132 = sphi 0, %s118
    %s138 = sphi 0, %s140
    %s141 = sphi 0, %s138
    %s142 = sphi 0, %s141
    %s158 = sphi 0, %s142
    %s164 = sphi 0, %s166
    %s167 = sphi 0, %s164
    %s168 = sphi 0, %s167
    %s184 = sphi 0, %s168
  $region4: #{netd_forward.14} parent=0 // loop_header_branch
    %16 = sbr.rel (%p14) target = $region8
  $region5: #{netd_forward.14} parent=0 // loop_body
    %s18 = ssub.s32 %s13, 1
    %s19 = ssub.s32 %s13, 2
    %s20 = sadd.s32 %s13, 1
    %s21 = ssub.s32 %s13, %s20
    %p22 = scmp.eq.s32.totalorder %s21, 0
    %s24 = sadd.s32 %s23, 1
    %s25 = scalar_select %p22, %s23, %s24
    %p28 = pneg %p22
    %p29 = scmp.eq.s32.totalorder %s13, 1
    %p30 = por %p28, %p29
    %p31 = scmp.ne.s32.totalorder %s23, %s26
    %p32 = scmp.eq.s32.totalorder %s13, 0
    %p33 = por %p31, %p32
    %p34 = scmp.ne.s32.totalorder %s23, %s26
    %p35 = scmp.eq.s32.totalorder %s18, 1
    %p36 = por %p34, %p35
    %p37 = scmp.ne.s32.totalorder %s26, %s27
    %p38 = scmp.eq.s32.totalorder %s18, 0
    %p39 = por %p37, %p38
    %p40 = scmp.ne.s32.totalorder %s26, %s27
    %p41 = scmp.eq.s32.totalorder %s19, 1
    %p42 = por %p40, %p41
    %p44 = scmp.ne.s32.totalorder %s27, %s43
    %p45 = scmp.eq.s32.totalorder %s19, 0
    %p46 = por %p44, %p45
    %s48 = sadd.s32 %s47, 1
    %p51 = scmp.eq.s32.totalorder %s13, 1
    %p52 = scmp.ne.s32.totalorder %s47, %s49
    %p53 = scmp.eq.s32.totalorder %s13, 0
    %p54 = por %p52, %p53
    %p55 = scmp.ne.s32.totalorder %s47, %s49
    %p56 = scmp.eq.s32.totalorder %s18, 1
    %p57 = por %p55, %p56
    %p58 = scmp.ne.s32.totalorder %s49, %s50
    %p59 = scmp.eq.s32.totalorder %s18, 0
    %p60 = por %p58, %p59
    %p61 = scmp.ne.s32.totalorder %s49, %s50
    %p62 = scmp.eq.s32.totalorder %s19, 1
    %p63 = por %p61, %p62
    %p65 = scmp.ne.s32.totalorder %s50, %s64
    %p66 = scmp.eq.s32.totalorder %s19, 0
    %p67 = por %p65, %p66
    %s69 = sadd.s32 %s68, 1
    %p72 = scmp.eq.s32.totalorder %s13, 1
    %p73 = scmp.ne.s32.totalorder %s68, %s70
    %p74 = scmp.eq.s32.totalorder %s13, 0
    %p75 = por %p73, %p74
    %p76 = scmp.ne.s32.totalorder %s68, %s70
    %p77 = scmp.eq.s32.totalorder %s18, 1
    %p78 = por %p76, %p77
    %p79 = scmp.ne.s32.totalorder %s70, %s71
    %p80 = scmp.eq.s32.totalorder %s18, 0
    %p81 = por %p79, %p80
    %p82 = scmp.ne.s32.totalorder %s70, %s71
    %p83 = scmp.eq.s32.totalorder %s19, 1
    %p84 = por %p82, %p83
    %p86 = scmp.ne.s32.totalorder %s71, %s85
    %p87 = scmp.eq.s32.totalorder %s19, 0
    %p88 = por %p86, %p87
    %s89 = ssub.s32 %s13, %s20
    %p90 = scmp.eq.s32.totalorder %s89, 0
    %s92 = sadd.s32 %s91, 1
    %s93 = scalar_select %p90, %s91, %s92
    %p96 = pneg %p90
    %p97 = scmp.eq.s32.totalorder %s13, 1
    %p98 = por %p96, %p97
    %p99 = scmp.ne.s32.totalorder %s91, %s94
    %p100 = scmp.eq.s32.totalorder %s13, 0
    %p101 = por %p99, %p100
    %p102 = scmp.ne.s32.totalorder %s91, %s94
    %p103 = scmp.eq.s32.totalorder %s18, 1
    %p104 = por %p102, %p103
    %p105 = scmp.ne.s32.totalorder %s94, %s95
    %p106 = scmp.eq.s32.totalorder %s18, 0
    %p107 = por %p105, %p106
    %p108 = scmp.ne.s32.totalorder %s94, %s95
    %p109 = scmp.eq.s32.totalorder %s19, 1
    %p110 = por %p108, %p109
    %p112 = scmp.ne.s32.totalorder %s95, %s111
    %p113 = scmp.eq.s32.totalorder %s19, 0
    %p114 = por %p112, %p113
    %s116 = sadd.s32 %s115, 1
    %p119 = scmp.eq.s32.totalorder %s13, 1
    %p120 = scmp.ne.s32.totalorder %s115, %s117
    %p121 = scmp.eq.s32.totalorder %s13, 0
    %p122 = por %p120, %p121
    %p123 = scmp.ne.s32.totalorder %s115, %s117
    %p124 = scmp.eq.s32.totalorder %s18, 1
    %p125 = por %p123, %p124
    %p126 = scmp.ne.s32.totalorder %s117, %s118
    %p127 = scmp.eq.s32.totalorder %s18, 0
    %p128 = por %p126, %p127
    %p129 = scmp.ne.s32.totalorder %s117, %s118
    %p130 = scmp.eq.s32.totalorder %s19, 1
    %p131 = por %p129, %p130
    %p133 = scmp.ne.s32.totalorder %s118, %s132
    %p134 = scmp.eq.s32.totalorder %s19, 0
    %p135 = por %p133, %p134
    %s136 = ssub.s32 %s13, %s20
    %p137 = scmp.eq.s32.totalorder %s136, 0
    %s139 = sadd.s32 %s138, 1
    %s140 = scalar_select %p137, %s138, %s139
    %p143 = pneg %p137
    %p144 = scmp.eq.s32.totalorder %s13, 1
    %p145 = por %p143, %p144
    %p146 = scmp.ne.s32.totalorder %s138, %s141
    %p147 = scmp.eq.s32.totalorder %s13, 0
    %p148 = por %p146, %p147
    %p149 = scmp.ne.s32.totalorder %s138, %s141
    %p150 = scmp.eq.s32.totalorder %s18, 1
    %p151 = por %p149, %p150
    %p152 = scmp.ne.s32.totalorder %s141, %s142
    %p153 = scmp.eq.s32.totalorder %s18, 0
    %p154 = por %p152, %p153
    %p155 = scmp.ne.s32.totalorder %s141, %s142
    %p156 = scmp.eq.s32.totalorder %s19, 1
    %p157 = por %p155, %p156
    %p159 = scmp.ne.s32.totalorder %s142, %s158
    %p160 = scmp.eq.s32.totalorder %s19, 0
    %p161 = por %p159, %p160
    %s162 = ssub.s32 %s13, %s20
    %p163 = scmp.eq.s32.totalorder %s162, 0
    %s165 = sadd.s32 %s164, 1
    %s166 = scalar_select %p163, %s164, %s165
    %p169 = pneg %p163
    %p170 = scmp.eq.s32.totalorder %s13, 1
    %p171 = por %p169, %p170
    %p172 = scmp.ne.s32.totalorder %s164, %s167
    %p173 = scmp.eq.s32.totalorder %s13, 0
    %p174 = por %p172, %p173
    %p175 = scmp.ne.s32.totalorder %s164, %s167
    %p176 = scmp.eq.s32.totalorder %s18, 1
    %p177 = por %p175, %p176
    %p178 = scmp.ne.s32.totalorder %s167, %s168
    %p179 = scmp.eq.s32.totalorder %s18, 0
    %p180 = por %p178, %p179
    %p181 = scmp.ne.s32.totalorder %s167, %s168
    %p182 = scmp.eq.s32.totalorder %s19, 1
    %p183 = por %p181, %p182
    %p185 = scmp.ne.s32.totalorder %s168, %s184
    %p186 = scmp.eq.s32.totalorder %s19, 0
    %p187 = por %p185, %p186
    %p188 = scmp.le.s32.totalorder 1, %s13
    %p189 = scmp.lt.s32.totalorder %s13, 3
    %p190 = pnand %p188, %p189
    %p191 = pneg %p190
    // Predicated region
    $region9: #{netd_forward.14} parent=5 // pred_check
      _
    $region10: #{netd_forward.14} parent=5 // pred_check_branch
      %193 = sbr.rel (%p190) target = $region12
    $region11: #{netd_forward.14} parent=5 // pred_region
      %s194 = ssub.s32 %s13, 1
      // Predicated region
      $region13: #{netd_forward.14} parent=11 // pred_check
        %p195 = pneg %p60
      $region14: #{netd_forward.14} parent=11 // pred_check_branch
        %197 = sbr.rel (%p195) target = $region16
      $region15: #{netd_forward.14} parent=11 // pred_region
        _
      $region16: #{netd_forward.14} parent=11 // pred_fallthru
        _
      // Predicated region
      $region17: #{netd_forward.14} parent=11 // pred_check
        %p198 = pneg %p81
      $region18: #{netd_forward.14} parent=11 // pred_check_branch
        %200 = sbr.rel (%p198) target = $region20
      $region19: #{netd_forward.14} parent=11 // pred_region
        _
      $region20: #{netd_forward.14} parent=11 // pred_fallthru
        _
      // Predicated region
      $region21: #{netd_forward.14} parent=11 // pred_check
        %p201 = pneg %p128
      $region22: #{netd_forward.14} parent=11 // pred_check_branch
        %203 = sbr.rel (%p201) target = $region24
      $region23: #{netd_forward.14} parent=11 // pred_region
        _
      $region24: #{netd_forward.14} parent=11 // pred_fallthru
        _
    $region12: #{netd_forward.14} parent=5 // pred_fallthru
      _
    %p204 = scmp.lt.s32.totalorder %s13, 2
    // Predicated region
    $region25: #{netd_forward.14} parent=5 // pred_check
      %p205 = pneg %p204
    $region26: #{netd_forward.14} parent=5 // pred_check_branch
      %207 = sbr.rel (%p205) target = $region28
    $region27: #{netd_forward.14} parent=5 // pred_region
      // Predicated region
      $region29: #{netd_forward.14} parent=27 // pred_check
        %p208 = pneg %p33
      $region30: #{netd_forward.14} parent=27 // pred_check_branch
        %210 = sbr.rel (%p208) target = $region32
      $region31: #{netd_forward.14} parent=27 // pred_region
        %p211 = scmp.lt.s32.totalorder %s13, 1
        %s212 = scalar_select %p211, %s13, 1
        %s213 = smul.addr %s212, 4
        %s214 = smul.addr %s213, 2
        %s215 = scalar_lea.vmem %s0, %s214
      $region32: #{netd_forward.14} parent=27 // pred_fallthru
        _
      // Predicated region
      $region33: #{netd_forward.14} parent=27 // pred_check
        %p216 = pneg %p101
      $region34: #{netd_forward.14} parent=27 // pred_check_branch
        %218 = sbr.rel (%p216) target = $region36
      $region35: #{netd_forward.14} parent=27 // pred_region
        %p219 = scmp.lt.s32.totalorder %s13, 1
        %s220 = scalar_select %p219, %s13, 1
        %s221 = smul.addr %s220, 4
        %s222 = smul.addr %s221, 2
        %s223 = scalar_lea.vmem %s3, %s222
      $region36: #{netd_forward.14} parent=27 // pred_fallthru
        _
    $region28: #{netd_forward.14} parent=5 // pred_fallthru
      _
    %p224 = scmp.le.s32.totalorder 1, %s13
    %p225 = scmp.lt.s32.totalorder %s13, 3
    %p226 = pnand %p224, %p225
    %p227 = pneg %p226
    // Predicated region
    $region37: #{netd_forward.14} parent=5 // pred_check
      _
    $region38: #{netd_forward.14} parent=5 // pred_check_branch
      %229 = sbr.rel (%p226) target = $region40
    $region39: #{netd_forward.14} parent=5 // pred_region
      %s230 = ssub.s32 %s13, 1
      %p231 = scmp.lt.s32.totalorder %s18, 1
      %s232 = scalar_select %p231, %s18, 1
      %s233 = smul.addr %s232, 4
      %s234 = smul.addr %s233, 2
      %s235 = scalar_lea.vmem %s0, %s234
      %p236 = pneg %p39
      %p237 = pneg %p36
      %p238 = pneg %p60
      %p239 = pneg %p57
      %p240 = pneg %p81
      %p241 = pneg %p78
      %p242 = scmp.lt.s32.totalorder %s18, 1
      %s243 = scalar_select %p242, %s18, 1
      %s244 = smul.addr %s243, 4
      %s245 = smul.addr %s244, 2
      %s246 = scalar_lea.vmem %s3, %s245
      %p247 = pneg %p107
      %p248 = pneg %p104
      %p249 = pneg %p128
      %p250 = pneg %p125
      %p251 = pneg %p154
      %p252 = pneg %p151
      %p253 = scmp.lt.s32.totalorder %s18, 1
      %s254 = scalar_select %p253, %s18, 1
      %s255 = smul.addr %s254, 2
      %s256 = smul.addr %s255, 2
      %s257 = scalar_lea.vmem %s5, %s256
      %p258 = pneg %p180
      %p259 = pneg %p177
      %p260 = scmp.lt.s32.totalorder %s18, 1
      %s261 = scalar_select %p260, %s18, 1
      %s262 = smul.addr %s261, 2
      %s263 = scalar_lea.vmem %s6, %s262
      %p264 = scmp.lt.s32.totalorder %s18, 1
      %s265 = scalar_select %p264, %s18, 1
      %s266 = smul.addr %s265, 4
      %s267 = smul.addr %s266, 2
      %s268 = scalar_lea.vmem %s0, %s267
      %p269 = scmp.lt.s32.totalorder %s18, 1
      %s270 = scalar_select %p269, %s18, 1
      %s271 = smul.addr %s270, 4
      %s272 = smul.addr %s271, 2
      %s273 = scalar_lea.vmem %s3, %s272
      %p274 = scmp.lt.s32.totalorder %s18, 1
      %s275 = scalar_select %p274, %s18, 1
      %s276 = smul.addr %s275, 2
      %s277 = smul.addr %s276, 2
      %s278 = scalar_lea.vmem %s5, %s277
      %p279 = scmp.lt.s32.totalorder %s18, 1
      %s280 = scalar_select %p279, %s18, 1
      %s281 = smul.addr %s280, 2
      %s282 = scalar_lea.vmem %s6, %s281
      %v284 = vld [vmem:[%s268] sm:$0xf]
      %v285 = vld [vmem:[%s268 + $0x4] sm:$0xf]
      %v286 = vld [vmem:[%s1] sm:$0x3]
      %v288 = vlaneseq
      %v289 = vshrl.u32 %v288, 7
      %v290 = vsub.s32 0, %v289
      %v291 = vrot.slane %v286, %v290
      %v292 = vlaneseq
      %v293 = vshrl.u32 %v292, 7
      %v294 = vsub.s32 1, %v293
      %v295 = vrot.slane %v286, %v294
      %v296 = vcombine.low %v291, %v295
      %v298 = vunpack.c.l.s4 1983009808
      %v299 = vunpack.c.0.s8 %v298
      %v300 = vlaneseq
      %v301 = vshrl.u32 %v300, 7
      %v302 = vsub.s32 %v299, %v301
      %v303 = vrot.slane %v296, %v302
      %v305 = vmul.f32 %v284, %v303
      %v306 = vmul.f32 %v285, %v303
      %v307 = vld [vmem:[%s2] sm:$0x3]
      %v309 = vlaneseq
      %v310 = vshrl.u32 %v309, 7
      %v311 = vsub.s32 0, %v310
      %v312 = vrot.slane %v307, %v311
      %v313 = vlaneseq
      %v314 = vshrl.u32 %v313, 7
      %v315 = vsub.s32 1, %v314
      %v316 = vrot.slane %v307, %v315
      %v317 = vcombine.low %v312, %v316
      %v319 = vunpack.c.l.s4 1983009808
      %v320 = vunpack.c.0.s8 %v319
      %v321 = vlaneseq
      %v322 = vshrl.u32 %v321, 7
      %v323 = vsub.s32 %v320, %v322
      %v324 = vrot.slane %v317, %v323
      %v326 = vadd.f32 %v305, %v324
      %v327 = vadd.f32 %v306, %v324
      %v328 = vld [vmem:[%s273] sm:$0xf]
      %v329 = vld [vmem:[%s273 + $0x4] sm:$0xf]
      %v330 = vmul.f32 %v326, 0.1
      %v331 = vmul.f32 %v327, 0.1
      %v332 = vadd.f32 %v328, %v330
      %v333 = vadd.f32 %v329, %v331
      %v337 = vunpack.c.l.s4 1983009808
      %v338 = vunpack.c.0.s8 %v337
      %v339 = vlaneseq
      %v340 = vshrl.u32 %v339, 7
      %v341 = vsub.s32 %v338, %v340
      %v342 = vrot.slane %v332, %v341
      %v343 = vcombine.high %v342, %v342
      %v345 = vunpack.c.l.s4 1983009808
      %v346 = vunpack.c.0.s8 %v345
      %v347 = vlaneseq
      %v348 = vshrl.u32 %v347, 7
      %v349 = vsub.s32 %v346, %v348
      %v350 = vrot.slane %v333, %v349
      %v351 = vcombine.high %v350, %v350
      %v356 = vpack.c.bf16 %v342, %v342
      %v357 = vpack.c.bf16 %v343, %v343
      %v358 = vpack.c.bf16 %v350, %v350
      %v359 = vpack.c.bf16 %v351, %v351
      %361 = vrot.lane.b32.xlu0 %v357, 64
      %v362 = vpop.permute.xlu0 %361
      %v364 = vshrl.u32 0, 16
      %v366 = vrot.slane %v364, 7
      %v367 = vshll.u32 0, 16
      %v369 = vor.u32 %v366, %v367
      %v371 = vshrl.u32 %v362, 16
      %v373 = vrot.slane %v371, 7
      %v374 = vshll.u32 %v362, 16
      %v376 = vor.u32 %v373, %v374
      %vm379 = vcmask 1040384
      %vm380 = vsmask.f32 256
      %vm381 = vmand %vm379, %vm380
      %v382 = vsel %vm381, 0, %v369
      %v383 = vsel %vm381, 0, %v376
      %v385 = vshrl.u32 %v356, 16
      %v387 = vrot.slane %v385, 7
      %v388 = vshll.u32 %v356, 16
      %v390 = vor.u32 %v387, %v388
      %v392 = vshrl.u32 %v358, 16
      %v394 = vrot.slane %v392, 7
      %v395 = vshll.u32 %v358, 16
      %v397 = vor.u32 %v394, %v395
      %398 = vrot.lane.b32.xlu0 %v390, 64
      %v399 = vpop.permute.xlu0 %398
      %400 = vrot.lane.b32.xlu0 %v397, 64
      %v401 = vpop.permute.xlu0 %400
      %v404 = vsel %vm381, 0, %v399
      %v405 = vsel %vm381, 0, %v401
      %v407 = vshrl.u32 %v357, 16
      %v409 = vrot.slane %v407, 7
      %v410 = vshll.u32 %v357, 16
      %v412 = vor.u32 %v409, %v410
      %v414 = vshrl.u32 %v359, 16
      %v416 = vrot.slane %v414, 7
      %v417 = vshll.u32 %v359, 16
      %v419 = vor.u32 %v416, %v417
      %420 = vrot.lane.b32.xlu0 %v412, 64
      %v421 = vpop.permute.xlu0 %420
      %422 = vrot.lane.b32.xlu0 %v419, 64
      %v423 = vpop.permute.xlu0 %422
      %v426 = vsel %vm381, 0, %v421
      %v427 = vsel %vm381, 0, %v423
      %429 = vrot.lane.b32.xlu0 0, 64
      %v430 = vpop.permute.xlu0 %429
      %433 = vrot.lane.b32.xlu0 %v404, 64
      %v434 = vpop.permute.xlu0 %433
      %435 = vrot.lane.b32.xlu0 %v405, 64
      %v436 = vpop.permute.xlu0 %435
      %438 = vrot.lane.b32.xlu0 %v359, 64
      %v439 = vpop.permute.xlu0 %438
      %vm440 = vcmask 523264
      %v443 = vsel %vm440, %v382, %v430
      %v445 = vsel %vm440, %v383, %v362
      %v447 = vsel %vm440, 0, %v434
      %v449 = vsel %vm440, %v362, %v436
      %v451 = vsel %vm440, %v426, %v362
      %v454 = vsel %vm440, %v427, %v439
      %v463 = vcombine.low %v443, %v447
      %v464 = vcombine.low %v356, %v451
      %v466 = vunpack.c.l.s4 1966171168
      %v467 = vunpack.c.0.s8 %v466
      %v468 = vlaneseq
      %v469 = vshrl.u32 %v468, 7
      %v470 = vsub.s32 %v467, %v469
      %v471 = vrot.slane %v463, %v470
      %v473 = vunpack.c.l.s4 1966171168
      %v474 = vunpack.c.0.s8 %v473
      %v475 = vlaneseq
      %v476 = vshrl.u32 %v475, 7
      %v477 = vsub.s32 %v474, %v476
      %v478 = vrot.slane %v464, %v477
      %v480 = vunpack.c.l.s4 1966171168
      %v481 = vunpack.c.0.s8 %v480
      %v482 = vlaneseq
      %v483 = vshrl.u32 %v482, 7
      %v484 = vsub.s32 %v481, %v483
      %v485 = vrot.slane %v362, %v484
      %v486 = vcombine.low %v471, %v478
      %v488 = vunpack.c.l.s4 1966171168
      %v489 = vunpack.c.0.s8 %v488
      %v490 = vlaneseq
      %v491 = vshrl.u32 %v490, 7
      %v492 = vsub.s32 %v489, %v491
      %v493 = vrot.slane %v486, %v492
      %v495 = vunpack.c.l.s4 1966171168
      %v496 = vunpack.c.0.s8 %v495
      %v497 = vlaneseq
      %v498 = vshrl.u32 %v497, 7
      %v499 = vsub.s32 %v496, %v498
      %v500 = vrot.slane %v485, %v499
      %v501 = vcombine.low %v493, %v500
      %v502 = vcombine.low %v445, %v449
      %v503 = vcombine.low %v358, %v454
      %v505 = vunpack.c.l.s4 1966171168
      %v506 = vunpack.c.0.s8 %v505
      %v507 = vlaneseq
      %v508 = vshrl.u32 %v507, 7
      %v509 = vsub.s32 %v506, %v508
      %v510 = vrot.slane %v502, %v509
      %v512 = vunpack.c.l.s4 1966171168
      %v513 = vunpack.c.0.s8 %v512
      %v514 = vlaneseq
      %v515 = vshrl.u32 %v514, 7
      %v516 = vsub.s32 %v513, %v515
      %v517 = vrot.slane %v503, %v516
      %v519 = vunpack.c.l.s4 1966171168
      %v520 = vunpack.c.0.s8 %v519
      %v521 = vlaneseq
      %v522 = vshrl.u32 %v521, 7
      %v523 = vsub.s32 %v520, %v522
      %v524 = vrot.slane %v439, %v523
      %v525 = vcombine.low %v510, %v517
      %v527 = vunpack.c.l.s4 1966171168
      %v528 = vunpack.c.0.s8 %v527
      %v529 = vlaneseq
      %v530 = vshrl.u32 %v529, 7
      %v531 = vsub.s32 %v528, %v530
      %v532 = vrot.slane %v525, %v531
      %v534 = vunpack.c.l.s4 1966171168
      %v535 = vunpack.c.0.s8 %v534
      %v536 = vlaneseq
      %v537 = vshrl.u32 %v536, 7
      %v538 = vsub.s32 %v535, %v537
      %v539 = vrot.slane %v524, %v538
      %v540 = vcombine.low %v532, %v539
      %v541 = vld [vmem:[%s4] sm:$0xf]
      %v542 = vld [vmem:[%s4 + $0x4] sm:$0xf]
      %v543 = vld [vmem:[%s4 + $0x8] sm:$0xf]
      %v544 = vld [vmem:[%s4 + $0xc] sm:$0xf]
      %v545 = vld [vmem:[%s4 + $0x10] sm:$0xf]
      %v546 = vld [vmem:[%s4 + $0x14] sm:$0xf]
      %v547 = vld [vmem:[%s4 + $0x18] sm:$0xf]
      %v548 = vld [vmem:[%s4 + $0x1c] sm:$0xf]
      %v549 = vld [vmem:[%s4 + $0x20] sm:$0xf]
      %v550 = vld [vmem:[%s4 + $0x24] sm:$0xf]
      %v551 = vld [vmem:[%s4 + $0x28] sm:$0xf]
      %v552 = vld [vmem:[%s4 + $0x2c] sm:$0xf]
      %v553 = vld [vmem:[%s4 + $0x30] sm:$0xf]
      %v554 = vld [vmem:[%s4 + $0x34] sm:$0xf]
      %v555 = vld [vmem:[%s4 + $0x38] sm:$0xf]
      %v556 = vld [vmem:[%s4 + $0x3c] sm:$0xf]
      %v557 = vld [vmem:[%s4 + $0x40] sm:$0xf]
      %v558 = vld [vmem:[%s4 + $0x44] sm:$0xf]
      %v559 = vld [vmem:[%s4 + $0x48] sm:$0xf]
      %v560 = vld [vmem:[%s4 + $0x4c] sm:$0xf]
      %v561 = vld [vmem:[%s4 + $0x50] sm:$0xf]
      %v562 = vld [vmem:[%s4 + $0x54] sm:$0xf]
      %v563 = vld [vmem:[%s4 + $0x58] sm:$0xf]
      %v564 = vld [vmem:[%s4 + $0x5c] sm:$0xf]
      %v565 = vld [vmem:[%s4 + $0x60] sm:$0xf]
      %v566 = vld [vmem:[%s4 + $0x64] sm:$0xf]
      %v567 = vld [vmem:[%s4 + $0x68] sm:$0xf]
      %v568 = vld [vmem:[%s4 + $0x6c] sm:$0xf]
      %v569 = vld [vmem:[%s4 + $0x70] sm:$0xf]
      %v570 = vld [vmem:[%s4 + $0x74] sm:$0xf]
      %v571 = vld [vmem:[%s4 + $0x78] sm:$0xf]
      %v572 = vld [vmem:[%s4 + $0x7c] sm:$0xf]
      %v573 = vld [vmem:[%s4 + $0x80] sm:$0xf]
      %v574 = vld [vmem:[%s4 + $0x84] sm:$0xf]
      %v575 = vld [vmem:[%s4 + $0x88] sm:$0xf]
      %v576 = vld [vmem:[%s4 + $0x8c] sm:$0xf]
      %v577 = vld [vmem:[%s4 + $0x90] sm:$0xf]
      %v578 = vld [vmem:[%s4 + $0x94] sm:$0xf]
      %v579 = vld [vmem:[%s4 + $0x98] sm:$0xf]
      %v580 = vld [vmem:[%s4 + $0x9c] sm:$0xf]
      %v581 = vld [vmem:[%s4 + $0xa0] sm:$0xf]
      %v582 = vld [vmem:[%s4 + $0xa4] sm:$0xf]
      %v583 = vld [vmem:[%s4 + $0xa8] sm:$0xf]
      %v584 = vld [vmem:[%s4 + $0xac] sm:$0xf]
      %v585 = vld [vmem:[%s4 + $0xb0] sm:$0xf]
      %v586 = vld [vmem:[%s4 + $0xb4] sm:$0xf]
      %v587 = vld [vmem:[%s4 + $0xb8] sm:$0xf]
      %v588 = vld [vmem:[%s4 + $0xbc] sm:$0xf]
      %v589 = vld [vmem:[%s4 + $0xc0] sm:$0xf]
      %v590 = vld [vmem:[%s4 + $0xc4] sm:$0xf]
      %v591 = vld [vmem:[%s4 + $0xc8] sm:$0xf]
      %v592 = vld [vmem:[%s4 + $0xcc] sm:$0xf]
      %v593 = vld [vmem:[%s4 + $0xd0] sm:$0xf]
      %v594 = vld [vmem:[%s4 + $0xd4] sm:$0xf]
      %v595 = vld [vmem:[%s4 + $0xd8] sm:$0xf]
      %v596 = vld [vmem:[%s4 + $0xdc] sm:$0xf]
      %v597 = vld [vmem:[%s4 + $0xe0] sm:$0xf]
      %v598 = vld [vmem:[%s4 + $0xe4] sm:$0xf]
      %v599 = vld [vmem:[%s4 + $0xe8] sm:$0xf]
      %v600 = vld [vmem:[%s4 + $0xec] sm:$0xf]
      %v601 = vld [vmem:[%s4 + $0xf0] sm:$0xf]
      %v602 = vld [vmem:[%s4 + $0xf4] sm:$0xf]
      %v603 = vld [vmem:[%s4 + $0xf8] sm:$0xf]
      %v604 = vld [vmem:[%s4 + $0xfc] sm:$0xf]
      %v605 = vld [vmem:[%s4 + $0x100] sm:$0xf]
      %v606 = vld [vmem:[%s4 + $0x104] sm:$0xf]
      %v607 = vld [vmem:[%s4 + $0x108] sm:$0xf]
      %v608 = vld [vmem:[%s4 + $0x10c] sm:$0xf]
      %v609 = vld [vmem:[%s4 + $0x110] sm:$0xf]
      %v610 = vld [vmem:[%s4 + $0x114] sm:$0xf]
      %v611 = vld [vmem:[%s4 + $0x118] sm:$0xf]
      %v612 = vld [vmem:[%s4 + $0x11c] sm:$0xf]
      %v613 = vcombine.low %v501, %v540
      %v614 = vcombine.high %v501, %v540
      %v616 = vunpack.c.l.s4 1966171168
      %v617 = vunpack.c.0.s8 %v616
      %v618 = vlaneseq
      %v619 = vshrl.u32 %v618, 7
      %v620 = vsub.s32 %v617, %v619
      %v621 = vrot.slane %v613, %v620
      %v623 = vunpack.c.l.s4 1966171168
      %v624 = vunpack.c.0.s8 %v623
      %v625 = vlaneseq
      %v626 = vshrl.u32 %v625, 7
      %v627 = vsub.s32 %v624, %v626
      %v628 = vrot.slane %v614, %v627
      %v629 = vcombine.high %v621, %v621
      %v631 = vunpack.c.l.s4 1966171168
      %v632 = vunpack.c.0.s8 %v631
      %v633 = vlaneseq
      %v634 = vshrl.u32 %v633, 7
      %v635 = vsub.s32 %v632, %v634
      %v636 = vrot.slane %v621, %v635
      %v638 = vunpack.c.l.s4 1966171168
      %v639 = vunpack.c.0.s8 %v638
      %v640 = vlaneseq
      %v641 = vshrl.u32 %v640, 7
      %v642 = vsub.s32 %v639, %v641
      %v643 = vrot.slane %v628, %v642
      %v645 = vunpack.c.l.s4 1966171168
      %v646 = vunpack.c.0.s8 %v645
      %v647 = vlaneseq
      %v648 = vshrl.u32 %v647, 7
      %v649 = vsub.s32 %v646, %v648
      %v650 = vrot.slane %v629, %v649
      %v651 = vcombine.high %v636, %v636
      %v652 = vcombine.high %v650, %v650
      %v729 = vunpack.c.l.b16 %v541
      %v730 = vunpack.c.l.b16 %v542
      %v731 = vunpack.c.l.b16 %v543
      %v732 = vunpack.c.l.b16 %v544
      %v733 = vunpack.c.l.b16 %v545
      %v734 = vunpack.c.l.b16 %v546
      %v735 = vunpack.c.l.b16 %v547
      %v736 = vunpack.c.l.b16 %v548
      %v737 = vunpack.c.l.b16 %v549
      %v738 = vunpack.c.l.b16 %v550
      %v739 = vunpack.c.l.b16 %v551
      %v740 = vunpack.c.l.b16 %v552
      %v741 = vunpack.c.l.b16 %v553
      %v742 = vunpack.c.l.b16 %v554
      %v743 = vunpack.c.l.b16 %v555
      %v744 = vunpack.c.l.b16 %v556
      %v745 = vunpack.c.l.b16 %v557
      %v746 = vunpack.c.l.b16 %v558
      %v747 = vunpack.c.l.b16 %v559
      %v748 = vunpack.c.l.b16 %v560
      %v749 = vunpack.c.l.b16 %v561
      %v750 = vunpack.c.l.b16 %v562
      %v751 = vunpack.c.l.b16 %v563
      %v752 = vunpack.c.l.b16 %v564
      %v753 = vunpack.c.l.b16 %v565
      %v754 = vunpack.c.l.b16 %v566
      %v755 = vunpack.c.l.b16 %v567
      %v756 = vunpack.c.l.b16 %v568
      %v757 = vunpack.c.l.b16 %v569
      %v758 = vunpack.c.l.b16 %v570
      %v759 = vunpack.c.l.b16 %v571
      %v760 = vunpack.c.l.b16 %v572
      %v761 = vunpack.c.l.b16 %v573
      %v762 = vunpack.c.l.b16 %v574
      %v763 = vunpack.c.l.b16 %v575
      %v764 = vunpack.c.l.b16 %v576
      %v765 = vunpack.c.l.b16 %v577
      %v766 = vunpack.c.l.b16 %v578
      %v767 = vunpack.c.l.b16 %v579
      %v768 = vunpack.c.l.b16 %v580
      %v769 = vunpack.c.l.b16 %v581
      %v770 = vunpack.c.l.b16 %v582
      %v771 = vunpack.c.l.b16 %v583
      %v772 = vunpack.c.l.b16 %v584
      %v773 = vunpack.c.l.b16 %v585
      %v774 = vunpack.c.l.b16 %v586
      %v775 = vunpack.c.l.b16 %v587
      %v776 = vunpack.c.l.b16 %v588
      %v777 = vunpack.c.l.b16 %v589
      %v778 = vunpack.c.l.b16 %v590
      %v779 = vunpack.c.l.b16 %v591
      %v780 = vunpack.c.l.b16 %v592
      %v781 = vunpack.c.l.b16 %v593
      %v782 = vunpack.c.l.b16 %v594
      %v783 = vunpack.c.l.b16 %v595
      %v784 = vunpack.c.l.b16 %v596
      %v785 = vunpack.c.l.b16 %v597
      %v786 = vunpack.c.l.b16 %v598
      %v787 = vunpack.c.l.b16 %v599
      %v788 = vunpack.c.l.b16 %v600
      %v789 = vunpack.c.l.b16 %v601
      %v790 = vunpack.c.l.b16 %v602
      %v791 = vunpack.c.l.b16 %v603
      %v792 = vunpack.c.l.b16 %v604
      %v793 = vunpack.c.l.b16 %v605
      %v794 = vunpack.c.l.b16 %v606
      %v795 = vunpack.c.l.b16 %v607
      %v796 = vunpack.c.l.b16 %v608
      %v797 = vunpack.c.l.b16 %v609
      %v798 = vunpack.c.l.b16 %v610
      %v799 = vunpack.c.l.b16 %v611
      %v800 = vunpack.c.l.b16 %v612
      %v801 = vpack.c.b16 %v730, %v729
      %v802 = vpack.c.b16 %v732, %v731
      %v803 = vpack.c.b16 %v734, %v733
      %v804 = vpack.c.b16 %v736, %v735
      %v805 = vpack.c.b16 %v738, %v737
      %v806 = vpack.c.b16 %v740, %v739
      %v807 = vpack.c.b16 %v742, %v741
      %v808 = vpack.c.b16 %v744, %v743
      %v809 = vpack.c.b16 %v746, %v745
      %v810 = vpack.c.b16 %v748, %v747
      %v811 = vpack.c.b16 %v750, %v749
      %v812 = vpack.c.b16 %v752, %v751
      %v813 = vpack.c.b16 %v754, %v753
      %v814 = vpack.c.b16 %v756, %v755
      %v815 = vpack.c.b16 %v758, %v757
      %v816 = vpack.c.b16 %v760, %v759
      %v817 = vpack.c.b16 %v762, %v761
      %v818 = vpack.c.b16 %v764, %v763
      %v819 = vpack.c.b16 %v766, %v765
      %v820 = vpack.c.b16 %v768, %v767
      %v821 = vpack.c.b16 %v770, %v769
      %v822 = vpack.c.b16 %v772, %v771
      %v823 = vpack.c.b16 %v774, %v773
      %v824 = vpack.c.b16 %v776, %v775
      %v825 = vpack.c.b16 %v778, %v777
      %v826 = vpack.c.b16 %v780, %v779
      %v827 = vpack.c.b16 %v782, %v781
      %v828 = vpack.c.b16 %v784, %v783
      %v829 = vpack.c.b16 %v786, %v785
      %v830 = vpack.c.b16 %v788, %v787
      %v831 = vpack.c.b16 %v790, %v789
      %v832 = vpack.c.b16 %v792, %v791
      %v833 = vpack.c.b16 %v794, %v793
      %v834 = vpack.c.b16 %v796, %v795
      %v835 = vpack.c.b16 %v798, %v797
      %v836 = vpack.c.b16 %v800, %v799
      %v874 = vsel %vm440, %v643, 0
      %876 = vmatprep.subr.bf16.mxu0 0
      %877 = vmatpush1.bf16.msra.mxu0 %v801
      %878 = vmatprep.subr.bf16.mxu0 0
      %879 = vmatpush1.bf16.msra.mxu0 %v802
      %880 = vmatprep.subr.bf16.mxu0 0
      %881 = vmatpush1.bf16.msra.mxu0 %v803
      %882 = vmatprep.subr.bf16.mxu0 0
      %883 = vmatpush1.bf16.msra.mxu0 %v804
      %884 = vmatprep.subr.bf16.mxu0 0
      %885 = vmatpush1.bf16.msra.mxu0 %v805
      %886 = vmatprep.subr.bf16.mxu0 0
      %887 = vmatpush1.bf16.msra.mxu0 %v806
      %888 = vmatprep.subr.bf16.mxu0 0
      %889 = vmatpush1.bf16.msra.mxu0 %v807
      %890 = vmatprep.subr.bf16.mxu0 0
      %891 = vmatpush1.bf16.msra.mxu0 %v808
      %892 = vmatprep.subr.bf16.mxu0 0
      %893 = vmatpush1.bf16.msra.mxu0 %v809
      %894 = vmatprep.subr.bf16.mxu0 0
      %895 = vmatpush1.bf16.msra.mxu0 %v810
      %896 = vmatprep.subr.bf16.mxu0 0
      %897 = vmatpush1.bf16.msra.mxu0 %v811
      %898 = vmatprep.subr.bf16.mxu0 0
      %899 = vmatpush1.bf16.msra.mxu0 %v812
      %900 = vmatprep.subr.bf16.mxu0 0
      %901 = vmatpush1.bf16.msra.mxu0 %v813
      %902 = vmatprep.subr.bf16.mxu0 0
      %903 = vmatpush1.bf16.msra.mxu0 %v814
      %904 = vmatprep.subr.bf16.mxu0 0
      %905 = vmatpush1.bf16.msra.mxu0 %v815
      %906 = vmatprep.subr.bf16.mxu0 0
      %907 = vmatpush1.bf16.msra.mxu0 %v816
      %908 = vmatprep.mubr.bf16.mxu0 %v650
      %909 = vmatmul.mubr.bf16.gmra.mrb[0].mxu0 %v636
      %v910 = vpop.f32.mrb[0].mxu0
      %v911 = vadd.f32 0.0, %v910
      %v912 = vpop.f32.mrb[0].mxu0
      %v913 = vpop.f32.mrb[0].mxu0
      %v914 = vpop.f32.mrb[0].mxu0
      %915 = vdwg.mxu0
      %916 = vmatprep.subr.bf16.mxu0 0
      %917 = vmatpush1.bf16.msra.mxu0 %v817
      %918 = vmatprep.subr.bf16.mxu0 0
      %919 = vmatpush1.bf16.msra.mxu0 %v818
      %920 = vmatprep.subr.bf16.mxu0 0
      %921 = vmatpush1.bf16.msra.mxu0 %v819
      %922 = vmatprep.subr.bf16.mxu0 0
      %923 = vmatpush1.bf16.msra.mxu0 %v820
      %924 = vmatprep.subr.bf16.mxu0 0
      %925 = vmatpush1.bf16.msra.mxu0 %v821
      %926 = vmatprep.subr.bf16.mxu0 0
      %927 = vmatpush1.bf16.msra.mxu0 %v822
      %928 = vmatprep.subr.bf16.mxu0 0
      %929 = vmatpush1.bf16.msra.mxu0 %v823
      %930 = vmatprep.subr.bf16.mxu0 0
      %931 = vmatpush1.bf16.msra.mxu0 %v824
      %932 = vmatprep.subr.bf16.mxu0 0
      %933 = vmatpush1.bf16.msra.mxu0 %v825
      %934 = vmatprep.subr.bf16.mxu0 0
      %935 = vmatpush1.bf16.msra.mxu0 %v826
      %936 = vmatprep.subr.bf16.mxu0 0
      %937 = vmatpush1.bf16.msra.mxu0 %v827
      %938 = vmatprep.subr.bf16.mxu0 0
      %939 = vmatpush1.bf16.msra.mxu0 %v828
      %940 = vmatprep.subr.bf16.mxu0 0
      %941 = vmatpush1.bf16.msra.mxu0 %v829
      %942 = vmatprep.subr.bf16.mxu0 0
      %943 = vmatpush1.bf16.msra.mxu0 %v830
      %944 = vmatprep.subr.bf16.mxu0 0
      %945 = vmatpush1.bf16.msra.mxu0 %v831
      %946 = vmatprep.subr.bf16.mxu0 0
      %947 = vmatpush1.bf16.msra.mxu0 %v832
      %948 = vmatprep.mubr.bf16.mxu0 %v652
      %949 = vmatmul.mubr.bf16.gmra.mrb[0].mxu0 %v651
      %v950 = vpop.f32.mrb[0].mxu0
      %v951 = vadd.f32 %v911, %v950
      %v952 = vpop.f32.mrb[0].mxu0
      %v953 = vpop.f32.mrb[0].mxu0
      %v954 = vpop.f32.mrb[0].mxu0
      %955 = vdwg.mxu0
      %956 = vmatprep.subr.bf16.mxu0 0
      %957 = vmatpush1.bf16.msra.mxu0 %v833
      %958 = vmatprep.subr.bf16.mxu0 0
      %959 = vmatpush1.bf16.msra.mxu0 %v834
      %960 = vmatprep.subr.bf16.mxu0 0
      %961 = vmatpush1.bf16.msra.mxu0 %v835
      %962 = vmatprep.subr.bf16.mxu0 0
      %963 = vmatpush1.bf16.msra.mxu0 %v836
      %964 = vmatprep.subr.bf16.mxu0 0
      %965 = vmatpush1.bf16.msra.mxu0 0
      %966 = vmatprep.subr.bf16.mxu0 0
      %967 = vmatpush1.bf16.msra.mxu0 0
      %968 = vmatprep.subr.bf16.mxu0 0
      %969 = vmatpush1.bf16.msra.mxu0 0
      %970 = vmatprep.subr.bf16.mxu0 0
      %971 = vmatpush1.bf16.msra.mxu0 0
      %972 = vmatprep.subr.bf16.mxu0 0
      %973 = vmatpush1.bf16.msra.mxu0 0
      %974 = vmatprep.subr.bf16.mxu0 0
      %975 = vmatpush1.bf16.msra.mxu0 0
      %976 = vmatprep.subr.bf16.mxu0 0
      %977 = vmatpush1.bf16.msra.mxu0 0
      %978 = vmatprep.subr.bf16.mxu0 0
      %979 = vmatpush1.bf16.msra.mxu0 0
      %980 = vmatprep.subr.bf16.mxu0 0
      %981 = vmatpush1.bf16.msra.mxu0 0
      %982 = vmatprep.subr.bf16.mxu0 0
      %983 = vmatpush1.bf16.msra.mxu0 0
      %984 = vmatprep.subr.bf16.mxu0 0
      %985 = vmatpush1.bf16.msra.mxu0 0
      %986 = vmatprep.subr.bf16.mxu0 0
      %987 = vmatpush1.bf16.msra.mxu0 0
      %988 = vmatprep.mubr.bf16.mxu0 0
      %989 = vmatmul.mubr.bf16.gmra.mrb[0].mxu0 %v874
      %v990 = vpop.f32.mrb[0].mxu0
      %v991 = vadd.f32 %v951, %v990
      %v992 = vpop.f32.mrb[0].mxu0
      %v993 = vpop.f32.mrb[0].mxu0
      %v994 = vpop.f32.mrb[0].mxu0
      %995 = vdwg.mxu0
      %vm996 = vcmask 1043456
      %v997 = vsel %vm996, %v991, 0.0
      %v998 = vrot.slane %v997, 4
      %v999 = vadd.f32 %v997, %v998
      %v1000 = vrot.slane %v999, 2
      %v1001 = vadd.f32 %v999, %v1000
      %v1002 = vrot.slane %v1001, 1
      %v1003 = vadd.f32 %v1001, %v1002
      %v1004 = vmul.f32 %v991, %v991
      %v1005 = vsel %vm996, %v1004, 0.0
      %v1006 = vrot.slane %v1005, 4
      %v1007 = vadd.f32 %v1005, %v1006
      %v1008 = vrot.slane %v1007, 2
      %v1009 = vadd.f32 %v1007, %v1008
      %v1010 = vrot.slane %v1009, 1
      %v1011 = vadd.f32 %v1009, %v1010
      %vm1012 = vcmask 1040384
      %v1013 = vsel %vm1012, %v1003, %v1011
      %1014 = vst [vmem:[%s282] sm:$0x3] %v1013
      %v1017 = vunpack.c.l.s4 1983009808
      %v1018 = vunpack.c.0.s8 %v1017
      %v1019 = vlaneseq
      %v1020 = vshrl.u32 %v1019, 7
      %v1021 = vsub.s32 %v1018, %v1020
      %v1022 = vrot.slane %v991, %v1021
      %v1023 = vcombine.high %v1022, %v1022
      %1026 = vst [vmem:[%s278] sm:$0x3] %v1022
      %1027 = vst [vmem:[%s278 + $0x2] sm:$0x3] %v1023
      %p1028 = scmp.lt.s32.totalorder %s18, 1
      %s1029 = scalar_select %p1028, %s18, 1
      %s1030 = smul.addr %s1029, 2
      %s1031 = smul.addr %s1030, 2
      %s1032 = scalar_lea.vmem %s5, %s1031
      %p1033 = scmp.lt.s32.totalorder %s18, 1
      %s1034 = scalar_select %p1033, %s18, 1
      %s1035 = smul.addr %s1034, 2
      %s1036 = scalar_lea.vmem %s6, %s1035
      // Predicated region
      $region41: #{netd_forward.14} parent=39 // pred_check
        %p1037 = pneg %p151
      $region42: #{netd_forward.14} parent=39 // pred_check_branch
        %1039 = sbr.rel (%p1037) target = $region44
      $region43: #{netd_forward.14} parent=39 // pred_region
        _
      $region44: #{netd_forward.14} parent=39 // pred_fallthru
        _
      // Predicated region
      $region45: #{netd_forward.14} parent=39 // pred_check
        %p1040 = pneg %p177
      $region46: #{netd_forward.14} parent=39 // pred_check_branch
        %1042 = sbr.rel (%p1040) target = $region48
      $region47: #{netd_forward.14} parent=39 // pred_region
        _
      $region48: #{netd_forward.14} parent=39 // pred_fallthru
        _
    $region40: #{netd_forward.14} parent=5 // pred_fallthru
      _
    %p1043 = scmp.le.s32.totalorder 2, %s13
    // Predicated region
    $region49: #{netd_forward.14} parent=5 // pred_check
      %p1044 = pneg %p1043
    $region50: #{netd_forward.14} parent=5 // pred_check_branch
      %1046 = sbr.rel (%p1044) target = $region52
    $region51: #{netd_forward.14} parent=5 // pred_region
      %s1047 = ssub.s32 %s13, 2
      // Predicated region
      $region53: #{netd_forward.14} parent=51 // pred_check
        %p1048 = pneg %p157
      $region54: #{netd_forward.14} parent=51 // pred_check_branch
        %1050 = sbr.rel (%p1048) target = $region56
      $region55: #{netd_forward.14} parent=51 // pred_region
        %p1051 = scmp.lt.s32.totalorder %s19, 1
        %s1052 = scalar_select %p1051, %s19, 1
        %s1053 = smul.addr %s1052, 2
        %s1054 = smul.addr %s1053, 2
        %s1055 = scalar_lea.vmem %s5, %s1054
      $region56: #{netd_forward.14} parent=51 // pred_fallthru
        _
      // Predicated region
      $region57: #{netd_forward.14} parent=51 // pred_check
        %p1056 = pneg %p183
      $region58: #{netd_forward.14} parent=51 // pred_check_branch
        %1058 = sbr.rel (%p1056) target = $region60
      $region59: #{netd_forward.14} parent=51 // pred_region
        %p1059 = scmp.lt.s32.totalorder %s19, 1
        %s1060 = scalar_select %p1059, %s19, 1
        %s1061 = smul.addr %s1060, 2
        %s1062 = scalar_lea.vmem %s6, %s1061
      $region60: #{netd_forward.14} parent=51 // pred_fallthru
        _
    $region52: #{netd_forward.14} parent=5 // pred_fallthru
      _
  $region6: #{netd_forward.14} parent=0 // loop_footer
    %s17 = sadd.s32 1, %s13
  $region7: #{netd_forward.14} parent=0 // loop_footer_branch
    %12 = sbr.rel target = $region3
  $region8: #{netd_forward.14} parent=0 // loop_exit
    _

</llo_original>
